<compile_context>
chip_gen: v7x
topology: tpu7x:2x2x1
jax: 0.10.0
libtpu: 0.0.40
codegen_flags: <defaults>
</compile_context>

<pallas_src>
import jax
import jax.numpy as jnp
from jax import lax
from jax.experimental import pallas as pl
from jax.experimental.pallas import tpu as pltpu

LANE = 128


def convblock_kernel(xpad_ref, w_ref, gamma_ref, beta_ref, out_ref, acc_ref):
    # xpad_ref : (N, H+2, W+2, Cin) bf16, zero-padded NHWC input
    # w_ref    : (9*Cin, Cp)        bf16, im2col weight matrix (Cp = Cout padded to 128-multiple)
    # gamma_ref, beta_ref : (1, Cp) f32  (zero in padded channels)
    # out_ref  : (N*H2*W2, Cp)      f32, pooled output, rows in (n, h2, w2) order, lane-dense
    # acc_ref  : (N*H*W, Cp)        f32 scratch, conv accumulator, rows in (n, h, w) order
    N, Hp, Wp, Cin = xpad_ref.shape
    H, W = Hp - 2, Wp - 2
    H2, W2 = H // 2, W // 2
    Cp = out_ref.shape[-1]
    NHW = N * H * W

    # ---- Phase 1: im2col in registers + ONE MXU matmul (bf16 operands, f32 accumulation) ----
    taps = []
    for kh in range(3):
        for kw in range(3):
            taps.append(xpad_ref[:, kh:kh + H, kw:kw + W, :].reshape(NHW, Cin))
    patch = jnp.concatenate(taps, axis=-1)                        # (NHW, 9*Cin) bf16, K=(kh,kw,ci)
    acc_ref[...] = jnp.dot(patch, w_ref[...],
                           preferred_element_type=jnp.float32)    # (NHW, Cp) f32
    # conv bias intentionally omitted: training-mode BN subtracts the batch mean, which cancels
    # any per-channel constant exactly.

    # ---- Phase 2: BN batch statistics, one chunked traversal accumulating s1 AND s2 ----
    # Each chunk is read once from VMEM; both sums come from the register-resident chunk.
    CH = 2 * W                          # one pool row-group worth of rows; always divides NHW
    n_chunks = NHW // CH
    s1 = jnp.zeros((1, Cp), jnp.float32)
    s2 = jnp.zeros((1, Cp), jnp.float32)
    for i in range(n_chunks):
        a = acc_ref[pl.ds(i * CH, CH), :]
        s1 = s1 + jnp.sum(a, axis=0, keepdims=True)
        s2 = s2 + jnp.sum(a * a, axis=0, keepdims=True)

    inv_n = 1.0 / float(NHW)
    mean = s1 * inv_n
    # TODO(synk): one-pass E[x^2]-mean^2 is cancellation-prone for large/shifted activations;
    # switch to a two-pass / compensated accumulation when this kernel is tiled for real shapes.
    var = jnp.maximum(s2 * inv_n - mean * mean, 0.0)
    scale = gamma_ref[...] * lax.rsqrt(var + 1e-5)                # (1, Cp)
    shift = beta_ref[...] - mean * scale                          # (1, Cp)

    # ---- Phase 3: fused BN-apply + ReLU + 2x2 max-pool, single traversal, direct output ----
    # acc rows are (n, h, w).  For pool group g = n*H2 + h2 the four legs of every 2x2 window are
    # the stride-2 sublane reads starting at r0, r0+1, r0+W, r0+W+1.  BN is applied before the max
    # (gamma may be negative, so the affine does not commute with max); ReLU commutes either way.
    def bn_relu(a):
        return jnp.maximum(a * scale + shift, 0.0)

    G = N * H2
    for g in range(G):
        r0 = g * 2 * W
        a00 = bn_relu(acc_ref[pl.ds(r0,         W2, 2), :])       # h even, w even
        a01 = bn_relu(acc_ref[pl.ds(r0 + 1,     W2, 2), :])       # h even, w odd
        a10 = bn_relu(acc_ref[pl.ds(r0 + W,     W2, 2), :])       # h odd,  w even
        a11 = bn_relu(acc_ref[pl.ds(r0 + W + 1, W2, 2), :])       # h odd,  w odd
        out_ref[g * W2:(g + 1) * W2, :] = jnp.maximum(jnp.maximum(a00, a01),
                                                      jnp.maximum(a10, a11))


def conv_block(x_nchw, w_oihw, b, gamma, beta):
    """ConvBlock forward. x_nchw: (N, Cin, H, W) f32 -> (N, Cout, H//2, W//2) f32."""
    N, Cin, H, W = x_nchw.shape
    Cout = w_oihw.shape[0]
    assert H % 2 == 0 and W % 2 == 0
    H2, W2 = H // 2, W // 2
    NHW = N * H * W
    Cp = max(LANE, ((Cout + LANE - 1) // LANE) * LANE)            # lane-dense channel padding

    # b intentionally unused: training-mode BN cancels the per-channel conv bias exactly.
    # TODO(synk): if this kernel is reused with eval-mode running stats, b must be re-added.
    del b

    # Input: NCHW -> NHWC, bf16 (MXU operand dtype; halves DMA), spatial zero-pad for padding=1.
    x_nhwc = jnp.transpose(x_nchw, (0, 2, 3, 1)).astype(jnp.bfloat16)
    xpad = jnp.pad(x_nhwc, ((0, 0), (1, 1), (1, 1), (0, 0)))

    # Weights: OIHW -> (kh, kw, Cin, Cout) -> (9*Cin, Cout), pad Cout -> Cp, bf16 for the MXU.
    w_mat = jnp.transpose(w_oihw, (2, 3, 1, 0)).astype(jnp.float32).reshape(9 * Cin, Cout)
    w_mat = jnp.pad(w_mat, ((0, 0), (0, Cp - Cout))).astype(jnp.bfloat16)
    gamma_p = jnp.pad(gamma.astype(jnp.float32), (0, Cp - Cout)).reshape(1, Cp)
    beta_p = jnp.pad(beta.astype(jnp.float32), (0, Cp - Cout)).reshape(1, Cp)

    # VMEM budget (tile-padded estimate incl. the bf16 patch temporary and chunk working sets).
    def rup(n, m):
        return ((n + m - 1) // m) * m
    vmem_est = (2 * N * (H + 2) * rup(W + 2, 16) * LANE * 2       # bf16 input (Cin lane-padded)
                + NHW * LANE * 2                                  # bf16 im2col patch temporary
                + NHW * Cp * 4                                    # f32 conv accumulator scratch
                + 2 * N * H2 * W2 * Cp * 4                        # f32 pooled output (+copy)
                + 16 * (2 * W) * Cp * 4)                          # chunk working set / spills
    assert vmem_est < 24 * 1024 * 1024, (
        "ConvBlock kernel is un-gridded; this shape needs spatial tiling (see TODO at top).")
    vmem_limit = int(min(64 * 1024 * 1024, max(32 * 1024 * 1024, 2 * vmem_est)))

    out = pl.pallas_call(
        convblock_kernel,
        out_shape=jax.ShapeDtypeStruct((N * H2 * W2, Cp), jnp.float32),
        in_specs=[pl.BlockSpec(memory_space=pltpu.MemorySpace.VMEM)] * 4,
        out_specs=pl.BlockSpec(memory_space=pltpu.MemorySpace.VMEM),
        scratch_shapes=[pltpu.VMEM((NHW, Cp), jnp.float32)],      # conv accumulator
        compiler_params=pltpu.CompilerParams(vmem_limit_bytes=vmem_limit),
    )(xpad, w_mat, gamma_p, beta_p)

    out_nhwc = out.reshape(N, H2, W2, Cp)[..., :Cout]
    return jnp.transpose(out_nhwc, (0, 3, 1, 2)).astype(jnp.float32)   # back to NCHW


def conv_block_reference(x_nchw, w_oihw, b, gamma, beta):
    """Pure-JAX reference matching PyTorch ConvBlock.forward (training-mode BN)."""
    y = lax.conv_general_dilated(
        x_nchw.astype(jnp.float32), w_oihw.astype(jnp.float32),
        window_strides=(1, 1), padding=((1, 1), (1, 1)),
        dimension_numbers=("NCHW", "OIHW", "NCHW"),
        precision=lax.Precision.HIGHEST)
    y = y + b.reshape(1, -1, 1, 1)
    mean = jnp.mean(y, axis=(0, 2, 3), keepdims=True)
    var = jnp.mean(jnp.square(y - mean), axis=(0, 2, 3), keepdims=True)   # biased variance
    y = (y - mean) * lax.rsqrt(var + 1e-5)
    y = y * gamma.reshape(1, -1, 1, 1) + beta.reshape(1, -1, 1, 1)
    y = jnp.maximum(y, 0.0)
    N, C, H, W = y.shape
    return y.reshape(N, C, H // 2, 2, W // 2, 2).max(axis=(3, 5))


if __name__ == "__main__":
    key = jax.random.PRNGKey(0)
    k_x, k_w, k_b, k_g, k_be = jax.random.split(key, 5)

    N, IN_CH, OUT_CH, H, W = 2, 4, 8, 16, 16

    # Deterministic parameter init (shapes from nn.Conv2d(in_ch,out_ch,3) / nn.BatchNorm2d(out_ch)).
    fan_in = IN_CH * 3 * 3
    bound = 1.0 / (float(fan_in) ** 0.5)
    w = jax.random.uniform(k_w, (OUT_CH, IN_CH, 3, 3), jnp.float32, -bound, bound)
    b = jax.random.uniform(k_b, (OUT_CH,), jnp.float32, -bound, bound)
    gamma = 1.0 + 0.1 * jax.random.normal(k_g, (OUT_CH,), jnp.float32)
    beta = 0.1 * jax.random.normal(k_be, (OUT_CH,), jnp.float32)
    # TODO(synk): BatchNorm running-stat updates are a training side effect and are not modeled
    # (they do not affect this forward output in training mode).

    x = jax.random.normal(k_x, (N, IN_CH, H, W), jnp.float32)

    out = jax.block_until_ready(conv_block(x, w, b, gamma, beta))
    ref = jax.block_until_ready(conv_block_reference(x, w, b, gamma, beta))

    assert out.shape == (N, OUT_CH, H // 2, W // 2), out.shape
    # Tolerance accounts for bf16 MXU operands in the kernel vs f32-HIGHEST reference conv.
    err = float(jnp.max(jnp.abs(out - ref)))
    assert err < 3e-2, err
    print("KERNEL_OK")
</pallas_src>

<mosaic_0001>
module attributes {stable_mosaic.version = 11 : i64} {
  func.func @convblock_kernel(%arg0: memref<2x18x18x4xbf16, #tpu.memory_space<vmem>>, %arg1: memref<36x128xbf16, #tpu.memory_space<vmem>>, %arg2: memref<1x128xf32, #tpu.memory_space<vmem>>, %arg3: memref<1x128xf32, #tpu.memory_space<vmem>>, %arg4: memref<128x128xf32, #tpu.memory_space<vmem>>, %arg5: memref<512x128xf32, #tpu.memory_space<vmem>>) attributes {dimension_semantics = [], scalar_prefetch = 0 : i64, scratch_operands = 1 : i64, tpu.core_type = #tpu.core_type<tc>} {
    %c0 = arith.constant 0 : index
    %c0_0 = arith.constant 0 : index
    %c0_1 = arith.constant 0 : index
    %c0_2 = arith.constant 0 : index
    %0 = vector.load %arg0[%c0, %c0_0, %c0_1, %c0_2] : memref<2x18x18x4xbf16, #tpu.memory_space<vmem>>, vector<2x16x16x4xbf16>
    %1 = vector.shape_cast %0 : vector<2x16x16x4xbf16> to vector<512x4xbf16>
    %c0_3 = arith.constant 0 : index
    %c0_4 = arith.constant 0 : index
    %c1 = arith.constant 1 : index
    %c0_5 = arith.constant 0 : index
    %2 = vector.load %arg0[%c0_3, %c0_4, %c1, %c0_5] : memref<2x18x18x4xbf16, #tpu.memory_space<vmem>>, vector<2x16x16x4xbf16>
    %3 = vector.shape_cast %2 : vector<2x16x16x4xbf16> to vector<512x4xbf16>
    %c0_6 = arith.constant 0 : index
    %c0_7 = arith.constant 0 : index
    %c2 = arith.constant 2 : index
    %c0_8 = arith.constant 0 : index
    %4 = vector.load %arg0[%c0_6, %c0_7, %c2, %c0_8] : memref<2x18x18x4xbf16, #tpu.memory_space<vmem>>, vector<2x16x16x4xbf16>
    %5 = vector.shape_cast %4 : vector<2x16x16x4xbf16> to vector<512x4xbf16>
    %c0_9 = arith.constant 0 : index
    %c1_10 = arith.constant 1 : index
    %c0_11 = arith.constant 0 : index
    %c0_12 = arith.constant 0 : index
    %6 = vector.load %arg0[%c0_9, %c1_10, %c0_11, %c0_12] : memref<2x18x18x4xbf16, #tpu.memory_space<vmem>>, vector<2x16x16x4xbf16>
    %7 = vector.shape_cast %6 : vector<2x16x16x4xbf16> to vector<512x4xbf16>
    %c0_13 = arith.constant 0 : index
    %c1_14 = arith.constant 1 : index
    %c1_15 = arith.constant 1 : index
    %c0_16 = arith.constant 0 : index
    %8 = vector.load %arg0[%c0_13, %c1_14, %c1_15, %c0_16] : memref<2x18x18x4xbf16, #tpu.memory_space<vmem>>, vector<2x16x16x4xbf16>
    %9 = vector.shape_cast %8 : vector<2x16x16x4xbf16> to vector<512x4xbf16>
    %c0_17 = arith.constant 0 : index
    %c1_18 = arith.constant 1 : index
    %c2_19 = arith.constant 2 : index
    %c0_20 = arith.constant 0 : index
    %10 = vector.load %arg0[%c0_17, %c1_18, %c2_19, %c0_20] : memref<2x18x18x4xbf16, #tpu.memory_space<vmem>>, vector<2x16x16x4xbf16>
    %11 = vector.shape_cast %10 : vector<2x16x16x4xbf16> to vector<512x4xbf16>
    %c0_21 = arith.constant 0 : index
    %c2_22 = arith.constant 2 : index
    %c0_23 = arith.constant 0 : index
    %c0_24 = arith.constant 0 : index
    %12 = vector.load %arg0[%c0_21, %c2_22, %c0_23, %c0_24] : memref<2x18x18x4xbf16, #tpu.memory_space<vmem>>, vector<2x16x16x4xbf16>
    %13 = vector.shape_cast %12 : vector<2x16x16x4xbf16> to vector<512x4xbf16>
    %c0_25 = arith.constant 0 : index
    %c2_26 = arith.constant 2 : index
    %c1_27 = arith.constant 1 : index
    %c0_28 = arith.constant 0 : index
    %14 = vector.load %arg0[%c0_25, %c2_26, %c1_27, %c0_28] : memref<2x18x18x4xbf16, #tpu.memory_space<vmem>>, vector<2x16x16x4xbf16>
    %15 = vector.shape_cast %14 : vector<2x16x16x4xbf16> to vector<512x4xbf16>
    %c0_29 = arith.constant 0 : index
    %c2_30 = arith.constant 2 : index
    %c2_31 = arith.constant 2 : index
    %c0_32 = arith.constant 0 : index
    %16 = vector.load %arg0[%c0_29, %c2_30, %c2_31, %c0_32] : memref<2x18x18x4xbf16, #tpu.memory_space<vmem>>, vector<2x16x16x4xbf16>
    %17 = vector.shape_cast %16 : vector<2x16x16x4xbf16> to vector<512x4xbf16>
    %18 = tpu.concatenate %1, %3, %5, %7, %9, %11, %13, %15, %17 in 1 : vector<512x4xbf16>, vector<512x4xbf16>, vector<512x4xbf16>, vector<512x4xbf16>, vector<512x4xbf16>, vector<512x4xbf16>, vector<512x4xbf16>, vector<512x4xbf16>, vector<512x4xbf16> -> vector<512x36xbf16>
    %c0_33 = arith.constant 0 : index
    %c0_34 = arith.constant 0 : index
    %19 = vector.load %arg1[%c0_33, %c0_34] : memref<36x128xbf16, #tpu.memory_space<vmem>>, vector<36x128xbf16>
    %cst = arith.constant dense<0.000000e+00> : vector<512x128xf32>
    %20 = tpu.matmul %18, %19, %cst {dimension_numbers = #tpu.dot_dimension_numbers<[1], [0], [0], [1], [0, 0, 1, 1], [], []>} : vector<512x36xbf16>, vector<36x128xbf16>, vector<512x128xf32> -> vector<512x128xf32>
    %c0_35 = arith.constant 0 : index
    %c0_36 = arith.constant 0 : index
    %21 = vector.load %arg5[%c0_35, %c0_36] : memref<512x128xf32, #tpu.memory_space<vmem>>, vector<512x128xf32>
    tpu.vector_store %arg5[%c0_35, %c0_36], %20 {strides = array<i32>} : memref<512x128xf32, #tpu.memory_space<vmem>>, vector<512x128xf32>,
    %cst_37 = arith.constant 0.000000e+00 : f32
    %22 = vector.broadcast %cst_37 : f32 to vector<1x128xf32>
    %cst_38 = arith.constant 0.000000e+00 : f32
    %23 = vector.broadcast %cst_38 : f32 to vector<1x128xf32>
    %c0_39 = arith.constant 0 : index
    %c0_40 = arith.constant 0 : index
    %24 = vector.load %arg5[%c0_39, %c0_40] : memref<512x128xf32, #tpu.memory_space<vmem>>, vector<32x128xf32>
    %cst_41 = arith.constant dense<0.000000e+00> : vector<128xf32>
    %25 = vector.multi_reduction <add>, %24, %cst_41 [0] : vector<32x128xf32> to vector<128xf32>
    %26 = vector.shape_cast %25 : vector<128xf32> to vector<1x128xf32>
    %27 = arith.addf %22, %26 : vector<1x128xf32>
    %28 = arith.mulf %24, %24 : vector<32x128xf32>
    %cst_42 = arith.constant dense<0.000000e+00> : vector<128xf32>
    %29 = vector.multi_reduction <add>, %28, %cst_42 [0] : vector<32x128xf32> to vector<128xf32>
    %30 = vector.shape_cast %29 : vector<128xf32> to vector<1x128xf32>
    %31 = arith.addf %23, %30 : vector<1x128xf32>
    %c32 = arith.constant 32 : index
    %c0_43 = arith.constant 0 : index
    %32 = vector.load %arg5[%c32, %c0_43] : memref<512x128xf32, #tpu.memory_space<vmem>>, vector<32x128xf32>
    %cst_44 = arith.constant dense<0.000000e+00> : vector<128xf32>
    %33 = vector.multi_reduction <add>, %32, %cst_44 [0] : vector<32x128xf32> to vector<128xf32>
    %34 = vector.shape_cast %33 : vector<128xf32> to vector<1x128xf32>
    %35 = arith.addf %27, %34 : vector<1x128xf32>
    %36 = arith.mulf %32, %32 : vector<32x128xf32>
    %cst_45 = arith.constant dense<0.000000e+00> : vector<128xf32>
    %37 = vector.multi_reduction <add>, %36, %cst_45 [0] : vector<32x128xf32> to vector<128xf32>
    %38 = vector.shape_cast %37 : vector<128xf32> to vector<1x128xf32>
    %39 = arith.addf %31, %38 : vector<1x128xf32>
    %c64 = arith.constant 64 : index
    %c0_46 = arith.constant 0 : index
    %40 = vector.load %arg5[%c64, %c0_46] : memref<512x128xf32, #tpu.memory_space<vmem>>, vector<32x128xf32>
    %cst_47 = arith.constant dense<0.000000e+00> : vector<128xf32>
    %41 = vector.multi_reduction <add>, %40, %cst_47 [0] : vector<32x128xf32> to vector<128xf32>
    %42 = vector.shape_cast %41 : vector<128xf32> to vector<1x128xf32>
    %43 = arith.addf %35, %42 : vector<1x128xf32>
    %44 = arith.mulf %40, %40 : vector<32x128xf32>
    %cst_48 = arith.constant dense<0.000000e+00> : vector<128xf32>
    %45 = vector.multi_reduction <add>, %44, %cst_48 [0] : vector<32x128xf32> to vector<128xf32>
    %46 = vector.shape_cast %45 : vector<128xf32> to vector<1x128xf32>
    %47 = arith.addf %39, %46 : vector<1x128xf32>
    %c96 = arith.constant 96 : index
    %c0_49 = arith.constant 0 : index
    %48 = vector.load %arg5[%c96, %c0_49] : memref<512x128xf32, #tpu.memory_space<vmem>>, vector<32x128xf32>
    %cst_50 = arith.constant dense<0.000000e+00> : vector<128xf32>
    %49 = vector.multi_reduction <add>, %48, %cst_50 [0] : vector<32x128xf32> to vector<128xf32>
    %50 = vector.shape_cast %49 : vector<128xf32> to vector<1x128xf32>
    %51 = arith.addf %43, %50 : vector<1x128xf32>
    %52 = arith.mulf %48, %48 : vector<32x128xf32>
    %cst_51 = arith.constant dense<0.000000e+00> : vector<128xf32>
    %53 = vector.multi_reduction <add>, %52, %cst_51 [0] : vector<32x128xf32> to vector<128xf32>
    %54 = vector.shape_cast %53 : vector<128xf32> to vector<1x128xf32>
    %55 = arith.addf %47, %54 : vector<1x128xf32>
    %c128 = arith.constant 128 : index
    %c0_52 = arith.constant 0 : index
    %56 = vector.load %arg5[%c128, %c0_52] : memref<512x128xf32, #tpu.memory_space<vmem>>, vector<32x128xf32>
    %cst_53 = arith.constant dense<0.000000e+00> : vector<128xf32>
    %57 = vector.multi_reduction <add>, %56, %cst_53 [0] : vector<32x128xf32> to vector<128xf32>
    %58 = vector.shape_cast %57 : vector<128xf32> to vector<1x128xf32>
    %59 = arith.addf %51, %58 : vector<1x128xf32>
    %60 = arith.mulf %56, %56 : vector<32x128xf32>
    %cst_54 = arith.constant dense<0.000000e+00> : vector<128xf32>
    %61 = vector.multi_reduction <add>, %60, %cst_54 [0] : vector<32x128xf32> to vector<128xf32>
    %62 = vector.shape_cast %61 : vector<128xf32> to vector<1x128xf32>
    %63 = arith.addf %55, %62 : vector<1x128xf32>
    %c160 = arith.constant 160 : index
    %c0_55 = arith.constant 0 : index
    %64 = vector.load %arg5[%c160, %c0_55] : memref<512x128xf32, #tpu.memory_space<vmem>>, vector<32x128xf32>
    %cst_56 = arith.constant dense<0.000000e+00> : vector<128xf32>
    %65 = vector.multi_reduction <add>, %64, %cst_56 [0] : vector<32x128xf32> to vector<128xf32>
    %66 = vector.shape_cast %65 : vector<128xf32> to vector<1x128xf32>
    %67 = arith.addf %59, %66 : vector<1x128xf32>
    %68 = arith.mulf %64, %64 : vector<32x128xf32>
    %cst_57 = arith.constant dense<0.000000e+00> : vector<128xf32>
    %69 = vector.multi_reduction <add>, %68, %cst_57 [0] : vector<32x128xf32> to vector<128xf32>
    %70 = vector.shape_cast %69 : vector<128xf32> to vector<1x128xf32>
    %71 = arith.addf %63, %70 : vector<1x128xf32>
    %c192 = arith.constant 192 : index
    %c0_58 = arith.constant 0 : index
    %72 = vector.load %arg5[%c192, %c0_58] : memref<512x128xf32, #tpu.memory_space<vmem>>, vector<32x128xf32>
    %cst_59 = arith.constant dense<0.000000e+00> : vector<128xf32>
    %73 = vector.multi_reduction <add>, %72, %cst_59 [0] : vector<32x128xf32> to vector<128xf32>
    %74 = vector.shape_cast %73 : vector<128xf32> to vector<1x128xf32>
    %75 = arith.addf %67, %74 : vector<1x128xf32>
    %76 = arith.mulf %72, %72 : vector<32x128xf32>
    %cst_60 = arith.constant dense<0.000000e+00> : vector<128xf32>
    %77 = vector.multi_reduction <add>, %76, %cst_60 [0] : vector<32x128xf32> to vector<128xf32>
    %78 = vector.shape_cast %77 : vector<128xf32> to vector<1x128xf32>
    %79 = arith.addf %71, %78 : vector<1x128xf32>
    %c224 = arith.constant 224 : index
    %c0_61 = arith.constant 0 : index
    %80 = vector.load %arg5[%c224, %c0_61] : memref<512x128xf32, #tpu.memory_space<vmem>>, vector<32x128xf32>
    %cst_62 = arith.constant dense<0.000000e+00> : vector<128xf32>
    %81 = vector.multi_reduction <add>, %80, %cst_62 [0] : vector<32x128xf32> to vector<128xf32>
    %82 = vector.shape_cast %81 : vector<128xf32> to vector<1x128xf32>
    %83 = arith.addf %75, %82 : vector<1x128xf32>
    %84 = arith.mulf %80, %80 : vector<32x128xf32>
    %cst_63 = arith.constant dense<0.000000e+00> : vector<128xf32>
    %85 = vector.multi_reduction <add>, %84, %cst_63 [0] : vector<32x128xf32> to vector<128xf32>
    %86 = vector.shape_cast %85 : vector<128xf32> to vector<1x128xf32>
    %87 = arith.addf %79, %86 : vector<1x128xf32>
    %c256 = arith.constant 256 : index
    %c0_64 = arith.constant 0 : index
    %88 = vector.load %arg5[%c256, %c0_64] : memref<512x128xf32, #tpu.memory_space<vmem>>, vector<32x128xf32>
    %cst_65 = arith.constant dense<0.000000e+00> : vector<128xf32>
    %89 = vector.multi_reduction <add>, %88, %cst_65 [0] : vector<32x128xf32> to vector<128xf32>
    %90 = vector.shape_cast %89 : vector<128xf32> to vector<1x128xf32>
    %91 = arith.addf %83, %90 : vector<1x128xf32>
    %92 = arith.mulf %88, %88 : vector<32x128xf32>
    %cst_66 = arith.constant dense<0.000000e+00> : vector<128xf32>
    %93 = vector.multi_reduction <add>, %92, %cst_66 [0] : vector<32x128xf32> to vector<128xf32>
    %94 = vector.shape_cast %93 : vector<128xf32> to vector<1x128xf32>
    %95 = arith.addf %87, %94 : vector<1x128xf32>
    %c288 = arith.constant 288 : index
    %c0_67 = arith.constant 0 : index
    %96 = vector.load %arg5[%c288, %c0_67] : memref<512x128xf32, #tpu.memory_space<vmem>>, vector<32x128xf32>
    %cst_68 = arith.constant dense<0.000000e+00> : vector<128xf32>
    %97 = vector.multi_reduction <add>, %96, %cst_68 [0] : vector<32x128xf32> to vector<128xf32>
    %98 = vector.shape_cast %97 : vector<128xf32> to vector<1x128xf32>
    %99 = arith.addf %91, %98 : vector<1x128xf32>
    %100 = arith.mulf %96, %96 : vector<32x128xf32>
    %cst_69 = arith.constant dense<0.000000e+00> : vector<128xf32>
    %101 = vector.multi_reduction <add>, %100, %cst_69 [0] : vector<32x128xf32> to vector<128xf32>
    %102 = vector.shape_cast %101 : vector<128xf32> to vector<1x128xf32>
    %103 = arith.addf %95, %102 : vector<1x128xf32>
    %c320 = arith.constant 320 : index
    %c0_70 = arith.constant 0 : index
    %104 = vector.load %arg5[%c320, %c0_70] : memref<512x128xf32, #tpu.memory_space<vmem>>, vector<32x128xf32>
    %cst_71 = arith.constant dense<0.000000e+00> : vector<128xf32>
    %105 = vector.multi_reduction <add>, %104, %cst_71 [0] : vector<32x128xf32> to vector<128xf32>
    %106 = vector.shape_cast %105 : vector<128xf32> to vector<1x128xf32>
    %107 = arith.addf %99, %106 : vector<1x128xf32>
    %108 = arith.mulf %104, %104 : vector<32x128xf32>
    %cst_72 = arith.constant dense<0.000000e+00> : vector<128xf32>
    %109 = vector.multi_reduction <add>, %108, %cst_72 [0] : vector<32x128xf32> to vector<128xf32>
    %110 = vector.shape_cast %109 : vector<128xf32> to vector<1x128xf32>
    %111 = arith.addf %103, %110 : vector<1x128xf32>
    %c352 = arith.constant 352 : index
    %c0_73 = arith.constant 0 : index
    %112 = vector.load %arg5[%c352, %c0_73] : memref<512x128xf32, #tpu.memory_space<vmem>>, vector<32x128xf32>
    %cst_74 = arith.constant dense<0.000000e+00> : vector<128xf32>
    %113 = vector.multi_reduction <add>, %112, %cst_74 [0] : vector<32x128xf32> to vector<128xf32>
    %114 = vector.shape_cast %113 : vector<128xf32> to vector<1x128xf32>
    %115 = arith.addf %107, %114 : vector<1x128xf32>
    %116 = arith.mulf %112, %112 : vector<32x128xf32>
    %cst_75 = arith.constant dense<0.000000e+00> : vector<128xf32>
    %117 = vector.multi_reduction <add>, %116, %cst_75 [0] : vector<32x128xf32> to vector<128xf32>
    %118 = vector.shape_cast %117 : vector<128xf32> to vector<1x128xf32>
    %119 = arith.addf %111, %118 : vector<1x128xf32>
    %c384 = arith.constant 384 : index
    %c0_76 = arith.constant 0 : index
    %120 = vector.load %arg5[%c384, %c0_76] : memref<512x128xf32, #tpu.memory_space<vmem>>, vector<32x128xf32>
    %cst_77 = arith.constant dense<0.000000e+00> : vector<128xf32>
    %121 = vector.multi_reduction <add>, %120, %cst_77 [0] : vector<32x128xf32> to vector<128xf32>
    %122 = vector.shape_cast %121 : vector<128xf32> to vector<1x128xf32>
    %123 = arith.addf %115, %122 : vector<1x128xf32>
    %124 = arith.mulf %120, %120 : vector<32x128xf32>
    %cst_78 = arith.constant dense<0.000000e+00> : vector<128xf32>
    %125 = vector.multi_reduction <add>, %124, %cst_78 [0] : vector<32x128xf32> to vector<128xf32>
    %126 = vector.shape_cast %125 : vector<128xf32> to vector<1x128xf32>
    %127 = arith.addf %119, %126 : vector<1x128xf32>
    %c416 = arith.constant 416 : index
    %c0_79 = arith.constant 0 : index
    %128 = vector.load %arg5[%c416, %c0_79] : memref<512x128xf32, #tpu.memory_space<vmem>>, vector<32x128xf32>
    %cst_80 = arith.constant dense<0.000000e+00> : vector<128xf32>
    %129 = vector.multi_reduction <add>, %128, %cst_80 [0] : vector<32x128xf32> to vector<128xf32>
    %130 = vector.shape_cast %129 : vector<128xf32> to vector<1x128xf32>
    %131 = arith.addf %123, %130 : vector<1x128xf32>
    %132 = arith.mulf %128, %128 : vector<32x128xf32>
    %cst_81 = arith.constant dense<0.000000e+00> : vector<128xf32>
    %133 = vector.multi_reduction <add>, %132, %cst_81 [0] : vector<32x128xf32> to vector<128xf32>
    %134 = vector.shape_cast %133 : vector<128xf32> to vector<1x128xf32>
    %135 = arith.addf %127, %134 : vector<1x128xf32>
    %c448 = arith.constant 448 : index
    %c0_82 = arith.constant 0 : index
    %136 = vector.load %arg5[%c448, %c0_82] : memref<512x128xf32, #tpu.memory_space<vmem>>, vector<32x128xf32>
    %cst_83 = arith.constant dense<0.000000e+00> : vector<128xf32>
    %137 = vector.multi_reduction <add>, %136, %cst_83 [0] : vector<32x128xf32> to vector<128xf32>
    %138 = vector.shape_cast %137 : vector<128xf32> to vector<1x128xf32>
    %139 = arith.addf %131, %138 : vector<1x128xf32>
    %140 = arith.mulf %136, %136 : vector<32x128xf32>
    %cst_84 = arith.constant dense<0.000000e+00> : vector<128xf32>
    %141 = vector.multi_reduction <add>, %140, %cst_84 [0] : vector<32x128xf32> to vector<128xf32>
    %142 = vector.shape_cast %141 : vector<128xf32> to vector<1x128xf32>
    %143 = arith.addf %135, %142 : vector<1x128xf32>
    %c480 = arith.constant 480 : index
    %c0_85 = arith.constant 0 : index
    %144 = vector.load %arg5[%c480, %c0_85] : memref<512x128xf32, #tpu.memory_space<vmem>>, vector<32x128xf32>
    %cst_86 = arith.constant dense<0.000000e+00> : vector<128xf32>
    %145 = vector.multi_reduction <add>, %144, %cst_86 [0] : vector<32x128xf32> to vector<128xf32>
    %146 = vector.shape_cast %145 : vector<128xf32> to vector<1x128xf32>
    %147 = arith.addf %139, %146 : vector<1x128xf32>
    %148 = arith.mulf %144, %144 : vector<32x128xf32>
    %cst_87 = arith.constant dense<0.000000e+00> : vector<128xf32>
    %149 = vector.multi_reduction <add>, %148, %cst_87 [0] : vector<32x128xf32> to vector<128xf32>
    %150 = vector.shape_cast %149 : vector<128xf32> to vector<1x128xf32>
    %151 = arith.addf %143, %150 : vector<1x128xf32>
    %cst_88 = arith.constant 0.001953125 : f32
    %152 = vector.broadcast %cst_88 : f32 to vector<1x128xf32>
    %153 = arith.mulf %147, %152 : vector<1x128xf32>
    %cst_89 = arith.constant 0.001953125 : f32
    %154 = vector.broadcast %cst_89 : f32 to vector<1x128xf32>
    %155 = arith.mulf %151, %154 : vector<1x128xf32>
    %156 = arith.mulf %153, %153 : vector<1x128xf32>
    %157 = arith.subf %155, %156 : vector<1x128xf32>
    %cst_90 = arith.constant 0.000000e+00 : f32
    %158 = vector.broadcast %cst_90 : f32 to vector<1x128xf32>
    %159 = arith.maximumf %157, %158 : vector<1x128xf32>
    %c0_91 = arith.constant 0 : index
    %c0_92 = arith.constant 0 : index
    %160 = vector.load %arg2[%c0_91, %c0_92] : memref<1x128xf32, #tpu.memory_space<vmem>>, vector<1x128xf32>
    %cst_93 = arith.constant 9.99999974E-6 : f32
    %161 = vector.broadcast %cst_93 : f32 to vector<1x128xf32>
    %162 = arith.addf %159, %161 : vector<1x128xf32>
    %163 = math.rsqrt %162 : vector<1x128xf32>
    %164 = arith.mulf %160, %163 : vector<1x128xf32>
    %c0_94 = arith.constant 0 : index
    %c0_95 = arith.constant 0 : index
    %165 = vector.load %arg3[%c0_94, %c0_95] : memref<1x128xf32, #tpu.memory_space<vmem>>, vector<1x128xf32>
    %166 = arith.mulf %153, %164 : vector<1x128xf32>
    %167 = arith.subf %165, %166 : vector<1x128xf32>
    %c0_96 = arith.constant 0 : index
    %c0_97 = arith.constant 0 : index
    %168 = tpu.strided_load %arg5[%c0_96, %c0_97] {strides = array<i32: 2, 1>} : memref<512x128xf32, #tpu.memory_space<vmem>>, vector<8x128xf32>
    %169 = vector.broadcast %164 : vector<1x128xf32> to vector<8x128xf32>
    %170 = arith.mulf %168, %169 : vector<8x128xf32>
    %171 = vector.broadcast %167 : vector<1x128xf32> to vector<8x128xf32>
    %172 = arith.addf %170, %171 : vector<8x128xf32>
    %cst_98 = arith.constant 0.000000e+00 : f32
    %173 = vector.broadcast %cst_98 : f32 to vector<8x128xf32>
    %174 = arith.maximumf %172, %173 : vector<8x128xf32>
    %c1_99 = arith.constant 1 : index
    %c0_100 = arith.constant 0 : index
    %175 = tpu.strided_load %arg5[%c1_99, %c0_100] {strides = array<i32: 2, 1>} : memref<512x128xf32, #tpu.memory_space<vmem>>, vector<8x128xf32>
    %176 = vector.broadcast %164 : vector<1x128xf32> to vector<8x128xf32>
    %177 = arith.mulf %175, %176 : vector<8x128xf32>
    %178 = vector.broadcast %167 : vector<1x128xf32> to vector<8x128xf32>
    %179 = arith.addf %177, %178 : vector<8x128xf32>
    %cst_101 = arith.constant 0.000000e+00 : f32
    %180 = vector.broadcast %cst_101 : f32 to vector<8x128xf32>
    %181 = arith.maximumf %179, %180 : vector<8x128xf32>
    %c16 = arith.constant 16 : index
    %c0_102 = arith.constant 0 : index
    %182 = tpu.strided_load %arg5[%c16, %c0_102] {strides = array<i32: 2, 1>} : memref<512x128xf32, #tpu.memory_space<vmem>>, vector<8x128xf32>
    %183 = vector.broadcast %164 : vector<1x128xf32> to vector<8x128xf32>
    %184 = arith.mulf %182, %183 : vector<8x128xf32>
    %185 = vector.broadcast %167 : vector<1x128xf32> to vector<8x128xf32>
    %186 = arith.addf %184, %185 : vector<8x128xf32>
    %cst_103 = arith.constant 0.000000e+00 : f32
    %187 = vector.broadcast %cst_103 : f32 to vector<8x128xf32>
    %188 = arith.maximumf %186, %187 : vector<8x128xf32>
    %c17 = arith.constant 17 : index
    %c0_104 = arith.constant 0 : index
    %189 = tpu.strided_load %arg5[%c17, %c0_104] {strides = array<i32: 2, 1>} : memref<512x128xf32, #tpu.memory_space<vmem>>, vector<8x128xf32>
    %190 = vector.broadcast %164 : vector<1x128xf32> to vector<8x128xf32>
    %191 = arith.mulf %189, %190 : vector<8x128xf32>
    %192 = vector.broadcast %167 : vector<1x128xf32> to vector<8x128xf32>
    %193 = arith.addf %191, %192 : vector<8x128xf32>
    %cst_105 = arith.constant 0.000000e+00 : f32
    %194 = vector.broadcast %cst_105 : f32 to vector<8x128xf32>
    %195 = arith.maximumf %193, %194 : vector<8x128xf32>
    %196 = arith.maximumf %174, %181 : vector<8x128xf32>
    %197 = arith.maximumf %188, %195 : vector<8x128xf32>
    %198 = arith.maximumf %196, %197 : vector<8x128xf32>
    %c0_106 = arith.constant 0 : index
    %c0_107 = arith.constant 0 : index
    %199 = vector.load %arg4[%c0_106, %c0_107] : memref<128x128xf32, #tpu.memory_space<vmem>>, vector<8x128xf32>
    tpu.vector_store %arg4[%c0_106, %c0_107], %198 {strides = array<i32>} : memref<128x128xf32, #tpu.memory_space<vmem>>, vector<8x128xf32>,
    %c32_108 = arith.constant 32 : index
    %c0_109 = arith.constant 0 : index
    %200 = tpu.strided_load %arg5[%c32_108, %c0_109] {strides = array<i32: 2, 1>} : memref<512x128xf32, #tpu.memory_space<vmem>>, vector<8x128xf32>
    %201 = vector.broadcast %164 : vector<1x128xf32> to vector<8x128xf32>
    %202 = arith.mulf %200, %201 : vector<8x128xf32>
    %203 = vector.broadcast %167 : vector<1x128xf32> to vector<8x128xf32>
    %204 = arith.addf %202, %203 : vector<8x128xf32>
    %cst_110 = arith.constant 0.000000e+00 : f32
    %205 = vector.broadcast %cst_110 : f32 to vector<8x128xf32>
    %206 = arith.maximumf %204, %205 : vector<8x128xf32>
    %c33 = arith.constant 33 : index
    %c0_111 = arith.constant 0 : index
    %207 = tpu.strided_load %arg5[%c33, %c0_111] {strides = array<i32: 2, 1>} : memref<512x128xf32, #tpu.memory_space<vmem>>, vector<8x128xf32>
    %208 = vector.broadcast %164 : vector<1x128xf32> to vector<8x128xf32>
    %209 = arith.mulf %207, %208 : vector<8x128xf32>
    %210 = vector.broadcast %167 : vector<1x128xf32> to vector<8x128xf32>
    %211 = arith.addf %209, %210 : vector<8x128xf32>
    %cst_112 = arith.constant 0.000000e+00 : f32
    %212 = vector.broadcast %cst_112 : f32 to vector<8x128xf32>
    %213 = arith.maximumf %211, %212 : vector<8x128xf32>
    %c48 = arith.constant 48 : index
    %c0_113 = arith.constant 0 : index
    %214 = tpu.strided_load %arg5[%c48, %c0_113] {strides = array<i32: 2, 1>} : memref<512x128xf32, #tpu.memory_space<vmem>>, vector<8x128xf32>
    %215 = vector.broadcast %164 : vector<1x128xf32> to vector<8x128xf32>
    %216 = arith.mulf %214, %215 : vector<8x128xf32>
    %217 = vector.broadcast %167 : vector<1x128xf32> to vector<8x128xf32>
    %218 = arith.addf %216, %217 : vector<8x128xf32>
    %cst_114 = arith.constant 0.000000e+00 : f32
    %219 = vector.broadcast %cst_114 : f32 to vector<8x128xf32>
    %220 = arith.maximumf %218, %219 : vector<8x128xf32>
    %c49 = arith.constant 49 : index
    %c0_115 = arith.constant 0 : index
    %221 = tpu.strided_load %arg5[%c49, %c0_115] {strides = array<i32: 2, 1>} : memref<512x128xf32, #tpu.memory_space<vmem>>, vector<8x128xf32>
    %222 = vector.broadcast %164 : vector<1x128xf32> to vector<8x128xf32>
    %223 = arith.mulf %221, %222 : vector<8x128xf32>
    %224 = vector.broadcast %167 : vector<1x128xf32> to vector<8x128xf32>
    %225 = arith.addf %223, %224 : vector<8x128xf32>
    %cst_116 = arith.constant 0.000000e+00 : f32
    %226 = vector.broadcast %cst_116 : f32 to vector<8x128xf32>
    %227 = arith.maximumf %225, %226 : vector<8x128xf32>
    %228 = arith.maximumf %206, %213 : vector<8x128xf32>
    %229 = arith.maximumf %220, %227 : vector<8x128xf32>
    %230 = arith.maximumf %228, %229 : vector<8x128xf32>
    %c8 = arith.constant 8 : index
    %c0_117 = arith.constant 0 : index
    %231 = vector.load %arg4[%c8, %c0_117] : memref<128x128xf32, #tpu.memory_space<vmem>>, vector<8x128xf32>
    tpu.vector_store %arg4[%c8, %c0_117], %230 {strides = array<i32>} : memref<128x128xf32, #tpu.memory_space<vmem>>, vector<8x128xf32>,
    %c64_118 = arith.constant 64 : index
    %c0_119 = arith.constant 0 : index
    %232 = tpu.strided_load %arg5[%c64_118, %c0_119] {strides = array<i32: 2, 1>} : memref<512x128xf32, #tpu.memory_space<vmem>>, vector<8x128xf32>
    %233 = vector.broadcast %164 : vector<1x128xf32> to vector<8x128xf32>
    %234 = arith.mulf %232, %233 : vector<8x128xf32>
    %235 = vector.broadcast %167 : vector<1x128xf32> to vector<8x128xf32>
    %236 = arith.addf %234, %235 : vector<8x128xf32>
    %cst_120 = arith.constant 0.000000e+00 : f32
    %237 = vector.broadcast %cst_120 : f32 to vector<8x128xf32>
    %238 = arith.maximumf %236, %237 : vector<8x128xf32>
    %c65 = arith.constant 65 : index
    %c0_121 = arith.constant 0 : index
    %239 = tpu.strided_load %arg5[%c65, %c0_121] {strides = array<i32: 2, 1>} : memref<512x128xf32, #tpu.memory_space<vmem>>, vector<8x128xf32>
    %240 = vector.broadcast %164 : vector<1x128xf32> to vector<8x128xf32>
    %241 = arith.mulf %239, %240 : vector<8x128xf32>
    %242 = vector.broadcast %167 : vector<1x128xf32> to vector<8x128xf32>
    %243 = arith.addf %241, %242 : vector<8x128xf32>
    %cst_122 = arith.constant 0.000000e+00 : f32
    %244 = vector.broadcast %cst_122 : f32 to vector<8x128xf32>
    %245 = arith.maximumf %243, %244 : vector<8x128xf32>
    %c80 = arith.constant 80 : index
    %c0_123 = arith.constant 0 : index
    %246 = tpu.strided_load %arg5[%c80, %c0_123] {strides = array<i32: 2, 1>} : memref<512x128xf32, #tpu.memory_space<vmem>>, vector<8x128xf32>
    %247 = vector.broadcast %164 : vector<1x128xf32> to vector<8x128xf32>
    %248 = arith.mulf %246, %247 : vector<8x128xf32>
    %249 = vector.broadcast %167 : vector<1x128xf32> to vector<8x128xf32>
    %250 = arith.addf %248, %249 : vector<8x128xf32>
    %cst_124 = arith.constant 0.000000e+00 : f32
    %251 = vector.broadcast %cst_124 : f32 to vector<8x128xf32>
    %252 = arith.maximumf %250, %251 : vector<8x128xf32>
    %c81 = arith.constant 81 : index
    %c0_125 = arith.constant 0 : index
    %253 = tpu.strided_load %arg5[%c81, %c0_125] {strides = array<i32: 2, 1>} : memref<512x128xf32, #tpu.memory_space<vmem>>, vector<8x128xf32>
    %254 = vector.broadcast %164 : vector<1x128xf32> to vector<8x128xf32>
    %255 = arith.mulf %253, %254 : vector<8x128xf32>
    %256 = vector.broadcast %167 : vector<1x128xf32> to vector<8x128xf32>
    %257 = arith.addf %255, %256 : vector<8x128xf32>
    %cst_126 = arith.constant 0.000000e+00 : f32
    %258 = vector.broadcast %cst_126 : f32 to vector<8x128xf32>
    %259 = arith.maximumf %257, %258 : vector<8x128xf32>
    %260 = arith.maximumf %238, %245 : vector<8x128xf32>
    %261 = arith.maximumf %252, %259 : vector<8x128xf32>
    %262 = arith.maximumf %260, %261 : vector<8x128xf32>
    %c16_127 = arith.constant 16 : index
    %c0_128 = arith.constant 0 : index
    %263 = vector.load %arg4[%c16_127, %c0_128] : memref<128x128xf32, #tpu.memory_space<vmem>>, vector<8x128xf32>
    tpu.vector_store %arg4[%c16_127, %c0_128], %262 {strides = array<i32>} : memref<128x128xf32, #tpu.memory_space<vmem>>, vector<8x128xf32>,
    %c96_129 = arith.constant 96 : index
    %c0_130 = arith.constant 0 : index
    %264 = tpu.strided_load %arg5[%c96_129, %c0_130] {strides = array<i32: 2, 1>} : memref<512x128xf32, #tpu.memory_space<vmem>>, vector<8x128xf32>
    %265 = vector.broadcast %164 : vector<1x128xf32> to vector<8x128xf32>
    %266 = arith.mulf %264, %265 : vector<8x128xf32>
    %267 = vector.broadcast %167 : vector<1x128xf32> to vector<8x128xf32>
    %268 = arith.addf %266, %267 : vector<8x128xf32>
    %cst_131 = arith.constant 0.000000e+00 : f32
    %269 = vector.broadcast %cst_131 : f32 to vector<8x128xf32>
    %270 = arith.maximumf %268, %269 : vector<8x128xf32>
    %c97 = arith.constant 97 : index
    %c0_132 = arith.constant 0 : index
    %271 = tpu.strided_load %arg5[%c97, %c0_132] {strides = array<i32: 2, 1>} : memref<512x128xf32, #tpu.memory_space<vmem>>, vector<8x128xf32>
    %272 = vector.broadcast %164 : vector<1x128xf32> to vector<8x128xf32>
    %273 = arith.mulf %271, %272 : vector<8x128xf32>
    %274 = vector.broadcast %167 : vector<1x128xf32> to vector<8x128xf32>
    %275 = arith.addf %273, %274 : vector<8x128xf32>
    %cst_133 = arith.constant 0.000000e+00 : f32
    %276 = vector.broadcast %cst_133 : f32 to vector<8x128xf32>
    %277 = arith.maximumf %275, %276 : vector<8x128xf32>
    %c112 = arith.constant 112 : index
    %c0_134 = arith.constant 0 : index
    %278 = tpu.strided_load %arg5[%c112, %c0_134] {strides = array<i32: 2, 1>} : memref<512x128xf32, #tpu.memory_space<vmem>>, vector<8x128xf32>
    %279 = vector.broadcast %164 : vector<1x128xf32> to vector<8x128xf32>
    %280 = arith.mulf %278, %279 : vector<8x128xf32>
    %281 = vector.broadcast %167 : vector<1x128xf32> to vector<8x128xf32>
    %282 = arith.addf %280, %281 : vector<8x128xf32>
    %cst_135 = arith.constant 0.000000e+00 : f32
    %283 = vector.broadcast %cst_135 : f32 to vector<8x128xf32>
    %284 = arith.maximumf %282, %283 : vector<8x128xf32>
    %c113 = arith.constant 113 : index
    %c0_136 = arith.constant 0 : index
    %285 = tpu.strided_load %arg5[%c113, %c0_136] {strides = array<i32: 2, 1>} : memref<512x128xf32, #tpu.memory_space<vmem>>, vector<8x128xf32>
    %286 = vector.broadcast %164 : vector<1x128xf32> to vector<8x128xf32>
    %287 = arith.mulf %285, %286 : vector<8x128xf32>
    %288 = vector.broadcast %167 : vector<1x128xf32> to vector<8x128xf32>
    %289 = arith.addf %287, %288 : vector<8x128xf32>
    %cst_137 = arith.constant 0.000000e+00 : f32
    %290 = vector.broadcast %cst_137 : f32 to vector<8x128xf32>
    %291 = arith.maximumf %289, %290 : vector<8x128xf32>
    %292 = arith.maximumf %270, %277 : vector<8x128xf32>
    %293 = arith.maximumf %284, %291 : vector<8x128xf32>
    %294 = arith.maximumf %292, %293 : vector<8x128xf32>
    %c24 = arith.constant 24 : index
    %c0_138 = arith.constant 0 : index
    %295 = vector.load %arg4[%c24, %c0_138] : memref<128x128xf32, #tpu.memory_space<vmem>>, vector<8x128xf32>
    tpu.vector_store %arg4[%c24, %c0_138], %294 {strides = array<i32>} : memref<128x128xf32, #tpu.memory_space<vmem>>, vector<8x128xf32>,
    %c128_139 = arith.constant 128 : index
    %c0_140 = arith.constant 0 : index
    %296 = tpu.strided_load %arg5[%c128_139, %c0_140] {strides = array<i32: 2, 1>} : memref<512x128xf32, #tpu.memory_space<vmem>>, vector<8x128xf32>
    %297 = vector.broadcast %164 : vector<1x128xf32> to vector<8x128xf32>
    %298 = arith.mulf %296, %297 : vector<8x128xf32>
    %299 = vector.broadcast %167 : vector<1x128xf32> to vector<8x128xf32>
    %300 = arith.addf %298, %299 : vector<8x128xf32>
    %cst_141 = arith.constant 0.000000e+00 : f32
    %301 = vector.broadcast %cst_141 : f32 to vector<8x128xf32>
    %302 = arith.maximumf %300, %301 : vector<8x128xf32>
    %c129 = arith.constant 129 : index
    %c0_142 = arith.constant 0 : index
    %303 = tpu.strided_load %arg5[%c129, %c0_142] {strides = array<i32: 2, 1>} : memref<512x128xf32, #tpu.memory_space<vmem>>, vector<8x128xf32>
    %304 = vector.broadcast %164 : vector<1x128xf32> to vector<8x128xf32>
    %305 = arith.mulf %303, %304 : vector<8x128xf32>
    %306 = vector.broadcast %167 : vector<1x128xf32> to vector<8x128xf32>
    %307 = arith.addf %305, %306 : vector<8x128xf32>
    %cst_143 = arith.constant 0.000000e+00 : f32
    %308 = vector.broadcast %cst_143 : f32 to vector<8x128xf32>
    %309 = arith.maximumf %307, %308 : vector<8x128xf32>
    %c144 = arith.constant 144 : index
    %c0_144 = arith.constant 0 : index
    %310 = tpu.strided_load %arg5[%c144, %c0_144] {strides = array<i32: 2, 1>} : memref<512x128xf32, #tpu.memory_space<vmem>>, vector<8x128xf32>
    %311 = vector.broadcast %164 : vector<1x128xf32> to vector<8x128xf32>
    %312 = arith.mulf %310, %311 : vector<8x128xf32>
    %313 = vector.broadcast %167 : vector<1x128xf32> to vector<8x128xf32>
    %314 = arith.addf %312, %313 : vector<8x128xf32>
    %cst_145 = arith.constant 0.000000e+00 : f32
    %315 = vector.broadcast %cst_145 : f32 to vector<8x128xf32>
    %316 = arith.maximumf %314, %315 : vector<8x128xf32>
    %c145 = arith.constant 145 : index
    %c0_146 = arith.constant 0 : index
    %317 = tpu.strided_load %arg5[%c145, %c0_146] {strides = array<i32: 2, 1>} : memref<512x128xf32, #tpu.memory_space<vmem>>, vector<8x128xf32>
    %318 = vector.broadcast %164 : vector<1x128xf32> to vector<8x128xf32>
    %319 = arith.mulf %317, %318 : vector<8x128xf32>
    %320 = vector.broadcast %167 : vector<1x128xf32> to vector<8x128xf32>
    %321 = arith.addf %319, %320 : vector<8x128xf32>
    %cst_147 = arith.constant 0.000000e+00 : f32
    %322 = vector.broadcast %cst_147 : f32 to vector<8x128xf32>
    %323 = arith.maximumf %321, %322 : vector<8x128xf32>
    %324 = arith.maximumf %302, %309 : vector<8x128xf32>
    %325 = arith.maximumf %316, %323 : vector<8x128xf32>
    %326 = arith.maximumf %324, %325 : vector<8x128xf32>
    %c32_148 = arith.constant 32 : index
    %c0_149 = arith.constant 0 : index
    %327 = vector.load %arg4[%c32_148, %c0_149] : memref<128x128xf32, #tpu.memory_space<vmem>>, vector<8x128xf32>
    tpu.vector_store %arg4[%c32_148, %c0_149], %326 {strides = array<i32>} : memref<128x128xf32, #tpu.memory_space<vmem>>, vector<8x128xf32>,
    %c160_150 = arith.constant 160 : index
    %c0_151 = arith.constant 0 : index
    %328 = tpu.strided_load %arg5[%c160_150, %c0_151] {strides = array<i32: 2, 1>} : memref<512x128xf32, #tpu.memory_space<vmem>>, vector<8x128xf32>
    %329 = vector.broadcast %164 : vector<1x128xf32> to vector<8x128xf32>
    %330 = arith.mulf %328, %329 : vector<8x128xf32>
    %331 = vector.broadcast %167 : vector<1x128xf32> to vector<8x128xf32>
    %332 = arith.addf %330, %331 : vector<8x128xf32>
    %cst_152 = arith.constant 0.000000e+00 : f32
    %333 = vector.broadcast %cst_152 : f32 to vector<8x128xf32>
    %334 = arith.maximumf %332, %333 : vector<8x128xf32>
    %c161 = arith.constant 161 : index
    %c0_153 = arith.constant 0 : index
    %335 = tpu.strided_load %arg5[%c161, %c0_153] {strides = array<i32: 2, 1>} : memref<512x128xf32, #tpu.memory_space<vmem>>, vector<8x128xf32>
    %336 = vector.broadcast %164 : vector<1x128xf32> to vector<8x128xf32>
    %337 = arith.mulf %335, %336 : vector<8x128xf32>
    %338 = vector.broadcast %167 : vector<1x128xf32> to vector<8x128xf32>
    %339 = arith.addf %337, %338 : vector<8x128xf32>
    %cst_154 = arith.constant 0.000000e+00 : f32
    %340 = vector.broadcast %cst_154 : f32 to vector<8x128xf32>
    %341 = arith.maximumf %339, %340 : vector<8x128xf32>
    %c176 = arith.constant 176 : index
    %c0_155 = arith.constant 0 : index
    %342 = tpu.strided_load %arg5[%c176, %c0_155] {strides = array<i32: 2, 1>} : memref<512x128xf32, #tpu.memory_space<vmem>>, vector<8x128xf32>
    %343 = vector.broadcast %164 : vector<1x128xf32> to vector<8x128xf32>
    %344 = arith.mulf %342, %343 : vector<8x128xf32>
    %345 = vector.broadcast %167 : vector<1x128xf32> to vector<8x128xf32>
    %346 = arith.addf %344, %345 : vector<8x128xf32>
    %cst_156 = arith.constant 0.000000e+00 : f32
    %347 = vector.broadcast %cst_156 : f32 to vector<8x128xf32>
    %348 = arith.maximumf %346, %347 : vector<8x128xf32>
    %c177 = arith.constant 177 : index
    %c0_157 = arith.constant 0 : index
    %349 = tpu.strided_load %arg5[%c177, %c0_157] {strides = array<i32: 2, 1>} : memref<512x128xf32, #tpu.memory_space<vmem>>, vector<8x128xf32>
    %350 = vector.broadcast %164 : vector<1x128xf32> to vector<8x128xf32>
    %351 = arith.mulf %349, %350 : vector<8x128xf32>
    %352 = vector.broadcast %167 : vector<1x128xf32> to vector<8x128xf32>
    %353 = arith.addf %351, %352 : vector<8x128xf32>
    %cst_158 = arith.constant 0.000000e+00 : f32
    %354 = vector.broadcast %cst_158 : f32 to vector<8x128xf32>
    %355 = arith.maximumf %353, %354 : vector<8x128xf32>
    %356 = arith.maximumf %334, %341 : vector<8x128xf32>
    %357 = arith.maximumf %348, %355 : vector<8x128xf32>
    %358 = arith.maximumf %356, %357 : vector<8x128xf32>
    %c40 = arith.constant 40 : index
    %c0_159 = arith.constant 0 : index
    %359 = vector.load %arg4[%c40, %c0_159] : memref<128x128xf32, #tpu.memory_space<vmem>>, vector<8x128xf32>
    tpu.vector_store %arg4[%c40, %c0_159], %358 {strides = array<i32>} : memref<128x128xf32, #tpu.memory_space<vmem>>, vector<8x128xf32>,
    %c192_160 = arith.constant 192 : index
    %c0_161 = arith.constant 0 : index
    %360 = tpu.strided_load %arg5[%c192_160, %c0_161] {strides = array<i32: 2, 1>} : memref<512x128xf32, #tpu.memory_space<vmem>>, vector<8x128xf32>
    %361 = vector.broadcast %164 : vector<1x128xf32> to vector<8x128xf32>
    %362 = arith.mulf %360, %361 : vector<8x128xf32>
    %363 = vector.broadcast %167 : vector<1x128xf32> to vector<8x128xf32>
    %364 = arith.addf %362, %363 : vector<8x128xf32>
    %cst_162 = arith.constant 0.000000e+00 : f32
    %365 = vector.broadcast %cst_162 : f32 to vector<8x128xf32>
    %366 = arith.maximumf %364, %365 : vector<8x128xf32>
    %c193 = arith.constant 193 : index
    %c0_163 = arith.constant 0 : index
    %367 = tpu.strided_load %arg5[%c193, %c0_163] {strides = array<i32: 2, 1>} : memref<512x128xf32, #tpu.memory_space<vmem>>, vector<8x128xf32>
    %368 = vector.broadcast %164 : vector<1x128xf32> to vector<8x128xf32>
    %369 = arith.mulf %367, %368 : vector<8x128xf32>
    %370 = vector.broadcast %167 : vector<1x128xf32> to vector<8x128xf32>
    %371 = arith.addf %369, %370 : vector<8x128xf32>
    %cst_164 = arith.constant 0.000000e+00 : f32
    %372 = vector.broadcast %cst_164 : f32 to vector<8x128xf32>
    %373 = arith.maximumf %371, %372 : vector<8x128xf32>
    %c208 = arith.constant 208 : index
    %c0_165 = arith.constant 0 : index
    %374 = tpu.strided_load %arg5[%c208, %c0_165] {strides = array<i32: 2, 1>} : memref<512x128xf32, #tpu.memory_space<vmem>>, vector<8x128xf32>
    %375 = vector.broadcast %164 : vector<1x128xf32> to vector<8x128xf32>
    %376 = arith.mulf %374, %375 : vector<8x128xf32>
    %377 = vector.broadcast %167 : vector<1x128xf32> to vector<8x128xf32>
    %378 = arith.addf %376, %377 : vector<8x128xf32>
    %cst_166 = arith.constant 0.000000e+00 : f32
    %379 = vector.broadcast %cst_166 : f32 to vector<8x128xf32>
    %380 = arith.maximumf %378, %379 : vector<8x128xf32>
    %c209 = arith.constant 209 : index
    %c0_167 = arith.constant 0 : index
    %381 = tpu.strided_load %arg5[%c209, %c0_167] {strides = array<i32: 2, 1>} : memref<512x128xf32, #tpu.memory_space<vmem>>, vector<8x128xf32>
    %382 = vector.broadcast %164 : vector<1x128xf32> to vector<8x128xf32>
    %383 = arith.mulf %381, %382 : vector<8x128xf32>
    %384 = vector.broadcast %167 : vector<1x128xf32> to vector<8x128xf32>
    %385 = arith.addf %383, %384 : vector<8x128xf32>
    %cst_168 = arith.constant 0.000000e+00 : f32
    %386 = vector.broadcast %cst_168 : f32 to vector<8x128xf32>
    %387 = arith.maximumf %385, %386 : vector<8x128xf32>
    %388 = arith.maximumf %366, %373 : vector<8x128xf32>
    %389 = arith.maximumf %380, %387 : vector<8x128xf32>
    %390 = arith.maximumf %388, %389 : vector<8x128xf32>
    %c48_169 = arith.constant 48 : index
    %c0_170 = arith.constant 0 : index
    %391 = vector.load %arg4[%c48_169, %c0_170] : memref<128x128xf32, #tpu.memory_space<vmem>>, vector<8x128xf32>
    tpu.vector_store %arg4[%c48_169, %c0_170], %390 {strides = array<i32>} : memref<128x128xf32, #tpu.memory_space<vmem>>, vector<8x128xf32>,
    %c224_171 = arith.constant 224 : index
    %c0_172 = arith.constant 0 : index
    %392 = tpu.strided_load %arg5[%c224_171, %c0_172] {strides = array<i32: 2, 1>} : memref<512x128xf32, #tpu.memory_space<vmem>>, vector<8x128xf32>
    %393 = vector.broadcast %164 : vector<1x128xf32> to vector<8x128xf32>
    %394 = arith.mulf %392, %393 : vector<8x128xf32>
    %395 = vector.broadcast %167 : vector<1x128xf32> to vector<8x128xf32>
    %396 = arith.addf %394, %395 : vector<8x128xf32>
    %cst_173 = arith.constant 0.000000e+00 : f32
    %397 = vector.broadcast %cst_173 : f32 to vector<8x128xf32>
    %398 = arith.maximumf %396, %397 : vector<8x128xf32>
    %c225 = arith.constant 225 : index
    %c0_174 = arith.constant 0 : index
    %399 = tpu.strided_load %arg5[%c225, %c0_174] {strides = array<i32: 2, 1>} : memref<512x128xf32, #tpu.memory_space<vmem>>, vector<8x128xf32>
    %400 = vector.broadcast %164 : vector<1x128xf32> to vector<8x128xf32>
    %401 = arith.mulf %399, %400 : vector<8x128xf32>
    %402 = vector.broadcast %167 : vector<1x128xf32> to vector<8x128xf32>
    %403 = arith.addf %401, %402 : vector<8x128xf32>
    %cst_175 = arith.constant 0.000000e+00 : f32
    %404 = vector.broadcast %cst_175 : f32 to vector<8x128xf32>
    %405 = arith.maximumf %403, %404 : vector<8x128xf32>
    %c240 = arith.constant 240 : index
    %c0_176 = arith.constant 0 : index
    %406 = tpu.strided_load %arg5[%c240, %c0_176] {strides = array<i32: 2, 1>} : memref<512x128xf32, #tpu.memory_space<vmem>>, vector<8x128xf32>
    %407 = vector.broadcast %164 : vector<1x128xf32> to vector<8x128xf32>
    %408 = arith.mulf %406, %407 : vector<8x128xf32>
    %409 = vector.broadcast %167 : vector<1x128xf32> to vector<8x128xf32>
    %410 = arith.addf %408, %409 : vector<8x128xf32>
    %cst_177 = arith.constant 0.000000e+00 : f32
    %411 = vector.broadcast %cst_177 : f32 to vector<8x128xf32>
    %412 = arith.maximumf %410, %411 : vector<8x128xf32>
    %c241 = arith.constant 241 : index
    %c0_178 = arith.constant 0 : index
    %413 = tpu.strided_load %arg5[%c241, %c0_178] {strides = array<i32: 2, 1>} : memref<512x128xf32, #tpu.memory_space<vmem>>, vector<8x128xf32>
    %414 = vector.broadcast %164 : vector<1x128xf32> to vector<8x128xf32>
    %415 = arith.mulf %413, %414 : vector<8x128xf32>
    %416 = vector.broadcast %167 : vector<1x128xf32> to vector<8x128xf32>
    %417 = arith.addf %415, %416 : vector<8x128xf32>
    %cst_179 = arith.constant 0.000000e+00 : f32
    %418 = vector.broadcast %cst_179 : f32 to vector<8x128xf32>
    %419 = arith.maximumf %417, %418 : vector<8x128xf32>
    %420 = arith.maximumf %398, %405 : vector<8x128xf32>
    %421 = arith.maximumf %412, %419 : vector<8x128xf32>
    %422 = arith.maximumf %420, %421 : vector<8x128xf32>
    %c56 = arith.constant 56 : index
    %c0_180 = arith.constant 0 : index
    %423 = vector.load %arg4[%c56, %c0_180] : memref<128x128xf32, #tpu.memory_space<vmem>>, vector<8x128xf32>
    tpu.vector_store %arg4[%c56, %c0_180], %422 {strides = array<i32>} : memref<128x128xf32, #tpu.memory_space<vmem>>, vector<8x128xf32>,
    %c256_181 = arith.constant 256 : index
    %c0_182 = arith.constant 0 : index
    %424 = tpu.strided_load %arg5[%c256_181, %c0_182] {strides = array<i32: 2, 1>} : memref<512x128xf32, #tpu.memory_space<vmem>>, vector<8x128xf32>
    %425 = vector.broadcast %164 : vector<1x128xf32> to vector<8x128xf32>
    %426 = arith.mulf %424, %425 : vector<8x128xf32>
    %427 = vector.broadcast %167 : vector<1x128xf32> to vector<8x128xf32>
    %428 = arith.addf %426, %427 : vector<8x128xf32>
    %cst_183 = arith.constant 0.000000e+00 : f32
    %429 = vector.broadcast %cst_183 : f32 to vector<8x128xf32>
    %430 = arith.maximumf %428, %429 : vector<8x128xf32>
    %c257 = arith.constant 257 : index
    %c0_184 = arith.constant 0 : index
    %431 = tpu.strided_load %arg5[%c257, %c0_184] {strides = array<i32: 2, 1>} : memref<512x128xf32, #tpu.memory_space<vmem>>, vector<8x128xf32>
    %432 = vector.broadcast %164 : vector<1x128xf32> to vector<8x128xf32>
    %433 = arith.mulf %431, %432 : vector<8x128xf32>
    %434 = vector.broadcast %167 : vector<1x128xf32> to vector<8x128xf32>
    %435 = arith.addf %433, %434 : vector<8x128xf32>
    %cst_185 = arith.constant 0.000000e+00 : f32
    %436 = vector.broadcast %cst_185 : f32 to vector<8x128xf32>
    %437 = arith.maximumf %435, %436 : vector<8x128xf32>
    %c272 = arith.constant 272 : index
    %c0_186 = arith.constant 0 : index
    %438 = tpu.strided_load %arg5[%c272, %c0_186] {strides = array<i32: 2, 1>} : memref<512x128xf32, #tpu.memory_space<vmem>>, vector<8x128xf32>
    %439 = vector.broadcast %164 : vector<1x128xf32> to vector<8x128xf32>
    %440 = arith.mulf %438, %439 : vector<8x128xf32>
    %441 = vector.broadcast %167 : vector<1x128xf32> to vector<8x128xf32>
    %442 = arith.addf %440, %441 : vector<8x128xf32>
    %cst_187 = arith.constant 0.000000e+00 : f32
    %443 = vector.broadcast %cst_187 : f32 to vector<8x128xf32>
    %444 = arith.maximumf %442, %443 : vector<8x128xf32>
    %c273 = arith.constant 273 : index
    %c0_188 = arith.constant 0 : index
    %445 = tpu.strided_load %arg5[%c273, %c0_188] {strides = array<i32: 2, 1>} : memref<512x128xf32, #tpu.memory_space<vmem>>, vector<8x128xf32>
    %446 = vector.broadcast %164 : vector<1x128xf32> to vector<8x128xf32>
    %447 = arith.mulf %445, %446 : vector<8x128xf32>
    %448 = vector.broadcast %167 : vector<1x128xf32> to vector<8x128xf32>
    %449 = arith.addf %447, %448 : vector<8x128xf32>
    %cst_189 = arith.constant 0.000000e+00 : f32
    %450 = vector.broadcast %cst_189 : f32 to vector<8x128xf32>
    %451 = arith.maximumf %449, %450 : vector<8x128xf32>
    %452 = arith.maximumf %430, %437 : vector<8x128xf32>
    %453 = arith.maximumf %444, %451 : vector<8x128xf32>
    %454 = arith.maximumf %452, %453 : vector<8x128xf32>
    %c64_190 = arith.constant 64 : index
    %c0_191 = arith.constant 0 : index
    %455 = vector.load %arg4[%c64_190, %c0_191] : memref<128x128xf32, #tpu.memory_space<vmem>>, vector<8x128xf32>
    tpu.vector_store %arg4[%c64_190, %c0_191], %454 {strides = array<i32>} : memref<128x128xf32, #tpu.memory_space<vmem>>, vector<8x128xf32>,
    %c288_192 = arith.constant 288 : index
    %c0_193 = arith.constant 0 : index
    %456 = tpu.strided_load %arg5[%c288_192, %c0_193] {strides = array<i32: 2, 1>} : memref<512x128xf32, #tpu.memory_space<vmem>>, vector<8x128xf32>
    %457 = vector.broadcast %164 : vector<1x128xf32> to vector<8x128xf32>
    %458 = arith.mulf %456, %457 : vector<8x128xf32>
    %459 = vector.broadcast %167 : vector<1x128xf32> to vector<8x128xf32>
    %460 = arith.addf %458, %459 : vector<8x128xf32>
    %cst_194 = arith.constant 0.000000e+00 : f32
    %461 = vector.broadcast %cst_194 : f32 to vector<8x128xf32>
    %462 = arith.maximumf %460, %461 : vector<8x128xf32>
    %c289 = arith.constant 289 : index
    %c0_195 = arith.constant 0 : index
    %463 = tpu.strided_load %arg5[%c289, %c0_195] {strides = array<i32: 2, 1>} : memref<512x128xf32, #tpu.memory_space<vmem>>, vector<8x128xf32>
    %464 = vector.broadcast %164 : vector<1x128xf32> to vector<8x128xf32>
    %465 = arith.mulf %463, %464 : vector<8x128xf32>
    %466 = vector.broadcast %167 : vector<1x128xf32> to vector<8x128xf32>
    %467 = arith.addf %465, %466 : vector<8x128xf32>
    %cst_196 = arith.constant 0.000000e+00 : f32
    %468 = vector.broadcast %cst_196 : f32 to vector<8x128xf32>
    %469 = arith.maximumf %467, %468 : vector<8x128xf32>
    %c304 = arith.constant 304 : index
    %c0_197 = arith.constant 0 : index
    %470 = tpu.strided_load %arg5[%c304, %c0_197] {strides = array<i32: 2, 1>} : memref<512x128xf32, #tpu.memory_space<vmem>>, vector<8x128xf32>
    %471 = vector.broadcast %164 : vector<1x128xf32> to vector<8x128xf32>
    %472 = arith.mulf %470, %471 : vector<8x128xf32>
    %473 = vector.broadcast %167 : vector<1x128xf32> to vector<8x128xf32>
    %474 = arith.addf %472, %473 : vector<8x128xf32>
    %cst_198 = arith.constant 0.000000e+00 : f32
    %475 = vector.broadcast %cst_198 : f32 to vector<8x128xf32>
    %476 = arith.maximumf %474, %475 : vector<8x128xf32>
    %c305 = arith.constant 305 : index
    %c0_199 = arith.constant 0 : index
    %477 = tpu.strided_load %arg5[%c305, %c0_199] {strides = array<i32: 2, 1>} : memref<512x128xf32, #tpu.memory_space<vmem>>, vector<8x128xf32>
    %478 = vector.broadcast %164 : vector<1x128xf32> to vector<8x128xf32>
    %479 = arith.mulf %477, %478 : vector<8x128xf32>
    %480 = vector.broadcast %167 : vector<1x128xf32> to vector<8x128xf32>
    %481 = arith.addf %479, %480 : vector<8x128xf32>
    %cst_200 = arith.constant 0.000000e+00 : f32
    %482 = vector.broadcast %cst_200 : f32 to vector<8x128xf32>
    %483 = arith.maximumf %481, %482 : vector<8x128xf32>
    %484 = arith.maximumf %462, %469 : vector<8x128xf32>
    %485 = arith.maximumf %476, %483 : vector<8x128xf32>
    %486 = arith.maximumf %484, %485 : vector<8x128xf32>
    %c72 = arith.constant 72 : index
    %c0_201 = arith.constant 0 : index
    %487 = vector.load %arg4[%c72, %c0_201] : memref<128x128xf32, #tpu.memory_space<vmem>>, vector<8x128xf32>
    tpu.vector_store %arg4[%c72, %c0_201], %486 {strides = array<i32>} : memref<128x128xf32, #tpu.memory_space<vmem>>, vector<8x128xf32>,
    %c320_202 = arith.constant 320 : index
    %c0_203 = arith.constant 0 : index
    %488 = tpu.strided_load %arg5[%c320_202, %c0_203] {strides = array<i32: 2, 1>} : memref<512x128xf32, #tpu.memory_space<vmem>>, vector<8x128xf32>
    %489 = vector.broadcast %164 : vector<1x128xf32> to vector<8x128xf32>
    %490 = arith.mulf %488, %489 : vector<8x128xf32>
    %491 = vector.broadcast %167 : vector<1x128xf32> to vector<8x128xf32>
    %492 = arith.addf %490, %491 : vector<8x128xf32>
    %cst_204 = arith.constant 0.000000e+00 : f32
    %493 = vector.broadcast %cst_204 : f32 to vector<8x128xf32>
    %494 = arith.maximumf %492, %493 : vector<8x128xf32>
    %c321 = arith.constant 321 : index
    %c0_205 = arith.constant 0 : index
    %495 = tpu.strided_load %arg5[%c321, %c0_205] {strides = array<i32: 2, 1>} : memref<512x128xf32, #tpu.memory_space<vmem>>, vector<8x128xf32>
    %496 = vector.broadcast %164 : vector<1x128xf32> to vector<8x128xf32>
    %497 = arith.mulf %495, %496 : vector<8x128xf32>
    %498 = vector.broadcast %167 : vector<1x128xf32> to vector<8x128xf32>
    %499 = arith.addf %497, %498 : vector<8x128xf32>
    %cst_206 = arith.constant 0.000000e+00 : f32
    %500 = vector.broadcast %cst_206 : f32 to vector<8x128xf32>
    %501 = arith.maximumf %499, %500 : vector<8x128xf32>
    %c336 = arith.constant 336 : index
    %c0_207 = arith.constant 0 : index
    %502 = tpu.strided_load %arg5[%c336, %c0_207] {strides = array<i32: 2, 1>} : memref<512x128xf32, #tpu.memory_space<vmem>>, vector<8x128xf32>
    %503 = vector.broadcast %164 : vector<1x128xf32> to vector<8x128xf32>
    %504 = arith.mulf %502, %503 : vector<8x128xf32>
    %505 = vector.broadcast %167 : vector<1x128xf32> to vector<8x128xf32>
    %506 = arith.addf %504, %505 : vector<8x128xf32>
    %cst_208 = arith.constant 0.000000e+00 : f32
    %507 = vector.broadcast %cst_208 : f32 to vector<8x128xf32>
    %508 = arith.maximumf %506, %507 : vector<8x128xf32>
    %c337 = arith.constant 337 : index
    %c0_209 = arith.constant 0 : index
    %509 = tpu.strided_load %arg5[%c337, %c0_209] {strides = array<i32: 2, 1>} : memref<512x128xf32, #tpu.memory_space<vmem>>, vector<8x128xf32>
    %510 = vector.broadcast %164 : vector<1x128xf32> to vector<8x128xf32>
    %511 = arith.mulf %509, %510 : vector<8x128xf32>
    %512 = vector.broadcast %167 : vector<1x128xf32> to vector<8x128xf32>
    %513 = arith.addf %511, %512 : vector<8x128xf32>
    %cst_210 = arith.constant 0.000000e+00 : f32
    %514 = vector.broadcast %cst_210 : f32 to vector<8x128xf32>
    %515 = arith.maximumf %513, %514 : vector<8x128xf32>
    %516 = arith.maximumf %494, %501 : vector<8x128xf32>
    %517 = arith.maximumf %508, %515 : vector<8x128xf32>
    %518 = arith.maximumf %516, %517 : vector<8x128xf32>
    %c80_211 = arith.constant 80 : index
    %c0_212 = arith.constant 0 : index
    %519 = vector.load %arg4[%c80_211, %c0_212] : memref<128x128xf32, #tpu.memory_space<vmem>>, vector<8x128xf32>
    tpu.vector_store %arg4[%c80_211, %c0_212], %518 {strides = array<i32>} : memref<128x128xf32, #tpu.memory_space<vmem>>, vector<8x128xf32>,
    %c352_213 = arith.constant 352 : index
    %c0_214 = arith.constant 0 : index
    %520 = tpu.strided_load %arg5[%c352_213, %c0_214] {strides = array<i32: 2, 1>} : memref<512x128xf32, #tpu.memory_space<vmem>>, vector<8x128xf32>
    %521 = vector.broadcast %164 : vector<1x128xf32> to vector<8x128xf32>
    %522 = arith.mulf %520, %521 : vector<8x128xf32>
    %523 = vector.broadcast %167 : vector<1x128xf32> to vector<8x128xf32>
    %524 = arith.addf %522, %523 : vector<8x128xf32>
    %cst_215 = arith.constant 0.000000e+00 : f32
    %525 = vector.broadcast %cst_215 : f32 to vector<8x128xf32>
    %526 = arith.maximumf %524, %525 : vector<8x128xf32>
    %c353 = arith.constant 353 : index
    %c0_216 = arith.constant 0 : index
    %527 = tpu.strided_load %arg5[%c353, %c0_216] {strides = array<i32: 2, 1>} : memref<512x128xf32, #tpu.memory_space<vmem>>, vector<8x128xf32>
    %528 = vector.broadcast %164 : vector<1x128xf32> to vector<8x128xf32>
    %529 = arith.mulf %527, %528 : vector<8x128xf32>
    %530 = vector.broadcast %167 : vector<1x128xf32> to vector<8x128xf32>
    %531 = arith.addf %529, %530 : vector<8x128xf32>
    %cst_217 = arith.constant 0.000000e+00 : f32
    %532 = vector.broadcast %cst_217 : f32 to vector<8x128xf32>
    %533 = arith.maximumf %531, %532 : vector<8x128xf32>
    %c368 = arith.constant 368 : index
    %c0_218 = arith.constant 0 : index
    %534 = tpu.strided_load %arg5[%c368, %c0_218] {strides = array<i32: 2, 1>} : memref<512x128xf32, #tpu.memory_space<vmem>>, vector<8x128xf32>
    %535 = vector.broadcast %164 : vector<1x128xf32> to vector<8x128xf32>
    %536 = arith.mulf %534, %535 : vector<8x128xf32>
    %537 = vector.broadcast %167 : vector<1x128xf32> to vector<8x128xf32>
    %538 = arith.addf %536, %537 : vector<8x128xf32>
    %cst_219 = arith.constant 0.000000e+00 : f32
    %539 = vector.broadcast %cst_219 : f32 to vector<8x128xf32>
    %540 = arith.maximumf %538, %539 : vector<8x128xf32>
    %c369 = arith.constant 369 : index
    %c0_220 = arith.constant 0 : index
    %541 = tpu.strided_load %arg5[%c369, %c0_220] {strides = array<i32: 2, 1>} : memref<512x128xf32, #tpu.memory_space<vmem>>, vector<8x128xf32>
    %542 = vector.broadcast %164 : vector<1x128xf32> to vector<8x128xf32>
    %543 = arith.mulf %541, %542 : vector<8x128xf32>
    %544 = vector.broadcast %167 : vector<1x128xf32> to vector<8x128xf32>
    %545 = arith.addf %543, %544 : vector<8x128xf32>
    %cst_221 = arith.constant 0.000000e+00 : f32
    %546 = vector.broadcast %cst_221 : f32 to vector<8x128xf32>
    %547 = arith.maximumf %545, %546 : vector<8x128xf32>
    %548 = arith.maximumf %526, %533 : vector<8x128xf32>
    %549 = arith.maximumf %540, %547 : vector<8x128xf32>
    %550 = arith.maximumf %548, %549 : vector<8x128xf32>
    %c88 = arith.constant 88 : index
    %c0_222 = arith.constant 0 : index
    %551 = vector.load %arg4[%c88, %c0_222] : memref<128x128xf32, #tpu.memory_space<vmem>>, vector<8x128xf32>
    tpu.vector_store %arg4[%c88, %c0_222], %550 {strides = array<i32>} : memref<128x128xf32, #tpu.memory_space<vmem>>, vector<8x128xf32>,
    %c384_223 = arith.constant 384 : index
    %c0_224 = arith.constant 0 : index
    %552 = tpu.strided_load %arg5[%c384_223, %c0_224] {strides = array<i32: 2, 1>} : memref<512x128xf32, #tpu.memory_space<vmem>>, vector<8x128xf32>
    %553 = vector.broadcast %164 : vector<1x128xf32> to vector<8x128xf32>
    %554 = arith.mulf %552, %553 : vector<8x128xf32>
    %555 = vector.broadcast %167 : vector<1x128xf32> to vector<8x128xf32>
    %556 = arith.addf %554, %555 : vector<8x128xf32>
    %cst_225 = arith.constant 0.000000e+00 : f32
    %557 = vector.broadcast %cst_225 : f32 to vector<8x128xf32>
    %558 = arith.maximumf %556, %557 : vector<8x128xf32>
    %c385 = arith.constant 385 : index
    %c0_226 = arith.constant 0 : index
    %559 = tpu.strided_load %arg5[%c385, %c0_226] {strides = array<i32: 2, 1>} : memref<512x128xf32, #tpu.memory_space<vmem>>, vector<8x128xf32>
    %560 = vector.broadcast %164 : vector<1x128xf32> to vector<8x128xf32>
    %561 = arith.mulf %559, %560 : vector<8x128xf32>
    %562 = vector.broadcast %167 : vector<1x128xf32> to vector<8x128xf32>
    %563 = arith.addf %561, %562 : vector<8x128xf32>
    %cst_227 = arith.constant 0.000000e+00 : f32
    %564 = vector.broadcast %cst_227 : f32 to vector<8x128xf32>
    %565 = arith.maximumf %563, %564 : vector<8x128xf32>
    %c400 = arith.constant 400 : index
    %c0_228 = arith.constant 0 : index
    %566 = tpu.strided_load %arg5[%c400, %c0_228] {strides = array<i32: 2, 1>} : memref<512x128xf32, #tpu.memory_space<vmem>>, vector<8x128xf32>
    %567 = vector.broadcast %164 : vector<1x128xf32> to vector<8x128xf32>
    %568 = arith.mulf %566, %567 : vector<8x128xf32>
    %569 = vector.broadcast %167 : vector<1x128xf32> to vector<8x128xf32>
    %570 = arith.addf %568, %569 : vector<8x128xf32>
    %cst_229 = arith.constant 0.000000e+00 : f32
    %571 = vector.broadcast %cst_229 : f32 to vector<8x128xf32>
    %572 = arith.maximumf %570, %571 : vector<8x128xf32>
    %c401 = arith.constant 401 : index
    %c0_230 = arith.constant 0 : index
    %573 = tpu.strided_load %arg5[%c401, %c0_230] {strides = array<i32: 2, 1>} : memref<512x128xf32, #tpu.memory_space<vmem>>, vector<8x128xf32>
    %574 = vector.broadcast %164 : vector<1x128xf32> to vector<8x128xf32>
    %575 = arith.mulf %573, %574 : vector<8x128xf32>
    %576 = vector.broadcast %167 : vector<1x128xf32> to vector<8x128xf32>
    %577 = arith.addf %575, %576 : vector<8x128xf32>
    %cst_231 = arith.constant 0.000000e+00 : f32
    %578 = vector.broadcast %cst_231 : f32 to vector<8x128xf32>
    %579 = arith.maximumf %577, %578 : vector<8x128xf32>
    %580 = arith.maximumf %558, %565 : vector<8x128xf32>
    %581 = arith.maximumf %572, %579 : vector<8x128xf32>
    %582 = arith.maximumf %580, %581 : vector<8x128xf32>
    %c96_232 = arith.constant 96 : index
    %c0_233 = arith.constant 0 : index
    %583 = vector.load %arg4[%c96_232, %c0_233] : memref<128x128xf32, #tpu.memory_space<vmem>>, vector<8x128xf32>
    tpu.vector_store %arg4[%c96_232, %c0_233], %582 {strides = array<i32>} : memref<128x128xf32, #tpu.memory_space<vmem>>, vector<8x128xf32>,
    %c416_234 = arith.constant 416 : index
    %c0_235 = arith.constant 0 : index
    %584 = tpu.strided_load %arg5[%c416_234, %c0_235] {strides = array<i32: 2, 1>} : memref<512x128xf32, #tpu.memory_space<vmem>>, vector<8x128xf32>
    %585 = vector.broadcast %164 : vector<1x128xf32> to vector<8x128xf32>
    %586 = arith.mulf %584, %585 : vector<8x128xf32>
    %587 = vector.broadcast %167 : vector<1x128xf32> to vector<8x128xf32>
    %588 = arith.addf %586, %587 : vector<8x128xf32>
    %cst_236 = arith.constant 0.000000e+00 : f32
    %589 = vector.broadcast %cst_236 : f32 to vector<8x128xf32>
    %590 = arith.maximumf %588, %589 : vector<8x128xf32>
    %c417 = arith.constant 417 : index
    %c0_237 = arith.constant 0 : index
    %591 = tpu.strided_load %arg5[%c417, %c0_237] {strides = array<i32: 2, 1>} : memref<512x128xf32, #tpu.memory_space<vmem>>, vector<8x128xf32>
    %592 = vector.broadcast %164 : vector<1x128xf32> to vector<8x128xf32>
    %593 = arith.mulf %591, %592 : vector<8x128xf32>
    %594 = vector.broadcast %167 : vector<1x128xf32> to vector<8x128xf32>
    %595 = arith.addf %593, %594 : vector<8x128xf32>
    %cst_238 = arith.constant 0.000000e+00 : f32
    %596 = vector.broadcast %cst_238 : f32 to vector<8x128xf32>
    %597 = arith.maximumf %595, %596 : vector<8x128xf32>
    %c432 = arith.constant 432 : index
    %c0_239 = arith.constant 0 : index
    %598 = tpu.strided_load %arg5[%c432, %c0_239] {strides = array<i32: 2, 1>} : memref<512x128xf32, #tpu.memory_space<vmem>>, vector<8x128xf32>
    %599 = vector.broadcast %164 : vector<1x128xf32> to vector<8x128xf32>
    %600 = arith.mulf %598, %599 : vector<8x128xf32>
    %601 = vector.broadcast %167 : vector<1x128xf32> to vector<8x128xf32>
    %602 = arith.addf %600, %601 : vector<8x128xf32>
    %cst_240 = arith.constant 0.000000e+00 : f32
    %603 = vector.broadcast %cst_240 : f32 to vector<8x128xf32>
    %604 = arith.maximumf %602, %603 : vector<8x128xf32>
    %c433 = arith.constant 433 : index
    %c0_241 = arith.constant 0 : index
    %605 = tpu.strided_load %arg5[%c433, %c0_241] {strides = array<i32: 2, 1>} : memref<512x128xf32, #tpu.memory_space<vmem>>, vector<8x128xf32>
    %606 = vector.broadcast %164 : vector<1x128xf32> to vector<8x128xf32>
    %607 = arith.mulf %605, %606 : vector<8x128xf32>
    %608 = vector.broadcast %167 : vector<1x128xf32> to vector<8x128xf32>
    %609 = arith.addf %607, %608 : vector<8x128xf32>
    %cst_242 = arith.constant 0.000000e+00 : f32
    %610 = vector.broadcast %cst_242 : f32 to vector<8x128xf32>
    %611 = arith.maximumf %609, %610 : vector<8x128xf32>
    %612 = arith.maximumf %590, %597 : vector<8x128xf32>
    %613 = arith.maximumf %604, %611 : vector<8x128xf32>
    %614 = arith.maximumf %612, %613 : vector<8x128xf32>
    %c104 = arith.constant 104 : index
    %c0_243 = arith.constant 0 : index
    %615 = vector.load %arg4[%c104, %c0_243] : memref<128x128xf32, #tpu.memory_space<vmem>>, vector<8x128xf32>
    tpu.vector_store %arg4[%c104, %c0_243], %614 {strides = array<i32>} : memref<128x128xf32, #tpu.memory_space<vmem>>, vector<8x128xf32>,
    %c448_244 = arith.constant 448 : index
    %c0_245 = arith.constant 0 : index
    %616 = tpu.strided_load %arg5[%c448_244, %c0_245] {strides = array<i32: 2, 1>} : memref<512x128xf32, #tpu.memory_space<vmem>>, vector<8x128xf32>
    %617 = vector.broadcast %164 : vector<1x128xf32> to vector<8x128xf32>
    %618 = arith.mulf %616, %617 : vector<8x128xf32>
    %619 = vector.broadcast %167 : vector<1x128xf32> to vector<8x128xf32>
    %620 = arith.addf %618, %619 : vector<8x128xf32>
    %cst_246 = arith.constant 0.000000e+00 : f32
    %621 = vector.broadcast %cst_246 : f32 to vector<8x128xf32>
    %622 = arith.maximumf %620, %621 : vector<8x128xf32>
    %c449 = arith.constant 449 : index
    %c0_247 = arith.constant 0 : index
    %623 = tpu.strided_load %arg5[%c449, %c0_247] {strides = array<i32: 2, 1>} : memref<512x128xf32, #tpu.memory_space<vmem>>, vector<8x128xf32>
    %624 = vector.broadcast %164 : vector<1x128xf32> to vector<8x128xf32>
    %625 = arith.mulf %623, %624 : vector<8x128xf32>
    %626 = vector.broadcast %167 : vector<1x128xf32> to vector<8x128xf32>
    %627 = arith.addf %625, %626 : vector<8x128xf32>
    %cst_248 = arith.constant 0.000000e+00 : f32
    %628 = vector.broadcast %cst_248 : f32 to vector<8x128xf32>
    %629 = arith.maximumf %627, %628 : vector<8x128xf32>
    %c464 = arith.constant 464 : index
    %c0_249 = arith.constant 0 : index
    %630 = tpu.strided_load %arg5[%c464, %c0_249] {strides = array<i32: 2, 1>} : memref<512x128xf32, #tpu.memory_space<vmem>>, vector<8x128xf32>
    %631 = vector.broadcast %164 : vector<1x128xf32> to vector<8x128xf32>
    %632 = arith.mulf %630, %631 : vector<8x128xf32>
    %633 = vector.broadcast %167 : vector<1x128xf32> to vector<8x128xf32>
    %634 = arith.addf %632, %633 : vector<8x128xf32>
    %cst_250 = arith.constant 0.000000e+00 : f32
    %635 = vector.broadcast %cst_250 : f32 to vector<8x128xf32>
    %636 = arith.maximumf %634, %635 : vector<8x128xf32>
    %c465 = arith.constant 465 : index
    %c0_251 = arith.constant 0 : index
    %637 = tpu.strided_load %arg5[%c465, %c0_251] {strides = array<i32: 2, 1>} : memref<512x128xf32, #tpu.memory_space<vmem>>, vector<8x128xf32>
    %638 = vector.broadcast %164 : vector<1x128xf32> to vector<8x128xf32>
    %639 = arith.mulf %637, %638 : vector<8x128xf32>
    %640 = vector.broadcast %167 : vector<1x128xf32> to vector<8x128xf32>
    %641 = arith.addf %639, %640 : vector<8x128xf32>
    %cst_252 = arith.constant 0.000000e+00 : f32
    %642 = vector.broadcast %cst_252 : f32 to vector<8x128xf32>
    %643 = arith.maximumf %641, %642 : vector<8x128xf32>
    %644 = arith.maximumf %622, %629 : vector<8x128xf32>
    %645 = arith.maximumf %636, %643 : vector<8x128xf32>
    %646 = arith.maximumf %644, %645 : vector<8x128xf32>
    %c112_253 = arith.constant 112 : index
    %c0_254 = arith.constant 0 : index
    %647 = vector.load %arg4[%c112_253, %c0_254] : memref<128x128xf32, #tpu.memory_space<vmem>>, vector<8x128xf32>
    tpu.vector_store %arg4[%c112_253, %c0_254], %646 {strides = array<i32>} : memref<128x128xf32, #tpu.memory_space<vmem>>, vector<8x128xf32>,
    %c480_255 = arith.constant 480 : index
    %c0_256 = arith.constant 0 : index
    %648 = tpu.strided_load %arg5[%c480_255, %c0_256] {strides = array<i32: 2, 1>} : memref<512x128xf32, #tpu.memory_space<vmem>>, vector<8x128xf32>
    %649 = vector.broadcast %164 : vector<1x128xf32> to vector<8x128xf32>
    %650 = arith.mulf %648, %649 : vector<8x128xf32>
    %651 = vector.broadcast %167 : vector<1x128xf32> to vector<8x128xf32>
    %652 = arith.addf %650, %651 : vector<8x128xf32>
    %cst_257 = arith.constant 0.000000e+00 : f32
    %653 = vector.broadcast %cst_257 : f32 to vector<8x128xf32>
    %654 = arith.maximumf %652, %653 : vector<8x128xf32>
    %c481 = arith.constant 481 : index
    %c0_258 = arith.constant 0 : index
    %655 = tpu.strided_load %arg5[%c481, %c0_258] {strides = array<i32: 2, 1>} : memref<512x128xf32, #tpu.memory_space<vmem>>, vector<8x128xf32>
    %656 = vector.broadcast %164 : vector<1x128xf32> to vector<8x128xf32>
    %657 = arith.mulf %655, %656 : vector<8x128xf32>
    %658 = vector.broadcast %167 : vector<1x128xf32> to vector<8x128xf32>
    %659 = arith.addf %657, %658 : vector<8x128xf32>
    %cst_259 = arith.constant 0.000000e+00 : f32
    %660 = vector.broadcast %cst_259 : f32 to vector<8x128xf32>
    %661 = arith.maximumf %659, %660 : vector<8x128xf32>
    %c496 = arith.constant 496 : index
    %c0_260 = arith.constant 0 : index
    %662 = tpu.strided_load %arg5[%c496, %c0_260] {strides = array<i32: 2, 1>} : memref<512x128xf32, #tpu.memory_space<vmem>>, vector<8x128xf32>
    %663 = vector.broadcast %164 : vector<1x128xf32> to vector<8x128xf32>
    %664 = arith.mulf %662, %663 : vector<8x128xf32>
    %665 = vector.broadcast %167 : vector<1x128xf32> to vector<8x128xf32>
    %666 = arith.addf %664, %665 : vector<8x128xf32>
    %cst_261 = arith.constant 0.000000e+00 : f32
    %667 = vector.broadcast %cst_261 : f32 to vector<8x128xf32>
    %668 = arith.maximumf %666, %667 : vector<8x128xf32>
    %c497 = arith.constant 497 : index
    %c0_262 = arith.constant 0 : index
    %669 = tpu.strided_load %arg5[%c497, %c0_262] {strides = array<i32: 2, 1>} : memref<512x128xf32, #tpu.memory_space<vmem>>, vector<8x128xf32>
    %670 = vector.broadcast %164 : vector<1x128xf32> to vector<8x128xf32>
    %671 = arith.mulf %669, %670 : vector<8x128xf32>
    %672 = vector.broadcast %167 : vector<1x128xf32> to vector<8x128xf32>
    %673 = arith.addf %671, %672 : vector<8x128xf32>
    %cst_263 = arith.constant 0.000000e+00 : f32
    %674 = vector.broadcast %cst_263 : f32 to vector<8x128xf32>
    %675 = arith.maximumf %673, %674 : vector<8x128xf32>
    %676 = arith.maximumf %654, %661 : vector<8x128xf32>
    %677 = arith.maximumf %668, %675 : vector<8x128xf32>
    %678 = arith.maximumf %676, %677 : vector<8x128xf32>
    %c120 = arith.constant 120 : index
    %c0_264 = arith.constant 0 : index
    %679 = vector.load %arg4[%c120, %c0_264] : memref<128x128xf32, #tpu.memory_space<vmem>>, vector<8x128xf32>
    tpu.vector_store %arg4[%c120, %c0_264], %678 {strides = array<i32>} : memref<128x128xf32, #tpu.memory_space<vmem>>, vector<8x128xf32>,
    return
  }
}

</mosaic_0001>

<llo_original>
// kernel: tpu_custom_call.1
$region0: #{tpu_custom_call.1}
  #allocation0 [shape = 'u32[]', space=smem, size = 0x4, offset = 0x4, fixed_abs, tag = 'smem constant byte address 0x4 - core index']
  #allocation1 [shape = 'u32[144,128]{1,0:T(1,128)}', space=vmem, size = 0x12000, scoped, tag = 'internal scratch']
  #allocation2 [shape = 'f32[512,128]{1,0:T(8,128)}', space=vmem, size = 0x40000, scoped, tag = 'scratch operand']
  %s0 = inlined_call_operand.vmem [shape: bf16[2,18,18,4], index: 0, kind: input, shape index: {}]
  %s1 = inlined_call_operand.vmem [shape: bf16[36,128], index: 1, kind: input, shape index: {}]
  %s2 = inlined_call_operand.vmem [shape: f32[1,128], index: 2, kind: input, shape index: {}]
  %s3 = inlined_call_operand.vmem [shape: f32[1,128], index: 3, kind: input, shape index: {}]
  %s4 = inlined_call_operand.hbm [shape: f32[128,128], index: 4, kind: output, shape index: {}]
  %s5 = sld [smem:[#allocation0]]
  $region26: #{tpu_custom_call.1} parent=0
    _
  %s7 = ssub.s32 1, %s5
  %s8 = scalar_select 0, %s7, %s5
  $region1: #{tpu_custom_call.1} parent=0
    #allocation3 [shape = 'u8[65536]{0}', space=vmem, size = 0x10000, scoped, tag = 'output window, operand 0, single buffered']
    #allocation4 [shape = 's32[1]{0}', space=sflag, size = 0x4, scoped, tag = 'scoped memory for tpu_custom_call.1']
    %9 = vsyncpa [#allocation4], 0
    // Predicated region
    $region2: #{tpu_custom_call.1} parent=1 // pred_check
      _
    $region3: #{tpu_custom_call.1} parent=1 // pred_check_branch
      %11 = sbr.rel (0) target = $region5
    $region4: #{tpu_custom_call.1} parent=1 // pred_region
      _
    $region5: #{tpu_custom_call.1} parent=1 // pred_fallthru
      _
    // Predicated region
    $region6: #{tpu_custom_call.1} parent=1 // pred_check
      _
    $region7: #{tpu_custom_call.1} parent=1 // pred_check_branch
      %13 = sbr.rel (0) target = $region9
    $region8: #{tpu_custom_call.1} parent=1 // pred_region
      _
    $region9: #{tpu_custom_call.1} parent=1 // pred_fallthru
      _
    // Predicated region
    $region10: #{tpu_custom_call.1} parent=1 // pred_check
      _
    $region11: #{tpu_custom_call.1} parent=1 // pred_check_branch
      %15 = sbr.rel (0) target = $region13
    $region12: #{tpu_custom_call.1} parent=1 // pred_region
      _
    $region13: #{tpu_custom_call.1} parent=1 // pred_fallthru
      _
    // Predicated region
    $region14: #{tpu_custom_call.1} parent=1 // pred_check
      _
    $region15: #{tpu_custom_call.1} parent=1 // pred_check_branch
      %17 = sbr.rel (0) target = $region17
    $region16: #{tpu_custom_call.1} parent=1 // pred_region
      _
    $region17: #{tpu_custom_call.1} parent=1 // pred_fallthru
      _
    %v19 = vld [vmem:[%s0] sm:$0xf]
    %v20 = vld [vmem:[%s0 + $0x4] sm:$0xf]
    %v21 = vld [vmem:[%s0 + $0xc] sm:$0xf]
    %v22 = vld [vmem:[%s0 + $0x10] sm:$0xf]
    %v23 = vld [vmem:[%s0 + $0x18] sm:$0xf]
    %v24 = vld [vmem:[%s0 + $0x1c] sm:$0xf]
    %v25 = vld [vmem:[%s0 + $0x24] sm:$0xf]
    %v26 = vld [vmem:[%s0 + $0x28] sm:$0xf]
    %v27 = vld [vmem:[%s0 + $0x30] sm:$0xf]
    %v28 = vld [vmem:[%s0 + $0x34] sm:$0xf]
    %v29 = vld [vmem:[%s0 + $0x3c] sm:$0xf]
    %v30 = vld [vmem:[%s0 + $0x40] sm:$0xf]
    %v31 = vld [vmem:[%s0 + $0x48] sm:$0xf]
    %v32 = vld [vmem:[%s0 + $0x4c] sm:$0xf]
    %v33 = vld [vmem:[%s0 + $0x54] sm:$0xf]
    %v34 = vld [vmem:[%s0 + $0x58] sm:$0xf]
    %v35 = vld [vmem:[%s0 + $0x60] sm:$0xf]
    %v36 = vld [vmem:[%s0 + $0x64] sm:$0xf]
    %v37 = vld [vmem:[%s0 + $0x6c] sm:$0xf]
    %v38 = vld [vmem:[%s0 + $0x70] sm:$0xf]
    %v39 = vld [vmem:[%s0 + $0x78] sm:$0xf]
    %v40 = vld [vmem:[%s0 + $0x7c] sm:$0xf]
    %v41 = vld [vmem:[%s0 + $0x84] sm:$0xf]
    %v42 = vld [vmem:[%s0 + $0x88] sm:$0xf]
    %v43 = vld [vmem:[%s0 + $0x90] sm:$0xf]
    %v44 = vld [vmem:[%s0 + $0x94] sm:$0xf]
    %v45 = vld [vmem:[%s0 + $0x9c] sm:$0xf]
    %v46 = vld [vmem:[%s0 + $0xa0] sm:$0xf]
    %v47 = vld [vmem:[%s0 + $0xa8] sm:$0xf]
    %v48 = vld [vmem:[%s0 + $0xac] sm:$0xf]
    %v49 = vld [vmem:[%s0 + $0xb4] sm:$0xf]
    %v50 = vld [vmem:[%s0 + $0xb8] sm:$0xf]
    %v51 = vld [vmem:[%s0 + $0xd8] sm:$0xf]
    %v52 = vld [vmem:[%s0 + $0xdc] sm:$0xf]
    %v53 = vld [vmem:[%s0 + $0xe4] sm:$0xf]
    %v54 = vld [vmem:[%s0 + $0xe8] sm:$0xf]
    %v55 = vld [vmem:[%s0 + $0xf0] sm:$0xf]
    %v56 = vld [vmem:[%s0 + $0xf4] sm:$0xf]
    %v57 = vld [vmem:[%s0 + $0xfc] sm:$0xf]
    %v58 = vld [vmem:[%s0 + $0x100] sm:$0xf]
    %v59 = vld [vmem:[%s0 + $0x108] sm:$0xf]
    %v60 = vld [vmem:[%s0 + $0x10c] sm:$0xf]
    %v61 = vld [vmem:[%s0 + $0x114] sm:$0xf]
    %v62 = vld [vmem:[%s0 + $0x118] sm:$0xf]
    %v63 = vld [vmem:[%s0 + $0x120] sm:$0xf]
    %v64 = vld [vmem:[%s0 + $0x124] sm:$0xf]
    %v65 = vld [vmem:[%s0 + $0x12c] sm:$0xf]
    %v66 = vld [vmem:[%s0 + $0x130] sm:$0xf]
    %v67 = vld [vmem:[%s0 + $0x138] sm:$0xf]
    %v68 = vld [vmem:[%s0 + $0x13c] sm:$0xf]
    %v69 = vld [vmem:[%s0 + $0x144] sm:$0xf]
    %v70 = vld [vmem:[%s0 + $0x148] sm:$0xf]
    %v71 = vld [vmem:[%s0 + $0x150] sm:$0xf]
    %v72 = vld [vmem:[%s0 + $0x154] sm:$0xf]
    %v73 = vld [vmem:[%s0 + $0x15c] sm:$0xf]
    %v74 = vld [vmem:[%s0 + $0x160] sm:$0xf]
    %v75 = vld [vmem:[%s0 + $0x168] sm:$0xf]
    %v76 = vld [vmem:[%s0 + $0x16c] sm:$0xf]
    %v77 = vld [vmem:[%s0 + $0x174] sm:$0xf]
    %v78 = vld [vmem:[%s0 + $0x178] sm:$0xf]
    %v79 = vld [vmem:[%s0 + $0x180] sm:$0xf]
    %v80 = vld [vmem:[%s0 + $0x184] sm:$0xf]
    %v81 = vld [vmem:[%s0 + $0x18c] sm:$0xf]
    %v82 = vld [vmem:[%s0 + $0x190] sm:$0xf]
    %v83 = vld [vmem:[%s0 + $0x8] sm:$0x1]
    %v84 = vld [vmem:[%s0 + $0x14] sm:$0x1]
    %v85 = vld [vmem:[%s0 + $0x20] sm:$0x1]
    %v86 = vld [vmem:[%s0 + $0x2c] sm:$0x1]
    %v87 = vld [vmem:[%s0 + $0x38] sm:$0x1]
    %v88 = vld [vmem:[%s0 + $0x44] sm:$0x1]
    %v89 = vld [vmem:[%s0 + $0x50] sm:$0x1]
    %v90 = vld [vmem:[%s0 + $0x5c] sm:$0x1]
    %v91 = vld [vmem:[%s0 + $0x68] sm:$0x1]
    %v92 = vld [vmem:[%s0 + $0x74] sm:$0x1]
    %v93 = vld [vmem:[%s0 + $0x80] sm:$0x1]
    %v94 = vld [vmem:[%s0 + $0x8c] sm:$0x1]
    %v95 = vld [vmem:[%s0 + $0x98] sm:$0x1]
    %v96 = vld [vmem:[%s0 + $0xa4] sm:$0x1]
    %v97 = vld [vmem:[%s0 + $0xb0] sm:$0x1]
    %v98 = vld [vmem:[%s0 + $0xbc] sm:$0x1]
    %v99 = vld [vmem:[%s0 + $0xe0] sm:$0x1]
    %v100 = vld [vmem:[%s0 + $0xec] sm:$0x1]
    %v101 = vld [vmem:[%s0 + $0xf8] sm:$0x1]
    %v102 = vld [vmem:[%s0 + $0x104] sm:$0x1]
    %v103 = vld [vmem:[%s0 + $0x110] sm:$0x1]
    %v104 = vld [vmem:[%s0 + $0x11c] sm:$0x1]
    %v105 = vld [vmem:[%s0 + $0x128] sm:$0x1]
    %v106 = vld [vmem:[%s0 + $0x134] sm:$0x1]
    %v107 = vld [vmem:[%s0 + $0x140] sm:$0x1]
    %v108 = vld [vmem:[%s0 + $0x14c] sm:$0x1]
    %v109 = vld [vmem:[%s0 + $0x158] sm:$0x1]
    %v110 = vld [vmem:[%s0 + $0x164] sm:$0x1]
    %v111 = vld [vmem:[%s0 + $0x170] sm:$0x1]
    %v112 = vld [vmem:[%s0 + $0x17c] sm:$0x1]
    %v113 = vld [vmem:[%s0 + $0x188] sm:$0x1]
    %v114 = vld [vmem:[%s0 + $0x194] sm:$0x1]
    %vm115 = vsmask.f32 3328
    %vm116 = vsmask.f32 7440
    %vm117 = vmor %vm115, %vm116
    %v119 = vshrl.u32 %v19, 16
    %v121 = vrot.slane %v119, 4
    %v122 = vshll.u32 %v19, 16
    %v124 = vrot.slane %v122, 5
    %v125 = vor.u32 %v121, %v124
    %v126 = vrot.slane %v125, 4
    %v128 = vshll.u32 %v20, 16
    %v130 = vrot.slane %v128, 5
    %v131 = vsel %vm117, %v126, %v130
    %v132 = vshrl.u32 %v20, 16
    %v134 = vrot.slane %v132, 4
    %v135 = vor.u32 %v134, %v130
    %v136 = vrot.slane %v135, 4
    %v138 = vshll.u32 %v83, 16
    %v140 = vrot.slane %v138, 5
    %v141 = vsel %vm117, %v136, %v140
    %v143 = vshrl.u32 %v21, 16
    %v145 = vrot.slane %v143, 4
    %v146 = vshll.u32 %v21, 16
    %v148 = vrot.slane %v146, 5
    %v149 = vor.u32 %v145, %v148
    %v150 = vrot.slane %v149, 4
    %v152 = vshll.u32 %v22, 16
    %v154 = vrot.slane %v152, 5
    %v155 = vsel %vm117, %v150, %v154
    %v156 = vshrl.u32 %v22, 16
    %v158 = vrot.slane %v156, 4
    %v159 = vor.u32 %v158, %v154
    %v160 = vrot.slane %v159, 4
    %v162 = vshll.u32 %v84, 16
    %v164 = vrot.slane %v162, 5
    %v165 = vsel %vm117, %v160, %v164
    %v167 = vshrl.u32 %v23, 16
    %v169 = vrot.slane %v167, 4
    %v170 = vshll.u32 %v23, 16
    %v172 = vrot.slane %v170, 5
    %v173 = vor.u32 %v169, %v172
    %v174 = vrot.slane %v173, 4
    %v176 = vshll.u32 %v24, 16
    %v178 = vrot.slane %v176, 5
    %v179 = vsel %vm117, %v174, %v178
    %v180 = vshrl.u32 %v24, 16
    %v182 = vrot.slane %v180, 4
    %v183 = vor.u32 %v182, %v178
    %v184 = vrot.slane %v183, 4
    %v186 = vshll.u32 %v85, 16
    %v188 = vrot.slane %v186, 5
    %v189 = vsel %vm117, %v184, %v188
    %v191 = vshrl.u32 %v25, 16
    %v193 = vrot.slane %v191, 4
    %v194 = vshll.u32 %v25, 16
    %v196 = vrot.slane %v194, 5
    %v197 = vor.u32 %v193, %v196
    %v198 = vrot.slane %v197, 4
    %v200 = vshll.u32 %v26, 16
    %v202 = vrot.slane %v200, 5
    %v203 = vsel %vm117, %v198, %v202
    %v204 = vshrl.u32 %v26, 16
    %v206 = vrot.slane %v204, 4
    %v207 = vor.u32 %v206, %v202
    %v208 = vrot.slane %v207, 4
    %v210 = vshll.u32 %v86, 16
    %v212 = vrot.slane %v210, 5
    %v213 = vsel %vm117, %v208, %v212
    %v215 = vshrl.u32 %v27, 16
    %v217 = vrot.slane %v215, 4
    %v218 = vshll.u32 %v27, 16
    %v220 = vrot.slane %v218, 5
    %v221 = vor.u32 %v217, %v220
    %v222 = vrot.slane %v221, 4
    %v224 = vshll.u32 %v28, 16
    %v226 = vrot.slane %v224, 5
    %v227 = vsel %vm117, %v222, %v226
    %v228 = vshrl.u32 %v28, 16
    %v230 = vrot.slane %v228, 4
    %v231 = vor.u32 %v230, %v226
    %v232 = vrot.slane %v231, 4
    %v234 = vshll.u32 %v87, 16
    %v236 = vrot.slane %v234, 5
    %v237 = vsel %vm117, %v232, %v236
    %v239 = vshrl.u32 %v29, 16
    %v241 = vrot.slane %v239, 4
    %v242 = vshll.u32 %v29, 16
    %v244 = vrot.slane %v242, 5
    %v245 = vor.u32 %v241, %v244
    %v246 = vrot.slane %v245, 4
    %v248 = vshll.u32 %v30, 16
    %v250 = vrot.slane %v248, 5
    %v251 = vsel %vm117, %v246, %v250
    %v252 = vshrl.u32 %v30, 16
    %v254 = vrot.slane %v252, 4
    %v255 = vor.u32 %v254, %v250
    %v256 = vrot.slane %v255, 4
    %v258 = vshll.u32 %v88, 16
    %v260 = vrot.slane %v258, 5
    %v261 = vsel %vm117, %v256, %v260
    %v263 = vshrl.u32 %v31, 16
    %v265 = vrot.slane %v263, 4
    %v266 = vshll.u32 %v31, 16
    %v268 = vrot.slane %v266, 5
    %v269 = vor.u32 %v265, %v268
    %v270 = vrot.slane %v269, 4
    %v272 = vshll.u32 %v32, 16
    %v274 = vrot.slane %v272, 5
    %v275 = vsel %vm117, %v270, %v274
    %v276 = vshrl.u32 %v32, 16
    %v278 = vrot.slane %v276, 4
    %v279 = vor.u32 %v278, %v274
    %v280 = vrot.slane %v279, 4
    %v282 = vshll.u32 %v89, 16
    %v284 = vrot.slane %v282, 5
    %v285 = vsel %vm117, %v280, %v284
    %v287 = vshrl.u32 %v33, 16
    %v289 = vrot.slane %v287, 4
    %v290 = vshll.u32 %v33, 16
    %v292 = vrot.slane %v290, 5
    %v293 = vor.u32 %v289, %v292
    %v294 = vrot.slane %v293, 4
    %v296 = vshll.u32 %v34, 16
    %v298 = vrot.slane %v296, 5
    %v299 = vsel %vm117, %v294, %v298
    %v300 = vshrl.u32 %v34, 16
    %v302 = vrot.slane %v300, 4
    %v303 = vor.u32 %v302, %v298
    %v304 = vrot.slane %v303, 4
    %v306 = vshll.u32 %v90, 16
    %v308 = vrot.slane %v306, 5
    %v309 = vsel %vm117, %v304, %v308
    %v311 = vshrl.u32 %v35, 16
    %v313 = vrot.slane %v311, 4
    %v314 = vshll.u32 %v35, 16
    %v316 = vrot.slane %v314, 5
    %v317 = vor.u32 %v313, %v316
    %v318 = vrot.slane %v317, 4
    %v320 = vshll.u32 %v36, 16
    %v322 = vrot.slane %v320, 5
    %v323 = vsel %vm117, %v318, %v322
    %v324 = vshrl.u32 %v36, 16
    %v326 = vrot.slane %v324, 4
    %v327 = vor.u32 %v326, %v322
    %v328 = vrot.slane %v327, 4
    %v330 = vshll.u32 %v91, 16
    %v332 = vrot.slane %v330, 5
    %v333 = vsel %vm117, %v328, %v332
    %v335 = vshrl.u32 %v37, 16
    %v337 = vrot.slane %v335, 4
    %v338 = vshll.u32 %v37, 16
    %v340 = vrot.slane %v338, 5
    %v341 = vor.u32 %v337, %v340
    %v342 = vrot.slane %v341, 4
    %v344 = vshll.u32 %v38, 16
    %v346 = vrot.slane %v344, 5
    %v347 = vsel %vm117, %v342, %v346
    %v348 = vshrl.u32 %v38, 16
    %v350 = vrot.slane %v348, 4
    %v351 = vor.u32 %v350, %v346
    %v352 = vrot.slane %v351, 4
    %v354 = vshll.u32 %v92, 16
    %v356 = vrot.slane %v354, 5
    %v357 = vsel %vm117, %v352, %v356
    %v359 = vshrl.u32 %v39, 16
    %v361 = vrot.slane %v359, 4
    %v362 = vshll.u32 %v39, 16
    %v364 = vrot.slane %v362, 5
    %v365 = vor.u32 %v361, %v364
    %v366 = vrot.slane %v365, 4
    %v368 = vshll.u32 %v40, 16
    %v370 = vrot.slane %v368, 5
    %v371 = vsel %vm117, %v366, %v370
    %v372 = vshrl.u32 %v40, 16
    %v374 = vrot.slane %v372, 4
    %v375 = vor.u32 %v374, %v370
    %v376 = vrot.slane %v375, 4
    %v378 = vshll.u32 %v93, 16
    %v380 = vrot.slane %v378, 5
    %v381 = vsel %vm117, %v376, %v380
    %v383 = vshrl.u32 %v41, 16
    %v385 = vrot.slane %v383, 4
    %v386 = vshll.u32 %v41, 16
    %v388 = vrot.slane %v386, 5
    %v389 = vor.u32 %v385, %v388
    %v390 = vrot.slane %v389, 4
    %v392 = vshll.u32 %v42, 16
    %v394 = vrot.slane %v392, 5
    %v395 = vsel %vm117, %v390, %v394
    %v396 = vshrl.u32 %v42, 16
    %v398 = vrot.slane %v396, 4
    %v399 = vor.u32 %v398, %v394
    %v400 = vrot.slane %v399, 4
    %v402 = vshll.u32 %v94, 16
    %v404 = vrot.slane %v402, 5
    %v405 = vsel %vm117, %v400, %v404
    %v407 = vshrl.u32 %v43, 16
    %v409 = vrot.slane %v407, 4
    %v410 = vshll.u32 %v43, 16
    %v412 = vrot.slane %v410, 5
    %v413 = vor.u32 %v409, %v412
    %v414 = vrot.slane %v413, 4
    %v416 = vshll.u32 %v44, 16
    %v418 = vrot.slane %v416, 5
    %v419 = vsel %vm117, %v414, %v418
    %v420 = vshrl.u32 %v44, 16
    %v422 = vrot.slane %v420, 4
    %v423 = vor.u32 %v422, %v418
    %v424 = vrot.slane %v423, 4
    %v426 = vshll.u32 %v95, 16
    %v428 = vrot.slane %v426, 5
    %v429 = vsel %vm117, %v424, %v428
    %v431 = vshrl.u32 %v45, 16
    %v433 = vrot.slane %v431, 4
    %v434 = vshll.u32 %v45, 16
    %v436 = vrot.slane %v434, 5
    %v437 = vor.u32 %v433, %v436
    %v438 = vrot.slane %v437, 4
    %v440 = vshll.u32 %v46, 16
    %v442 = vrot.slane %v440, 5
    %v443 = vsel %vm117, %v438, %v442
    %v444 = vshrl.u32 %v46, 16
    %v446 = vrot.slane %v444, 4
    %v447 = vor.u32 %v446, %v442
    %v448 = vrot.slane %v447, 4
    %v450 = vshll.u32 %v96, 16
    %v452 = vrot.slane %v450, 5
    %v453 = vsel %vm117, %v448, %v452
    %v455 = vshrl.u32 %v47, 16
    %v457 = vrot.slane %v455, 4
    %v458 = vshll.u32 %v47, 16
    %v460 = vrot.slane %v458, 5
    %v461 = vor.u32 %v457, %v460
    %v462 = vrot.slane %v461, 4
    %v464 = vshll.u32 %v48, 16
    %v466 = vrot.slane %v464, 5
    %v467 = vsel %vm117, %v462, %v466
    %v468 = vshrl.u32 %v48, 16
    %v470 = vrot.slane %v468, 4
    %v471 = vor.u32 %v470, %v466
    %v472 = vrot.slane %v471, 4
    %v474 = vshll.u32 %v97, 16
    %v476 = vrot.slane %v474, 5
    %v477 = vsel %vm117, %v472, %v476
    %v479 = vshrl.u32 %v49, 16
    %v481 = vrot.slane %v479, 4
    %v482 = vshll.u32 %v49, 16
    %v484 = vrot.slane %v482, 5
    %v485 = vor.u32 %v481, %v484
    %v486 = vrot.slane %v485, 4
    %v488 = vshll.u32 %v50, 16
    %v490 = vrot.slane %v488, 5
    %v491 = vsel %vm117, %v486, %v490
    %v492 = vshrl.u32 %v50, 16
    %v494 = vrot.slane %v492, 4
    %v495 = vor.u32 %v494, %v490
    %v496 = vrot.slane %v495, 4
    %v498 = vshll.u32 %v98, 16
    %v500 = vrot.slane %v498, 5
    %v501 = vsel %vm117, %v496, %v500
    %v503 = vshrl.u32 %v51, 16
    %v505 = vrot.slane %v503, 4
    %v506 = vshll.u32 %v51, 16
    %v508 = vrot.slane %v506, 5
    %v509 = vor.u32 %v505, %v508
    %v510 = vrot.slane %v509, 4
    %v512 = vshll.u32 %v52, 16
    %v514 = vrot.slane %v512, 5
    %v515 = vsel %vm117, %v510, %v514
    %v516 = vshrl.u32 %v52, 16
    %v518 = vrot.slane %v516, 4
    %v519 = vor.u32 %v518, %v514
    %v520 = vrot.slane %v519, 4
    %v522 = vshll.u32 %v99, 16
    %v524 = vrot.slane %v522, 5
    %v525 = vsel %vm117, %v520, %v524
    %v527 = vshrl.u32 %v53, 16
    %v529 = vrot.slane %v527, 4
    %v530 = vshll.u32 %v53, 16
    %v532 = vrot.slane %v530, 5
    %v533 = vor.u32 %v529, %v532
    %v534 = vrot.slane %v533, 4
    %v536 = vshll.u32 %v54, 16
    %v538 = vrot.slane %v536, 5
    %v539 = vsel %vm117, %v534, %v538
    %v540 = vshrl.u32 %v54, 16
    %v542 = vrot.slane %v540, 4
    %v543 = vor.u32 %v542, %v538
    %v544 = vrot.slane %v543, 4
    %v546 = vshll.u32 %v100, 16
    %v548 = vrot.slane %v546, 5
    %v549 = vsel %vm117, %v544, %v548
    %v551 = vshrl.u32 %v55, 16
    %v553 = vrot.slane %v551, 4
    %v554 = vshll.u32 %v55, 16
    %v556 = vrot.slane %v554, 5
    %v557 = vor.u32 %v553, %v556
    %v558 = vrot.slane %v557, 4
    %v560 = vshll.u32 %v56, 16
    %v562 = vrot.slane %v560, 5
    %v563 = vsel %vm117, %v558, %v562
    %v564 = vshrl.u32 %v56, 16
    %v566 = vrot.slane %v564, 4
    %v567 = vor.u32 %v566, %v562
    %v568 = vrot.slane %v567, 4
    %v570 = vshll.u32 %v101, 16
    %v572 = vrot.slane %v570, 5
    %v573 = vsel %vm117, %v568, %v572
    %v575 = vshrl.u32 %v57, 16
    %v577 = vrot.slane %v575, 4
    %v578 = vshll.u32 %v57, 16
    %v580 = vrot.slane %v578, 5
    %v581 = vor.u32 %v577, %v580
    %v582 = vrot.slane %v581, 4
    %v584 = vshll.u32 %v58, 16
    %v586 = vrot.slane %v584, 5
    %v587 = vsel %vm117, %v582, %v586
    %v588 = vshrl.u32 %v58, 16
    %v590 = vrot.slane %v588, 4
    %v591 = vor.u32 %v590, %v586
    %v592 = vrot.slane %v591, 4
    %v594 = vshll.u32 %v102, 16
    %v596 = vrot.slane %v594, 5
    %v597 = vsel %vm117, %v592, %v596
    %v599 = vshrl.u32 %v59, 16
    %v601 = vrot.slane %v599, 4
    %v602 = vshll.u32 %v59, 16
    %v604 = vrot.slane %v602, 5
    %v605 = vor.u32 %v601, %v604
    %v606 = vrot.slane %v605, 4
    %v608 = vshll.u32 %v60, 16
    %v610 = vrot.slane %v608, 5
    %v611 = vsel %vm117, %v606, %v610
    %v612 = vshrl.u32 %v60, 16
    %v614 = vrot.slane %v612, 4
    %v615 = vor.u32 %v614, %v610
    %v616 = vrot.slane %v615, 4
    %v618 = vshll.u32 %v103, 16
    %v620 = vrot.slane %v618, 5
    %v621 = vsel %vm117, %v616, %v620
    %v623 = vshrl.u32 %v61, 16
    %v625 = vrot.slane %v623, 4
    %v626 = vshll.u32 %v61, 16
    %v628 = vrot.slane %v626, 5
    %v629 = vor.u32 %v625, %v628
    %v630 = vrot.slane %v629, 4
    %v632 = vshll.u32 %v62, 16
    %v634 = vrot.slane %v632, 5
    %v635 = vsel %vm117, %v630, %v634
    %v636 = vshrl.u32 %v62, 16
    %v638 = vrot.slane %v636, 4
    %v639 = vor.u32 %v638, %v634
    %v640 = vrot.slane %v639, 4
    %v642 = vshll.u32 %v104, 16
    %v644 = vrot.slane %v642, 5
    %v645 = vsel %vm117, %v640, %v644
    %v647 = vshrl.u32 %v63, 16
    %v649 = vrot.slane %v647, 4
    %v650 = vshll.u32 %v63, 16
    %v652 = vrot.slane %v650, 5
    %v653 = vor.u32 %v649, %v652
    %v654 = vrot.slane %v653, 4
    %v656 = vshll.u32 %v64, 16
    %v658 = vrot.slane %v656, 5
    %v659 = vsel %vm117, %v654, %v658
    %v660 = vshrl.u32 %v64, 16
    %v662 = vrot.slane %v660, 4
    %v663 = vor.u32 %v662, %v658
    %v664 = vrot.slane %v663, 4
    %v666 = vshll.u32 %v105, 16
    %v668 = vrot.slane %v666, 5
    %v669 = vsel %vm117, %v664, %v668
    %v671 = vshrl.u32 %v65, 16
    %v673 = vrot.slane %v671, 4
    %v674 = vshll.u32 %v65, 16
    %v676 = vrot.slane %v674, 5
    %v677 = vor.u32 %v673, %v676
    %v678 = vrot.slane %v677, 4
    %v680 = vshll.u32 %v66, 16
    %v682 = vrot.slane %v680, 5
    %v683 = vsel %vm117, %v678, %v682
    %v684 = vshrl.u32 %v66, 16
    %v686 = vrot.slane %v684, 4
    %v687 = vor.u32 %v686, %v682
    %v688 = vrot.slane %v687, 4
    %v690 = vshll.u32 %v106, 16
    %v692 = vrot.slane %v690, 5
    %v693 = vsel %vm117, %v688, %v692
    %v695 = vshrl.u32 %v67, 16
    %v697 = vrot.slane %v695, 4
    %v698 = vshll.u32 %v67, 16
    %v700 = vrot.slane %v698, 5
    %v701 = vor.u32 %v697, %v700
    %v702 = vrot.slane %v701, 4
    %v704 = vshll.u32 %v68, 16
    %v706 = vrot.slane %v704, 5
    %v707 = vsel %vm117, %v702, %v706
    %v708 = vshrl.u32 %v68, 16
    %v710 = vrot.slane %v708, 4
    %v711 = vor.u32 %v710, %v706
    %v712 = vrot.slane %v711, 4
    %v714 = vshll.u32 %v107, 16
    %v716 = vrot.slane %v714, 5
    %v717 = vsel %vm117, %v712, %v716
    %v719 = vshrl.u32 %v69, 16
    %v721 = vrot.slane %v719, 4
    %v722 = vshll.u32 %v69, 16
    %v724 = vrot.slane %v722, 5
    %v725 = vor.u32 %v721, %v724
    %v726 = vrot.slane %v725, 4
    %v728 = vshll.u32 %v70, 16
    %v730 = vrot.slane %v728, 5
    %v731 = vsel %vm117, %v726, %v730
    %v732 = vshrl.u32 %v70, 16
    %v734 = vrot.slane %v732, 4
    %v735 = vor.u32 %v734, %v730
    %v736 = vrot.slane %v735, 4
    %v738 = vshll.u32 %v108, 16
    %v740 = vrot.slane %v738, 5
    %v741 = vsel %vm117, %v736, %v740
    %v743 = vshrl.u32 %v71, 16
    %v745 = vrot.slane %v743, 4
    %v746 = vshll.u32 %v71, 16
    %v748 = vrot.slane %v746, 5
    %v749 = vor.u32 %v745, %v748
    %v750 = vrot.slane %v749, 4
    %v752 = vshll.u32 %v72, 16
    %v754 = vrot.slane %v752, 5
    %v755 = vsel %vm117, %v750, %v754
    %v756 = vshrl.u32 %v72, 16
    %v758 = vrot.slane %v756, 4
    %v759 = vor.u32 %v758, %v754
    %v760 = vrot.slane %v759, 4
    %v762 = vshll.u32 %v109, 16
    %v764 = vrot.slane %v762, 5
    %v765 = vsel %vm117, %v760, %v764
    %v767 = vshrl.u32 %v73, 16
    %v769 = vrot.slane %v767, 4
    %v770 = vshll.u32 %v73, 16
    %v772 = vrot.slane %v770, 5
    %v773 = vor.u32 %v769, %v772
    %v774 = vrot.slane %v773, 4
    %v776 = vshll.u32 %v74, 16
    %v778 = vrot.slane %v776, 5
    %v779 = vsel %vm117, %v774, %v778
    %v780 = vshrl.u32 %v74, 16
    %v782 = vrot.slane %v780, 4
    %v783 = vor.u32 %v782, %v778
    %v784 = vrot.slane %v783, 4
    %v786 = vshll.u32 %v110, 16
    %v788 = vrot.slane %v786, 5
    %v789 = vsel %vm117, %v784, %v788
    %v791 = vshrl.u32 %v75, 16
    %v793 = vrot.slane %v791, 4
    %v794 = vshll.u32 %v75, 16
    %v796 = vrot.slane %v794, 5
    %v797 = vor.u32 %v793, %v796
    %v798 = vrot.slane %v797, 4
    %v800 = vshll.u32 %v76, 16
    %v802 = vrot.slane %v800, 5
    %v803 = vsel %vm117, %v798, %v802
    %v804 = vshrl.u32 %v76, 16
    %v806 = vrot.slane %v804, 4
    %v807 = vor.u32 %v806, %v802
    %v808 = vrot.slane %v807, 4
    %v810 = vshll.u32 %v111, 16
    %v812 = vrot.slane %v810, 5
    %v813 = vsel %vm117, %v808, %v812
    %v815 = vshrl.u32 %v77, 16
    %v817 = vrot.slane %v815, 4
    %v818 = vshll.u32 %v77, 16
    %v820 = vrot.slane %v818, 5
    %v821 = vor.u32 %v817, %v820
    %v822 = vrot.slane %v821, 4
    %v824 = vshll.u32 %v78, 16
    %v826 = vrot.slane %v824, 5
    %v827 = vsel %vm117, %v822, %v826
    %v828 = vshrl.u32 %v78, 16
    %v830 = vrot.slane %v828, 4
    %v831 = vor.u32 %v830, %v826
    %v832 = vrot.slane %v831, 4
    %v834 = vshll.u32 %v112, 16
    %v836 = vrot.slane %v834, 5
    %v837 = vsel %vm117, %v832, %v836
    %v839 = vshrl.u32 %v79, 16
    %v841 = vrot.slane %v839, 4
    %v842 = vshll.u32 %v79, 16
    %v844 = vrot.slane %v842, 5
    %v845 = vor.u32 %v841, %v844
    %v846 = vrot.slane %v845, 4
    %v848 = vshll.u32 %v80, 16
    %v850 = vrot.slane %v848, 5
    %v851 = vsel %vm117, %v846, %v850
    %v852 = vshrl.u32 %v80, 16
    %v854 = vrot.slane %v852, 4
    %v855 = vor.u32 %v854, %v850
    %v856 = vrot.slane %v855, 4
    %v858 = vshll.u32 %v113, 16
    %v860 = vrot.slane %v858, 5
    %v861 = vsel %vm117, %v856, %v860
    %v863 = vshrl.u32 %v81, 16
    %v865 = vrot.slane %v863, 4
    %v866 = vshll.u32 %v81, 16
    %v868 = vrot.slane %v866, 5
    %v869 = vor.u32 %v865, %v868
    %v870 = vrot.slane %v869, 4
    %v872 = vshll.u32 %v82, 16
    %v874 = vrot.slane %v872, 5
    %v875 = vsel %vm117, %v870, %v874
    %v876 = vshrl.u32 %v82, 16
    %v878 = vrot.slane %v876, 4
    %v879 = vor.u32 %v878, %v874
    %v880 = vrot.slane %v879, 4
    %v882 = vshll.u32 %v114, 16
    %v884 = vrot.slane %v882, 5
    %v885 = vsel %vm117, %v880, %v884
    %v886 = vld [vmem:[%s0] sm:$0xe]
    %v887 = vld [vmem:[%s0 + $0xc] sm:$0xe]
    %v888 = vld [vmem:[%s0 + $0x18] sm:$0xe]
    %v889 = vld [vmem:[%s0 + $0x24] sm:$0xe]
    %v890 = vld [vmem:[%s0 + $0x30] sm:$0xe]
    %v891 = vld [vmem:[%s0 + $0x3c] sm:$0xe]
    %v892 = vld [vmem:[%s0 + $0x48] sm:$0xe]
    %v893 = vld [vmem:[%s0 + $0x54] sm:$0xe]
    %v894 = vld [vmem:[%s0 + $0x60] sm:$0xe]
    %v895 = vld [vmem:[%s0 + $0x6c] sm:$0xe]
    %v896 = vld [vmem:[%s0 + $0x78] sm:$0xe]
    %v897 = vld [vmem:[%s0 + $0x84] sm:$0xe]
    %v898 = vld [vmem:[%s0 + $0x90] sm:$0xe]
    %v899 = vld [vmem:[%s0 + $0x9c] sm:$0xe]
    %v900 = vld [vmem:[%s0 + $0xa8] sm:$0xe]
    %v901 = vld [vmem:[%s0 + $0xb4] sm:$0xe]
    %v902 = vld [vmem:[%s0 + $0xd8] sm:$0xe]
    %v903 = vld [vmem:[%s0 + $0xe4] sm:$0xe]
    %v904 = vld [vmem:[%s0 + $0xf0] sm:$0xe]
    %v905 = vld [vmem:[%s0 + $0xfc] sm:$0xe]
    %v906 = vld [vmem:[%s0 + $0x108] sm:$0xe]
    %v907 = vld [vmem:[%s0 + $0x114] sm:$0xe]
    %v908 = vld [vmem:[%s0 + $0x120] sm:$0xe]
    %v909 = vld [vmem:[%s0 + $0x12c] sm:$0xe]
    %v910 = vld [vmem:[%s0 + $0x138] sm:$0xe]
    %v911 = vld [vmem:[%s0 + $0x144] sm:$0xe]
    %v912 = vld [vmem:[%s0 + $0x150] sm:$0xe]
    %v913 = vld [vmem:[%s0 + $0x15c] sm:$0xe]
    %v914 = vld [vmem:[%s0 + $0x168] sm:$0xe]
    %v915 = vld [vmem:[%s0 + $0x174] sm:$0xe]
    %v916 = vld [vmem:[%s0 + $0x180] sm:$0xe]
    %v917 = vld [vmem:[%s0 + $0x18c] sm:$0xe]
    %vm1014 = vcmask 1042432
    %vm1015 = vcmask 1046532
    %vm1016 = vmor %vm1014, %vm1015
    %v1017 = vrot.slane %v886, 5
    %v1018 = vrot.slane %v1017, 4
    %v1019 = vrot.slane %v20, 5
    %v1020 = vsel %vm1016, %v1018, %v1019
    %v1021 = vrot.slane %v1019, 4
    %v1022 = vrot.slane %v83, 5
    %v1023 = vsel %vm1016, %v1021, %v1022
    %v1024 = vrot.slane %v887, 5
    %v1025 = vrot.slane %v1024, 4
    %v1026 = vrot.slane %v22, 5
    %v1027 = vsel %vm1016, %v1025, %v1026
    %v1028 = vrot.slane %v1026, 4
    %v1029 = vrot.slane %v84, 5
    %v1030 = vsel %vm1016, %v1028, %v1029
    %v1031 = vrot.slane %v888, 5
    %v1032 = vrot.slane %v1031, 4
    %v1033 = vrot.slane %v24, 5
    %v1034 = vsel %vm1016, %v1032, %v1033
    %v1035 = vrot.slane %v1033, 4
    %v1036 = vrot.slane %v85, 5
    %v1037 = vsel %vm1016, %v1035, %v1036
    %v1038 = vrot.slane %v889, 5
    %v1039 = vrot.slane %v1038, 4
    %v1040 = vrot.slane %v26, 5
    %v1041 = vsel %vm1016, %v1039, %v1040
    %v1042 = vrot.slane %v1040, 4
    %v1043 = vrot.slane %v86, 5
    %v1044 = vsel %vm1016, %v1042, %v1043
    %v1045 = vrot.slane %v890, 5
    %v1046 = vrot.slane %v1045, 4
    %v1047 = vrot.slane %v28, 5
    %v1048 = vsel %vm1016, %v1046, %v1047
    %v1049 = vrot.slane %v1047, 4
    %v1050 = vrot.slane %v87, 5
    %v1051 = vsel %vm1016, %v1049, %v1050
    %v1052 = vrot.slane %v891, 5
    %v1053 = vrot.slane %v1052, 4
    %v1054 = vrot.slane %v30, 5
    %v1055 = vsel %vm1016, %v1053, %v1054
    %v1056 = vrot.slane %v1054, 4
    %v1057 = vrot.slane %v88, 5
    %v1058 = vsel %vm1016, %v1056, %v1057
    %v1059 = vrot.slane %v892, 5
    %v1060 = vrot.slane %v1059, 4
    %v1061 = vrot.slane %v32, 5
    %v1062 = vsel %vm1016, %v1060, %v1061
    %v1063 = vrot.slane %v1061, 4
    %v1064 = vrot.slane %v89, 5
    %v1065 = vsel %vm1016, %v1063, %v1064
    %v1066 = vrot.slane %v893, 5
    %v1067 = vrot.slane %v1066, 4
    %v1068 = vrot.slane %v34, 5
    %v1069 = vsel %vm1016, %v1067, %v1068
    %v1070 = vrot.slane %v1068, 4
    %v1071 = vrot.slane %v90, 5
    %v1072 = vsel %vm1016, %v1070, %v1071
    %v1073 = vrot.slane %v894, 5
    %v1074 = vrot.slane %v1073, 4
    %v1075 = vrot.slane %v36, 5
    %v1076 = vsel %vm1016, %v1074, %v1075
    %v1077 = vrot.slane %v1075, 4
    %v1078 = vrot.slane %v91, 5
    %v1079 = vsel %vm1016, %v1077, %v1078
    %v1080 = vrot.slane %v895, 5
    %v1081 = vrot.slane %v1080, 4
    %v1082 = vrot.slane %v38, 5
    %v1083 = vsel %vm1016, %v1081, %v1082
    %v1084 = vrot.slane %v1082, 4
    %v1085 = vrot.slane %v92, 5
    %v1086 = vsel %vm1016, %v1084, %v1085
    %v1087 = vrot.slane %v896, 5
    %v1088 = vrot.slane %v1087, 4
    %v1089 = vrot.slane %v40, 5
    %v1090 = vsel %vm1016, %v1088, %v1089
    %v1091 = vrot.slane %v1089, 4
    %v1092 = vrot.slane %v93, 5
    %v1093 = vsel %vm1016, %v1091, %v1092
    %v1094 = vrot.slane %v897, 5
    %v1095 = vrot.slane %v1094, 4
    %v1096 = vrot.slane %v42, 5
    %v1097 = vsel %vm1016, %v1095, %v1096
    %v1098 = vrot.slane %v1096, 4
    %v1099 = vrot.slane %v94, 5
    %v1100 = vsel %vm1016, %v1098, %v1099
    %v1101 = vrot.slane %v898, 5
    %v1102 = vrot.slane %v1101, 4
    %v1103 = vrot.slane %v44, 5
    %v1104 = vsel %vm1016, %v1102, %v1103
    %v1105 = vrot.slane %v1103, 4
    %v1106 = vrot.slane %v95, 5
    %v1107 = vsel %vm1016, %v1105, %v1106
    %v1108 = vrot.slane %v899, 5
    %v1109 = vrot.slane %v1108, 4
    %v1110 = vrot.slane %v46, 5
    %v1111 = vsel %vm1016, %v1109, %v1110
    %v1112 = vrot.slane %v1110, 4
    %v1113 = vrot.slane %v96, 5
    %v1114 = vsel %vm1016, %v1112, %v1113
    %v1115 = vrot.slane %v900, 5
    %v1116 = vrot.slane %v1115, 4
    %v1117 = vrot.slane %v48, 5
    %v1118 = vsel %vm1016, %v1116, %v1117
    %v1119 = vrot.slane %v1117, 4
    %v1120 = vrot.slane %v97, 5
    %v1121 = vsel %vm1016, %v1119, %v1120
    %v1122 = vrot.slane %v901, 5
    %v1123 = vrot.slane %v1122, 4
    %v1124 = vrot.slane %v50, 5
    %v1125 = vsel %vm1016, %v1123, %v1124
    %v1126 = vrot.slane %v1124, 4
    %v1127 = vrot.slane %v98, 5
    %v1128 = vsel %vm1016, %v1126, %v1127
    %v1129 = vrot.slane %v902, 5
    %v1130 = vrot.slane %v1129, 4
    %v1131 = vrot.slane %v52, 5
    %v1132 = vsel %vm1016, %v1130, %v1131
    %v1133 = vrot.slane %v1131, 4
    %v1134 = vrot.slane %v99, 5
    %v1135 = vsel %vm1016, %v1133, %v1134
    %v1136 = vrot.slane %v903, 5
    %v1137 = vrot.slane %v1136, 4
    %v1138 = vrot.slane %v54, 5
    %v1139 = vsel %vm1016, %v1137, %v1138
    %v1140 = vrot.slane %v1138, 4
    %v1141 = vrot.slane %v100, 5
    %v1142 = vsel %vm1016, %v1140, %v1141
    %v1143 = vrot.slane %v904, 5
    %v1144 = vrot.slane %v1143, 4
    %v1145 = vrot.slane %v56, 5
    %v1146 = vsel %vm1016, %v1144, %v1145
    %v1147 = vrot.slane %v1145, 4
    %v1148 = vrot.slane %v101, 5
    %v1149 = vsel %vm1016, %v1147, %v1148
    %v1150 = vrot.slane %v905, 5
    %v1151 = vrot.slane %v1150, 4
    %v1152 = vrot.slane %v58, 5
    %v1153 = vsel %vm1016, %v1151, %v1152
    %v1154 = vrot.slane %v1152, 4
    %v1155 = vrot.slane %v102, 5
    %v1156 = vsel %vm1016, %v1154, %v1155
    %v1157 = vrot.slane %v906, 5
    %v1158 = vrot.slane %v1157, 4
    %v1159 = vrot.slane %v60, 5
    %v1160 = vsel %vm1016, %v1158, %v1159
    %v1161 = vrot.slane %v1159, 4
    %v1162 = vrot.slane %v103, 5
    %v1163 = vsel %vm1016, %v1161, %v1162
    %v1164 = vrot.slane %v907, 5
    %v1165 = vrot.slane %v1164, 4
    %v1166 = vrot.slane %v62, 5
    %v1167 = vsel %vm1016, %v1165, %v1166
    %v1168 = vrot.slane %v1166, 4
    %v1169 = vrot.slane %v104, 5
    %v1170 = vsel %vm1016, %v1168, %v1169
    %v1171 = vrot.slane %v908, 5
    %v1172 = vrot.slane %v1171, 4
    %v1173 = vrot.slane %v64, 5
    %v1174 = vsel %vm1016, %v1172, %v1173
    %v1175 = vrot.slane %v1173, 4
    %v1176 = vrot.slane %v105, 5
    %v1177 = vsel %vm1016, %v1175, %v1176
    %v1178 = vrot.slane %v909, 5
    %v1179 = vrot.slane %v1178, 4
    %v1180 = vrot.slane %v66, 5
    %v1181 = vsel %vm1016, %v1179, %v1180
    %v1182 = vrot.slane %v1180, 4
    %v1183 = vrot.slane %v106, 5
    %v1184 = vsel %vm1016, %v1182, %v1183
    %v1185 = vrot.slane %v910, 5
    %v1186 = vrot.slane %v1185, 4
    %v1187 = vrot.slane %v68, 5
    %v1188 = vsel %vm1016, %v1186, %v1187
    %v1189 = vrot.slane %v1187, 4
    %v1190 = vrot.slane %v107, 5
    %v1191 = vsel %vm1016, %v1189, %v1190
    %v1192 = vrot.slane %v911, 5
    %v1193 = vrot.slane %v1192, 4
    %v1194 = vrot.slane %v70, 5
    %v1195 = vsel %vm1016, %v1193, %v1194
    %v1196 = vrot.slane %v1194, 4
    %v1197 = vrot.slane %v108, 5
    %v1198 = vsel %vm1016, %v1196, %v1197
    %v1199 = vrot.slane %v912, 5
    %v1200 = vrot.slane %v1199, 4
    %v1201 = vrot.slane %v72, 5
    %v1202 = vsel %vm1016, %v1200, %v1201
    %v1203 = vrot.slane %v1201, 4
    %v1204 = vrot.slane %v109, 5
    %v1205 = vsel %vm1016, %v1203, %v1204
    %v1206 = vrot.slane %v913, 5
    %v1207 = vrot.slane %v1206, 4
    %v1208 = vrot.slane %v74, 5
    %v1209 = vsel %vm1016, %v1207, %v1208
    %v1210 = vrot.slane %v1208, 4
    %v1211 = vrot.slane %v110, 5
    %v1212 = vsel %vm1016, %v1210, %v1211
    %v1213 = vrot.slane %v914, 5
    %v1214 = vrot.slane %v1213, 4
    %v1215 = vrot.slane %v76, 5
    %v1216 = vsel %vm1016, %v1214, %v1215
    %v1217 = vrot.slane %v1215, 4
    %v1218 = vrot.slane %v111, 5
    %v1219 = vsel %vm1016, %v1217, %v1218
    %v1220 = vrot.slane %v915, 5
    %v1221 = vrot.slane %v1220, 4
    %v1222 = vrot.slane %v78, 5
    %v1223 = vsel %vm1016, %v1221, %v1222
    %v1224 = vrot.slane %v1222, 4
    %v1225 = vrot.slane %v112, 5
    %v1226 = vsel %vm1016, %v1224, %v1225
    %v1227 = vrot.slane %v916, 5
    %v1228 = vrot.slane %v1227, 4
    %v1229 = vrot.slane %v80, 5
    %v1230 = vsel %vm1016, %v1228, %v1229
    %v1231 = vrot.slane %v1229, 4
    %v1232 = vrot.slane %v113, 5
    %v1233 = vsel %vm1016, %v1231, %v1232
    %v1234 = vrot.slane %v917, 5
    %v1235 = vrot.slane %v1234, 4
    %v1236 = vrot.slane %v82, 5
    %v1237 = vsel %vm1016, %v1235, %v1236
    %v1238 = vrot.slane %v1236, 4
    %v1239 = vrot.slane %v114, 5
    %v1240 = vsel %vm1016, %v1238, %v1239
    %s1241 = scalar_lea.vmem %s0, 12
    %v1242 = vld [vmem:[%s1241] sm:$0xf]
    %v1243 = vld [vmem:[%s1241 + $0x4] sm:$0xf]
    %v1244 = vld [vmem:[%s1241 + $0xc] sm:$0xf]
    %v1245 = vld [vmem:[%s1241 + $0x10] sm:$0xf]
    %v1246 = vld [vmem:[%s1241 + $0x18] sm:$0xf]
    %v1247 = vld [vmem:[%s1241 + $0x1c] sm:$0xf]
    %v1248 = vld [vmem:[%s1241 + $0x24] sm:$0xf]
    %v1249 = vld [vmem:[%s1241 + $0x28] sm:$0xf]
    %v1250 = vld [vmem:[%s1241 + $0x30] sm:$0xf]
    %v1251 = vld [vmem:[%s1241 + $0x34] sm:$0xf]
    %v1252 = vld [vmem:[%s1241 + $0x3c] sm:$0xf]
    %v1253 = vld [vmem:[%s1241 + $0x40] sm:$0xf]
    %v1254 = vld [vmem:[%s1241 + $0x48] sm:$0xf]
    %v1255 = vld [vmem:[%s1241 + $0x4c] sm:$0xf]
    %v1256 = vld [vmem:[%s1241 + $0x54] sm:$0xf]
    %v1257 = vld [vmem:[%s1241 + $0x58] sm:$0xf]
    %v1258 = vld [vmem:[%s1241 + $0x60] sm:$0xf]
    %v1259 = vld [vmem:[%s1241 + $0x64] sm:$0xf]
    %v1260 = vld [vmem:[%s1241 + $0x6c] sm:$0xf]
    %v1261 = vld [vmem:[%s1241 + $0x70] sm:$0xf]
    %v1262 = vld [vmem:[%s1241 + $0x78] sm:$0xf]
    %v1263 = vld [vmem:[%s1241 + $0x7c] sm:$0xf]
    %v1264 = vld [vmem:[%s1241 + $0x84] sm:$0xf]
    %v1265 = vld [vmem:[%s1241 + $0x88] sm:$0xf]
    %v1266 = vld [vmem:[%s1241 + $0x90] sm:$0xf]
    %v1267 = vld [vmem:[%s1241 + $0x94] sm:$0xf]
    %v1268 = vld [vmem:[%s1241 + $0x9c] sm:$0xf]
    %v1269 = vld [vmem:[%s1241 + $0xa0] sm:$0xf]
    %v1270 = vld [vmem:[%s1241 + $0xa8] sm:$0xf]
    %v1271 = vld [vmem:[%s1241 + $0xac] sm:$0xf]
    %v1272 = vld [vmem:[%s1241 + $0xb4] sm:$0xf]
    %v1273 = vld [vmem:[%s1241 + $0xb8] sm:$0xf]
    %v1274 = vld [vmem:[%s1241 + $0xd8] sm:$0xf]
    %v1275 = vld [vmem:[%s1241 + $0xdc] sm:$0xf]
    %v1276 = vld [vmem:[%s1241 + $0xe4] sm:$0xf]
    %v1277 = vld [vmem:[%s1241 + $0xe8] sm:$0xf]
    %v1278 = vld [vmem:[%s1241 + $0xf0] sm:$0xf]
    %v1279 = vld [vmem:[%s1241 + $0xf4] sm:$0xf]
    %v1280 = vld [vmem:[%s1241 + $0xfc] sm:$0xf]
    %v1281 = vld [vmem:[%s1241 + $0x100] sm:$0xf]
    %v1282 = vld [vmem:[%s1241 + $0x108] sm:$0xf]
    %v1283 = vld [vmem:[%s1241 + $0x10c] sm:$0xf]
    %v1284 = vld [vmem:[%s1241 + $0x114] sm:$0xf]
    %v1285 = vld [vmem:[%s1241 + $0x118] sm:$0xf]
    %v1286 = vld [vmem:[%s1241 + $0x120] sm:$0xf]
    %v1287 = vld [vmem:[%s1241 + $0x124] sm:$0xf]
    %v1288 = vld [vmem:[%s1241 + $0x12c] sm:$0xf]
    %v1289 = vld [vmem:[%s1241 + $0x130] sm:$0xf]
    %v1290 = vld [vmem:[%s1241 + $0x138] sm:$0xf]
    %v1291 = vld [vmem:[%s1241 + $0x13c] sm:$0xf]
    %v1292 = vld [vmem:[%s1241 + $0x144] sm:$0xf]
    %v1293 = vld [vmem:[%s1241 + $0x148] sm:$0xf]
    %v1294 = vld [vmem:[%s1241 + $0x150] sm:$0xf]
    %v1295 = vld [vmem:[%s1241 + $0x154] sm:$0xf]
    %v1296 = vld [vmem:[%s1241 + $0x15c] sm:$0xf]
    %v1297 = vld [vmem:[%s1241 + $0x160] sm:$0xf]
    %v1298 = vld [vmem:[%s1241 + $0x168] sm:$0xf]
    %v1299 = vld [vmem:[%s1241 + $0x16c] sm:$0xf]
    %v1300 = vld [vmem:[%s1241 + $0x174] sm:$0xf]
    %v1301 = vld [vmem:[%s1241 + $0x178] sm:$0xf]
    %v1302 = vld [vmem:[%s1241 + $0x180] sm:$0xf]
    %v1303 = vld [vmem:[%s1241 + $0x184] sm:$0xf]
    %v1304 = vld [vmem:[%s1241 + $0x18c] sm:$0xf]
    %v1305 = vld [vmem:[%s1241 + $0x190] sm:$0xf]
    %v1306 = vld [vmem:[%s1241 + $0x8] sm:$0x1]
    %v1307 = vld [vmem:[%s1241 + $0x14] sm:$0x1]
    %v1308 = vld [vmem:[%s1241 + $0x20] sm:$0x1]
    %v1309 = vld [vmem:[%s1241 + $0x2c] sm:$0x1]
    %v1310 = vld [vmem:[%s1241 + $0x38] sm:$0x1]
    %v1311 = vld [vmem:[%s1241 + $0x44] sm:$0x1]
    %v1312 = vld [vmem:[%s1241 + $0x50] sm:$0x1]
    %v1313 = vld [vmem:[%s1241 + $0x5c] sm:$0x1]
    %v1314 = vld [vmem:[%s1241 + $0x68] sm:$0x1]
    %v1315 = vld [vmem:[%s1241 + $0x74] sm:$0x1]
    %v1316 = vld [vmem:[%s1241 + $0x80] sm:$0x1]
    %v1317 = vld [vmem:[%s1241 + $0x8c] sm:$0x1]
    %v1318 = vld [vmem:[%s1241 + $0x98] sm:$0x1]
    %v1319 = vld [vmem:[%s1241 + $0xa4] sm:$0x1]
    %v1320 = vld [vmem:[%s1241 + $0xb0] sm:$0x1]
    %v1321 = vld [vmem:[%s1241 + $0xbc] sm:$0x1]
    %v1322 = vld [vmem:[%s1241 + $0xe0] sm:$0x1]
    %v1323 = vld [vmem:[%s1241 + $0xec] sm:$0x1]
    %v1324 = vld [vmem:[%s1241 + $0xf8] sm:$0x1]
    %v1325 = vld [vmem:[%s1241 + $0x104] sm:$0x1]
    %v1326 = vld [vmem:[%s1241 + $0x110] sm:$0x1]
    %v1327 = vld [vmem:[%s1241 + $0x11c] sm:$0x1]
    %v1328 = vld [vmem:[%s1241 + $0x128] sm:$0x1]
    %v1329 = vld [vmem:[%s1241 + $0x134] sm:$0x1]
    %v1330 = vld [vmem:[%s1241 + $0x140] sm:$0x1]
    %v1331 = vld [vmem:[%s1241 + $0x14c] sm:$0x1]
    %v1332 = vld [vmem:[%s1241 + $0x158] sm:$0x1]
    %v1333 = vld [vmem:[%s1241 + $0x164] sm:$0x1]
    %v1334 = vld [vmem:[%s1241 + $0x170] sm:$0x1]
    %v1335 = vld [vmem:[%s1241 + $0x17c] sm:$0x1]
    %v1336 = vld [vmem:[%s1241 + $0x188] sm:$0x1]
    %v1337 = vld [vmem:[%s1241 + $0x194] sm:$0x1]
    %v1339 = vshrl.u32 %v1242, 16
    %v1341 = vrot.slane %v1339, 4
    %v1342 = vshll.u32 %v1242, 16
    %v1344 = vrot.slane %v1342, 5
    %v1345 = vor.u32 %v1341, %v1344
    %v1346 = vrot.slane %v1345, 4
    %v1348 = vshll.u32 %v1243, 16
    %v1350 = vrot.slane %v1348, 5
    %v1351 = vsel %vm117, %v1346, %v1350
    %v1352 = vshrl.u32 %v1243, 16
    %v1354 = vrot.slane %v1352, 4
    %v1355 = vor.u32 %v1354, %v1350
    %v1356 = vrot.slane %v1355, 4
    %v1358 = vshll.u32 %v1306, 16
    %v1360 = vrot.slane %v1358, 5
    %v1361 = vsel %vm117, %v1356, %v1360
    %v1363 = vshrl.u32 %v1244, 16
    %v1365 = vrot.slane %v1363, 4
    %v1366 = vshll.u32 %v1244, 16
    %v1368 = vrot.slane %v1366, 5
    %v1369 = vor.u32 %v1365, %v1368
    %v1370 = vrot.slane %v1369, 4
    %v1372 = vshll.u32 %v1245, 16
    %v1374 = vrot.slane %v1372, 5
    %v1375 = vsel %vm117, %v1370, %v1374
    %v1376 = vshrl.u32 %v1245, 16
    %v1378 = vrot.slane %v1376, 4
    %v1379 = vor.u32 %v1378, %v1374
    %v1380 = vrot.slane %v1379, 4
    %v1382 = vshll.u32 %v1307, 16
    %v1384 = vrot.slane %v1382, 5
    %v1385 = vsel %vm117, %v1380, %v1384
    %v1387 = vshrl.u32 %v1246, 16
    %v1389 = vrot.slane %v1387, 4
    %v1390 = vshll.u32 %v1246, 16
    %v1392 = vrot.slane %v1390, 5
    %v1393 = vor.u32 %v1389, %v1392
    %v1394 = vrot.slane %v1393, 4
    %v1396 = vshll.u32 %v1247, 16
    %v1398 = vrot.slane %v1396, 5
    %v1399 = vsel %vm117, %v1394, %v1398
    %v1400 = vshrl.u32 %v1247, 16
    %v1402 = vrot.slane %v1400, 4
    %v1403 = vor.u32 %v1402, %v1398
    %v1404 = vrot.slane %v1403, 4
    %v1406 = vshll.u32 %v1308, 16
    %v1408 = vrot.slane %v1406, 5
    %v1409 = vsel %vm117, %v1404, %v1408
    %v1411 = vshrl.u32 %v1248, 16
    %v1413 = vrot.slane %v1411, 4
    %v1414 = vshll.u32 %v1248, 16
    %v1416 = vrot.slane %v1414, 5
    %v1417 = vor.u32 %v1413, %v1416
    %v1418 = vrot.slane %v1417, 4
    %v1420 = vshll.u32 %v1249, 16
    %v1422 = vrot.slane %v1420, 5
    %v1423 = vsel %vm117, %v1418, %v1422
    %v1424 = vshrl.u32 %v1249, 16
    %v1426 = vrot.slane %v1424, 4
    %v1427 = vor.u32 %v1426, %v1422
    %v1428 = vrot.slane %v1427, 4
    %v1430 = vshll.u32 %v1309, 16
    %v1432 = vrot.slane %v1430, 5
    %v1433 = vsel %vm117, %v1428, %v1432
    %v1435 = vshrl.u32 %v1250, 16
    %v1437 = vrot.slane %v1435, 4
    %v1438 = vshll.u32 %v1250, 16
    %v1440 = vrot.slane %v1438, 5
    %v1441 = vor.u32 %v1437, %v1440
    %v1442 = vrot.slane %v1441, 4
    %v1444 = vshll.u32 %v1251, 16
    %v1446 = vrot.slane %v1444, 5
    %v1447 = vsel %vm117, %v1442, %v1446
    %v1448 = vshrl.u32 %v1251, 16
    %v1450 = vrot.slane %v1448, 4
    %v1451 = vor.u32 %v1450, %v1446
    %v1452 = vrot.slane %v1451, 4
    %v1454 = vshll.u32 %v1310, 16
    %v1456 = vrot.slane %v1454, 5
    %v1457 = vsel %vm117, %v1452, %v1456
    %v1459 = vshrl.u32 %v1252, 16
    %v1461 = vrot.slane %v1459, 4
    %v1462 = vshll.u32 %v1252, 16
    %v1464 = vrot.slane %v1462, 5
    %v1465 = vor.u32 %v1461, %v1464
    %v1466 = vrot.slane %v1465, 4
    %v1468 = vshll.u32 %v1253, 16
    %v1470 = vrot.slane %v1468, 5
    %v1471 = vsel %vm117, %v1466, %v1470
    %v1472 = vshrl.u32 %v1253, 16
    %v1474 = vrot.slane %v1472, 4
    %v1475 = vor.u32 %v1474, %v1470
    %v1476 = vrot.slane %v1475, 4
    %v1478 = vshll.u32 %v1311, 16
    %v1480 = vrot.slane %v1478, 5
    %v1481 = vsel %vm117, %v1476, %v1480
    %v1483 = vshrl.u32 %v1254, 16
    %v1485 = vrot.slane %v1483, 4
    %v1486 = vshll.u32 %v1254, 16
    %v1488 = vrot.slane %v1486, 5
    %v1489 = vor.u32 %v1485, %v1488
    %v1490 = vrot.slane %v1489, 4
    %v1492 = vshll.u32 %v1255, 16
    %v1494 = vrot.slane %v1492, 5
    %v1495 = vsel %vm117, %v1490, %v1494
    %v1496 = vshrl.u32 %v1255, 16
    %v1498 = vrot.slane %v1496, 4
    %v1499 = vor.u32 %v1498, %v1494
    %v1500 = vrot.slane %v1499, 4
    %v1502 = vshll.u32 %v1312, 16
    %v1504 = vrot.slane %v1502, 5
    %v1505 = vsel %vm117, %v1500, %v1504
    %v1507 = vshrl.u32 %v1256, 16
    %v1509 = vrot.slane %v1507, 4
    %v1510 = vshll.u32 %v1256, 16
    %v1512 = vrot.slane %v1510, 5
    %v1513 = vor.u32 %v1509, %v1512
    %v1514 = vrot.slane %v1513, 4
    %v1516 = vshll.u32 %v1257, 16
    %v1518 = vrot.slane %v1516, 5
    %v1519 = vsel %vm117, %v1514, %v1518
    %v1520 = vshrl.u32 %v1257, 16
    %v1522 = vrot.slane %v1520, 4
    %v1523 = vor.u32 %v1522, %v1518
    %v1524 = vrot.slane %v1523, 4
    %v1526 = vshll.u32 %v1313, 16
    %v1528 = vrot.slane %v1526, 5
    %v1529 = vsel %vm117, %v1524, %v1528
    %v1531 = vshrl.u32 %v1258, 16
    %v1533 = vrot.slane %v1531, 4
    %v1534 = vshll.u32 %v1258, 16
    %v1536 = vrot.slane %v1534, 5
    %v1537 = vor.u32 %v1533, %v1536
    %v1538 = vrot.slane %v1537, 4
    %v1540 = vshll.u32 %v1259, 16
    %v1542 = vrot.slane %v1540, 5
    %v1543 = vsel %vm117, %v1538, %v1542
    %v1544 = vshrl.u32 %v1259, 16
    %v1546 = vrot.slane %v1544, 4
    %v1547 = vor.u32 %v1546, %v1542
    %v1548 = vrot.slane %v1547, 4
    %v1550 = vshll.u32 %v1314, 16
    %v1552 = vrot.slane %v1550, 5
    %v1553 = vsel %vm117, %v1548, %v1552
    %v1555 = vshrl.u32 %v1260, 16
    %v1557 = vrot.slane %v1555, 4
    %v1558 = vshll.u32 %v1260, 16
    %v1560 = vrot.slane %v1558, 5
    %v1561 = vor.u32 %v1557, %v1560
    %v1562 = vrot.slane %v1561, 4
    %v1564 = vshll.u32 %v1261, 16
    %v1566 = vrot.slane %v1564, 5
    %v1567 = vsel %vm117, %v1562, %v1566
    %v1568 = vshrl.u32 %v1261, 16
    %v1570 = vrot.slane %v1568, 4
    %v1571 = vor.u32 %v1570, %v1566
    %v1572 = vrot.slane %v1571, 4
    %v1574 = vshll.u32 %v1315, 16
    %v1576 = vrot.slane %v1574, 5
    %v1577 = vsel %vm117, %v1572, %v1576
    %v1579 = vshrl.u32 %v1262, 16
    %v1581 = vrot.slane %v1579, 4
    %v1582 = vshll.u32 %v1262, 16
    %v1584 = vrot.slane %v1582, 5
    %v1585 = vor.u32 %v1581, %v1584
    %v1586 = vrot.slane %v1585, 4
    %v1588 = vshll.u32 %v1263, 16
    %v1590 = vrot.slane %v1588, 5
    %v1591 = vsel %vm117, %v1586, %v1590
    %v1592 = vshrl.u32 %v1263, 16
    %v1594 = vrot.slane %v1592, 4
    %v1595 = vor.u32 %v1594, %v1590
    %v1596 = vrot.slane %v1595, 4
    %v1598 = vshll.u32 %v1316, 16
    %v1600 = vrot.slane %v1598, 5
    %v1601 = vsel %vm117, %v1596, %v1600
    %v1603 = vshrl.u32 %v1264, 16
    %v1605 = vrot.slane %v1603, 4
    %v1606 = vshll.u32 %v1264, 16
    %v1608 = vrot.slane %v1606, 5
    %v1609 = vor.u32 %v1605, %v1608
    %v1610 = vrot.slane %v1609, 4
    %v1612 = vshll.u32 %v1265, 16
    %v1614 = vrot.slane %v1612, 5
    %v1615 = vsel %vm117, %v1610, %v1614
    %v1616 = vshrl.u32 %v1265, 16
    %v1618 = vrot.slane %v1616, 4
    %v1619 = vor.u32 %v1618, %v1614
    %v1620 = vrot.slane %v1619, 4
    %v1622 = vshll.u32 %v1317, 16
    %v1624 = vrot.slane %v1622, 5
    %v1625 = vsel %vm117, %v1620, %v1624
    %v1627 = vshrl.u32 %v1266, 16
    %v1629 = vrot.slane %v1627, 4
    %v1630 = vshll.u32 %v1266, 16
    %v1632 = vrot.slane %v1630, 5
    %v1633 = vor.u32 %v1629, %v1632
    %v1634 = vrot.slane %v1633, 4
    %v1636 = vshll.u32 %v1267, 16
    %v1638 = vrot.slane %v1636, 5
    %v1639 = vsel %vm117, %v1634, %v1638
    %v1640 = vshrl.u32 %v1267, 16
    %v1642 = vrot.slane %v1640, 4
    %v1643 = vor.u32 %v1642, %v1638
    %v1644 = vrot.slane %v1643, 4
    %v1646 = vshll.u32 %v1318, 16
    %v1648 = vrot.slane %v1646, 5
    %v1649 = vsel %vm117, %v1644, %v1648
    %v1651 = vshrl.u32 %v1268, 16
    %v1653 = vrot.slane %v1651, 4
    %v1654 = vshll.u32 %v1268, 16
    %v1656 = vrot.slane %v1654, 5
    %v1657 = vor.u32 %v1653, %v1656
    %v1658 = vrot.slane %v1657, 4
    %v1660 = vshll.u32 %v1269, 16
    %v1662 = vrot.slane %v1660, 5
    %v1663 = vsel %vm117, %v1658, %v1662
    %v1664 = vshrl.u32 %v1269, 16
    %v1666 = vrot.slane %v1664, 4
    %v1667 = vor.u32 %v1666, %v1662
    %v1668 = vrot.slane %v1667, 4
    %v1670 = vshll.u32 %v1319, 16
    %v1672 = vrot.slane %v1670, 5
    %v1673 = vsel %vm117, %v1668, %v1672
    %v1675 = vshrl.u32 %v1270, 16
    %v1677 = vrot.slane %v1675, 4
    %v1678 = vshll.u32 %v1270, 16
    %v1680 = vrot.slane %v1678, 5
    %v1681 = vor.u32 %v1677, %v1680
    %v1682 = vrot.slane %v1681, 4
    %v1684 = vshll.u32 %v1271, 16
    %v1686 = vrot.slane %v1684, 5
    %v1687 = vsel %vm117, %v1682, %v1686
    %v1688 = vshrl.u32 %v1271, 16
    %v1690 = vrot.slane %v1688, 4
    %v1691 = vor.u32 %v1690, %v1686
    %v1692 = vrot.slane %v1691, 4
    %v1694 = vshll.u32 %v1320, 16
    %v1696 = vrot.slane %v1694, 5
    %v1697 = vsel %vm117, %v1692, %v1696
    %v1699 = vshrl.u32 %v1272, 16
    %v1701 = vrot.slane %v1699, 4
    %v1702 = vshll.u32 %v1272, 16
    %v1704 = vrot.slane %v1702, 5
    %v1705 = vor.u32 %v1701, %v1704
    %v1706 = vrot.slane %v1705, 4
    %v1708 = vshll.u32 %v1273, 16
    %v1710 = vrot.slane %v1708, 5
    %v1711 = vsel %vm117, %v1706, %v1710
    %v1712 = vshrl.u32 %v1273, 16
    %v1714 = vrot.slane %v1712, 4
    %v1715 = vor.u32 %v1714, %v1710
    %v1716 = vrot.slane %v1715, 4
    %v1718 = vshll.u32 %v1321, 16
    %v1720 = vrot.slane %v1718, 5
    %v1721 = vsel %vm117, %v1716, %v1720
    %v1723 = vshrl.u32 %v1274, 16
    %v1725 = vrot.slane %v1723, 4
    %v1726 = vshll.u32 %v1274, 16
    %v1728 = vrot.slane %v1726, 5
    %v1729 = vor.u32 %v1725, %v1728
    %v1730 = vrot.slane %v1729, 4
    %v1732 = vshll.u32 %v1275, 16
    %v1734 = vrot.slane %v1732, 5
    %v1735 = vsel %vm117, %v1730, %v1734
    %v1736 = vshrl.u32 %v1275, 16
    %v1738 = vrot.slane %v1736, 4
    %v1739 = vor.u32 %v1738, %v1734
    %v1740 = vrot.slane %v1739, 4
    %v1742 = vshll.u32 %v1322, 16
    %v1744 = vrot.slane %v1742, 5
    %v1745 = vsel %vm117, %v1740, %v1744
    %v1747 = vshrl.u32 %v1276, 16
    %v1749 = vrot.slane %v1747, 4
    %v1750 = vshll.u32 %v1276, 16
    %v1752 = vrot.slane %v1750, 5
    %v1753 = vor.u32 %v1749, %v1752
    %v1754 = vrot.slane %v1753, 4
    %v1756 = vshll.u32 %v1277, 16
    %v1758 = vrot.slane %v1756, 5
    %v1759 = vsel %vm117, %v1754, %v1758
    %v1760 = vshrl.u32 %v1277, 16
    %v1762 = vrot.slane %v1760, 4
    %v1763 = vor.u32 %v1762, %v1758
    %v1764 = vrot.slane %v1763, 4
    %v1766 = vshll.u32 %v1323, 16
    %v1768 = vrot.slane %v1766, 5
    %v1769 = vsel %vm117, %v1764, %v1768
    %v1771 = vshrl.u32 %v1278, 16
    %v1773 = vrot.slane %v1771, 4
    %v1774 = vshll.u32 %v1278, 16
    %v1776 = vrot.slane %v1774, 5
    %v1777 = vor.u32 %v1773, %v1776
    %v1778 = vrot.slane %v1777, 4
    %v1780 = vshll.u32 %v1279, 16
    %v1782 = vrot.slane %v1780, 5
    %v1783 = vsel %vm117, %v1778, %v1782
    %v1784 = vshrl.u32 %v1279, 16
    %v1786 = vrot.slane %v1784, 4
    %v1787 = vor.u32 %v1786, %v1782
    %v1788 = vrot.slane %v1787, 4
    %v1790 = vshll.u32 %v1324, 16
    %v1792 = vrot.slane %v1790, 5
    %v1793 = vsel %vm117, %v1788, %v1792
    %v1795 = vshrl.u32 %v1280, 16
    %v1797 = vrot.slane %v1795, 4
    %v1798 = vshll.u32 %v1280, 16
    %v1800 = vrot.slane %v1798, 5
    %v1801 = vor.u32 %v1797, %v1800
    %v1802 = vrot.slane %v1801, 4
    %v1804 = vshll.u32 %v1281, 16
    %v1806 = vrot.slane %v1804, 5
    %v1807 = vsel %vm117, %v1802, %v1806
    %v1808 = vshrl.u32 %v1281, 16
    %v1810 = vrot.slane %v1808, 4
    %v1811 = vor.u32 %v1810, %v1806
    %v1812 = vrot.slane %v1811, 4
    %v1814 = vshll.u32 %v1325, 16
    %v1816 = vrot.slane %v1814, 5
    %v1817 = vsel %vm117, %v1812, %v1816
    %v1819 = vshrl.u32 %v1282, 16
    %v1821 = vrot.slane %v1819, 4
    %v1822 = vshll.u32 %v1282, 16
    %v1824 = vrot.slane %v1822, 5
    %v1825 = vor.u32 %v1821, %v1824
    %v1826 = vrot.slane %v1825, 4
    %v1828 = vshll.u32 %v1283, 16
    %v1830 = vrot.slane %v1828, 5
    %v1831 = vsel %vm117, %v1826, %v1830
    %v1832 = vshrl.u32 %v1283, 16
    %v1834 = vrot.slane %v1832, 4
    %v1835 = vor.u32 %v1834, %v1830
    %v1836 = vrot.slane %v1835, 4
    %v1838 = vshll.u32 %v1326, 16
    %v1840 = vrot.slane %v1838, 5
    %v1841 = vsel %vm117, %v1836, %v1840
    %v1843 = vshrl.u32 %v1284, 16
    %v1845 = vrot.slane %v1843, 4
    %v1846 = vshll.u32 %v1284, 16
    %v1848 = vrot.slane %v1846, 5
    %v1849 = vor.u32 %v1845, %v1848
    %v1850 = vrot.slane %v1849, 4
    %v1852 = vshll.u32 %v1285, 16
    %v1854 = vrot.slane %v1852, 5
    %v1855 = vsel %vm117, %v1850, %v1854
    %v1856 = vshrl.u32 %v1285, 16
    %v1858 = vrot.slane %v1856, 4
    %v1859 = vor.u32 %v1858, %v1854
    %v1860 = vrot.slane %v1859, 4
    %v1862 = vshll.u32 %v1327, 16
    %v1864 = vrot.slane %v1862, 5
    %v1865 = vsel %vm117, %v1860, %v1864
    %v1867 = vshrl.u32 %v1286, 16
    %v1869 = vrot.slane %v1867, 4
    %v1870 = vshll.u32 %v1286, 16
    %v1872 = vrot.slane %v1870, 5
    %v1873 = vor.u32 %v1869, %v1872
    %v1874 = vrot.slane %v1873, 4
    %v1876 = vshll.u32 %v1287, 16
    %v1878 = vrot.slane %v1876, 5
    %v1879 = vsel %vm117, %v1874, %v1878
    %v1880 = vshrl.u32 %v1287, 16
    %v1882 = vrot.slane %v1880, 4
    %v1883 = vor.u32 %v1882, %v1878
    %v1884 = vrot.slane %v1883, 4
    %v1886 = vshll.u32 %v1328, 16
    %v1888 = vrot.slane %v1886, 5
    %v1889 = vsel %vm117, %v1884, %v1888
    %v1891 = vshrl.u32 %v1288, 16
    %v1893 = vrot.slane %v1891, 4
    %v1894 = vshll.u32 %v1288, 16
    %v1896 = vrot.slane %v1894, 5
    %v1897 = vor.u32 %v1893, %v1896
    %v1898 = vrot.slane %v1897, 4
    %v1900 = vshll.u32 %v1289, 16
    %v1902 = vrot.slane %v1900, 5
    %v1903 = vsel %vm117, %v1898, %v1902
    %v1904 = vshrl.u32 %v1289, 16
    %v1906 = vrot.slane %v1904, 4
    %v1907 = vor.u32 %v1906, %v1902
    %v1908 = vrot.slane %v1907, 4
    %v1910 = vshll.u32 %v1329, 16
    %v1912 = vrot.slane %v1910, 5
    %v1913 = vsel %vm117, %v1908, %v1912
    %v1915 = vshrl.u32 %v1290, 16
    %v1917 = vrot.slane %v1915, 4
    %v1918 = vshll.u32 %v1290, 16
    %v1920 = vrot.slane %v1918, 5
    %v1921 = vor.u32 %v1917, %v1920
    %v1922 = vrot.slane %v1921, 4
    %v1924 = vshll.u32 %v1291, 16
    %v1926 = vrot.slane %v1924, 5
    %v1927 = vsel %vm117, %v1922, %v1926
    %v1928 = vshrl.u32 %v1291, 16
    %v1930 = vrot.slane %v1928, 4
    %v1931 = vor.u32 %v1930, %v1926
    %v1932 = vrot.slane %v1931, 4
    %v1934 = vshll.u32 %v1330, 16
    %v1936 = vrot.slane %v1934, 5
    %v1937 = vsel %vm117, %v1932, %v1936
    %v1939 = vshrl.u32 %v1292, 16
    %v1941 = vrot.slane %v1939, 4
    %v1942 = vshll.u32 %v1292, 16
    %v1944 = vrot.slane %v1942, 5
    %v1945 = vor.u32 %v1941, %v1944
    %v1946 = vrot.slane %v1945, 4
    %v1948 = vshll.u32 %v1293, 16
    %v1950 = vrot.slane %v1948, 5
    %v1951 = vsel %vm117, %v1946, %v1950
    %v1952 = vshrl.u32 %v1293, 16
    %v1954 = vrot.slane %v1952, 4
    %v1955 = vor.u32 %v1954, %v1950
    %v1956 = vrot.slane %v1955, 4
    %v1958 = vshll.u32 %v1331, 16
    %v1960 = vrot.slane %v1958, 5
    %v1961 = vsel %vm117, %v1956, %v1960
    %v1963 = vshrl.u32 %v1294, 16
    %v1965 = vrot.slane %v1963, 4
    %v1966 = vshll.u32 %v1294, 16
    %v1968 = vrot.slane %v1966, 5
    %v1969 = vor.u32 %v1965, %v1968
    %v1970 = vrot.slane %v1969, 4
    %v1972 = vshll.u32 %v1295, 16
    %v1974 = vrot.slane %v1972, 5
    %v1975 = vsel %vm117, %v1970, %v1974
    %v1976 = vshrl.u32 %v1295, 16
    %v1978 = vrot.slane %v1976, 4
    %v1979 = vor.u32 %v1978, %v1974
    %v1980 = vrot.slane %v1979, 4
    %v1982 = vshll.u32 %v1332, 16
    %v1984 = vrot.slane %v1982, 5
    %v1985 = vsel %vm117, %v1980, %v1984
    %v1987 = vshrl.u32 %v1296, 16
    %v1989 = vrot.slane %v1987, 4
    %v1990 = vshll.u32 %v1296, 16
    %v1992 = vrot.slane %v1990, 5
    %v1993 = vor.u32 %v1989, %v1992
    %v1994 = vrot.slane %v1993, 4
    %v1996 = vshll.u32 %v1297, 16
    %v1998 = vrot.slane %v1996, 5
    %v1999 = vsel %vm117, %v1994, %v1998
    %v2000 = vshrl.u32 %v1297, 16
    %v2002 = vrot.slane %v2000, 4
    %v2003 = vor.u32 %v2002, %v1998
    %v2004 = vrot.slane %v2003, 4
    %v2006 = vshll.u32 %v1333, 16
    %v2008 = vrot.slane %v2006, 5
    %v2009 = vsel %vm117, %v2004, %v2008
    %v2011 = vshrl.u32 %v1298, 16
    %v2013 = vrot.slane %v2011, 4
    %v2014 = vshll.u32 %v1298, 16
    %v2016 = vrot.slane %v2014, 5
    %v2017 = vor.u32 %v2013, %v2016
    %v2018 = vrot.slane %v2017, 4
    %v2020 = vshll.u32 %v1299, 16
    %v2022 = vrot.slane %v2020, 5
    %v2023 = vsel %vm117, %v2018, %v2022
    %v2024 = vshrl.u32 %v1299, 16
    %v2026 = vrot.slane %v2024, 4
    %v2027 = vor.u32 %v2026, %v2022
    %v2028 = vrot.slane %v2027, 4
    %v2030 = vshll.u32 %v1334, 16
    %v2032 = vrot.slane %v2030, 5
    %v2033 = vsel %vm117, %v2028, %v2032
    %v2035 = vshrl.u32 %v1300, 16
    %v2037 = vrot.slane %v2035, 4
    %v2038 = vshll.u32 %v1300, 16
    %v2040 = vrot.slane %v2038, 5
    %v2041 = vor.u32 %v2037, %v2040
    %v2042 = vrot.slane %v2041, 4
    %v2044 = vshll.u32 %v1301, 16
    %v2046 = vrot.slane %v2044, 5
    %v2047 = vsel %vm117, %v2042, %v2046
    %v2048 = vshrl.u32 %v1301, 16
    %v2050 = vrot.slane %v2048, 4
    %v2051 = vor.u32 %v2050, %v2046
    %v2052 = vrot.slane %v2051, 4
    %v2054 = vshll.u32 %v1335, 16
    %v2056 = vrot.slane %v2054, 5
    %v2057 = vsel %vm117, %v2052, %v2056
    %v2059 = vshrl.u32 %v1302, 16
    %v2061 = vrot.slane %v2059, 4
    %v2062 = vshll.u32 %v1302, 16
    %v2064 = vrot.slane %v2062, 5
    %v2065 = vor.u32 %v2061, %v2064
    %v2066 = vrot.slane %v2065, 4
    %v2068 = vshll.u32 %v1303, 16
    %v2070 = vrot.slane %v2068, 5
    %v2071 = vsel %vm117, %v2066, %v2070
    %v2072 = vshrl.u32 %v1303, 16
    %v2074 = vrot.slane %v2072, 4
    %v2075 = vor.u32 %v2074, %v2070
    %v2076 = vrot.slane %v2075, 4
    %v2078 = vshll.u32 %v1336, 16
    %v2080 = vrot.slane %v2078, 5
    %v2081 = vsel %vm117, %v2076, %v2080
    %v2083 = vshrl.u32 %v1304, 16
    %v2085 = vrot.slane %v2083, 4
    %v2086 = vshll.u32 %v1304, 16
    %v2088 = vrot.slane %v2086, 5
    %v2089 = vor.u32 %v2085, %v2088
    %v2090 = vrot.slane %v2089, 4
    %v2092 = vshll.u32 %v1305, 16
    %v2094 = vrot.slane %v2092, 5
    %v2095 = vsel %vm117, %v2090, %v2094
    %v2096 = vshrl.u32 %v1305, 16
    %v2098 = vrot.slane %v2096, 4
    %v2099 = vor.u32 %v2098, %v2094
    %v2100 = vrot.slane %v2099, 4
    %v2102 = vshll.u32 %v1337, 16
    %v2104 = vrot.slane %v2102, 5
    %v2105 = vsel %vm117, %v2100, %v2104
    %v2106 = vld [vmem:[%s1241] sm:$0xe]
    %v2107 = vld [vmem:[%s1241 + $0xc] sm:$0xe]
    %v2108 = vld [vmem:[%s1241 + $0x18] sm:$0xe]
    %v2109 = vld [vmem:[%s1241 + $0x24] sm:$0xe]
    %v2110 = vld [vmem:[%s1241 + $0x30] sm:$0xe]
    %v2111 = vld [vmem:[%s1241 + $0x3c] sm:$0xe]
    %v2112 = vld [vmem:[%s1241 + $0x48] sm:$0xe]
    %v2113 = vld [vmem:[%s1241 + $0x54] sm:$0xe]
    %v2114 = vld [vmem:[%s1241 + $0x60] sm:$0xe]
    %v2115 = vld [vmem:[%s1241 + $0x6c] sm:$0xe]
    %v2116 = vld [vmem:[%s1241 + $0x78] sm:$0xe]
    %v2117 = vld [vmem:[%s1241 + $0x84] sm:$0xe]
    %v2118 = vld [vmem:[%s1241 + $0x90] sm:$0xe]
    %v2119 = vld [vmem:[%s1241 + $0x9c] sm:$0xe]
    %v2120 = vld [vmem:[%s1241 + $0xa8] sm:$0xe]
    %v2121 = vld [vmem:[%s1241 + $0xb4] sm:$0xe]
    %v2122 = vld [vmem:[%s1241 + $0xd8] sm:$0xe]
    %v2123 = vld [vmem:[%s1241 + $0xe4] sm:$0xe]
    %v2124 = vld [vmem:[%s1241 + $0xf0] sm:$0xe]
    %v2125 = vld [vmem:[%s1241 + $0xfc] sm:$0xe]
    %v2126 = vld [vmem:[%s1241 + $0x108] sm:$0xe]
    %v2127 = vld [vmem:[%s1241 + $0x114] sm:$0xe]
    %v2128 = vld [vmem:[%s1241 + $0x120] sm:$0xe]
    %v2129 = vld [vmem:[%s1241 + $0x12c] sm:$0xe]
    %v2130 = vld [vmem:[%s1241 + $0x138] sm:$0xe]
    %v2131 = vld [vmem:[%s1241 + $0x144] sm:$0xe]
    %v2132 = vld [vmem:[%s1241 + $0x150] sm:$0xe]
    %v2133 = vld [vmem:[%s1241 + $0x15c] sm:$0xe]
    %v2134 = vld [vmem:[%s1241 + $0x168] sm:$0xe]
    %v2135 = vld [vmem:[%s1241 + $0x174] sm:$0xe]
    %v2136 = vld [vmem:[%s1241 + $0x180] sm:$0xe]
    %v2137 = vld [vmem:[%s1241 + $0x18c] sm:$0xe]
    %v2234 = vrot.slane %v2106, 5
    %v2235 = vrot.slane %v2234, 4
    %v2236 = vrot.slane %v1243, 5
    %v2237 = vsel %vm1016, %v2235, %v2236
    %v2238 = vrot.slane %v2236, 4
    %v2239 = vrot.slane %v1306, 5
    %v2240 = vsel %vm1016, %v2238, %v2239
    %v2241 = vrot.slane %v2107, 5
    %v2242 = vrot.slane %v2241, 4
    %v2243 = vrot.slane %v1245, 5
    %v2244 = vsel %vm1016, %v2242, %v2243
    %v2245 = vrot.slane %v2243, 4
    %v2246 = vrot.slane %v1307, 5
    %v2247 = vsel %vm1016, %v2245, %v2246
    %v2248 = vrot.slane %v2108, 5
    %v2249 = vrot.slane %v2248, 4
    %v2250 = vrot.slane %v1247, 5
    %v2251 = vsel %vm1016, %v2249, %v2250
    %v2252 = vrot.slane %v2250, 4
    %v2253 = vrot.slane %v1308, 5
    %v2254 = vsel %vm1016, %v2252, %v2253
    %v2255 = vrot.slane %v2109, 5
    %v2256 = vrot.slane %v2255, 4
    %v2257 = vrot.slane %v1249, 5
    %v2258 = vsel %vm1016, %v2256, %v2257
    %v2259 = vrot.slane %v2257, 4
    %v2260 = vrot.slane %v1309, 5
    %v2261 = vsel %vm1016, %v2259, %v2260
    %v2262 = vrot.slane %v2110, 5
    %v2263 = vrot.slane %v2262, 4
    %v2264 = vrot.slane %v1251, 5
    %v2265 = vsel %vm1016, %v2263, %v2264
    %v2266 = vrot.slane %v2264, 4
    %v2267 = vrot.slane %v1310, 5
    %v2268 = vsel %vm1016, %v2266, %v2267
    %v2269 = vrot.slane %v2111, 5
    %v2270 = vrot.slane %v2269, 4
    %v2271 = vrot.slane %v1253, 5
    %v2272 = vsel %vm1016, %v2270, %v2271
    %v2273 = vrot.slane %v2271, 4
    %v2274 = vrot.slane %v1311, 5
    %v2275 = vsel %vm1016, %v2273, %v2274
    %v2276 = vrot.slane %v2112, 5
    %v2277 = vrot.slane %v2276, 4
    %v2278 = vrot.slane %v1255, 5
    %v2279 = vsel %vm1016, %v2277, %v2278
    %v2280 = vrot.slane %v2278, 4
    %v2281 = vrot.slane %v1312, 5
    %v2282 = vsel %vm1016, %v2280, %v2281
    %v2283 = vrot.slane %v2113, 5
    %v2284 = vrot.slane %v2283, 4
    %v2285 = vrot.slane %v1257, 5
    %v2286 = vsel %vm1016, %v2284, %v2285
    %v2287 = vrot.slane %v2285, 4
    %v2288 = vrot.slane %v1313, 5
    %v2289 = vsel %vm1016, %v2287, %v2288
    %v2290 = vrot.slane %v2114, 5
    %v2291 = vrot.slane %v2290, 4
    %v2292 = vrot.slane %v1259, 5
    %v2293 = vsel %vm1016, %v2291, %v2292
    %v2294 = vrot.slane %v2292, 4
    %v2295 = vrot.slane %v1314, 5
    %v2296 = vsel %vm1016, %v2294, %v2295
    %v2297 = vrot.slane %v2115, 5
    %v2298 = vrot.slane %v2297, 4
    %v2299 = vrot.slane %v1261, 5
    %v2300 = vsel %vm1016, %v2298, %v2299
    %v2301 = vrot.slane %v2299, 4
    %v2302 = vrot.slane %v1315, 5
    %v2303 = vsel %vm1016, %v2301, %v2302
    %v2304 = vrot.slane %v2116, 5
    %v2305 = vrot.slane %v2304, 4
    %v2306 = vrot.slane %v1263, 5
    %v2307 = vsel %vm1016, %v2305, %v2306
    %v2308 = vrot.slane %v2306, 4
    %v2309 = vrot.slane %v1316, 5
    %v2310 = vsel %vm1016, %v2308, %v2309
    %v2311 = vrot.slane %v2117, 5
    %v2312 = vrot.slane %v2311, 4
    %v2313 = vrot.slane %v1265, 5
    %v2314 = vsel %vm1016, %v2312, %v2313
    %v2315 = vrot.slane %v2313, 4
    %v2316 = vrot.slane %v1317, 5
    %v2317 = vsel %vm1016, %v2315, %v2316
    %v2318 = vrot.slane %v2118, 5
    %v2319 = vrot.slane %v2318, 4
    %v2320 = vrot.slane %v1267, 5
    %v2321 = vsel %vm1016, %v2319, %v2320
    %v2322 = vrot.slane %v2320, 4
    %v2323 = vrot.slane %v1318, 5
    %v2324 = vsel %vm1016, %v2322, %v2323
    %v2325 = vrot.slane %v2119, 5
    %v2326 = vrot.slane %v2325, 4
    %v2327 = vrot.slane %v1269, 5
    %v2328 = vsel %vm1016, %v2326, %v2327
    %v2329 = vrot.slane %v2327, 4
    %v2330 = vrot.slane %v1319, 5
    %v2331 = vsel %vm1016, %v2329, %v2330
    %v2332 = vrot.slane %v2120, 5
    %v2333 = vrot.slane %v2332, 4
    %v2334 = vrot.slane %v1271, 5
    %v2335 = vsel %vm1016, %v2333, %v2334
    %v2336 = vrot.slane %v2334, 4
    %v2337 = vrot.slane %v1320, 5
    %v2338 = vsel %vm1016, %v2336, %v2337
    %v2339 = vrot.slane %v2121, 5
    %v2340 = vrot.slane %v2339, 4
    %v2341 = vrot.slane %v1273, 5
    %v2342 = vsel %vm1016, %v2340, %v2341
    %v2343 = vrot.slane %v2341, 4
    %v2344 = vrot.slane %v1321, 5
    %v2345 = vsel %vm1016, %v2343, %v2344
    %v2346 = vrot.slane %v2122, 5
    %v2347 = vrot.slane %v2346, 4
    %v2348 = vrot.slane %v1275, 5
    %v2349 = vsel %vm1016, %v2347, %v2348
    %v2350 = vrot.slane %v2348, 4
    %v2351 = vrot.slane %v1322, 5
    %v2352 = vsel %vm1016, %v2350, %v2351
    %v2353 = vrot.slane %v2123, 5
    %v2354 = vrot.slane %v2353, 4
    %v2355 = vrot.slane %v1277, 5
    %v2356 = vsel %vm1016, %v2354, %v2355
    %v2357 = vrot.slane %v2355, 4
    %v2358 = vrot.slane %v1323, 5
    %v2359 = vsel %vm1016, %v2357, %v2358
    %v2360 = vrot.slane %v2124, 5
    %v2361 = vrot.slane %v2360, 4
    %v2362 = vrot.slane %v1279, 5
    %v2363 = vsel %vm1016, %v2361, %v2362
    %v2364 = vrot.slane %v2362, 4
    %v2365 = vrot.slane %v1324, 5
    %v2366 = vsel %vm1016, %v2364, %v2365
    %v2367 = vrot.slane %v2125, 5
    %v2368 = vrot.slane %v2367, 4
    %v2369 = vrot.slane %v1281, 5
    %v2370 = vsel %vm1016, %v2368, %v2369
    %v2371 = vrot.slane %v2369, 4
    %v2372 = vrot.slane %v1325, 5
    %v2373 = vsel %vm1016, %v2371, %v2372
    %v2374 = vrot.slane %v2126, 5
    %v2375 = vrot.slane %v2374, 4
    %v2376 = vrot.slane %v1283, 5
    %v2377 = vsel %vm1016, %v2375, %v2376
    %v2378 = vrot.slane %v2376, 4
    %v2379 = vrot.slane %v1326, 5
    %v2380 = vsel %vm1016, %v2378, %v2379
    %v2381 = vrot.slane %v2127, 5
    %v2382 = vrot.slane %v2381, 4
    %v2383 = vrot.slane %v1285, 5
    %v2384 = vsel %vm1016, %v2382, %v2383
    %v2385 = vrot.slane %v2383, 4
    %v2386 = vrot.slane %v1327, 5
    %v2387 = vsel %vm1016, %v2385, %v2386
    %v2388 = vrot.slane %v2128, 5
    %v2389 = vrot.slane %v2388, 4
    %v2390 = vrot.slane %v1287, 5
    %v2391 = vsel %vm1016, %v2389, %v2390
    %v2392 = vrot.slane %v2390, 4
    %v2393 = vrot.slane %v1328, 5
    %v2394 = vsel %vm1016, %v2392, %v2393
    %v2395 = vrot.slane %v2129, 5
    %v2396 = vrot.slane %v2395, 4
    %v2397 = vrot.slane %v1289, 5
    %v2398 = vsel %vm1016, %v2396, %v2397
    %v2399 = vrot.slane %v2397, 4
    %v2400 = vrot.slane %v1329, 5
    %v2401 = vsel %vm1016, %v2399, %v2400
    %v2402 = vrot.slane %v2130, 5
    %v2403 = vrot.slane %v2402, 4
    %v2404 = vrot.slane %v1291, 5
    %v2405 = vsel %vm1016, %v2403, %v2404
    %v2406 = vrot.slane %v2404, 4
    %v2407 = vrot.slane %v1330, 5
    %v2408 = vsel %vm1016, %v2406, %v2407
    %v2409 = vrot.slane %v2131, 5
    %v2410 = vrot.slane %v2409, 4
    %v2411 = vrot.slane %v1293, 5
    %v2412 = vsel %vm1016, %v2410, %v2411
    %v2413 = vrot.slane %v2411, 4
    %v2414 = vrot.slane %v1331, 5
    %v2415 = vsel %vm1016, %v2413, %v2414
    %v2416 = vrot.slane %v2132, 5
    %v2417 = vrot.slane %v2416, 4
    %v2418 = vrot.slane %v1295, 5
    %v2419 = vsel %vm1016, %v2417, %v2418
    %v2420 = vrot.slane %v2418, 4
    %v2421 = vrot.slane %v1332, 5
    %v2422 = vsel %vm1016, %v2420, %v2421
    %v2423 = vrot.slane %v2133, 5
    %v2424 = vrot.slane %v2423, 4
    %v2425 = vrot.slane %v1297, 5
    %v2426 = vsel %vm1016, %v2424, %v2425
    %v2427 = vrot.slane %v2425, 4
    %v2428 = vrot.slane %v1333, 5
    %v2429 = vsel %vm1016, %v2427, %v2428
    %v2430 = vrot.slane %v2134, 5
    %v2431 = vrot.slane %v2430, 4
    %v2432 = vrot.slane %v1299, 5
    %v2433 = vsel %vm1016, %v2431, %v2432
    %v2434 = vrot.slane %v2432, 4
    %v2435 = vrot.slane %v1334, 5
    %v2436 = vsel %vm1016, %v2434, %v2435
    %v2437 = vrot.slane %v2135, 5
    %v2438 = vrot.slane %v2437, 4
    %v2439 = vrot.slane %v1301, 5
    %v2440 = vsel %vm1016, %v2438, %v2439
    %v2441 = vrot.slane %v2439, 4
    %v2442 = vrot.slane %v1335, 5
    %v2443 = vsel %vm1016, %v2441, %v2442
    %v2444 = vrot.slane %v2136, 5
    %v2445 = vrot.slane %v2444, 4
    %v2446 = vrot.slane %v1303, 5
    %v2447 = vsel %vm1016, %v2445, %v2446
    %v2448 = vrot.slane %v2446, 4
    %v2449 = vrot.slane %v1336, 5
    %v2450 = vsel %vm1016, %v2448, %v2449
    %v2451 = vrot.slane %v2137, 5
    %v2452 = vrot.slane %v2451, 4
    %v2453 = vrot.slane %v1305, 5
    %v2454 = vsel %vm1016, %v2452, %v2453
    %v2455 = vrot.slane %v2453, 4
    %v2456 = vrot.slane %v1337, 5
    %v2457 = vsel %vm1016, %v2455, %v2456
    %s2458 = scalar_lea.vmem %s0, 24
    %v2459 = vld [vmem:[%s2458] sm:$0xf]
    %v2460 = vld [vmem:[%s2458 + $0x4] sm:$0xf]
    %v2461 = vld [vmem:[%s2458 + $0xc] sm:$0xf]
    %v2462 = vld [vmem:[%s2458 + $0x10] sm:$0xf]
    %v2463 = vld [vmem:[%s2458 + $0x18] sm:$0xf]
    %v2464 = vld [vmem:[%s2458 + $0x1c] sm:$0xf]
    %v2465 = vld [vmem:[%s2458 + $0x24] sm:$0xf]
    %v2466 = vld [vmem:[%s2458 + $0x28] sm:$0xf]
    %v2467 = vld [vmem:[%s2458 + $0x30] sm:$0xf]
    %v2468 = vld [vmem:[%s2458 + $0x34] sm:$0xf]
    %v2469 = vld [vmem:[%s2458 + $0x3c] sm:$0xf]
    %v2470 = vld [vmem:[%s2458 + $0x40] sm:$0xf]
    %v2471 = vld [vmem:[%s2458 + $0x48] sm:$0xf]
    %v2472 = vld [vmem:[%s2458 + $0x4c] sm:$0xf]
    %v2473 = vld [vmem:[%s2458 + $0x54] sm:$0xf]
    %v2474 = vld [vmem:[%s2458 + $0x58] sm:$0xf]
    %v2475 = vld [vmem:[%s2458 + $0x60] sm:$0xf]
    %v2476 = vld [vmem:[%s2458 + $0x64] sm:$0xf]
    %v2477 = vld [vmem:[%s2458 + $0x6c] sm:$0xf]
    %v2478 = vld [vmem:[%s2458 + $0x70] sm:$0xf]
    %v2479 = vld [vmem:[%s2458 + $0x78] sm:$0xf]
    %v2480 = vld [vmem:[%s2458 + $0x7c] sm:$0xf]
    %v2481 = vld [vmem:[%s2458 + $0x84] sm:$0xf]
    %v2482 = vld [vmem:[%s2458 + $0x88] sm:$0xf]
    %v2483 = vld [vmem:[%s2458 + $0x90] sm:$0xf]
    %v2484 = vld [vmem:[%s2458 + $0x94] sm:$0xf]
    %v2485 = vld [vmem:[%s2458 + $0x9c] sm:$0xf]
    %v2486 = vld [vmem:[%s2458 + $0xa0] sm:$0xf]
    %v2487 = vld [vmem:[%s2458 + $0xa8] sm:$0xf]
    %v2488 = vld [vmem:[%s2458 + $0xac] sm:$0xf]
    %v2489 = vld [vmem:[%s2458 + $0xb4] sm:$0xf]
    %v2490 = vld [vmem:[%s2458 + $0xb8] sm:$0xf]
    %v2491 = vld [vmem:[%s2458 + $0xd8] sm:$0xf]
    %v2492 = vld [vmem:[%s2458 + $0xdc] sm:$0xf]
    %v2493 = vld [vmem:[%s2458 + $0xe4] sm:$0xf]
    %v2494 = vld [vmem:[%s2458 + $0xe8] sm:$0xf]
    %v2495 = vld [vmem:[%s2458 + $0xf0] sm:$0xf]
    %v2496 = vld [vmem:[%s2458 + $0xf4] sm:$0xf]
    %v2497 = vld [vmem:[%s2458 + $0xfc] sm:$0xf]
    %v2498 = vld [vmem:[%s2458 + $0x100] sm:$0xf]
    %v2499 = vld [vmem:[%s2458 + $0x108] sm:$0xf]
    %v2500 = vld [vmem:[%s2458 + $0x10c] sm:$0xf]
    %v2501 = vld [vmem:[%s2458 + $0x114] sm:$0xf]
    %v2502 = vld [vmem:[%s2458 + $0x118] sm:$0xf]
    %v2503 = vld [vmem:[%s2458 + $0x120] sm:$0xf]
    %v2504 = vld [vmem:[%s2458 + $0x124] sm:$0xf]
    %v2505 = vld [vmem:[%s2458 + $0x12c] sm:$0xf]
    %v2506 = vld [vmem:[%s2458 + $0x130] sm:$0xf]
    %v2507 = vld [vmem:[%s2458 + $0x138] sm:$0xf]
    %v2508 = vld [vmem:[%s2458 + $0x13c] sm:$0xf]
    %v2509 = vld [vmem:[%s2458 + $0x144] sm:$0xf]
    %v2510 = vld [vmem:[%s2458 + $0x148] sm:$0xf]
    %v2511 = vld [vmem:[%s2458 + $0x150] sm:$0xf]
    %v2512 = vld [vmem:[%s2458 + $0x154] sm:$0xf]
    %v2513 = vld [vmem:[%s2458 + $0x15c] sm:$0xf]
    %v2514 = vld [vmem:[%s2458 + $0x160] sm:$0xf]
    %v2515 = vld [vmem:[%s2458 + $0x168] sm:$0xf]
    %v2516 = vld [vmem:[%s2458 + $0x16c] sm:$0xf]
    %v2517 = vld [vmem:[%s2458 + $0x174] sm:$0xf]
    %v2518 = vld [vmem:[%s2458 + $0x178] sm:$0xf]
    %v2519 = vld [vmem:[%s2458 + $0x180] sm:$0xf]
    %v2520 = vld [vmem:[%s2458 + $0x184] sm:$0xf]
    %v2521 = vld [vmem:[%s2458 + $0x18c] sm:$0xf]
    %v2522 = vld [vmem:[%s2458 + $0x190] sm:$0xf]
    %v2523 = vld [vmem:[%s2458 + $0x8] sm:$0x1]
    %v2524 = vld [vmem:[%s2458 + $0x14] sm:$0x1]
    %v2525 = vld [vmem:[%s2458 + $0x20] sm:$0x1]
    %v2526 = vld [vmem:[%s2458 + $0x2c] sm:$0x1]
    %v2527 = vld [vmem:[%s2458 + $0x38] sm:$0x1]
    %v2528 = vld [vmem:[%s2458 + $0x44] sm:$0x1]
    %v2529 = vld [vmem:[%s2458 + $0x50] sm:$0x1]
    %v2530 = vld [vmem:[%s2458 + $0x5c] sm:$0x1]
    %v2531 = vld [vmem:[%s2458 + $0x68] sm:$0x1]
    %v2532 = vld [vmem:[%s2458 + $0x74] sm:$0x1]
    %v2533 = vld [vmem:[%s2458 + $0x80] sm:$0x1]
    %v2534 = vld [vmem:[%s2458 + $0x8c] sm:$0x1]
    %v2535 = vld [vmem:[%s2458 + $0x98] sm:$0x1]
    %v2536 = vld [vmem:[%s2458 + $0xa4] sm:$0x1]
    %v2537 = vld [vmem:[%s2458 + $0xb0] sm:$0x1]
    %v2538 = vld [vmem:[%s2458 + $0xbc] sm:$0x1]
    %v2539 = vld [vmem:[%s2458 + $0xe0] sm:$0x1]
    %v2540 = vld [vmem:[%s2458 + $0xec] sm:$0x1]
    %v2541 = vld [vmem:[%s2458 + $0xf8] sm:$0x1]
    %v2542 = vld [vmem:[%s2458 + $0x104] sm:$0x1]
    %v2543 = vld [vmem:[%s2458 + $0x110] sm:$0x1]
    %v2544 = vld [vmem:[%s2458 + $0x11c] sm:$0x1]
    %v2545 = vld [vmem:[%s2458 + $0x128] sm:$0x1]
    %v2546 = vld [vmem:[%s2458 + $0x134] sm:$0x1]
    %v2547 = vld [vmem:[%s2458 + $0x140] sm:$0x1]
    %v2548 = vld [vmem:[%s2458 + $0x14c] sm:$0x1]
    %v2549 = vld [vmem:[%s2458 + $0x158] sm:$0x1]
    %v2550 = vld [vmem:[%s2458 + $0x164] sm:$0x1]
    %v2551 = vld [vmem:[%s2458 + $0x170] sm:$0x1]
    %v2552 = vld [vmem:[%s2458 + $0x17c] sm:$0x1]
    %v2553 = vld [vmem:[%s2458 + $0x188] sm:$0x1]
    %v2554 = vld [vmem:[%s2458 + $0x194] sm:$0x1]
    %v2556 = vshrl.u32 %v2459, 16
    %v2558 = vrot.slane %v2556, 4
    %v2559 = vshll.u32 %v2459, 16
    %v2561 = vrot.slane %v2559, 5
    %v2562 = vor.u32 %v2558, %v2561
    %v2563 = vrot.slane %v2562, 4
    %v2565 = vshll.u32 %v2460, 16
    %v2567 = vrot.slane %v2565, 5
    %v2568 = vsel %vm117, %v2563, %v2567
    %v2569 = vshrl.u32 %v2460, 16
    %v2571 = vrot.slane %v2569, 4
    %v2572 = vor.u32 %v2571, %v2567
    %v2573 = vrot.slane %v2572, 4
    %v2575 = vshll.u32 %v2523, 16
    %v2577 = vrot.slane %v2575, 5
    %v2578 = vsel %vm117, %v2573, %v2577
    %v2580 = vshrl.u32 %v2461, 16
    %v2582 = vrot.slane %v2580, 4
    %v2583 = vshll.u32 %v2461, 16
    %v2585 = vrot.slane %v2583, 5
    %v2586 = vor.u32 %v2582, %v2585
    %v2587 = vrot.slane %v2586, 4
    %v2589 = vshll.u32 %v2462, 16
    %v2591 = vrot.slane %v2589, 5
    %v2592 = vsel %vm117, %v2587, %v2591
    %v2593 = vshrl.u32 %v2462, 16
    %v2595 = vrot.slane %v2593, 4
    %v2596 = vor.u32 %v2595, %v2591
    %v2597 = vrot.slane %v2596, 4
    %v2599 = vshll.u32 %v2524, 16
    %v2601 = vrot.slane %v2599, 5
    %v2602 = vsel %vm117, %v2597, %v2601
    %v2604 = vshrl.u32 %v2463, 16
    %v2606 = vrot.slane %v2604, 4
    %v2607 = vshll.u32 %v2463, 16
    %v2609 = vrot.slane %v2607, 5
    %v2610 = vor.u32 %v2606, %v2609
    %v2611 = vrot.slane %v2610, 4
    %v2613 = vshll.u32 %v2464, 16
    %v2615 = vrot.slane %v2613, 5
    %v2616 = vsel %vm117, %v2611, %v2615
    %v2617 = vshrl.u32 %v2464, 16
    %v2619 = vrot.slane %v2617, 4
    %v2620 = vor.u32 %v2619, %v2615
    %v2621 = vrot.slane %v2620, 4
    %v2623 = vshll.u32 %v2525, 16
    %v2625 = vrot.slane %v2623, 5
    %v2626 = vsel %vm117, %v2621, %v2625
    %v2628 = vshrl.u32 %v2465, 16
    %v2630 = vrot.slane %v2628, 4
    %v2631 = vshll.u32 %v2465, 16
    %v2633 = vrot.slane %v2631, 5
    %v2634 = vor.u32 %v2630, %v2633
    %v2635 = vrot.slane %v2634, 4
    %v2637 = vshll.u32 %v2466, 16
    %v2639 = vrot.slane %v2637, 5
    %v2640 = vsel %vm117, %v2635, %v2639
    %v2641 = vshrl.u32 %v2466, 16
    %v2643 = vrot.slane %v2641, 4
    %v2644 = vor.u32 %v2643, %v2639
    %v2645 = vrot.slane %v2644, 4
    %v2647 = vshll.u32 %v2526, 16
    %v2649 = vrot.slane %v2647, 5
    %v2650 = vsel %vm117, %v2645, %v2649
    %v2652 = vshrl.u32 %v2467, 16
    %v2654 = vrot.slane %v2652, 4
    %v2655 = vshll.u32 %v2467, 16
    %v2657 = vrot.slane %v2655, 5
    %v2658 = vor.u32 %v2654, %v2657
    %v2659 = vrot.slane %v2658, 4
    %v2661 = vshll.u32 %v2468, 16
    %v2663 = vrot.slane %v2661, 5
    %v2664 = vsel %vm117, %v2659, %v2663
    %v2665 = vshrl.u32 %v2468, 16
    %v2667 = vrot.slane %v2665, 4
    %v2668 = vor.u32 %v2667, %v2663
    %v2669 = vrot.slane %v2668, 4
    %v2671 = vshll.u32 %v2527, 16
    %v2673 = vrot.slane %v2671, 5
    %v2674 = vsel %vm117, %v2669, %v2673
    %v2676 = vshrl.u32 %v2469, 16
    %v2678 = vrot.slane %v2676, 4
    %v2679 = vshll.u32 %v2469, 16
    %v2681 = vrot.slane %v2679, 5
    %v2682 = vor.u32 %v2678, %v2681
    %v2683 = vrot.slane %v2682, 4
    %v2685 = vshll.u32 %v2470, 16
    %v2687 = vrot.slane %v2685, 5
    %v2688 = vsel %vm117, %v2683, %v2687
    %v2689 = vshrl.u32 %v2470, 16
    %v2691 = vrot.slane %v2689, 4
    %v2692 = vor.u32 %v2691, %v2687
    %v2693 = vrot.slane %v2692, 4
    %v2695 = vshll.u32 %v2528, 16
    %v2697 = vrot.slane %v2695, 5
    %v2698 = vsel %vm117, %v2693, %v2697
    %v2700 = vshrl.u32 %v2471, 16
    %v2702 = vrot.slane %v2700, 4
    %v2703 = vshll.u32 %v2471, 16
    %v2705 = vrot.slane %v2703, 5
    %v2706 = vor.u32 %v2702, %v2705
    %v2707 = vrot.slane %v2706, 4
    %v2709 = vshll.u32 %v2472, 16
    %v2711 = vrot.slane %v2709, 5
    %v2712 = vsel %vm117, %v2707, %v2711
    %v2713 = vshrl.u32 %v2472, 16
    %v2715 = vrot.slane %v2713, 4
    %v2716 = vor.u32 %v2715, %v2711
    %v2717 = vrot.slane %v2716, 4
    %v2719 = vshll.u32 %v2529, 16
    %v2721 = vrot.slane %v2719, 5
    %v2722 = vsel %vm117, %v2717, %v2721
    %v2724 = vshrl.u32 %v2473, 16
    %v2726 = vrot.slane %v2724, 4
    %v2727 = vshll.u32 %v2473, 16
    %v2729 = vrot.slane %v2727, 5
    %v2730 = vor.u32 %v2726, %v2729
    %v2731 = vrot.slane %v2730, 4
    %v2733 = vshll.u32 %v2474, 16
    %v2735 = vrot.slane %v2733, 5
    %v2736 = vsel %vm117, %v2731, %v2735
    %v2737 = vshrl.u32 %v2474, 16
    %v2739 = vrot.slane %v2737, 4
    %v2740 = vor.u32 %v2739, %v2735
    %v2741 = vrot.slane %v2740, 4
    %v2743 = vshll.u32 %v2530, 16
    %v2745 = vrot.slane %v2743, 5
    %v2746 = vsel %vm117, %v2741, %v2745
    %v2748 = vshrl.u32 %v2475, 16
    %v2750 = vrot.slane %v2748, 4
    %v2751 = vshll.u32 %v2475, 16
    %v2753 = vrot.slane %v2751, 5
    %v2754 = vor.u32 %v2750, %v2753
    %v2755 = vrot.slane %v2754, 4
    %v2757 = vshll.u32 %v2476, 16
    %v2759 = vrot.slane %v2757, 5
    %v2760 = vsel %vm117, %v2755, %v2759
    %v2761 = vshrl.u32 %v2476, 16
    %v2763 = vrot.slane %v2761, 4
    %v2764 = vor.u32 %v2763, %v2759
    %v2765 = vrot.slane %v2764, 4
    %v2767 = vshll.u32 %v2531, 16
    %v2769 = vrot.slane %v2767, 5
    %v2770 = vsel %vm117, %v2765, %v2769
    %v2772 = vshrl.u32 %v2477, 16
    %v2774 = vrot.slane %v2772, 4
    %v2775 = vshll.u32 %v2477, 16
    %v2777 = vrot.slane %v2775, 5
    %v2778 = vor.u32 %v2774, %v2777
    %v2779 = vrot.slane %v2778, 4
    %v2781 = vshll.u32 %v2478, 16
    %v2783 = vrot.slane %v2781, 5
    %v2784 = vsel %vm117, %v2779, %v2783
    %v2785 = vshrl.u32 %v2478, 16
    %v2787 = vrot.slane %v2785, 4
    %v2788 = vor.u32 %v2787, %v2783
    %v2789 = vrot.slane %v2788, 4
    %v2791 = vshll.u32 %v2532, 16
    %v2793 = vrot.slane %v2791, 5
    %v2794 = vsel %vm117, %v2789, %v2793
    %v2796 = vshrl.u32 %v2479, 16
    %v2798 = vrot.slane %v2796, 4
    %v2799 = vshll.u32 %v2479, 16
    %v2801 = vrot.slane %v2799, 5
    %v2802 = vor.u32 %v2798, %v2801
    %v2803 = vrot.slane %v2802, 4
    %v2805 = vshll.u32 %v2480, 16
    %v2807 = vrot.slane %v2805, 5
    %v2808 = vsel %vm117, %v2803, %v2807
    %v2809 = vshrl.u32 %v2480, 16
    %v2811 = vrot.slane %v2809, 4
    %v2812 = vor.u32 %v2811, %v2807
    %v2813 = vrot.slane %v2812, 4
    %v2815 = vshll.u32 %v2533, 16
    %v2817 = vrot.slane %v2815, 5
    %v2818 = vsel %vm117, %v2813, %v2817
    %v2820 = vshrl.u32 %v2481, 16
    %v2822 = vrot.slane %v2820, 4
    %v2823 = vshll.u32 %v2481, 16
    %v2825 = vrot.slane %v2823, 5
    %v2826 = vor.u32 %v2822, %v2825
    %v2827 = vrot.slane %v2826, 4
    %v2829 = vshll.u32 %v2482, 16
    %v2831 = vrot.slane %v2829, 5
    %v2832 = vsel %vm117, %v2827, %v2831
    %v2833 = vshrl.u32 %v2482, 16
    %v2835 = vrot.slane %v2833, 4
    %v2836 = vor.u32 %v2835, %v2831
    %v2837 = vrot.slane %v2836, 4
    %v2839 = vshll.u32 %v2534, 16
    %v2841 = vrot.slane %v2839, 5
    %v2842 = vsel %vm117, %v2837, %v2841
    %v2844 = vshrl.u32 %v2483, 16
    %v2846 = vrot.slane %v2844, 4
    %v2847 = vshll.u32 %v2483, 16
    %v2849 = vrot.slane %v2847, 5
    %v2850 = vor.u32 %v2846, %v2849
    %v2851 = vrot.slane %v2850, 4
    %v2853 = vshll.u32 %v2484, 16
    %v2855 = vrot.slane %v2853, 5
    %v2856 = vsel %vm117, %v2851, %v2855
    %v2857 = vshrl.u32 %v2484, 16
    %v2859 = vrot.slane %v2857, 4
    %v2860 = vor.u32 %v2859, %v2855
    %v2861 = vrot.slane %v2860, 4
    %v2863 = vshll.u32 %v2535, 16
    %v2865 = vrot.slane %v2863, 5
    %v2866 = vsel %vm117, %v2861, %v2865
    %v2868 = vshrl.u32 %v2485, 16
    %v2870 = vrot.slane %v2868, 4
    %v2871 = vshll.u32 %v2485, 16
    %v2873 = vrot.slane %v2871, 5
    %v2874 = vor.u32 %v2870, %v2873
    %v2875 = vrot.slane %v2874, 4
    %v2877 = vshll.u32 %v2486, 16
    %v2879 = vrot.slane %v2877, 5
    %v2880 = vsel %vm117, %v2875, %v2879
    %v2881 = vshrl.u32 %v2486, 16
    %v2883 = vrot.slane %v2881, 4
    %v2884 = vor.u32 %v2883, %v2879
    %v2885 = vrot.slane %v2884, 4
    %v2887 = vshll.u32 %v2536, 16
    %v2889 = vrot.slane %v2887, 5
    %v2890 = vsel %vm117, %v2885, %v2889
    %v2892 = vshrl.u32 %v2487, 16
    %v2894 = vrot.slane %v2892, 4
    %v2895 = vshll.u32 %v2487, 16
    %v2897 = vrot.slane %v2895, 5
    %v2898 = vor.u32 %v2894, %v2897
    %v2899 = vrot.slane %v2898, 4
    %v2901 = vshll.u32 %v2488, 16
    %v2903 = vrot.slane %v2901, 5
    %v2904 = vsel %vm117, %v2899, %v2903
    %v2905 = vshrl.u32 %v2488, 16
    %v2907 = vrot.slane %v2905, 4
    %v2908 = vor.u32 %v2907, %v2903
    %v2909 = vrot.slane %v2908, 4
    %v2911 = vshll.u32 %v2537, 16
    %v2913 = vrot.slane %v2911, 5
    %v2914 = vsel %vm117, %v2909, %v2913
    %v2916 = vshrl.u32 %v2489, 16
    %v2918 = vrot.slane %v2916, 4
    %v2919 = vshll.u32 %v2489, 16
    %v2921 = vrot.slane %v2919, 5
    %v2922 = vor.u32 %v2918, %v2921
    %v2923 = vrot.slane %v2922, 4
    %v2925 = vshll.u32 %v2490, 16
    %v2927 = vrot.slane %v2925, 5
    %v2928 = vsel %vm117, %v2923, %v2927
    %v2929 = vshrl.u32 %v2490, 16
    %v2931 = vrot.slane %v2929, 4
    %v2932 = vor.u32 %v2931, %v2927
    %v2933 = vrot.slane %v2932, 4
    %v2935 = vshll.u32 %v2538, 16
    %v2937 = vrot.slane %v2935, 5
    %v2938 = vsel %vm117, %v2933, %v2937
    %v2940 = vshrl.u32 %v2491, 16
    %v2942 = vrot.slane %v2940, 4
    %v2943 = vshll.u32 %v2491, 16
    %v2945 = vrot.slane %v2943, 5
    %v2946 = vor.u32 %v2942, %v2945
    %v2947 = vrot.slane %v2946, 4
    %v2949 = vshll.u32 %v2492, 16
    %v2951 = vrot.slane %v2949, 5
    %v2952 = vsel %vm117, %v2947, %v2951
    %v2953 = vshrl.u32 %v2492, 16
    %v2955 = vrot.slane %v2953, 4
    %v2956 = vor.u32 %v2955, %v2951
    %v2957 = vrot.slane %v2956, 4
    %v2959 = vshll.u32 %v2539, 16
    %v2961 = vrot.slane %v2959, 5
    %v2962 = vsel %vm117, %v2957, %v2961
    %v2964 = vshrl.u32 %v2493, 16
    %v2966 = vrot.slane %v2964, 4
    %v2967 = vshll.u32 %v2493, 16
    %v2969 = vrot.slane %v2967, 5
    %v2970 = vor.u32 %v2966, %v2969
    %v2971 = vrot.slane %v2970, 4
    %v2973 = vshll.u32 %v2494, 16
    %v2975 = vrot.slane %v2973, 5
    %v2976 = vsel %vm117, %v2971, %v2975
    %v2977 = vshrl.u32 %v2494, 16
    %v2979 = vrot.slane %v2977, 4
    %v2980 = vor.u32 %v2979, %v2975
    %v2981 = vrot.slane %v2980, 4
    %v2983 = vshll.u32 %v2540, 16
    %v2985 = vrot.slane %v2983, 5
    %v2986 = vsel %vm117, %v2981, %v2985
    %v2988 = vshrl.u32 %v2495, 16
    %v2990 = vrot.slane %v2988, 4
    %v2991 = vshll.u32 %v2495, 16
    %v2993 = vrot.slane %v2991, 5
    %v2994 = vor.u32 %v2990, %v2993
    %v2995 = vrot.slane %v2994, 4
    %v2997 = vshll.u32 %v2496, 16
    %v2999 = vrot.slane %v2997, 5
    %v3000 = vsel %vm117, %v2995, %v2999
    %v3001 = vshrl.u32 %v2496, 16
    %v3003 = vrot.slane %v3001, 4
    %v3004 = vor.u32 %v3003, %v2999
    %v3005 = vrot.slane %v3004, 4
    %v3007 = vshll.u32 %v2541, 16
    %v3009 = vrot.slane %v3007, 5
    %v3010 = vsel %vm117, %v3005, %v3009
    %v3012 = vshrl.u32 %v2497, 16
    %v3014 = vrot.slane %v3012, 4
    %v3015 = vshll.u32 %v2497, 16
    %v3017 = vrot.slane %v3015, 5
    %v3018 = vor.u32 %v3014, %v3017
    %v3019 = vrot.slane %v3018, 4
    %v3021 = vshll.u32 %v2498, 16
    %v3023 = vrot.slane %v3021, 5
    %v3024 = vsel %vm117, %v3019, %v3023
    %v3025 = vshrl.u32 %v2498, 16
    %v3027 = vrot.slane %v3025, 4
    %v3028 = vor.u32 %v3027, %v3023
    %v3029 = vrot.slane %v3028, 4
    %v3031 = vshll.u32 %v2542, 16
    %v3033 = vrot.slane %v3031, 5
    %v3034 = vsel %vm117, %v3029, %v3033
    %v3036 = vshrl.u32 %v2499, 16
    %v3038 = vrot.slane %v3036, 4
    %v3039 = vshll.u32 %v2499, 16
    %v3041 = vrot.slane %v3039, 5
    %v3042 = vor.u32 %v3038, %v3041
    %v3043 = vrot.slane %v3042, 4
    %v3045 = vshll.u32 %v2500, 16
    %v3047 = vrot.slane %v3045, 5
    %v3048 = vsel %vm117, %v3043, %v3047
    %v3049 = vshrl.u32 %v2500, 16
    %v3051 = vrot.slane %v3049, 4
    %v3052 = vor.u32 %v3051, %v3047
    %v3053 = vrot.slane %v3052, 4
    %v3055 = vshll.u32 %v2543, 16
    %v3057 = vrot.slane %v3055, 5
    %v3058 = vsel %vm117, %v3053, %v3057
    %v3060 = vshrl.u32 %v2501, 16
    %v3062 = vrot.slane %v3060, 4
    %v3063 = vshll.u32 %v2501, 16
    %v3065 = vrot.slane %v3063, 5
    %v3066 = vor.u32 %v3062, %v3065
    %v3067 = vrot.slane %v3066, 4
    %v3069 = vshll.u32 %v2502, 16
    %v3071 = vrot.slane %v3069, 5
    %v3072 = vsel %vm117, %v3067, %v3071
    %v3073 = vshrl.u32 %v2502, 16
    %v3075 = vrot.slane %v3073, 4
    %v3076 = vor.u32 %v3075, %v3071
    %v3077 = vrot.slane %v3076, 4
    %v3079 = vshll.u32 %v2544, 16
    %v3081 = vrot.slane %v3079, 5
    %v3082 = vsel %vm117, %v3077, %v3081
    %v3084 = vshrl.u32 %v2503, 16
    %v3086 = vrot.slane %v3084, 4
    %v3087 = vshll.u32 %v2503, 16
    %v3089 = vrot.slane %v3087, 5
    %v3090 = vor.u32 %v3086, %v3089
    %v3091 = vrot.slane %v3090, 4
    %v3093 = vshll.u32 %v2504, 16
    %v3095 = vrot.slane %v3093, 5
    %v3096 = vsel %vm117, %v3091, %v3095
    %v3097 = vshrl.u32 %v2504, 16
    %v3099 = vrot.slane %v3097, 4
    %v3100 = vor.u32 %v3099, %v3095
    %v3101 = vrot.slane %v3100, 4
    %v3103 = vshll.u32 %v2545, 16
    %v3105 = vrot.slane %v3103, 5
    %v3106 = vsel %vm117, %v3101, %v3105
    %v3108 = vshrl.u32 %v2505, 16
    %v3110 = vrot.slane %v3108, 4
    %v3111 = vshll.u32 %v2505, 16
    %v3113 = vrot.slane %v3111, 5
    %v3114 = vor.u32 %v3110, %v3113
    %v3115 = vrot.slane %v3114, 4
    %v3117 = vshll.u32 %v2506, 16
    %v3119 = vrot.slane %v3117, 5
    %v3120 = vsel %vm117, %v3115, %v3119
    %v3121 = vshrl.u32 %v2506, 16
    %v3123 = vrot.slane %v3121, 4
    %v3124 = vor.u32 %v3123, %v3119
    %v3125 = vrot.slane %v3124, 4
    %v3127 = vshll.u32 %v2546, 16
    %v3129 = vrot.slane %v3127, 5
    %v3130 = vsel %vm117, %v3125, %v3129
    %v3132 = vshrl.u32 %v2507, 16
    %v3134 = vrot.slane %v3132, 4
    %v3135 = vshll.u32 %v2507, 16
    %v3137 = vrot.slane %v3135, 5
    %v3138 = vor.u32 %v3134, %v3137
    %v3139 = vrot.slane %v3138, 4
    %v3141 = vshll.u32 %v2508, 16
    %v3143 = vrot.slane %v3141, 5
    %v3144 = vsel %vm117, %v3139, %v3143
    %v3145 = vshrl.u32 %v2508, 16
    %v3147 = vrot.slane %v3145, 4
    %v3148 = vor.u32 %v3147, %v3143
    %v3149 = vrot.slane %v3148, 4
    %v3151 = vshll.u32 %v2547, 16
    %v3153 = vrot.slane %v3151, 5
    %v3154 = vsel %vm117, %v3149, %v3153
    %v3156 = vshrl.u32 %v2509, 16
    %v3158 = vrot.slane %v3156, 4
    %v3159 = vshll.u32 %v2509, 16
    %v3161 = vrot.slane %v3159, 5
    %v3162 = vor.u32 %v3158, %v3161
    %v3163 = vrot.slane %v3162, 4
    %v3165 = vshll.u32 %v2510, 16
    %v3167 = vrot.slane %v3165, 5
    %v3168 = vsel %vm117, %v3163, %v3167
    %v3169 = vshrl.u32 %v2510, 16
    %v3171 = vrot.slane %v3169, 4
    %v3172 = vor.u32 %v3171, %v3167
    %v3173 = vrot.slane %v3172, 4
    %v3175 = vshll.u32 %v2548, 16
    %v3177 = vrot.slane %v3175, 5
    %v3178 = vsel %vm117, %v3173, %v3177
    %v3180 = vshrl.u32 %v2511, 16
    %v3182 = vrot.slane %v3180, 4
    %v3183 = vshll.u32 %v2511, 16
    %v3185 = vrot.slane %v3183, 5
    %v3186 = vor.u32 %v3182, %v3185
    %v3187 = vrot.slane %v3186, 4
    %v3189 = vshll.u32 %v2512, 16
    %v3191 = vrot.slane %v3189, 5
    %v3192 = vsel %vm117, %v3187, %v3191
    %v3193 = vshrl.u32 %v2512, 16
    %v3195 = vrot.slane %v3193, 4
    %v3196 = vor.u32 %v3195, %v3191
    %v3197 = vrot.slane %v3196, 4
    %v3199 = vshll.u32 %v2549, 16
    %v3201 = vrot.slane %v3199, 5
    %v3202 = vsel %vm117, %v3197, %v3201
    %v3204 = vshrl.u32 %v2513, 16
    %v3206 = vrot.slane %v3204, 4
    %v3207 = vshll.u32 %v2513, 16
    %v3209 = vrot.slane %v3207, 5
    %v3210 = vor.u32 %v3206, %v3209
    %v3211 = vrot.slane %v3210, 4
    %v3213 = vshll.u32 %v2514, 16
    %v3215 = vrot.slane %v3213, 5
    %v3216 = vsel %vm117, %v3211, %v3215
    %v3217 = vshrl.u32 %v2514, 16
    %v3219 = vrot.slane %v3217, 4
    %v3220 = vor.u32 %v3219, %v3215
    %v3221 = vrot.slane %v3220, 4
    %v3223 = vshll.u32 %v2550, 16
    %v3225 = vrot.slane %v3223, 5
    %v3226 = vsel %vm117, %v3221, %v3225
    %v3228 = vshrl.u32 %v2515, 16
    %v3230 = vrot.slane %v3228, 4
    %v3231 = vshll.u32 %v2515, 16
    %v3233 = vrot.slane %v3231, 5
    %v3234 = vor.u32 %v3230, %v3233
    %v3235 = vrot.slane %v3234, 4
    %v3237 = vshll.u32 %v2516, 16
    %v3239 = vrot.slane %v3237, 5
    %v3240 = vsel %vm117, %v3235, %v3239
    %v3241 = vshrl.u32 %v2516, 16
    %v3243 = vrot.slane %v3241, 4
    %v3244 = vor.u32 %v3243, %v3239
    %v3245 = vrot.slane %v3244, 4
    %v3247 = vshll.u32 %v2551, 16
    %v3249 = vrot.slane %v3247, 5
    %v3250 = vsel %vm117, %v3245, %v3249
    %v3252 = vshrl.u32 %v2517, 16
    %v3254 = vrot.slane %v3252, 4
    %v3255 = vshll.u32 %v2517, 16
    %v3257 = vrot.slane %v3255, 5
    %v3258 = vor.u32 %v3254, %v3257
    %v3259 = vrot.slane %v3258, 4
    %v3261 = vshll.u32 %v2518, 16
    %v3263 = vrot.slane %v3261, 5
    %v3264 = vsel %vm117, %v3259, %v3263
    %v3265 = vshrl.u32 %v2518, 16
    %v3267 = vrot.slane %v3265, 4
    %v3268 = vor.u32 %v3267, %v3263
    %v3269 = vrot.slane %v3268, 4
    %v3271 = vshll.u32 %v2552, 16
    %v3273 = vrot.slane %v3271, 5
    %v3274 = vsel %vm117, %v3269, %v3273
    %v3276 = vshrl.u32 %v2519, 16
    %v3278 = vrot.slane %v3276, 4
    %v3279 = vshll.u32 %v2519, 16
    %v3281 = vrot.slane %v3279, 5
    %v3282 = vor.u32 %v3278, %v3281
    %v3283 = vrot.slane %v3282, 4
    %v3285 = vshll.u32 %v2520, 16
    %v3287 = vrot.slane %v3285, 5
    %v3288 = vsel %vm117, %v3283, %v3287
    %v3289 = vshrl.u32 %v2520, 16
    %v3291 = vrot.slane %v3289, 4
    %v3292 = vor.u32 %v3291, %v3287
    %v3293 = vrot.slane %v3292, 4
    %v3295 = vshll.u32 %v2553, 16
    %v3297 = vrot.slane %v3295, 5
    %v3298 = vsel %vm117, %v3293, %v3297
    %v3300 = vshrl.u32 %v2521, 16
    %v3302 = vrot.slane %v3300, 4
    %v3303 = vshll.u32 %v2521, 16
    %v3305 = vrot.slane %v3303, 5
    %v3306 = vor.u32 %v3302, %v3305
    %v3307 = vrot.slane %v3306, 4
    %v3309 = vshll.u32 %v2522, 16
    %v3311 = vrot.slane %v3309, 5
    %v3312 = vsel %vm117, %v3307, %v3311
    %v3313 = vshrl.u32 %v2522, 16
    %v3315 = vrot.slane %v3313, 4
    %v3316 = vor.u32 %v3315, %v3311
    %v3317 = vrot.slane %v3316, 4
    %v3319 = vshll.u32 %v2554, 16
    %v3321 = vrot.slane %v3319, 5
    %v3322 = vsel %vm117, %v3317, %v3321
    %v3323 = vld [vmem:[%s2458] sm:$0xe]
    %v3324 = vld [vmem:[%s2458 + $0xc] sm:$0xe]
    %v3325 = vld [vmem:[%s2458 + $0x18] sm:$0xe]
    %v3326 = vld [vmem:[%s2458 + $0x24] sm:$0xe]
    %v3327 = vld [vmem:[%s2458 + $0x30] sm:$0xe]
    %v3328 = vld [vmem:[%s2458 + $0x3c] sm:$0xe]
    %v3329 = vld [vmem:[%s2458 + $0x48] sm:$0xe]
    %v3330 = vld [vmem:[%s2458 + $0x54] sm:$0xe]
    %v3331 = vld [vmem:[%s2458 + $0x60] sm:$0xe]
    %v3332 = vld [vmem:[%s2458 + $0x6c] sm:$0xe]
    %v3333 = vld [vmem:[%s2458 + $0x78] sm:$0xe]
    %v3334 = vld [vmem:[%s2458 + $0x84] sm:$0xe]
    %v3335 = vld [vmem:[%s2458 + $0x90] sm:$0xe]
    %v3336 = vld [vmem:[%s2458 + $0x9c] sm:$0xe]
    %v3337 = vld [vmem:[%s2458 + $0xa8] sm:$0xe]
    %v3338 = vld [vmem:[%s2458 + $0xb4] sm:$0xe]
    %v3339 = vld [vmem:[%s2458 + $0xd8] sm:$0xe]
    %v3340 = vld [vmem:[%s2458 + $0xe4] sm:$0xe]
    %v3341 = vld [vmem:[%s2458 + $0xf0] sm:$0xe]
    %v3342 = vld [vmem:[%s2458 + $0xfc] sm:$0xe]
    %v3343 = vld [vmem:[%s2458 + $0x108] sm:$0xe]
    %v3344 = vld [vmem:[%s2458 + $0x114] sm:$0xe]
    %v3345 = vld [vmem:[%s2458 + $0x120] sm:$0xe]
    %v3346 = vld [vmem:[%s2458 + $0x12c] sm:$0xe]
    %v3347 = vld [vmem:[%s2458 + $0x138] sm:$0xe]
    %v3348 = vld [vmem:[%s2458 + $0x144] sm:$0xe]
    %v3349 = vld [vmem:[%s2458 + $0x150] sm:$0xe]
    %v3350 = vld [vmem:[%s2458 + $0x15c] sm:$0xe]
    %v3351 = vld [vmem:[%s2458 + $0x168] sm:$0xe]
    %v3352 = vld [vmem:[%s2458 + $0x174] sm:$0xe]
    %v3353 = vld [vmem:[%s2458 + $0x180] sm:$0xe]
    %v3354 = vld [vmem:[%s2458 + $0x18c] sm:$0xe]
    %v3451 = vrot.slane %v3323, 5
    %v3452 = vrot.slane %v3451, 4
    %v3453 = vrot.slane %v2460, 5
    %v3454 = vsel %vm1016, %v3452, %v3453
    %v3455 = vrot.slane %v3453, 4
    %v3456 = vrot.slane %v2523, 5
    %v3457 = vsel %vm1016, %v3455, %v3456
    %v3458 = vrot.slane %v3324, 5
    %v3459 = vrot.slane %v3458, 4
    %v3460 = vrot.slane %v2462, 5
    %v3461 = vsel %vm1016, %v3459, %v3460
    %v3462 = vrot.slane %v3460, 4
    %v3463 = vrot.slane %v2524, 5
    %v3464 = vsel %vm1016, %v3462, %v3463
    %v3465 = vrot.slane %v3325, 5
    %v3466 = vrot.slane %v3465, 4
    %v3467 = vrot.slane %v2464, 5
    %v3468 = vsel %vm1016, %v3466, %v3467
    %v3469 = vrot.slane %v3467, 4
    %v3470 = vrot.slane %v2525, 5
    %v3471 = vsel %vm1016, %v3469, %v3470
    %v3472 = vrot.slane %v3326, 5
    %v3473 = vrot.slane %v3472, 4
    %v3474 = vrot.slane %v2466, 5
    %v3475 = vsel %vm1016, %v3473, %v3474
    %v3476 = vrot.slane %v3474, 4
    %v3477 = vrot.slane %v2526, 5
    %v3478 = vsel %vm1016, %v3476, %v3477
    %v3479 = vrot.slane %v3327, 5
    %v3480 = vrot.slane %v3479, 4
    %v3481 = vrot.slane %v2468, 5
    %v3482 = vsel %vm1016, %v3480, %v3481
    %v3483 = vrot.slane %v3481, 4
    %v3484 = vrot.slane %v2527, 5
    %v3485 = vsel %vm1016, %v3483, %v3484
    %v3486 = vrot.slane %v3328, 5
    %v3487 = vrot.slane %v3486, 4
    %v3488 = vrot.slane %v2470, 5
    %v3489 = vsel %vm1016, %v3487, %v3488
    %v3490 = vrot.slane %v3488, 4
    %v3491 = vrot.slane %v2528, 5
    %v3492 = vsel %vm1016, %v3490, %v3491
    %v3493 = vrot.slane %v3329, 5
    %v3494 = vrot.slane %v3493, 4
    %v3495 = vrot.slane %v2472, 5
    %v3496 = vsel %vm1016, %v3494, %v3495
    %v3497 = vrot.slane %v3495, 4
    %v3498 = vrot.slane %v2529, 5
    %v3499 = vsel %vm1016, %v3497, %v3498
    %v3500 = vrot.slane %v3330, 5
    %v3501 = vrot.slane %v3500, 4
    %v3502 = vrot.slane %v2474, 5
    %v3503 = vsel %vm1016, %v3501, %v3502
    %v3504 = vrot.slane %v3502, 4
    %v3505 = vrot.slane %v2530, 5
    %v3506 = vsel %vm1016, %v3504, %v3505
    %v3507 = vrot.slane %v3331, 5
    %v3508 = vrot.slane %v3507, 4
    %v3509 = vrot.slane %v2476, 5
    %v3510 = vsel %vm1016, %v3508, %v3509
    %v3511 = vrot.slane %v3509, 4
    %v3512 = vrot.slane %v2531, 5
    %v3513 = vsel %vm1016, %v3511, %v3512
    %v3514 = vrot.slane %v3332, 5
    %v3515 = vrot.slane %v3514, 4
    %v3516 = vrot.slane %v2478, 5
    %v3517 = vsel %vm1016, %v3515, %v3516
    %v3518 = vrot.slane %v3516, 4
    %v3519 = vrot.slane %v2532, 5
    %v3520 = vsel %vm1016, %v3518, %v3519
    %v3521 = vrot.slane %v3333, 5
    %v3522 = vrot.slane %v3521, 4
    %v3523 = vrot.slane %v2480, 5
    %v3524 = vsel %vm1016, %v3522, %v3523
    %v3525 = vrot.slane %v3523, 4
    %v3526 = vrot.slane %v2533, 5
    %v3527 = vsel %vm1016, %v3525, %v3526
    %v3528 = vrot.slane %v3334, 5
    %v3529 = vrot.slane %v3528, 4
    %v3530 = vrot.slane %v2482, 5
    %v3531 = vsel %vm1016, %v3529, %v3530
    %v3532 = vrot.slane %v3530, 4
    %v3533 = vrot.slane %v2534, 5
    %v3534 = vsel %vm1016, %v3532, %v3533
    %v3535 = vrot.slane %v3335, 5
    %v3536 = vrot.slane %v3535, 4
    %v3537 = vrot.slane %v2484, 5
    %v3538 = vsel %vm1016, %v3536, %v3537
    %v3539 = vrot.slane %v3537, 4
    %v3540 = vrot.slane %v2535, 5
    %v3541 = vsel %vm1016, %v3539, %v3540
    %v3542 = vrot.slane %v3336, 5
    %v3543 = vrot.slane %v3542, 4
    %v3544 = vrot.slane %v2486, 5
    %v3545 = vsel %vm1016, %v3543, %v3544
    %v3546 = vrot.slane %v3544, 4
    %v3547 = vrot.slane %v2536, 5
    %v3548 = vsel %vm1016, %v3546, %v3547
    %v3549 = vrot.slane %v3337, 5
    %v3550 = vrot.slane %v3549, 4
    %v3551 = vrot.slane %v2488, 5
    %v3552 = vsel %vm1016, %v3550, %v3551
    %v3553 = vrot.slane %v3551, 4
    %v3554 = vrot.slane %v2537, 5
    %v3555 = vsel %vm1016, %v3553, %v3554
    %v3556 = vrot.slane %v3338, 5
    %v3557 = vrot.slane %v3556, 4
    %v3558 = vrot.slane %v2490, 5
    %v3559 = vsel %vm1016, %v3557, %v3558
    %v3560 = vrot.slane %v3558, 4
    %v3561 = vrot.slane %v2538, 5
    %v3562 = vsel %vm1016, %v3560, %v3561
    %v3563 = vrot.slane %v3339, 5
    %v3564 = vrot.slane %v3563, 4
    %v3565 = vrot.slane %v2492, 5
    %v3566 = vsel %vm1016, %v3564, %v3565
    %v3567 = vrot.slane %v3565, 4
    %v3568 = vrot.slane %v2539, 5
    %v3569 = vsel %vm1016, %v3567, %v3568
    %v3570 = vrot.slane %v3340, 5
    %v3571 = vrot.slane %v3570, 4
    %v3572 = vrot.slane %v2494, 5
    %v3573 = vsel %vm1016, %v3571, %v3572
    %v3574 = vrot.slane %v3572, 4
    %v3575 = vrot.slane %v2540, 5
    %v3576 = vsel %vm1016, %v3574, %v3575
    %v3577 = vrot.slane %v3341, 5
    %v3578 = vrot.slane %v3577, 4
    %v3579 = vrot.slane %v2496, 5
    %v3580 = vsel %vm1016, %v3578, %v3579
    %v3581 = vrot.slane %v3579, 4
    %v3582 = vrot.slane %v2541, 5
    %v3583 = vsel %vm1016, %v3581, %v3582
    %v3584 = vrot.slane %v3342, 5
    %v3585 = vrot.slane %v3584, 4
    %v3586 = vrot.slane %v2498, 5
    %v3587 = vsel %vm1016, %v3585, %v3586
    %v3588 = vrot.slane %v3586, 4
    %v3589 = vrot.slane %v2542, 5
    %v3590 = vsel %vm1016, %v3588, %v3589
    %v3591 = vrot.slane %v3343, 5
    %v3592 = vrot.slane %v3591, 4
    %v3593 = vrot.slane %v2500, 5
    %v3594 = vsel %vm1016, %v3592, %v3593
    %v3595 = vrot.slane %v3593, 4
    %v3596 = vrot.slane %v2543, 5
    %v3597 = vsel %vm1016, %v3595, %v3596
    %v3598 = vrot.slane %v3344, 5
    %v3599 = vrot.slane %v3598, 4
    %v3600 = vrot.slane %v2502, 5
    %v3601 = vsel %vm1016, %v3599, %v3600
    %v3602 = vrot.slane %v3600, 4
    %v3603 = vrot.slane %v2544, 5
    %v3604 = vsel %vm1016, %v3602, %v3603
    %v3605 = vrot.slane %v3345, 5
    %v3606 = vrot.slane %v3605, 4
    %v3607 = vrot.slane %v2504, 5
    %v3608 = vsel %vm1016, %v3606, %v3607
    %v3609 = vrot.slane %v3607, 4
    %v3610 = vrot.slane %v2545, 5
    %v3611 = vsel %vm1016, %v3609, %v3610
    %v3612 = vrot.slane %v3346, 5
    %v3613 = vrot.slane %v3612, 4
    %v3614 = vrot.slane %v2506, 5
    %v3615 = vsel %vm1016, %v3613, %v3614
    %v3616 = vrot.slane %v3614, 4
    %v3617 = vrot.slane %v2546, 5
    %v3618 = vsel %vm1016, %v3616, %v3617
    %v3619 = vrot.slane %v3347, 5
    %v3620 = vrot.slane %v3619, 4
    %v3621 = vrot.slane %v2508, 5
    %v3622 = vsel %vm1016, %v3620, %v3621
    %v3623 = vrot.slane %v3621, 4
    %v3624 = vrot.slane %v2547, 5
    %v3625 = vsel %vm1016, %v3623, %v3624
    %v3626 = vrot.slane %v3348, 5
    %v3627 = vrot.slane %v3626, 4
    %v3628 = vrot.slane %v2510, 5
    %v3629 = vsel %vm1016, %v3627, %v3628
    %v3630 = vrot.slane %v3628, 4
    %v3631 = vrot.slane %v2548, 5
    %v3632 = vsel %vm1016, %v3630, %v3631
    %v3633 = vrot.slane %v3349, 5
    %v3634 = vrot.slane %v3633, 4
    %v3635 = vrot.slane %v2512, 5
    %v3636 = vsel %vm1016, %v3634, %v3635
    %v3637 = vrot.slane %v3635, 4
    %v3638 = vrot.slane %v2549, 5
    %v3639 = vsel %vm1016, %v3637, %v3638
    %v3640 = vrot.slane %v3350, 5
    %v3641 = vrot.slane %v3640, 4
    %v3642 = vrot.slane %v2514, 5
    %v3643 = vsel %vm1016, %v3641, %v3642
    %v3644 = vrot.slane %v3642, 4
    %v3645 = vrot.slane %v2550, 5
    %v3646 = vsel %vm1016, %v3644, %v3645
    %v3647 = vrot.slane %v3351, 5
    %v3648 = vrot.slane %v3647, 4
    %v3649 = vrot.slane %v2516, 5
    %v3650 = vsel %vm1016, %v3648, %v3649
    %v3651 = vrot.slane %v3649, 4
    %v3652 = vrot.slane %v2551, 5
    %v3653 = vsel %vm1016, %v3651, %v3652
    %v3654 = vrot.slane %v3352, 5
    %v3655 = vrot.slane %v3654, 4
    %v3656 = vrot.slane %v2518, 5
    %v3657 = vsel %vm1016, %v3655, %v3656
    %v3658 = vrot.slane %v3656, 4
    %v3659 = vrot.slane %v2552, 5
    %v3660 = vsel %vm1016, %v3658, %v3659
    %v3661 = vrot.slane %v3353, 5
    %v3662 = vrot.slane %v3661, 4
    %v3663 = vrot.slane %v2520, 5
    %v3664 = vsel %vm1016, %v3662, %v3663
    %v3665 = vrot.slane %v3663, 4
    %v3666 = vrot.slane %v2553, 5
    %v3667 = vsel %vm1016, %v3665, %v3666
    %v3668 = vrot.slane %v3354, 5
    %v3669 = vrot.slane %v3668, 4
    %v3670 = vrot.slane %v2522, 5
    %v3671 = vsel %vm1016, %v3669, %v3670
    %v3672 = vrot.slane %v3670, 4
    %v3673 = vrot.slane %v2554, 5
    %v3674 = vsel %vm1016, %v3672, %v3673
    %v3707 = vunpack.c.l.b16 %v19
    %v3708 = vunpack.c.l.b16 %v20
    %v3709 = vunpack.c.l.b16 %v21
    %v3710 = vunpack.c.l.b16 %v22
    %v3711 = vunpack.c.l.b16 %v23
    %v3712 = vunpack.c.l.b16 %v24
    %v3713 = vunpack.c.l.b16 %v25
    %v3714 = vunpack.c.l.b16 %v26
    %v3715 = vunpack.c.l.b16 %v27
    %v3716 = vunpack.c.l.b16 %v28
    %v3717 = vunpack.c.l.b16 %v29
    %v3718 = vunpack.c.l.b16 %v30
    %v3719 = vunpack.c.l.b16 %v31
    %v3720 = vunpack.c.l.b16 %v32
    %v3721 = vunpack.c.l.b16 %v33
    %v3722 = vunpack.c.l.b16 %v34
    %v3723 = vunpack.c.l.b16 %v35
    %v3724 = vunpack.c.l.b16 %v36
    %v3725 = vunpack.c.l.b16 %v37
    %v3726 = vunpack.c.l.b16 %v38
    %v3727 = vunpack.c.l.b16 %v39
    %v3728 = vunpack.c.l.b16 %v40
    %v3729 = vunpack.c.l.b16 %v41
    %v3730 = vunpack.c.l.b16 %v42
    %v3731 = vunpack.c.l.b16 %v43
    %v3732 = vunpack.c.l.b16 %v44
    %v3733 = vunpack.c.l.b16 %v45
    %v3734 = vunpack.c.l.b16 %v46
    %v3735 = vunpack.c.l.b16 %v47
    %v3736 = vunpack.c.l.b16 %v48
    %v3737 = vunpack.c.l.b16 %v49
    %v3738 = vunpack.c.l.b16 %v50
    %v3739 = vunpack.c.l.b16 %v51
    %v3740 = vunpack.c.l.b16 %v52
    %v3741 = vunpack.c.l.b16 %v53
    %v3742 = vunpack.c.l.b16 %v54
    %v3743 = vunpack.c.l.b16 %v55
    %v3744 = vunpack.c.l.b16 %v56
    %v3745 = vunpack.c.l.b16 %v57
    %v3746 = vunpack.c.l.b16 %v58
    %v3747 = vunpack.c.l.b16 %v59
    %v3748 = vunpack.c.l.b16 %v60
    %v3749 = vunpack.c.l.b16 %v61
    %v3750 = vunpack.c.l.b16 %v62
    %v3751 = vunpack.c.l.b16 %v63
    %v3752 = vunpack.c.l.b16 %v64
    %v3753 = vunpack.c.l.b16 %v65
    %v3754 = vunpack.c.l.b16 %v66
    %v3755 = vunpack.c.l.b16 %v67
    %v3756 = vunpack.c.l.b16 %v68
    %v3757 = vunpack.c.l.b16 %v69
    %v3758 = vunpack.c.l.b16 %v70
    %v3759 = vunpack.c.l.b16 %v71
    %v3760 = vunpack.c.l.b16 %v72
    %v3761 = vunpack.c.l.b16 %v73
    %v3762 = vunpack.c.l.b16 %v74
    %v3763 = vunpack.c.l.b16 %v75
    %v3764 = vunpack.c.l.b16 %v76
    %v3765 = vunpack.c.l.b16 %v77
    %v3766 = vunpack.c.l.b16 %v78
    %v3767 = vunpack.c.l.b16 %v79
    %v3768 = vunpack.c.l.b16 %v80
    %v3769 = vunpack.c.l.b16 %v81
    %v3770 = vunpack.c.l.b16 %v82
    %v3771 = vpack.c.b16 %v3708, %v3707
    %v3772 = vpack.c.b16 %v3710, %v3709
    %v3773 = vpack.c.b16 %v3712, %v3711
    %v3774 = vpack.c.b16 %v3714, %v3713
    %v3775 = vpack.c.b16 %v3716, %v3715
    %v3776 = vpack.c.b16 %v3718, %v3717
    %v3777 = vpack.c.b16 %v3720, %v3719
    %v3778 = vpack.c.b16 %v3722, %v3721
    %v3779 = vpack.c.b16 %v3724, %v3723
    %v3780 = vpack.c.b16 %v3726, %v3725
    %v3781 = vpack.c.b16 %v3728, %v3727
    %v3782 = vpack.c.b16 %v3730, %v3729
    %v3783 = vpack.c.b16 %v3732, %v3731
    %v3784 = vpack.c.b16 %v3734, %v3733
    %v3785 = vpack.c.b16 %v3736, %v3735
    %v3786 = vpack.c.b16 %v3738, %v3737
    %v3787 = vpack.c.b16 %v3740, %v3739
    %v3788 = vpack.c.b16 %v3742, %v3741
    %v3789 = vpack.c.b16 %v3744, %v3743
    %v3790 = vpack.c.b16 %v3746, %v3745
    %v3791 = vpack.c.b16 %v3748, %v3747
    %v3792 = vpack.c.b16 %v3750, %v3749
    %v3793 = vpack.c.b16 %v3752, %v3751
    %v3794 = vpack.c.b16 %v3754, %v3753
    %v3795 = vpack.c.b16 %v3756, %v3755
    %v3796 = vpack.c.b16 %v3758, %v3757
    %v3797 = vpack.c.b16 %v3760, %v3759
    %v3798 = vpack.c.b16 %v3762, %v3761
    %v3799 = vpack.c.b16 %v3764, %v3763
    %v3800 = vpack.c.b16 %v3766, %v3765
    %v3801 = vpack.c.b16 %v3768, %v3767
    %v3802 = vpack.c.b16 %v3770, %v3769
    %v3803 = vunpack.c.l.b16 %v131
    %v3804 = vunpack.c.l.b16 %v141
    %v3805 = vunpack.c.l.b16 %v155
    %v3806 = vunpack.c.l.b16 %v165
    %v3807 = vunpack.c.l.b16 %v179
    %v3808 = vunpack.c.l.b16 %v189
    %v3809 = vunpack.c.l.b16 %v203
    %v3810 = vunpack.c.l.b16 %v213
    %v3811 = vunpack.c.l.b16 %v227
    %v3812 = vunpack.c.l.b16 %v237
    %v3813 = vunpack.c.l.b16 %v251
    %v3814 = vunpack.c.l.b16 %v261
    %v3815 = vunpack.c.l.b16 %v275
    %v3816 = vunpack.c.l.b16 %v285
    %v3817 = vunpack.c.l.b16 %v299
    %v3818 = vunpack.c.l.b16 %v309
    %v3819 = vunpack.c.l.b16 %v323
    %v3820 = vunpack.c.l.b16 %v333
    %v3821 = vunpack.c.l.b16 %v347
    %v3822 = vunpack.c.l.b16 %v357
    %v3823 = vunpack.c.l.b16 %v371
    %v3824 = vunpack.c.l.b16 %v381
    %v3825 = vunpack.c.l.b16 %v395
    %v3826 = vunpack.c.l.b16 %v405
    %v3827 = vunpack.c.l.b16 %v419
    %v3828 = vunpack.c.l.b16 %v429
    %v3829 = vunpack.c.l.b16 %v443
    %v3830 = vunpack.c.l.b16 %v453
    %v3831 = vunpack.c.l.b16 %v467
    %v3832 = vunpack.c.l.b16 %v477
    %v3833 = vunpack.c.l.b16 %v491
    %v3834 = vunpack.c.l.b16 %v501
    %v3835 = vunpack.c.l.b16 %v515
    %v3836 = vunpack.c.l.b16 %v525
    %v3837 = vunpack.c.l.b16 %v539
    %v3838 = vunpack.c.l.b16 %v549
    %v3839 = vunpack.c.l.b16 %v563
    %v3840 = vunpack.c.l.b16 %v573
    %v3841 = vunpack.c.l.b16 %v587
    %v3842 = vunpack.c.l.b16 %v597
    %v3843 = vunpack.c.l.b16 %v611
    %v3844 = vunpack.c.l.b16 %v621
    %v3845 = vunpack.c.l.b16 %v635
    %v3846 = vunpack.c.l.b16 %v645
    %v3847 = vunpack.c.l.b16 %v659
    %v3848 = vunpack.c.l.b16 %v669
    %v3849 = vunpack.c.l.b16 %v683
    %v3850 = vunpack.c.l.b16 %v693
    %v3851 = vunpack.c.l.b16 %v707
    %v3852 = vunpack.c.l.b16 %v717
    %v3853 = vunpack.c.l.b16 %v731
    %v3854 = vunpack.c.l.b16 %v741
    %v3855 = vunpack.c.l.b16 %v755
    %v3856 = vunpack.c.l.b16 %v765
    %v3857 = vunpack.c.l.b16 %v779
    %v3858 = vunpack.c.l.b16 %v789
    %v3859 = vunpack.c.l.b16 %v803
    %v3860 = vunpack.c.l.b16 %v813
    %v3861 = vunpack.c.l.b16 %v827
    %v3862 = vunpack.c.l.b16 %v837
    %v3863 = vunpack.c.l.b16 %v851
    %v3864 = vunpack.c.l.b16 %v861
    %v3865 = vunpack.c.l.b16 %v875
    %v3866 = vunpack.c.l.b16 %v885
    %v3867 = vpack.c.b16 %v3804, %v3803
    %v3868 = vpack.c.b16 %v3806, %v3805
    %v3869 = vpack.c.b16 %v3808, %v3807
    %v3870 = vpack.c.b16 %v3810, %v3809
    %v3871 = vpack.c.b16 %v3812, %v3811
    %v3872 = vpack.c.b16 %v3814, %v3813
    %v3873 = vpack.c.b16 %v3816, %v3815
    %v3874 = vpack.c.b16 %v3818, %v3817
    %v3875 = vpack.c.b16 %v3820, %v3819
    %v3876 = vpack.c.b16 %v3822, %v3821
    %v3877 = vpack.c.b16 %v3824, %v3823
    %v3878 = vpack.c.b16 %v3826, %v3825
    %v3879 = vpack.c.b16 %v3828, %v3827
    %v3880 = vpack.c.b16 %v3830, %v3829
    %v3881 = vpack.c.b16 %v3832, %v3831
    %v3882 = vpack.c.b16 %v3834, %v3833
    %v3883 = vpack.c.b16 %v3836, %v3835
    %v3884 = vpack.c.b16 %v3838, %v3837
    %v3885 = vpack.c.b16 %v3840, %v3839
    %v3886 = vpack.c.b16 %v3842, %v3841
    %v3887 = vpack.c.b16 %v3844, %v3843
    %v3888 = vpack.c.b16 %v3846, %v3845
    %v3889 = vpack.c.b16 %v3848, %v3847
    %v3890 = vpack.c.b16 %v3850, %v3849
    %v3891 = vpack.c.b16 %v3852, %v3851
    %v3892 = vpack.c.b16 %v3854, %v3853
    %v3893 = vpack.c.b16 %v3856, %v3855
    %v3894 = vpack.c.b16 %v3858, %v3857
    %v3895 = vpack.c.b16 %v3860, %v3859
    %v3896 = vpack.c.b16 %v3862, %v3861
    %v3897 = vpack.c.b16 %v3864, %v3863
    %v3898 = vpack.c.b16 %v3866, %v3865
    %3899 = vrot.lane.b32.xlu0 %v3867, 4
    %v3900 = vpop.permute.xlu0 %3899
    %3901 = vrot.lane.b32.xlu0 %v3868, 4
    %v3902 = vpop.permute.xlu0 %3901
    %3903 = vrot.lane.b32.xlu0 %v3869, 4
    %v3904 = vpop.permute.xlu0 %3903
    %3905 = vrot.lane.b32.xlu0 %v3870, 4
    %v3906 = vpop.permute.xlu0 %3905
    %3907 = vrot.lane.b32.xlu0 %v3871, 4
    %v3908 = vpop.permute.xlu0 %3907
    %3909 = vrot.lane.b32.xlu0 %v3872, 4
    %v3910 = vpop.permute.xlu0 %3909
    %3911 = vrot.lane.b32.xlu0 %v3873, 4
    %v3912 = vpop.permute.xlu0 %3911
    %3913 = vrot.lane.b32.xlu0 %v3874, 4
    %v3914 = vpop.permute.xlu0 %3913
    %3915 = vrot.lane.b32.xlu0 %v3875, 4
    %v3916 = vpop.permute.xlu0 %3915
    %3917 = vrot.lane.b32.xlu0 %v3876, 4
    %v3918 = vpop.permute.xlu0 %3917
    %3919 = vrot.lane.b32.xlu0 %v3877, 4
    %v3920 = vpop.permute.xlu0 %3919
    %3921 = vrot.lane.b32.xlu0 %v3878, 4
    %v3922 = vpop.permute.xlu0 %3921
    %3923 = vrot.lane.b32.xlu0 %v3879, 4
    %v3924 = vpop.permute.xlu0 %3923
    %3925 = vrot.lane.b32.xlu0 %v3880, 4
    %v3926 = vpop.permute.xlu0 %3925
    %3927 = vrot.lane.b32.xlu0 %v3881, 4
    %v3928 = vpop.permute.xlu0 %3927
    %3929 = vrot.lane.b32.xlu0 %v3882, 4
    %v3930 = vpop.permute.xlu0 %3929
    %3931 = vrot.lane.b32.xlu0 %v3883, 4
    %v3932 = vpop.permute.xlu0 %3931
    %3933 = vrot.lane.b32.xlu0 %v3884, 4
    %v3934 = vpop.permute.xlu0 %3933
    %3935 = vrot.lane.b32.xlu0 %v3885, 4
    %v3936 = vpop.permute.xlu0 %3935
    %3937 = vrot.lane.b32.xlu0 %v3886, 4
    %v3938 = vpop.permute.xlu0 %3937
    %3939 = vrot.lane.b32.xlu0 %v3887, 4
    %v3940 = vpop.permute.xlu0 %3939
    %3941 = vrot.lane.b32.xlu0 %v3888, 4
    %v3942 = vpop.permute.xlu0 %3941
    %3943 = vrot.lane.b32.xlu0 %v3889, 4
    %v3944 = vpop.permute.xlu0 %3943
    %3945 = vrot.lane.b32.xlu0 %v3890, 4
    %v3946 = vpop.permute.xlu0 %3945
    %3947 = vrot.lane.b32.xlu0 %v3891, 4
    %v3948 = vpop.permute.xlu0 %3947
    %3949 = vrot.lane.b32.xlu0 %v3892, 4
    %v3950 = vpop.permute.xlu0 %3949
    %3951 = vrot.lane.b32.xlu0 %v3893, 4
    %v3952 = vpop.permute.xlu0 %3951
    %3953 = vrot.lane.b32.xlu0 %v3894, 4
    %v3954 = vpop.permute.xlu0 %3953
    %3955 = vrot.lane.b32.xlu0 %v3895, 4
    %v3956 = vpop.permute.xlu0 %3955
    %3957 = vrot.lane.b32.xlu0 %v3896, 4
    %v3958 = vpop.permute.xlu0 %3957
    %3959 = vrot.lane.b32.xlu0 %v3897, 4
    %v3960 = vpop.permute.xlu0 %3959
    %3961 = vrot.lane.b32.xlu0 %v3898, 4
    %v3962 = vpop.permute.xlu0 %3961
    %v3963 = vunpack.c.l.b16 %v1020
    %v3964 = vunpack.c.l.b16 %v1023
    %v3965 = vunpack.c.l.b16 %v1027
    %v3966 = vunpack.c.l.b16 %v1030
    %v3967 = vunpack.c.l.b16 %v1034
    %v3968 = vunpack.c.l.b16 %v1037
    %v3969 = vunpack.c.l.b16 %v1041
    %v3970 = vunpack.c.l.b16 %v1044
    %v3971 = vunpack.c.l.b16 %v1048
    %v3972 = vunpack.c.l.b16 %v1051
    %v3973 = vunpack.c.l.b16 %v1055
    %v3974 = vunpack.c.l.b16 %v1058
    %v3975 = vunpack.c.l.b16 %v1062
    %v3976 = vunpack.c.l.b16 %v1065
    %v3977 = vunpack.c.l.b16 %v1069
    %v3978 = vunpack.c.l.b16 %v1072
    %v3979 = vunpack.c.l.b16 %v1076
    %v3980 = vunpack.c.l.b16 %v1079
    %v3981 = vunpack.c.l.b16 %v1083
    %v3982 = vunpack.c.l.b16 %v1086
    %v3983 = vunpack.c.l.b16 %v1090
    %v3984 = vunpack.c.l.b16 %v1093
    %v3985 = vunpack.c.l.b16 %v1097
    %v3986 = vunpack.c.l.b16 %v1100
    %v3987 = vunpack.c.l.b16 %v1104
    %v3988 = vunpack.c.l.b16 %v1107
    %v3989 = vunpack.c.l.b16 %v1111
    %v3990 = vunpack.c.l.b16 %v1114
    %v3991 = vunpack.c.l.b16 %v1118
    %v3992 = vunpack.c.l.b16 %v1121
    %v3993 = vunpack.c.l.b16 %v1125
    %v3994 = vunpack.c.l.b16 %v1128
    %v3995 = vunpack.c.l.b16 %v1132
    %v3996 = vunpack.c.l.b16 %v1135
    %v3997 = vunpack.c.l.b16 %v1139
    %v3998 = vunpack.c.l.b16 %v1142
    %v3999 = vunpack.c.l.b16 %v1146
    %v4000 = vunpack.c.l.b16 %v1149
    %v4001 = vunpack.c.l.b16 %v1153
    %v4002 = vunpack.c.l.b16 %v1156
    %v4003 = vunpack.c.l.b16 %v1160
    %v4004 = vunpack.c.l.b16 %v1163
    %v4005 = vunpack.c.l.b16 %v1167
    %v4006 = vunpack.c.l.b16 %v1170
    %v4007 = vunpack.c.l.b16 %v1174
    %v4008 = vunpack.c.l.b16 %v1177
    %v4009 = vunpack.c.l.b16 %v1181
    %v4010 = vunpack.c.l.b16 %v1184
    %v4011 = vunpack.c.l.b16 %v1188
    %v4012 = vunpack.c.l.b16 %v1191
    %v4013 = vunpack.c.l.b16 %v1195
    %v4014 = vunpack.c.l.b16 %v1198
    %v4015 = vunpack.c.l.b16 %v1202
    %v4016 = vunpack.c.l.b16 %v1205
    %v4017 = vunpack.c.l.b16 %v1209
    %v4018 = vunpack.c.l.b16 %v1212
    %v4019 = vunpack.c.l.b16 %v1216
    %v4020 = vunpack.c.l.b16 %v1219
    %v4021 = vunpack.c.l.b16 %v1223
    %v4022 = vunpack.c.l.b16 %v1226
    %v4023 = vunpack.c.l.b16 %v1230
    %v4024 = vunpack.c.l.b16 %v1233
    %v4025 = vunpack.c.l.b16 %v1237
    %v4026 = vunpack.c.l.b16 %v1240
    %v4027 = vpack.c.b16 %v3964, %v3963
    %v4028 = vpack.c.b16 %v3966, %v3965
    %v4029 = vpack.c.b16 %v3968, %v3967
    %v4030 = vpack.c.b16 %v3970, %v3969
    %v4031 = vpack.c.b16 %v3972, %v3971
    %v4032 = vpack.c.b16 %v3974, %v3973
    %v4033 = vpack.c.b16 %v3976, %v3975
    %v4034 = vpack.c.b16 %v3978, %v3977
    %v4035 = vpack.c.b16 %v3980, %v3979
    %v4036 = vpack.c.b16 %v3982, %v3981
    %v4037 = vpack.c.b16 %v3984, %v3983
    %v4038 = vpack.c.b16 %v3986, %v3985
    %v4039 = vpack.c.b16 %v3988, %v3987
    %v4040 = vpack.c.b16 %v3990, %v3989
    %v4041 = vpack.c.b16 %v3992, %v3991
    %v4042 = vpack.c.b16 %v3994, %v3993
    %v4043 = vpack.c.b16 %v3996, %v3995
    %v4044 = vpack.c.b16 %v3998, %v3997
    %v4045 = vpack.c.b16 %v4000, %v3999
    %v4046 = vpack.c.b16 %v4002, %v4001
    %v4047 = vpack.c.b16 %v4004, %v4003
    %v4048 = vpack.c.b16 %v4006, %v4005
    %v4049 = vpack.c.b16 %v4008, %v4007
    %v4050 = vpack.c.b16 %v4010, %v4009
    %v4051 = vpack.c.b16 %v4012, %v4011
    %v4052 = vpack.c.b16 %v4014, %v4013
    %v4053 = vpack.c.b16 %v4016, %v4015
    %v4054 = vpack.c.b16 %v4018, %v4017
    %v4055 = vpack.c.b16 %v4020, %v4019
    %v4056 = vpack.c.b16 %v4022, %v4021
    %v4057 = vpack.c.b16 %v4024, %v4023
    %v4058 = vpack.c.b16 %v4026, %v4025
    %4059 = vrot.lane.b32.xlu0 %v4027, 8
    %v4060 = vpop.permute.xlu0 %4059
    %4061 = vrot.lane.b32.xlu0 %v4028, 8
    %v4062 = vpop.permute.xlu0 %4061
    %4063 = vrot.lane.b32.xlu0 %v4029, 8
    %v4064 = vpop.permute.xlu0 %4063
    %4065 = vrot.lane.b32.xlu0 %v4030, 8
    %v4066 = vpop.permute.xlu0 %4065
    %4067 = vrot.lane.b32.xlu0 %v4031, 8
    %v4068 = vpop.permute.xlu0 %4067
    %4069 = vrot.lane.b32.xlu0 %v4032, 8
    %v4070 = vpop.permute.xlu0 %4069
    %4071 = vrot.lane.b32.xlu0 %v4033, 8
    %v4072 = vpop.permute.xlu0 %4071
    %4073 = vrot.lane.b32.xlu0 %v4034, 8
    %v4074 = vpop.permute.xlu0 %4073
    %4075 = vrot.lane.b32.xlu0 %v4035, 8
    %v4076 = vpop.permute.xlu0 %4075
    %4077 = vrot.lane.b32.xlu0 %v4036, 8
    %v4078 = vpop.permute.xlu0 %4077
    %4079 = vrot.lane.b32.xlu0 %v4037, 8
    %v4080 = vpop.permute.xlu0 %4079
    %4081 = vrot.lane.b32.xlu0 %v4038, 8
    %v4082 = vpop.permute.xlu0 %4081
    %4083 = vrot.lane.b32.xlu0 %v4039, 8
    %v4084 = vpop.permute.xlu0 %4083
    %4085 = vrot.lane.b32.xlu0 %v4040, 8
    %v4086 = vpop.permute.xlu0 %4085
    %4087 = vrot.lane.b32.xlu0 %v4041, 8
    %v4088 = vpop.permute.xlu0 %4087
    %4089 = vrot.lane.b32.xlu0 %v4042, 8
    %v4090 = vpop.permute.xlu0 %4089
    %4091 = vrot.lane.b32.xlu0 %v4043, 8
    %v4092 = vpop.permute.xlu0 %4091
    %4093 = vrot.lane.b32.xlu0 %v4044, 8
    %v4094 = vpop.permute.xlu0 %4093
    %4095 = vrot.lane.b32.xlu0 %v4045, 8
    %v4096 = vpop.permute.xlu0 %4095
    %4097 = vrot.lane.b32.xlu0 %v4046, 8
    %v4098 = vpop.permute.xlu0 %4097
    %4099 = vrot.lane.b32.xlu0 %v4047, 8
    %v4100 = vpop.permute.xlu0 %4099
    %4101 = vrot.lane.b32.xlu0 %v4048, 8
    %v4102 = vpop.permute.xlu0 %4101
    %4103 = vrot.lane.b32.xlu0 %v4049, 8
    %v4104 = vpop.permute.xlu0 %4103
    %4105 = vrot.lane.b32.xlu0 %v4050, 8
    %v4106 = vpop.permute.xlu0 %4105
    %4107 = vrot.lane.b32.xlu0 %v4051, 8
    %v4108 = vpop.permute.xlu0 %4107
    %4109 = vrot.lane.b32.xlu0 %v4052, 8
    %v4110 = vpop.permute.xlu0 %4109
    %4111 = vrot.lane.b32.xlu0 %v4053, 8
    %v4112 = vpop.permute.xlu0 %4111
    %4113 = vrot.lane.b32.xlu0 %v4054, 8
    %v4114 = vpop.permute.xlu0 %4113
    %4115 = vrot.lane.b32.xlu0 %v4055, 8
    %v4116 = vpop.permute.xlu0 %4115
    %4117 = vrot.lane.b32.xlu0 %v4056, 8
    %v4118 = vpop.permute.xlu0 %4117
    %4119 = vrot.lane.b32.xlu0 %v4057, 8
    %v4120 = vpop.permute.xlu0 %4119
    %4121 = vrot.lane.b32.xlu0 %v4058, 8
    %v4122 = vpop.permute.xlu0 %4121
    %v4155 = vunpack.c.l.b16 %v1242
    %v4156 = vunpack.c.l.b16 %v1243
    %v4157 = vunpack.c.l.b16 %v1244
    %v4158 = vunpack.c.l.b16 %v1245
    %v4159 = vunpack.c.l.b16 %v1246
    %v4160 = vunpack.c.l.b16 %v1247
    %v4161 = vunpack.c.l.b16 %v1248
    %v4162 = vunpack.c.l.b16 %v1249
    %v4163 = vunpack.c.l.b16 %v1250
    %v4164 = vunpack.c.l.b16 %v1251
    %v4165 = vunpack.c.l.b16 %v1252
    %v4166 = vunpack.c.l.b16 %v1253
    %v4167 = vunpack.c.l.b16 %v1254
    %v4168 = vunpack.c.l.b16 %v1255
    %v4169 = vunpack.c.l.b16 %v1256
    %v4170 = vunpack.c.l.b16 %v1257
    %v4171 = vunpack.c.l.b16 %v1258
    %v4172 = vunpack.c.l.b16 %v1259
    %v4173 = vunpack.c.l.b16 %v1260
    %v4174 = vunpack.c.l.b16 %v1261
    %v4175 = vunpack.c.l.b16 %v1262
    %v4176 = vunpack.c.l.b16 %v1263
    %v4177 = vunpack.c.l.b16 %v1264
    %v4178 = vunpack.c.l.b16 %v1265
    %v4179 = vunpack.c.l.b16 %v1266
    %v4180 = vunpack.c.l.b16 %v1267
    %v4181 = vunpack.c.l.b16 %v1268
    %v4182 = vunpack.c.l.b16 %v1269
    %v4183 = vunpack.c.l.b16 %v1270
    %v4184 = vunpack.c.l.b16 %v1271
    %v4185 = vunpack.c.l.b16 %v1272
    %v4186 = vunpack.c.l.b16 %v1273
    %v4187 = vunpack.c.l.b16 %v1274
    %v4188 = vunpack.c.l.b16 %v1275
    %v4189 = vunpack.c.l.b16 %v1276
    %v4190 = vunpack.c.l.b16 %v1277
    %v4191 = vunpack.c.l.b16 %v1278
    %v4192 = vunpack.c.l.b16 %v1279
    %v4193 = vunpack.c.l.b16 %v1280
    %v4194 = vunpack.c.l.b16 %v1281
    %v4195 = vunpack.c.l.b16 %v1282
    %v4196 = vunpack.c.l.b16 %v1283
    %v4197 = vunpack.c.l.b16 %v1284
    %v4198 = vunpack.c.l.b16 %v1285
    %v4199 = vunpack.c.l.b16 %v1286
    %v4200 = vunpack.c.l.b16 %v1287
    %v4201 = vunpack.c.l.b16 %v1288
    %v4202 = vunpack.c.l.b16 %v1289
    %v4203 = vunpack.c.l.b16 %v1290
    %v4204 = vunpack.c.l.b16 %v1291
    %v4205 = vunpack.c.l.b16 %v1292
    %v4206 = vunpack.c.l.b16 %v1293
    %v4207 = vunpack.c.l.b16 %v1294
    %v4208 = vunpack.c.l.b16 %v1295
    %v4209 = vunpack.c.l.b16 %v1296
    %v4210 = vunpack.c.l.b16 %v1297
    %v4211 = vunpack.c.l.b16 %v1298
    %v4212 = vunpack.c.l.b16 %v1299
    %v4213 = vunpack.c.l.b16 %v1300
    %v4214 = vunpack.c.l.b16 %v1301
    %v4215 = vunpack.c.l.b16 %v1302
    %v4216 = vunpack.c.l.b16 %v1303
    %v4217 = vunpack.c.l.b16 %v1304
    %v4218 = vunpack.c.l.b16 %v1305
    %v4219 = vpack.c.b16 %v4156, %v4155
    %v4220 = vpack.c.b16 %v4158, %v4157
    %v4221 = vpack.c.b16 %v4160, %v4159
    %v4222 = vpack.c.b16 %v4162, %v4161
    %v4223 = vpack.c.b16 %v4164, %v4163
    %v4224 = vpack.c.b16 %v4166, %v4165
    %v4225 = vpack.c.b16 %v4168, %v4167
    %v4226 = vpack.c.b16 %v4170, %v4169
    %v4227 = vpack.c.b16 %v4172, %v4171
    %v4228 = vpack.c.b16 %v4174, %v4173
    %v4229 = vpack.c.b16 %v4176, %v4175
    %v4230 = vpack.c.b16 %v4178, %v4177
    %v4231 = vpack.c.b16 %v4180, %v4179
    %v4232 = vpack.c.b16 %v4182, %v4181
    %v4233 = vpack.c.b16 %v4184, %v4183
    %v4234 = vpack.c.b16 %v4186, %v4185
    %v4235 = vpack.c.b16 %v4188, %v4187
    %v4236 = vpack.c.b16 %v4190, %v4189
    %v4237 = vpack.c.b16 %v4192, %v4191
    %v4238 = vpack.c.b16 %v4194, %v4193
    %v4239 = vpack.c.b16 %v4196, %v4195
    %v4240 = vpack.c.b16 %v4198, %v4197
    %v4241 = vpack.c.b16 %v4200, %v4199
    %v4242 = vpack.c.b16 %v4202, %v4201
    %v4243 = vpack.c.b16 %v4204, %v4203
    %v4244 = vpack.c.b16 %v4206, %v4205
    %v4245 = vpack.c.b16 %v4208, %v4207
    %v4246 = vpack.c.b16 %v4210, %v4209
    %v4247 = vpack.c.b16 %v4212, %v4211
    %v4248 = vpack.c.b16 %v4214, %v4213
    %v4249 = vpack.c.b16 %v4216, %v4215
    %v4250 = vpack.c.b16 %v4218, %v4217
    %4251 = vrot.lane.b32.xlu0 %v4219, 12
    %v4252 = vpop.permute.xlu0 %4251
    %4253 = vrot.lane.b32.xlu0 %v4220, 12
    %v4254 = vpop.permute.xlu0 %4253
    %4255 = vrot.lane.b32.xlu0 %v4221, 12
    %v4256 = vpop.permute.xlu0 %4255
    %4257 = vrot.lane.b32.xlu0 %v4222, 12
    %v4258 = vpop.permute.xlu0 %4257
    %4259 = vrot.lane.b32.xlu0 %v4223, 12
    %v4260 = vpop.permute.xlu0 %4259
    %4261 = vrot.lane.b32.xlu0 %v4224, 12
    %v4262 = vpop.permute.xlu0 %4261
    %4263 = vrot.lane.b32.xlu0 %v4225, 12
    %v4264 = vpop.permute.xlu0 %4263
    %4265 = vrot.lane.b32.xlu0 %v4226, 12
    %v4266 = vpop.permute.xlu0 %4265
    %4267 = vrot.lane.b32.xlu0 %v4227, 12
    %v4268 = vpop.permute.xlu0 %4267
    %4269 = vrot.lane.b32.xlu0 %v4228, 12
    %v4270 = vpop.permute.xlu0 %4269
    %4271 = vrot.lane.b32.xlu0 %v4229, 12
    %v4272 = vpop.permute.xlu0 %4271
    %4273 = vrot.lane.b32.xlu0 %v4230, 12
    %v4274 = vpop.permute.xlu0 %4273
    %4275 = vrot.lane.b32.xlu0 %v4231, 12
    %v4276 = vpop.permute.xlu0 %4275
    %4277 = vrot.lane.b32.xlu0 %v4232, 12
    %v4278 = vpop.permute.xlu0 %4277
    %4279 = vrot.lane.b32.xlu0 %v4233, 12
    %v4280 = vpop.permute.xlu0 %4279
    %4281 = vrot.lane.b32.xlu0 %v4234, 12
    %v4282 = vpop.permute.xlu0 %4281
    %4283 = vrot.lane.b32.xlu0 %v4235, 12
    %v4284 = vpop.permute.xlu0 %4283
    %4285 = vrot.lane.b32.xlu0 %v4236, 12
    %v4286 = vpop.permute.xlu0 %4285
    %4287 = vrot.lane.b32.xlu0 %v4237, 12
    %v4288 = vpop.permute.xlu0 %4287
    %4289 = vrot.lane.b32.xlu0 %v4238, 12
    %v4290 = vpop.permute.xlu0 %4289
    %4291 = vrot.lane.b32.xlu0 %v4239, 12
    %v4292 = vpop.permute.xlu0 %4291
    %4293 = vrot.lane.b32.xlu0 %v4240, 12
    %v4294 = vpop.permute.xlu0 %4293
    %4295 = vrot.lane.b32.xlu0 %v4241, 12
    %v4296 = vpop.permute.xlu0 %4295
    %4297 = vrot.lane.b32.xlu0 %v4242, 12
    %v4298 = vpop.permute.xlu0 %4297
    %4299 = vrot.lane.b32.xlu0 %v4243, 12
    %v4300 = vpop.permute.xlu0 %4299
    %4301 = vrot.lane.b32.xlu0 %v4244, 12
    %v4302 = vpop.permute.xlu0 %4301
    %4303 = vrot.lane.b32.xlu0 %v4245, 12
    %v4304 = vpop.permute.xlu0 %4303
    %4305 = vrot.lane.b32.xlu0 %v4246, 12
    %v4306 = vpop.permute.xlu0 %4305
    %4307 = vrot.lane.b32.xlu0 %v4247, 12
    %v4308 = vpop.permute.xlu0 %4307
    %4309 = vrot.lane.b32.xlu0 %v4248, 12
    %v4310 = vpop.permute.xlu0 %4309
    %4311 = vrot.lane.b32.xlu0 %v4249, 12
    %v4312 = vpop.permute.xlu0 %4311
    %4313 = vrot.lane.b32.xlu0 %v4250, 12
    %v4314 = vpop.permute.xlu0 %4313
    %v4315 = vunpack.c.l.b16 %v1351
    %v4316 = vunpack.c.l.b16 %v1361
    %v4317 = vunpack.c.l.b16 %v1375
    %v4318 = vunpack.c.l.b16 %v1385
    %v4319 = vunpack.c.l.b16 %v1399
    %v4320 = vunpack.c.l.b16 %v1409
    %v4321 = vunpack.c.l.b16 %v1423
    %v4322 = vunpack.c.l.b16 %v1433
    %v4323 = vunpack.c.l.b16 %v1447
    %v4324 = vunpack.c.l.b16 %v1457
    %v4325 = vunpack.c.l.b16 %v1471
    %v4326 = vunpack.c.l.b16 %v1481
    %v4327 = vunpack.c.l.b16 %v1495
    %v4328 = vunpack.c.l.b16 %v1505
    %v4329 = vunpack.c.l.b16 %v1519
    %v4330 = vunpack.c.l.b16 %v1529
    %v4331 = vunpack.c.l.b16 %v1543
    %v4332 = vunpack.c.l.b16 %v1553
    %v4333 = vunpack.c.l.b16 %v1567
    %v4334 = vunpack.c.l.b16 %v1577
    %v4335 = vunpack.c.l.b16 %v1591
    %v4336 = vunpack.c.l.b16 %v1601
    %v4337 = vunpack.c.l.b16 %v1615
    %v4338 = vunpack.c.l.b16 %v1625
    %v4339 = vunpack.c.l.b16 %v1639
    %v4340 = vunpack.c.l.b16 %v1649
    %v4341 = vunpack.c.l.b16 %v1663
    %v4342 = vunpack.c.l.b16 %v1673
    %v4343 = vunpack.c.l.b16 %v1687
    %v4344 = vunpack.c.l.b16 %v1697
    %v4345 = vunpack.c.l.b16 %v1711
    %v4346 = vunpack.c.l.b16 %v1721
    %v4347 = vunpack.c.l.b16 %v1735
    %v4348 = vunpack.c.l.b16 %v1745
    %v4349 = vunpack.c.l.b16 %v1759
    %v4350 = vunpack.c.l.b16 %v1769
    %v4351 = vunpack.c.l.b16 %v1783
    %v4352 = vunpack.c.l.b16 %v1793
    %v4353 = vunpack.c.l.b16 %v1807
    %v4354 = vunpack.c.l.b16 %v1817
    %v4355 = vunpack.c.l.b16 %v1831
    %v4356 = vunpack.c.l.b16 %v1841
    %v4357 = vunpack.c.l.b16 %v1855
    %v4358 = vunpack.c.l.b16 %v1865
    %v4359 = vunpack.c.l.b16 %v1879
    %v4360 = vunpack.c.l.b16 %v1889
    %v4361 = vunpack.c.l.b16 %v1903
    %v4362 = vunpack.c.l.b16 %v1913
    %v4363 = vunpack.c.l.b16 %v1927
    %v4364 = vunpack.c.l.b16 %v1937
    %v4365 = vunpack.c.l.b16 %v1951
    %v4366 = vunpack.c.l.b16 %v1961
    %v4367 = vunpack.c.l.b16 %v1975
    %v4368 = vunpack.c.l.b16 %v1985
    %v4369 = vunpack.c.l.b16 %v1999
    %v4370 = vunpack.c.l.b16 %v2009
    %v4371 = vunpack.c.l.b16 %v2023
    %v4372 = vunpack.c.l.b16 %v2033
    %v4373 = vunpack.c.l.b16 %v2047
    %v4374 = vunpack.c.l.b16 %v2057
    %v4375 = vunpack.c.l.b16 %v2071
    %v4376 = vunpack.c.l.b16 %v2081
    %v4377 = vunpack.c.l.b16 %v2095
    %v4378 = vunpack.c.l.b16 %v2105
    %v4379 = vpack.c.b16 %v4316, %v4315
    %v4380 = vpack.c.b16 %v4318, %v4317
    %v4381 = vpack.c.b16 %v4320, %v4319
    %v4382 = vpack.c.b16 %v4322, %v4321
    %v4383 = vpack.c.b16 %v4324, %v4323
    %v4384 = vpack.c.b16 %v4326, %v4325
    %v4385 = vpack.c.b16 %v4328, %v4327
    %v4386 = vpack.c.b16 %v4330, %v4329
    %v4387 = vpack.c.b16 %v4332, %v4331
    %v4388 = vpack.c.b16 %v4334, %v4333
    %v4389 = vpack.c.b16 %v4336, %v4335
    %v4390 = vpack.c.b16 %v4338, %v4337
    %v4391 = vpack.c.b16 %v4340, %v4339
    %v4392 = vpack.c.b16 %v4342, %v4341
    %v4393 = vpack.c.b16 %v4344, %v4343
    %v4394 = vpack.c.b16 %v4346, %v4345
    %v4395 = vpack.c.b16 %v4348, %v4347
    %v4396 = vpack.c.b16 %v4350, %v4349
    %v4397 = vpack.c.b16 %v4352, %v4351
    %v4398 = vpack.c.b16 %v4354, %v4353
    %v4399 = vpack.c.b16 %v4356, %v4355
    %v4400 = vpack.c.b16 %v4358, %v4357
    %v4401 = vpack.c.b16 %v4360, %v4359
    %v4402 = vpack.c.b16 %v4362, %v4361
    %v4403 = vpack.c.b16 %v4364, %v4363
    %v4404 = vpack.c.b16 %v4366, %v4365
    %v4405 = vpack.c.b16 %v4368, %v4367
    %v4406 = vpack.c.b16 %v4370, %v4369
    %v4407 = vpack.c.b16 %v4372, %v4371
    %v4408 = vpack.c.b16 %v4374, %v4373
    %v4409 = vpack.c.b16 %v4376, %v4375
    %v4410 = vpack.c.b16 %v4378, %v4377
    %4411 = vrot.lane.b32.xlu0 %v4379, 16
    %v4412 = vpop.permute.xlu0 %4411
    %4413 = vrot.lane.b32.xlu0 %v4380, 16
    %v4414 = vpop.permute.xlu0 %4413
    %4415 = vrot.lane.b32.xlu0 %v4381, 16
    %v4416 = vpop.permute.xlu0 %4415
    %4417 = vrot.lane.b32.xlu0 %v4382, 16
    %v4418 = vpop.permute.xlu0 %4417
    %4419 = vrot.lane.b32.xlu0 %v4383, 16
    %v4420 = vpop.permute.xlu0 %4419
    %4421 = vrot.lane.b32.xlu0 %v4384, 16
    %v4422 = vpop.permute.xlu0 %4421
    %4423 = vrot.lane.b32.xlu0 %v4385, 16
    %v4424 = vpop.permute.xlu0 %4423
    %4425 = vrot.lane.b32.xlu0 %v4386, 16
    %v4426 = vpop.permute.xlu0 %4425
    %4427 = vrot.lane.b32.xlu0 %v4387, 16
    %v4428 = vpop.permute.xlu0 %4427
    %4429 = vrot.lane.b32.xlu0 %v4388, 16
    %v4430 = vpop.permute.xlu0 %4429
    %4431 = vrot.lane.b32.xlu0 %v4389, 16
    %v4432 = vpop.permute.xlu0 %4431
    %4433 = vrot.lane.b32.xlu0 %v4390, 16
    %v4434 = vpop.permute.xlu0 %4433
    %4435 = vrot.lane.b32.xlu0 %v4391, 16
    %v4436 = vpop.permute.xlu0 %4435
    %4437 = vrot.lane.b32.xlu0 %v4392, 16
    %v4438 = vpop.permute.xlu0 %4437
    %4439 = vrot.lane.b32.xlu0 %v4393, 16
    %v4440 = vpop.permute.xlu0 %4439
    %4441 = vrot.lane.b32.xlu0 %v4394, 16
    %v4442 = vpop.permute.xlu0 %4441
    %4443 = vrot.lane.b32.xlu0 %v4395, 16
    %v4444 = vpop.permute.xlu0 %4443
    %4445 = vrot.lane.b32.xlu0 %v4396, 16
    %v4446 = vpop.permute.xlu0 %4445
    %4447 = vrot.lane.b32.xlu0 %v4397, 16
    %v4448 = vpop.permute.xlu0 %4447
    %4449 = vrot.lane.b32.xlu0 %v4398, 16
    %v4450 = vpop.permute.xlu0 %4449
    %4451 = vrot.lane.b32.xlu0 %v4399, 16
    %v4452 = vpop.permute.xlu0 %4451
    %4453 = vrot.lane.b32.xlu0 %v4400, 16
    %v4454 = vpop.permute.xlu0 %4453
    %4455 = vrot.lane.b32.xlu0 %v4401, 16
    %v4456 = vpop.permute.xlu0 %4455
    %4457 = vrot.lane.b32.xlu0 %v4402, 16
    %v4458 = vpop.permute.xlu0 %4457
    %4459 = vrot.lane.b32.xlu0 %v4403, 16
    %v4460 = vpop.permute.xlu0 %4459
    %4461 = vrot.lane.b32.xlu0 %v4404, 16
    %v4462 = vpop.permute.xlu0 %4461
    %4463 = vrot.lane.b32.xlu0 %v4405, 16
    %v4464 = vpop.permute.xlu0 %4463
    %4465 = vrot.lane.b32.xlu0 %v4406, 16
    %v4466 = vpop.permute.xlu0 %4465
    %4467 = vrot.lane.b32.xlu0 %v4407, 16
    %v4468 = vpop.permute.xlu0 %4467
    %4469 = vrot.lane.b32.xlu0 %v4408, 16
    %v4470 = vpop.permute.xlu0 %4469
    %4471 = vrot.lane.b32.xlu0 %v4409, 16
    %v4472 = vpop.permute.xlu0 %4471
    %4473 = vrot.lane.b32.xlu0 %v4410, 16
    %v4474 = vpop.permute.xlu0 %4473
    %v4475 = vunpack.c.l.b16 %v2237
    %v4476 = vunpack.c.l.b16 %v2240
    %v4477 = vunpack.c.l.b16 %v2244
    %v4478 = vunpack.c.l.b16 %v2247
    %v4479 = vunpack.c.l.b16 %v2251
    %v4480 = vunpack.c.l.b16 %v2254
    %v4481 = vunpack.c.l.b16 %v2258
    %v4482 = vunpack.c.l.b16 %v2261
    %v4483 = vunpack.c.l.b16 %v2265
    %v4484 = vunpack.c.l.b16 %v2268
    %v4485 = vunpack.c.l.b16 %v2272
    %v4486 = vunpack.c.l.b16 %v2275
    %v4487 = vunpack.c.l.b16 %v2279
    %v4488 = vunpack.c.l.b16 %v2282
    %v4489 = vunpack.c.l.b16 %v2286
    %v4490 = vunpack.c.l.b16 %v2289
    %v4491 = vunpack.c.l.b16 %v2293
    %v4492 = vunpack.c.l.b16 %v2296
    %v4493 = vunpack.c.l.b16 %v2300
    %v4494 = vunpack.c.l.b16 %v2303
    %v4495 = vunpack.c.l.b16 %v2307
    %v4496 = vunpack.c.l.b16 %v2310
    %v4497 = vunpack.c.l.b16 %v2314
    %v4498 = vunpack.c.l.b16 %v2317
    %v4499 = vunpack.c.l.b16 %v2321
    %v4500 = vunpack.c.l.b16 %v2324
    %v4501 = vunpack.c.l.b16 %v2328
    %v4502 = vunpack.c.l.b16 %v2331
    %v4503 = vunpack.c.l.b16 %v2335
    %v4504 = vunpack.c.l.b16 %v2338
    %v4505 = vunpack.c.l.b16 %v2342
    %v4506 = vunpack.c.l.b16 %v2345
    %v4507 = vunpack.c.l.b16 %v2349
    %v4508 = vunpack.c.l.b16 %v2352
    %v4509 = vunpack.c.l.b16 %v2356
    %v4510 = vunpack.c.l.b16 %v2359
    %v4511 = vunpack.c.l.b16 %v2363
    %v4512 = vunpack.c.l.b16 %v2366
    %v4513 = vunpack.c.l.b16 %v2370
    %v4514 = vunpack.c.l.b16 %v2373
    %v4515 = vunpack.c.l.b16 %v2377
    %v4516 = vunpack.c.l.b16 %v2380
    %v4517 = vunpack.c.l.b16 %v2384
    %v4518 = vunpack.c.l.b16 %v2387
    %v4519 = vunpack.c.l.b16 %v2391
    %v4520 = vunpack.c.l.b16 %v2394
    %v4521 = vunpack.c.l.b16 %v2398
    %v4522 = vunpack.c.l.b16 %v2401
    %v4523 = vunpack.c.l.b16 %v2405
    %v4524 = vunpack.c.l.b16 %v2408
    %v4525 = vunpack.c.l.b16 %v2412
    %v4526 = vunpack.c.l.b16 %v2415
    %v4527 = vunpack.c.l.b16 %v2419
    %v4528 = vunpack.c.l.b16 %v2422
    %v4529 = vunpack.c.l.b16 %v2426
    %v4530 = vunpack.c.l.b16 %v2429
    %v4531 = vunpack.c.l.b16 %v2433
    %v4532 = vunpack.c.l.b16 %v2436
    %v4533 = vunpack.c.l.b16 %v2440
    %v4534 = vunpack.c.l.b16 %v2443
    %v4535 = vunpack.c.l.b16 %v2447
    %v4536 = vunpack.c.l.b16 %v2450
    %v4537 = vunpack.c.l.b16 %v2454
    %v4538 = vunpack.c.l.b16 %v2457
    %v4539 = vpack.c.b16 %v4476, %v4475
    %v4540 = vpack.c.b16 %v4478, %v4477
    %v4541 = vpack.c.b16 %v4480, %v4479
    %v4542 = vpack.c.b16 %v4482, %v4481
    %v4543 = vpack.c.b16 %v4484, %v4483
    %v4544 = vpack.c.b16 %v4486, %v4485
    %v4545 = vpack.c.b16 %v4488, %v4487
    %v4546 = vpack.c.b16 %v4490, %v4489
    %v4547 = vpack.c.b16 %v4492, %v4491
    %v4548 = vpack.c.b16 %v4494, %v4493
    %v4549 = vpack.c.b16 %v4496, %v4495
    %v4550 = vpack.c.b16 %v4498, %v4497
    %v4551 = vpack.c.b16 %v4500, %v4499
    %v4552 = vpack.c.b16 %v4502, %v4501
    %v4553 = vpack.c.b16 %v4504, %v4503
    %v4554 = vpack.c.b16 %v4506, %v4505
    %v4555 = vpack.c.b16 %v4508, %v4507
    %v4556 = vpack.c.b16 %v4510, %v4509
    %v4557 = vpack.c.b16 %v4512, %v4511
    %v4558 = vpack.c.b16 %v4514, %v4513
    %v4559 = vpack.c.b16 %v4516, %v4515
    %v4560 = vpack.c.b16 %v4518, %v4517
    %v4561 = vpack.c.b16 %v4520, %v4519
    %v4562 = vpack.c.b16 %v4522, %v4521
    %v4563 = vpack.c.b16 %v4524, %v4523
    %v4564 = vpack.c.b16 %v4526, %v4525
    %v4565 = vpack.c.b16 %v4528, %v4527
    %v4566 = vpack.c.b16 %v4530, %v4529
    %v4567 = vpack.c.b16 %v4532, %v4531
    %v4568 = vpack.c.b16 %v4534, %v4533
    %v4569 = vpack.c.b16 %v4536, %v4535
    %v4570 = vpack.c.b16 %v4538, %v4537
    %4571 = vrot.lane.b32.xlu0 %v4539, 20
    %v4572 = vpop.permute.xlu0 %4571
    %4573 = vrot.lane.b32.xlu0 %v4540, 20
    %v4574 = vpop.permute.xlu0 %4573
    %4575 = vrot.lane.b32.xlu0 %v4541, 20
    %v4576 = vpop.permute.xlu0 %4575
    %4577 = vrot.lane.b32.xlu0 %v4542, 20
    %v4578 = vpop.permute.xlu0 %4577
    %4579 = vrot.lane.b32.xlu0 %v4543, 20
    %v4580 = vpop.permute.xlu0 %4579
    %4581 = vrot.lane.b32.xlu0 %v4544, 20
    %v4582 = vpop.permute.xlu0 %4581
    %4583 = vrot.lane.b32.xlu0 %v4545, 20
    %v4584 = vpop.permute.xlu0 %4583
    %4585 = vrot.lane.b32.xlu0 %v4546, 20
    %v4586 = vpop.permute.xlu0 %4585
    %4587 = vrot.lane.b32.xlu0 %v4547, 20
    %v4588 = vpop.permute.xlu0 %4587
    %4589 = vrot.lane.b32.xlu0 %v4548, 20
    %v4590 = vpop.permute.xlu0 %4589
    %4591 = vrot.lane.b32.xlu0 %v4549, 20
    %v4592 = vpop.permute.xlu0 %4591
    %4593 = vrot.lane.b32.xlu0 %v4550, 20
    %v4594 = vpop.permute.xlu0 %4593
    %4595 = vrot.lane.b32.xlu0 %v4551, 20
    %v4596 = vpop.permute.xlu0 %4595
    %4597 = vrot.lane.b32.xlu0 %v4552, 20
    %v4598 = vpop.permute.xlu0 %4597
    %4599 = vrot.lane.b32.xlu0 %v4553, 20
    %v4600 = vpop.permute.xlu0 %4599
    %4601 = vrot.lane.b32.xlu0 %v4554, 20
    %v4602 = vpop.permute.xlu0 %4601
    %4603 = vrot.lane.b32.xlu0 %v4555, 20
    %v4604 = vpop.permute.xlu0 %4603
    %4605 = vrot.lane.b32.xlu0 %v4556, 20
    %v4606 = vpop.permute.xlu0 %4605
    %4607 = vrot.lane.b32.xlu0 %v4557, 20
    %v4608 = vpop.permute.xlu0 %4607
    %4609 = vrot.lane.b32.xlu0 %v4558, 20
    %v4610 = vpop.permute.xlu0 %4609
    %4611 = vrot.lane.b32.xlu0 %v4559, 20
    %v4612 = vpop.permute.xlu0 %4611
    %4613 = vrot.lane.b32.xlu0 %v4560, 20
    %v4614 = vpop.permute.xlu0 %4613
    %4615 = vrot.lane.b32.xlu0 %v4561, 20
    %v4616 = vpop.permute.xlu0 %4615
    %4617 = vrot.lane.b32.xlu0 %v4562, 20
    %v4618 = vpop.permute.xlu0 %4617
    %4619 = vrot.lane.b32.xlu0 %v4563, 20
    %v4620 = vpop.permute.xlu0 %4619
    %4621 = vrot.lane.b32.xlu0 %v4564, 20
    %v4622 = vpop.permute.xlu0 %4621
    %4623 = vrot.lane.b32.xlu0 %v4565, 20
    %v4624 = vpop.permute.xlu0 %4623
    %4625 = vrot.lane.b32.xlu0 %v4566, 20
    %v4626 = vpop.permute.xlu0 %4625
    %4627 = vrot.lane.b32.xlu0 %v4567, 20
    %v4628 = vpop.permute.xlu0 %4627
    %4629 = vrot.lane.b32.xlu0 %v4568, 20
    %v4630 = vpop.permute.xlu0 %4629
    %4631 = vrot.lane.b32.xlu0 %v4569, 20
    %v4632 = vpop.permute.xlu0 %4631
    %4633 = vrot.lane.b32.xlu0 %v4570, 20
    %v4634 = vpop.permute.xlu0 %4633
    %v4667 = vunpack.c.l.b16 %v2459
    %v4668 = vunpack.c.l.b16 %v2460
    %v4669 = vunpack.c.l.b16 %v2461
    %v4670 = vunpack.c.l.b16 %v2462
    %v4671 = vunpack.c.l.b16 %v2463
    %v4672 = vunpack.c.l.b16 %v2464
    %v4673 = vunpack.c.l.b16 %v2465
    %v4674 = vunpack.c.l.b16 %v2466
    %v4675 = vunpack.c.l.b16 %v2467
    %v4676 = vunpack.c.l.b16 %v2468
    %v4677 = vunpack.c.l.b16 %v2469
    %v4678 = vunpack.c.l.b16 %v2470
    %v4679 = vunpack.c.l.b16 %v2471
    %v4680 = vunpack.c.l.b16 %v2472
    %v4681 = vunpack.c.l.b16 %v2473
    %v4682 = vunpack.c.l.b16 %v2474
    %v4683 = vunpack.c.l.b16 %v2475
    %v4684 = vunpack.c.l.b16 %v2476
    %v4685 = vunpack.c.l.b16 %v2477
    %v4686 = vunpack.c.l.b16 %v2478
    %v4687 = vunpack.c.l.b16 %v2479
    %v4688 = vunpack.c.l.b16 %v2480
    %v4689 = vunpack.c.l.b16 %v2481
    %v4690 = vunpack.c.l.b16 %v2482
    %v4691 = vunpack.c.l.b16 %v2483
    %v4692 = vunpack.c.l.b16 %v2484
    %v4693 = vunpack.c.l.b16 %v2485
    %v4694 = vunpack.c.l.b16 %v2486
    %v4695 = vunpack.c.l.b16 %v2487
    %v4696 = vunpack.c.l.b16 %v2488
    %v4697 = vunpack.c.l.b16 %v2489
    %v4698 = vunpack.c.l.b16 %v2490
    %v4699 = vunpack.c.l.b16 %v2491
    %v4700 = vunpack.c.l.b16 %v2492
    %v4701 = vunpack.c.l.b16 %v2493
    %v4702 = vunpack.c.l.b16 %v2494
    %v4703 = vunpack.c.l.b16 %v2495
    %v4704 = vunpack.c.l.b16 %v2496
    %v4705 = vunpack.c.l.b16 %v2497
    %v4706 = vunpack.c.l.b16 %v2498
    %v4707 = vunpack.c.l.b16 %v2499
    %v4708 = vunpack.c.l.b16 %v2500
    %v4709 = vunpack.c.l.b16 %v2501
    %v4710 = vunpack.c.l.b16 %v2502
    %v4711 = vunpack.c.l.b16 %v2503
    %v4712 = vunpack.c.l.b16 %v2504
    %v4713 = vunpack.c.l.b16 %v2505
    %v4714 = vunpack.c.l.b16 %v2506
    %v4715 = vunpack.c.l.b16 %v2507
    %v4716 = vunpack.c.l.b16 %v2508
    %v4717 = vunpack.c.l.b16 %v2509
    %v4718 = vunpack.c.l.b16 %v2510
    %v4719 = vunpack.c.l.b16 %v2511
    %v4720 = vunpack.c.l.b16 %v2512
    %v4721 = vunpack.c.l.b16 %v2513
    %v4722 = vunpack.c.l.b16 %v2514
    %v4723 = vunpack.c.l.b16 %v2515
    %v4724 = vunpack.c.l.b16 %v2516
    %v4725 = vunpack.c.l.b16 %v2517
    %v4726 = vunpack.c.l.b16 %v2518
    %v4727 = vunpack.c.l.b16 %v2519
    %v4728 = vunpack.c.l.b16 %v2520
    %v4729 = vunpack.c.l.b16 %v2521
    %v4730 = vunpack.c.l.b16 %v2522
    %v4731 = vpack.c.b16 %v4668, %v4667
    %v4732 = vpack.c.b16 %v4670, %v4669
    %v4733 = vpack.c.b16 %v4672, %v4671
    %v4734 = vpack.c.b16 %v4674, %v4673
    %v4735 = vpack.c.b16 %v4676, %v4675
    %v4736 = vpack.c.b16 %v4678, %v4677
    %v4737 = vpack.c.b16 %v4680, %v4679
    %v4738 = vpack.c.b16 %v4682, %v4681
    %v4739 = vpack.c.b16 %v4684, %v4683
    %v4740 = vpack.c.b16 %v4686, %v4685
    %v4741 = vpack.c.b16 %v4688, %v4687
    %v4742 = vpack.c.b16 %v4690, %v4689
    %v4743 = vpack.c.b16 %v4692, %v4691
    %v4744 = vpack.c.b16 %v4694, %v4693
    %v4745 = vpack.c.b16 %v4696, %v4695
    %v4746 = vpack.c.b16 %v4698, %v4697
    %v4747 = vpack.c.b16 %v4700, %v4699
    %v4748 = vpack.c.b16 %v4702, %v4701
    %v4749 = vpack.c.b16 %v4704, %v4703
    %v4750 = vpack.c.b16 %v4706, %v4705
    %v4751 = vpack.c.b16 %v4708, %v4707
    %v4752 = vpack.c.b16 %v4710, %v4709
    %v4753 = vpack.c.b16 %v4712, %v4711
    %v4754 = vpack.c.b16 %v4714, %v4713
    %v4755 = vpack.c.b16 %v4716, %v4715
    %v4756 = vpack.c.b16 %v4718, %v4717
    %v4757 = vpack.c.b16 %v4720, %v4719
    %v4758 = vpack.c.b16 %v4722, %v4721
    %v4759 = vpack.c.b16 %v4724, %v4723
    %v4760 = vpack.c.b16 %v4726, %v4725
    %v4761 = vpack.c.b16 %v4728, %v4727
    %v4762 = vpack.c.b16 %v4730, %v4729
    %4763 = vrot.lane.b32.xlu0 %v4731, 24
    %v4764 = vpop.permute.xlu0 %4763
    %4765 = vrot.lane.b32.xlu0 %v4732, 24
    %v4766 = vpop.permute.xlu0 %4765
    %4767 = vrot.lane.b32.xlu0 %v4733, 24
    %v4768 = vpop.permute.xlu0 %4767
    %4769 = vrot.lane.b32.xlu0 %v4734, 24
    %v4770 = vpop.permute.xlu0 %4769
    %4771 = vrot.lane.b32.xlu0 %v4735, 24
    %v4772 = vpop.permute.xlu0 %4771
    %4773 = vrot.lane.b32.xlu0 %v4736, 24
    %v4774 = vpop.permute.xlu0 %4773
    %4775 = vrot.lane.b32.xlu0 %v4737, 24
    %v4776 = vpop.permute.xlu0 %4775
    %4777 = vrot.lane.b32.xlu0 %v4738, 24
    %v4778 = vpop.permute.xlu0 %4777
    %4779 = vrot.lane.b32.xlu0 %v4739, 24
    %v4780 = vpop.permute.xlu0 %4779
    %4781 = vrot.lane.b32.xlu0 %v4740, 24
    %v4782 = vpop.permute.xlu0 %4781
    %4783 = vrot.lane.b32.xlu0 %v4741, 24
    %v4784 = vpop.permute.xlu0 %4783
    %4785 = vrot.lane.b32.xlu0 %v4742, 24
    %v4786 = vpop.permute.xlu0 %4785
    %4787 = vrot.lane.b32.xlu0 %v4743, 24
    %v4788 = vpop.permute.xlu0 %4787
    %4789 = vrot.lane.b32.xlu0 %v4744, 24
    %v4790 = vpop.permute.xlu0 %4789
    %4791 = vrot.lane.b32.xlu0 %v4745, 24
    %v4792 = vpop.permute.xlu0 %4791
    %4793 = vrot.lane.b32.xlu0 %v4746, 24
    %v4794 = vpop.permute.xlu0 %4793
    %4795 = vrot.lane.b32.xlu0 %v4747, 24
    %v4796 = vpop.permute.xlu0 %4795
    %4797 = vrot.lane.b32.xlu0 %v4748, 24
    %v4798 = vpop.permute.xlu0 %4797
    %4799 = vrot.lane.b32.xlu0 %v4749, 24
    %v4800 = vpop.permute.xlu0 %4799
    %4801 = vrot.lane.b32.xlu0 %v4750, 24
    %v4802 = vpop.permute.xlu0 %4801
    %4803 = vrot.lane.b32.xlu0 %v4751, 24
    %v4804 = vpop.permute.xlu0 %4803
    %4805 = vrot.lane.b32.xlu0 %v4752, 24
    %v4806 = vpop.permute.xlu0 %4805
    %4807 = vrot.lane.b32.xlu0 %v4753, 24
    %v4808 = vpop.permute.xlu0 %4807
    %4809 = vrot.lane.b32.xlu0 %v4754, 24
    %v4810 = vpop.permute.xlu0 %4809
    %4811 = vrot.lane.b32.xlu0 %v4755, 24
    %v4812 = vpop.permute.xlu0 %4811
    %4813 = vrot.lane.b32.xlu0 %v4756, 24
    %v4814 = vpop.permute.xlu0 %4813
    %4815 = vrot.lane.b32.xlu0 %v4757, 24
    %v4816 = vpop.permute.xlu0 %4815
    %4817 = vrot.lane.b32.xlu0 %v4758, 24
    %v4818 = vpop.permute.xlu0 %4817
    %4819 = vrot.lane.b32.xlu0 %v4759, 24
    %v4820 = vpop.permute.xlu0 %4819
    %4821 = vrot.lane.b32.xlu0 %v4760, 24
    %v4822 = vpop.permute.xlu0 %4821
    %4823 = vrot.lane.b32.xlu0 %v4761, 24
    %v4824 = vpop.permute.xlu0 %4823
    %4825 = vrot.lane.b32.xlu0 %v4762, 24
    %v4826 = vpop.permute.xlu0 %4825
    %v4827 = vunpack.c.l.b16 %v2568
    %v4828 = vunpack.c.l.b16 %v2578
    %v4829 = vunpack.c.l.b16 %v2592
    %v4830 = vunpack.c.l.b16 %v2602
    %v4831 = vunpack.c.l.b16 %v2616
    %v4832 = vunpack.c.l.b16 %v2626
    %v4833 = vunpack.c.l.b16 %v2640
    %v4834 = vunpack.c.l.b16 %v2650
    %v4835 = vunpack.c.l.b16 %v2664
    %v4836 = vunpack.c.l.b16 %v2674
    %v4837 = vunpack.c.l.b16 %v2688
    %v4838 = vunpack.c.l.b16 %v2698
    %v4839 = vunpack.c.l.b16 %v2712
    %v4840 = vunpack.c.l.b16 %v2722
    %v4841 = vunpack.c.l.b16 %v2736
    %v4842 = vunpack.c.l.b16 %v2746
    %v4843 = vunpack.c.l.b16 %v2760
    %v4844 = vunpack.c.l.b16 %v2770
    %v4845 = vunpack.c.l.b16 %v2784
    %v4846 = vunpack.c.l.b16 %v2794
    %v4847 = vunpack.c.l.b16 %v2808
    %v4848 = vunpack.c.l.b16 %v2818
    %v4849 = vunpack.c.l.b16 %v2832
    %v4850 = vunpack.c.l.b16 %v2842
    %v4851 = vunpack.c.l.b16 %v2856
    %v4852 = vunpack.c.l.b16 %v2866
    %v4853 = vunpack.c.l.b16 %v2880
    %v4854 = vunpack.c.l.b16 %v2890
    %v4855 = vunpack.c.l.b16 %v2904
    %v4856 = vunpack.c.l.b16 %v2914
    %v4857 = vunpack.c.l.b16 %v2928
    %v4858 = vunpack.c.l.b16 %v2938
    %v4859 = vunpack.c.l.b16 %v2952
    %v4860 = vunpack.c.l.b16 %v2962
    %v4861 = vunpack.c.l.b16 %v2976
    %v4862 = vunpack.c.l.b16 %v2986
    %v4863 = vunpack.c.l.b16 %v3000
    %v4864 = vunpack.c.l.b16 %v3010
    %v4865 = vunpack.c.l.b16 %v3024
    %v4866 = vunpack.c.l.b16 %v3034
    %v4867 = vunpack.c.l.b16 %v3048
    %v4868 = vunpack.c.l.b16 %v3058
    %v4869 = vunpack.c.l.b16 %v3072
    %v4870 = vunpack.c.l.b16 %v3082
    %v4871 = vunpack.c.l.b16 %v3096
    %v4872 = vunpack.c.l.b16 %v3106
    %v4873 = vunpack.c.l.b16 %v3120
    %v4874 = vunpack.c.l.b16 %v3130
    %v4875 = vunpack.c.l.b16 %v3144
    %v4876 = vunpack.c.l.b16 %v3154
    %v4877 = vunpack.c.l.b16 %v3168
    %v4878 = vunpack.c.l.b16 %v3178
    %v4879 = vunpack.c.l.b16 %v3192
    %v4880 = vunpack.c.l.b16 %v3202
    %v4881 = vunpack.c.l.b16 %v3216
    %v4882 = vunpack.c.l.b16 %v3226
    %v4883 = vunpack.c.l.b16 %v3240
    %v4884 = vunpack.c.l.b16 %v3250
    %v4885 = vunpack.c.l.b16 %v3264
    %v4886 = vunpack.c.l.b16 %v3274
    %v4887 = vunpack.c.l.b16 %v3288
    %v4888 = vunpack.c.l.b16 %v3298
    %v4889 = vunpack.c.l.b16 %v3312
    %v4890 = vunpack.c.l.b16 %v3322
    %v4891 = vpack.c.b16 %v4828, %v4827
    %v4892 = vpack.c.b16 %v4830, %v4829
    %v4893 = vpack.c.b16 %v4832, %v4831
    %v4894 = vpack.c.b16 %v4834, %v4833
    %v4895 = vpack.c.b16 %v4836, %v4835
    %v4896 = vpack.c.b16 %v4838, %v4837
    %v4897 = vpack.c.b16 %v4840, %v4839
    %v4898 = vpack.c.b16 %v4842, %v4841
    %v4899 = vpack.c.b16 %v4844, %v4843
    %v4900 = vpack.c.b16 %v4846, %v4845
    %v4901 = vpack.c.b16 %v4848, %v4847
    %v4902 = vpack.c.b16 %v4850, %v4849
    %v4903 = vpack.c.b16 %v4852, %v4851
    %v4904 = vpack.c.b16 %v4854, %v4853
    %v4905 = vpack.c.b16 %v4856, %v4855
    %v4906 = vpack.c.b16 %v4858, %v4857
    %v4907 = vpack.c.b16 %v4860, %v4859
    %v4908 = vpack.c.b16 %v4862, %v4861
    %v4909 = vpack.c.b16 %v4864, %v4863
    %v4910 = vpack.c.b16 %v4866, %v4865
    %v4911 = vpack.c.b16 %v4868, %v4867
    %v4912 = vpack.c.b16 %v4870, %v4869
    %v4913 = vpack.c.b16 %v4872, %v4871
    %v4914 = vpack.c.b16 %v4874, %v4873
    %v4915 = vpack.c.b16 %v4876, %v4875
    %v4916 = vpack.c.b16 %v4878, %v4877
    %v4917 = vpack.c.b16 %v4880, %v4879
    %v4918 = vpack.c.b16 %v4882, %v4881
    %v4919 = vpack.c.b16 %v4884, %v4883
    %v4920 = vpack.c.b16 %v4886, %v4885
    %v4921 = vpack.c.b16 %v4888, %v4887
    %v4922 = vpack.c.b16 %v4890, %v4889
    %4923 = vrot.lane.b32.xlu0 %v4891, 28
    %v4924 = vpop.permute.xlu0 %4923
    %4925 = vrot.lane.b32.xlu0 %v4892, 28
    %v4926 = vpop.permute.xlu0 %4925
    %4927 = vrot.lane.b32.xlu0 %v4893, 28
    %v4928 = vpop.permute.xlu0 %4927
    %4929 = vrot.lane.b32.xlu0 %v4894, 28
    %v4930 = vpop.permute.xlu0 %4929
    %4931 = vrot.lane.b32.xlu0 %v4895, 28
    %v4932 = vpop.permute.xlu0 %4931
    %4933 = vrot.lane.b32.xlu0 %v4896, 28
    %v4934 = vpop.permute.xlu0 %4933
    %4935 = vrot.lane.b32.xlu0 %v4897, 28
    %v4936 = vpop.permute.xlu0 %4935
    %4937 = vrot.lane.b32.xlu0 %v4898, 28
    %v4938 = vpop.permute.xlu0 %4937
    %4939 = vrot.lane.b32.xlu0 %v4899, 28
    %v4940 = vpop.permute.xlu0 %4939
    %4941 = vrot.lane.b32.xlu0 %v4900, 28
    %v4942 = vpop.permute.xlu0 %4941
    %4943 = vrot.lane.b32.xlu0 %v4901, 28
    %v4944 = vpop.permute.xlu0 %4943
    %4945 = vrot.lane.b32.xlu0 %v4902, 28
    %v4946 = vpop.permute.xlu0 %4945
    %4947 = vrot.lane.b32.xlu0 %v4903, 28
    %v4948 = vpop.permute.xlu0 %4947
    %4949 = vrot.lane.b32.xlu0 %v4904, 28
    %v4950 = vpop.permute.xlu0 %4949
    %4951 = vrot.lane.b32.xlu0 %v4905, 28
    %v4952 = vpop.permute.xlu0 %4951
    %4953 = vrot.lane.b32.xlu0 %v4906, 28
    %v4954 = vpop.permute.xlu0 %4953
    %4955 = vrot.lane.b32.xlu0 %v4907, 28
    %v4956 = vpop.permute.xlu0 %4955
    %4957 = vrot.lane.b32.xlu0 %v4908, 28
    %v4958 = vpop.permute.xlu0 %4957
    %4959 = vrot.lane.b32.xlu0 %v4909, 28
    %v4960 = vpop.permute.xlu0 %4959
    %4961 = vrot.lane.b32.xlu0 %v4910, 28
    %v4962 = vpop.permute.xlu0 %4961
    %4963 = vrot.lane.b32.xlu0 %v4911, 28
    %v4964 = vpop.permute.xlu0 %4963
    %4965 = vrot.lane.b32.xlu0 %v4912, 28
    %v4966 = vpop.permute.xlu0 %4965
    %4967 = vrot.lane.b32.xlu0 %v4913, 28
    %v4968 = vpop.permute.xlu0 %4967
    %4969 = vrot.lane.b32.xlu0 %v4914, 28
    %v4970 = vpop.permute.xlu0 %4969
    %4971 = vrot.lane.b32.xlu0 %v4915, 28
    %v4972 = vpop.permute.xlu0 %4971
    %4973 = vrot.lane.b32.xlu0 %v4916, 28
    %v4974 = vpop.permute.xlu0 %4973
    %4975 = vrot.lane.b32.xlu0 %v4917, 28
    %v4976 = vpop.permute.xlu0 %4975
    %4977 = vrot.lane.b32.xlu0 %v4918, 28
    %v4978 = vpop.permute.xlu0 %4977
    %4979 = vrot.lane.b32.xlu0 %v4919, 28
    %v4980 = vpop.permute.xlu0 %4979
    %4981 = vrot.lane.b32.xlu0 %v4920, 28
    %v4982 = vpop.permute.xlu0 %4981
    %4983 = vrot.lane.b32.xlu0 %v4921, 28
    %v4984 = vpop.permute.xlu0 %4983
    %4985 = vrot.lane.b32.xlu0 %v4922, 28
    %v4986 = vpop.permute.xlu0 %4985
    %v4987 = vunpack.c.l.b16 %v3454
    %v4988 = vunpack.c.l.b16 %v3457
    %v4989 = vunpack.c.l.b16 %v3461
    %v4990 = vunpack.c.l.b16 %v3464
    %v4991 = vunpack.c.l.b16 %v3468
    %v4992 = vunpack.c.l.b16 %v3471
    %v4993 = vunpack.c.l.b16 %v3475
    %v4994 = vunpack.c.l.b16 %v3478
    %v4995 = vunpack.c.l.b16 %v3482
    %v4996 = vunpack.c.l.b16 %v3485
    %v4997 = vunpack.c.l.b16 %v3489
    %v4998 = vunpack.c.l.b16 %v3492
    %v4999 = vunpack.c.l.b16 %v3496
    %v5000 = vunpack.c.l.b16 %v3499
    %v5001 = vunpack.c.l.b16 %v3503
    %v5002 = vunpack.c.l.b16 %v3506
    %v5003 = vunpack.c.l.b16 %v3510
    %v5004 = vunpack.c.l.b16 %v3513
    %v5005 = vunpack.c.l.b16 %v3517
    %v5006 = vunpack.c.l.b16 %v3520
    %v5007 = vunpack.c.l.b16 %v3524
    %v5008 = vunpack.c.l.b16 %v3527
    %v5009 = vunpack.c.l.b16 %v3531
    %v5010 = vunpack.c.l.b16 %v3534
    %v5011 = vunpack.c.l.b16 %v3538
    %v5012 = vunpack.c.l.b16 %v3541
    %v5013 = vunpack.c.l.b16 %v3545
    %v5014 = vunpack.c.l.b16 %v3548
    %v5015 = vunpack.c.l.b16 %v3552
    %v5016 = vunpack.c.l.b16 %v3555
    %v5017 = vunpack.c.l.b16 %v3559
    %v5018 = vunpack.c.l.b16 %v3562
    %v5019 = vunpack.c.l.b16 %v3566
    %v5020 = vunpack.c.l.b16 %v3569
    %v5021 = vunpack.c.l.b16 %v3573
    %v5022 = vunpack.c.l.b16 %v3576
    %v5023 = vunpack.c.l.b16 %v3580
    %v5024 = vunpack.c.l.b16 %v3583
    %v5025 = vunpack.c.l.b16 %v3587
    %v5026 = vunpack.c.l.b16 %v3590
    %v5027 = vunpack.c.l.b16 %v3594
    %v5028 = vunpack.c.l.b16 %v3597
    %v5029 = vunpack.c.l.b16 %v3601
    %v5030 = vunpack.c.l.b16 %v3604
    %v5031 = vunpack.c.l.b16 %v3608
    %v5032 = vunpack.c.l.b16 %v3611
    %v5033 = vunpack.c.l.b16 %v3615
    %v5034 = vunpack.c.l.b16 %v3618
    %v5035 = vunpack.c.l.b16 %v3622
    %v5036 = vunpack.c.l.b16 %v3625
    %v5037 = vunpack.c.l.b16 %v3629
    %v5038 = vunpack.c.l.b16 %v3632
    %v5039 = vunpack.c.l.b16 %v3636
    %v5040 = vunpack.c.l.b16 %v3639
    %v5041 = vunpack.c.l.b16 %v3643
    %v5042 = vunpack.c.l.b16 %v3646
    %v5043 = vunpack.c.l.b16 %v3650
    %v5044 = vunpack.c.l.b16 %v3653
    %v5045 = vunpack.c.l.b16 %v3657
    %v5046 = vunpack.c.l.b16 %v3660
    %v5047 = vunpack.c.l.b16 %v3664
    %v5048 = vunpack.c.l.b16 %v3667
    %v5049 = vunpack.c.l.b16 %v3671
    %v5050 = vunpack.c.l.b16 %v3674
    %v5051 = vpack.c.b16 %v4988, %v4987
    %v5052 = vpack.c.b16 %v4990, %v4989
    %v5053 = vpack.c.b16 %v4992, %v4991
    %v5054 = vpack.c.b16 %v4994, %v4993
    %v5055 = vpack.c.b16 %v4996, %v4995
    %v5056 = vpack.c.b16 %v4998, %v4997
    %v5057 = vpack.c.b16 %v5000, %v4999
    %v5058 = vpack.c.b16 %v5002, %v5001
    %v5059 = vpack.c.b16 %v5004, %v5003
    %v5060 = vpack.c.b16 %v5006, %v5005
    %v5061 = vpack.c.b16 %v5008, %v5007
    %v5062 = vpack.c.b16 %v5010, %v5009
    %v5063 = vpack.c.b16 %v5012, %v5011
    %v5064 = vpack.c.b16 %v5014, %v5013
    %v5065 = vpack.c.b16 %v5016, %v5015
    %v5066 = vpack.c.b16 %v5018, %v5017
    %v5067 = vpack.c.b16 %v5020, %v5019
    %v5068 = vpack.c.b16 %v5022, %v5021
    %v5069 = vpack.c.b16 %v5024, %v5023
    %v5070 = vpack.c.b16 %v5026, %v5025
    %v5071 = vpack.c.b16 %v5028, %v5027
    %v5072 = vpack.c.b16 %v5030, %v5029
    %v5073 = vpack.c.b16 %v5032, %v5031
    %v5074 = vpack.c.b16 %v5034, %v5033
    %v5075 = vpack.c.b16 %v5036, %v5035
    %v5076 = vpack.c.b16 %v5038, %v5037
    %v5077 = vpack.c.b16 %v5040, %v5039
    %v5078 = vpack.c.b16 %v5042, %v5041
    %v5079 = vpack.c.b16 %v5044, %v5043
    %v5080 = vpack.c.b16 %v5046, %v5045
    %v5081 = vpack.c.b16 %v5048, %v5047
    %v5082 = vpack.c.b16 %v5050, %v5049
    %5083 = vrot.lane.b32.xlu0 %v5051, 32
    %v5084 = vpop.permute.xlu0 %5083
    %5085 = vrot.lane.b32.xlu0 %v5052, 32
    %v5086 = vpop.permute.xlu0 %5085
    %5087 = vrot.lane.b32.xlu0 %v5053, 32
    %v5088 = vpop.permute.xlu0 %5087
    %5089 = vrot.lane.b32.xlu0 %v5054, 32
    %v5090 = vpop.permute.xlu0 %5089
    %5091 = vrot.lane.b32.xlu0 %v5055, 32
    %v5092 = vpop.permute.xlu0 %5091
    %5093 = vrot.lane.b32.xlu0 %v5056, 32
    %v5094 = vpop.permute.xlu0 %5093
    %5095 = vrot.lane.b32.xlu0 %v5057, 32
    %v5096 = vpop.permute.xlu0 %5095
    %5097 = vrot.lane.b32.xlu0 %v5058, 32
    %v5098 = vpop.permute.xlu0 %5097
    %5099 = vrot.lane.b32.xlu0 %v5059, 32
    %v5100 = vpop.permute.xlu0 %5099
    %5101 = vrot.lane.b32.xlu0 %v5060, 32
    %v5102 = vpop.permute.xlu0 %5101
    %5103 = vrot.lane.b32.xlu0 %v5061, 32
    %v5104 = vpop.permute.xlu0 %5103
    %5105 = vrot.lane.b32.xlu0 %v5062, 32
    %v5106 = vpop.permute.xlu0 %5105
    %5107 = vrot.lane.b32.xlu0 %v5063, 32
    %v5108 = vpop.permute.xlu0 %5107
    %5109 = vrot.lane.b32.xlu0 %v5064, 32
    %v5110 = vpop.permute.xlu0 %5109
    %5111 = vrot.lane.b32.xlu0 %v5065, 32
    %v5112 = vpop.permute.xlu0 %5111
    %5113 = vrot.lane.b32.xlu0 %v5066, 32
    %v5114 = vpop.permute.xlu0 %5113
    %5115 = vrot.lane.b32.xlu0 %v5067, 32
    %v5116 = vpop.permute.xlu0 %5115
    %5117 = vrot.lane.b32.xlu0 %v5068, 32
    %v5118 = vpop.permute.xlu0 %5117
    %5119 = vrot.lane.b32.xlu0 %v5069, 32
    %v5120 = vpop.permute.xlu0 %5119
    %5121 = vrot.lane.b32.xlu0 %v5070, 32
    %v5122 = vpop.permute.xlu0 %5121
    %5123 = vrot.lane.b32.xlu0 %v5071, 32
    %v5124 = vpop.permute.xlu0 %5123
    %5125 = vrot.lane.b32.xlu0 %v5072, 32
    %v5126 = vpop.permute.xlu0 %5125
    %5127 = vrot.lane.b32.xlu0 %v5073, 32
    %v5128 = vpop.permute.xlu0 %5127
    %5129 = vrot.lane.b32.xlu0 %v5074, 32
    %v5130 = vpop.permute.xlu0 %5129
    %5131 = vrot.lane.b32.xlu0 %v5075, 32
    %v5132 = vpop.permute.xlu0 %5131
    %5133 = vrot.lane.b32.xlu0 %v5076, 32
    %v5134 = vpop.permute.xlu0 %5133
    %5135 = vrot.lane.b32.xlu0 %v5077, 32
    %v5136 = vpop.permute.xlu0 %5135
    %5137 = vrot.lane.b32.xlu0 %v5078, 32
    %v5138 = vpop.permute.xlu0 %5137
    %5139 = vrot.lane.b32.xlu0 %v5079, 32
    %v5140 = vpop.permute.xlu0 %5139
    %5141 = vrot.lane.b32.xlu0 %v5080, 32
    %v5142 = vpop.permute.xlu0 %5141
    %5143 = vrot.lane.b32.xlu0 %v5081, 32
    %v5144 = vpop.permute.xlu0 %5143
    %5145 = vrot.lane.b32.xlu0 %v5082, 32
    %v5146 = vpop.permute.xlu0 %5145
    %vm5147 = vcmask 31744
    %v5150 = vsel %vm5147, %v3771, %v3900
    %v5153 = vsel %vm5147, %v3772, %v3902
    %v5156 = vsel %vm5147, %v3773, %v3904
    %v5159 = vsel %vm5147, %v3774, %v3906
    %v5162 = vsel %vm5147, %v3775, %v3908
    %v5165 = vsel %vm5147, %v3776, %v3910
    %v5168 = vsel %vm5147, %v3777, %v3912
    %v5171 = vsel %vm5147, %v3778, %v3914
    %v5174 = vsel %vm5147, %v3779, %v3916
    %v5177 = vsel %vm5147, %v3780, %v3918
    %v5180 = vsel %vm5147, %v3781, %v3920
    %v5183 = vsel %vm5147, %v3782, %v3922
    %v5186 = vsel %vm5147, %v3783, %v3924
    %v5189 = vsel %vm5147, %v3784, %v3926
    %v5192 = vsel %vm5147, %v3785, %v3928
    %v5195 = vsel %vm5147, %v3786, %v3930
    %v5198 = vsel %vm5147, %v3787, %v3932
    %v5201 = vsel %vm5147, %v3788, %v3934
    %v5204 = vsel %vm5147, %v3789, %v3936
    %v5207 = vsel %vm5147, %v3790, %v3938
    %v5210 = vsel %vm5147, %v3791, %v3940
    %v5213 = vsel %vm5147, %v3792, %v3942
    %v5216 = vsel %vm5147, %v3793, %v3944
    %v5219 = vsel %vm5147, %v3794, %v3946
    %v5222 = vsel %vm5147, %v3795, %v3948
    %v5225 = vsel %vm5147, %v3796, %v3950
    %v5228 = vsel %vm5147, %v3797, %v3952
    %v5231 = vsel %vm5147, %v3798, %v3954
    %v5234 = vsel %vm5147, %v3799, %v3956
    %v5237 = vsel %vm5147, %v3800, %v3958
    %v5240 = vsel %vm5147, %v3801, %v3960
    %v5243 = vsel %vm5147, %v3802, %v3962
    %vm5244 = vcmask 64512
    %v5246 = vsel %vm5244, %v5150, %v4060
    %v5248 = vsel %vm5244, %v5153, %v4062
    %v5250 = vsel %vm5244, %v5156, %v4064
    %v5252 = vsel %vm5244, %v5159, %v4066
    %v5254 = vsel %vm5244, %v5162, %v4068
    %v5256 = vsel %vm5244, %v5165, %v4070
    %v5258 = vsel %vm5244, %v5168, %v4072
    %v5260 = vsel %vm5244, %v5171, %v4074
    %v5262 = vsel %vm5244, %v5174, %v4076
    %v5264 = vsel %vm5244, %v5177, %v4078
    %v5266 = vsel %vm5244, %v5180, %v4080
    %v5268 = vsel %vm5244, %v5183, %v4082
    %v5270 = vsel %vm5244, %v5186, %v4084
    %v5272 = vsel %vm5244, %v5189, %v4086
    %v5274 = vsel %vm5244, %v5192, %v4088
    %v5276 = vsel %vm5244, %v5195, %v4090
    %v5278 = vsel %vm5244, %v5198, %v4092
    %v5280 = vsel %vm5244, %v5201, %v4094
    %v5282 = vsel %vm5244, %v5204, %v4096
    %v5284 = vsel %vm5244, %v5207, %v4098
    %v5286 = vsel %vm5244, %v5210, %v4100
    %v5288 = vsel %vm5244, %v5213, %v4102
    %v5290 = vsel %vm5244, %v5216, %v4104
    %v5292 = vsel %vm5244, %v5219, %v4106
    %v5294 = vsel %vm5244, %v5222, %v4108
    %v5296 = vsel %vm5244, %v5225, %v4110
    %v5298 = vsel %vm5244, %v5228, %v4112
    %v5300 = vsel %vm5244, %v5231, %v4114
    %v5302 = vsel %vm5244, %v5234, %v4116
    %v5304 = vsel %vm5244, %v5237, %v4118
    %v5306 = vsel %vm5244, %v5240, %v4120
    %v5308 = vsel %vm5244, %v5243, %v4122
    %vm5309 = vcmask 97280
    %v5311 = vsel %vm5309, %v5246, %v4252
    %v5313 = vsel %vm5309, %v5248, %v4254
    %v5315 = vsel %vm5309, %v5250, %v4256
    %v5317 = vsel %vm5309, %v5252, %v4258
    %v5319 = vsel %vm5309, %v5254, %v4260
    %v5321 = vsel %vm5309, %v5256, %v4262
    %v5323 = vsel %vm5309, %v5258, %v4264
    %v5325 = vsel %vm5309, %v5260, %v4266
    %v5327 = vsel %vm5309, %v5262, %v4268
    %v5329 = vsel %vm5309, %v5264, %v4270
    %v5331 = vsel %vm5309, %v5266, %v4272
    %v5333 = vsel %vm5309, %v5268, %v4274
    %v5335 = vsel %vm5309, %v5270, %v4276
    %v5337 = vsel %vm5309, %v5272, %v4278
    %v5339 = vsel %vm5309, %v5274, %v4280
    %v5341 = vsel %vm5309, %v5276, %v4282
    %v5343 = vsel %vm5309, %v5278, %v4284
    %v5345 = vsel %vm5309, %v5280, %v4286
    %v5347 = vsel %vm5309, %v5282, %v4288
    %v5349 = vsel %vm5309, %v5284, %v4290
    %v5351 = vsel %vm5309, %v5286, %v4292
    %v5353 = vsel %vm5309, %v5288, %v4294
    %v5355 = vsel %vm5309, %v5290, %v4296
    %v5357 = vsel %vm5309, %v5292, %v4298
    %v5359 = vsel %vm5309, %v5294, %v4300
    %v5361 = vsel %vm5309, %v5296, %v4302
    %v5363 = vsel %vm5309, %v5298, %v4304
    %v5365 = vsel %vm5309, %v5300, %v4306
    %v5367 = vsel %vm5309, %v5302, %v4308
    %v5369 = vsel %vm5309, %v5304, %v4310
    %v5371 = vsel %vm5309, %v5306, %v4312
    %v5373 = vsel %vm5309, %v5308, %v4314
    %vm5374 = vcmask 130048
    %v5376 = vsel %vm5374, %v5311, %v4412
    %v5378 = vsel %vm5374, %v5313, %v4414
    %v5380 = vsel %vm5374, %v5315, %v4416
    %v5382 = vsel %vm5374, %v5317, %v4418
    %v5384 = vsel %vm5374, %v5319, %v4420
    %v5386 = vsel %vm5374, %v5321, %v4422
    %v5388 = vsel %vm5374, %v5323, %v4424
    %v5390 = vsel %vm5374, %v5325, %v4426
    %v5392 = vsel %vm5374, %v5327, %v4428
    %v5394 = vsel %vm5374, %v5329, %v4430
    %v5396 = vsel %vm5374, %v5331, %v4432
    %v5398 = vsel %vm5374, %v5333, %v4434
    %v5400 = vsel %vm5374, %v5335, %v4436
    %v5402 = vsel %vm5374, %v5337, %v4438
    %v5404 = vsel %vm5374, %v5339, %v4440
    %v5406 = vsel %vm5374, %v5341, %v4442
    %v5408 = vsel %vm5374, %v5343, %v4444
    %v5410 = vsel %vm5374, %v5345, %v4446
    %v5412 = vsel %vm5374, %v5347, %v4448
    %v5414 = vsel %vm5374, %v5349, %v4450
    %v5416 = vsel %vm5374, %v5351, %v4452
    %v5418 = vsel %vm5374, %v5353, %v4454
    %v5420 = vsel %vm5374, %v5355, %v4456
    %v5422 = vsel %vm5374, %v5357, %v4458
    %v5424 = vsel %vm5374, %v5359, %v4460
    %v5426 = vsel %vm5374, %v5361, %v4462
    %v5428 = vsel %vm5374, %v5363, %v4464
    %v5430 = vsel %vm5374, %v5365, %v4466
    %v5432 = vsel %vm5374, %v5367, %v4468
    %v5434 = vsel %vm5374, %v5369, %v4470
    %v5436 = vsel %vm5374, %v5371, %v4472
    %v5438 = vsel %vm5374, %v5373, %v4474
    %vm5439 = vcmask 162816
    %v5441 = vsel %vm5439, %v5376, %v4572
    %v5443 = vsel %vm5439, %v5378, %v4574
    %v5445 = vsel %vm5439, %v5380, %v4576
    %v5447 = vsel %vm5439, %v5382, %v4578
    %v5449 = vsel %vm5439, %v5384, %v4580
    %v5451 = vsel %vm5439, %v5386, %v4582
    %v5453 = vsel %vm5439, %v5388, %v4584
    %v5455 = vsel %vm5439, %v5390, %v4586
    %v5457 = vsel %vm5439, %v5392, %v4588
    %v5459 = vsel %vm5439, %v5394, %v4590
    %v5461 = vsel %vm5439, %v5396, %v4592
    %v5463 = vsel %vm5439, %v5398, %v4594
    %v5465 = vsel %vm5439, %v5400, %v4596
    %v5467 = vsel %vm5439, %v5402, %v4598
    %v5469 = vsel %vm5439, %v5404, %v4600
    %v5471 = vsel %vm5439, %v5406, %v4602
    %v5473 = vsel %vm5439, %v5408, %v4604
    %v5475 = vsel %vm5439, %v5410, %v4606
    %v5477 = vsel %vm5439, %v5412, %v4608
    %v5479 = vsel %vm5439, %v5414, %v4610
    %v5481 = vsel %vm5439, %v5416, %v4612
    %v5483 = vsel %vm5439, %v5418, %v4614
    %v5485 = vsel %vm5439, %v5420, %v4616
    %v5487 = vsel %vm5439, %v5422, %v4618
    %v5489 = vsel %vm5439, %v5424, %v4620
    %v5491 = vsel %vm5439, %v5426, %v4622
    %v5493 = vsel %vm5439, %v5428, %v4624
    %v5495 = vsel %vm5439, %v5430, %v4626
    %v5497 = vsel %vm5439, %v5432, %v4628
    %v5499 = vsel %vm5439, %v5434, %v4630
    %v5501 = vsel %vm5439, %v5436, %v4632
    %v5503 = vsel %vm5439, %v5438, %v4634
    %vm5504 = vcmask 195584
    %v5506 = vsel %vm5504, %v5441, %v4764
    %v5508 = vsel %vm5504, %v5443, %v4766
    %v5510 = vsel %vm5504, %v5445, %v4768
    %v5512 = vsel %vm5504, %v5447, %v4770
    %v5514 = vsel %vm5504, %v5449, %v4772
    %v5516 = vsel %vm5504, %v5451, %v4774
    %v5518 = vsel %vm5504, %v5453, %v4776
    %v5520 = vsel %vm5504, %v5455, %v4778
    %v5522 = vsel %vm5504, %v5457, %v4780
    %v5524 = vsel %vm5504, %v5459, %v4782
    %v5526 = vsel %vm5504, %v5461, %v4784
    %v5528 = vsel %vm5504, %v5463, %v4786
    %v5530 = vsel %vm5504, %v5465, %v4788
    %v5532 = vsel %vm5504, %v5467, %v4790
    %v5534 = vsel %vm5504, %v5469, %v4792
    %v5536 = vsel %vm5504, %v5471, %v4794
    %v5538 = vsel %vm5504, %v5473, %v4796
    %v5540 = vsel %vm5504, %v5475, %v4798
    %v5542 = vsel %vm5504, %v5477, %v4800
    %v5544 = vsel %vm5504, %v5479, %v4802
    %v5546 = vsel %vm5504, %v5481, %v4804
    %v5548 = vsel %vm5504, %v5483, %v4806
    %v5550 = vsel %vm5504, %v5485, %v4808
    %v5552 = vsel %vm5504, %v5487, %v4810
    %v5554 = vsel %vm5504, %v5489, %v4812
    %v5556 = vsel %vm5504, %v5491, %v4814
    %v5558 = vsel %vm5504, %v5493, %v4816
    %v5560 = vsel %vm5504, %v5495, %v4818
    %v5562 = vsel %vm5504, %v5497, %v4820
    %v5564 = vsel %vm5504, %v5499, %v4822
    %v5566 = vsel %vm5504, %v5501, %v4824
    %v5568 = vsel %vm5504, %v5503, %v4826
    %vm5569 = vcmask 228352
    %v5571 = vsel %vm5569, %v5506, %v4924
    %v5573 = vsel %vm5569, %v5508, %v4926
    %v5575 = vsel %vm5569, %v5510, %v4928
    %v5577 = vsel %vm5569, %v5512, %v4930
    %v5579 = vsel %vm5569, %v5514, %v4932
    %v5581 = vsel %vm5569, %v5516, %v4934
    %v5583 = vsel %vm5569, %v5518, %v4936
    %v5585 = vsel %vm5569, %v5520, %v4938
    %v5587 = vsel %vm5569, %v5522, %v4940
    %v5589 = vsel %vm5569, %v5524, %v4942
    %v5591 = vsel %vm5569, %v5526, %v4944
    %v5593 = vsel %vm5569, %v5528, %v4946
    %v5595 = vsel %vm5569, %v5530, %v4948
    %v5597 = vsel %vm5569, %v5532, %v4950
    %v5599 = vsel %vm5569, %v5534, %v4952
    %v5601 = vsel %vm5569, %v5536, %v4954
    %v5603 = vsel %vm5569, %v5538, %v4956
    %v5605 = vsel %vm5569, %v5540, %v4958
    %v5607 = vsel %vm5569, %v5542, %v4960
    %v5609 = vsel %vm5569, %v5544, %v4962
    %v5611 = vsel %vm5569, %v5546, %v4964
    %v5613 = vsel %vm5569, %v5548, %v4966
    %v5615 = vsel %vm5569, %v5550, %v4968
    %v5617 = vsel %vm5569, %v5552, %v4970
    %v5619 = vsel %vm5569, %v5554, %v4972
    %v5621 = vsel %vm5569, %v5556, %v4974
    %v5623 = vsel %vm5569, %v5558, %v4976
    %v5625 = vsel %vm5569, %v5560, %v4978
    %v5627 = vsel %vm5569, %v5562, %v4980
    %v5629 = vsel %vm5569, %v5564, %v4982
    %v5631 = vsel %vm5569, %v5566, %v4984
    %v5633 = vsel %vm5569, %v5568, %v4986
    %vm5634 = vcmask 261120
    %v5636 = vsel %vm5634, %v5571, %v5084
    %v5638 = vsel %vm5634, %v5573, %v5086
    %v5640 = vsel %vm5634, %v5575, %v5088
    %v5642 = vsel %vm5634, %v5577, %v5090
    %v5644 = vsel %vm5634, %v5579, %v5092
    %v5646 = vsel %vm5634, %v5581, %v5094
    %v5648 = vsel %vm5634, %v5583, %v5096
    %v5650 = vsel %vm5634, %v5585, %v5098
    %v5652 = vsel %vm5634, %v5587, %v5100
    %v5654 = vsel %vm5634, %v5589, %v5102
    %v5656 = vsel %vm5634, %v5591, %v5104
    %v5658 = vsel %vm5634, %v5593, %v5106
    %v5660 = vsel %vm5634, %v5595, %v5108
    %v5662 = vsel %vm5634, %v5597, %v5110
    %v5664 = vsel %vm5634, %v5599, %v5112
    %v5666 = vsel %vm5634, %v5601, %v5114
    %v5668 = vsel %vm5634, %v5603, %v5116
    %v5670 = vsel %vm5634, %v5605, %v5118
    %v5672 = vsel %vm5634, %v5607, %v5120
    %v5674 = vsel %vm5634, %v5609, %v5122
    %v5676 = vsel %vm5634, %v5611, %v5124
    %v5678 = vsel %vm5634, %v5613, %v5126
    %v5680 = vsel %vm5634, %v5615, %v5128
    %v5682 = vsel %vm5634, %v5617, %v5130
    %v5684 = vsel %vm5634, %v5619, %v5132
    %v5686 = vsel %vm5634, %v5621, %v5134
    %v5688 = vsel %vm5634, %v5623, %v5136
    %v5690 = vsel %vm5634, %v5625, %v5138
    %v5692 = vsel %vm5634, %v5627, %v5140
    %v5694 = vsel %vm5634, %v5629, %v5142
    %v5696 = vsel %vm5634, %v5631, %v5144
    %v5698 = vsel %vm5634, %v5633, %v5146
    %v5699 = vld [vmem:[%s1] sm:$0xf]
    %v5700 = vld [vmem:[%s1 + $0x4] sm:$0xf]
    %v5701 = vld [vmem:[%s1 + $0x8] sm:$0xf]
    %v5702 = vld [vmem:[%s1 + $0xc] sm:$0xf]
    %v5703 = vld [vmem:[%s1 + $0x10] sm:$0x3]
    %v5709 = vunpack.c.l.b16 %v5699
    %v5710 = vunpack.c.l.b16 %v5700
    %v5711 = vunpack.c.l.b16 %v5701
    %v5712 = vunpack.c.l.b16 %v5702
    %v5713 = vunpack.c.l.b16 %v5703
    %v5714 = vpack.c.b16 %v5710, %v5709
    %v5715 = vpack.c.b16 %v5712, %v5711
    %v5716 = vpack.c.b16 %v5713, %v5713
    %vm5719 = vcmask 293888
    %v5720 = vsel %vm5719, %v5636, 0
    %v5722 = vsel %vm5719, %v5638, 0
    %v5724 = vsel %vm5719, %v5640, 0
    %v5726 = vsel %vm5719, %v5642, 0
    %v5728 = vsel %vm5719, %v5644, 0
    %v5730 = vsel %vm5719, %v5646, 0
    %v5732 = vsel %vm5719, %v5648, 0
    %v5734 = vsel %vm5719, %v5650, 0
    %v5736 = vsel %vm5719, %v5652, 0
    %v5738 = vsel %vm5719, %v5654, 0
    %v5740 = vsel %vm5719, %v5656, 0
    %v5742 = vsel %vm5719, %v5658, 0
    %v5744 = vsel %vm5719, %v5660, 0
    %v5746 = vsel %vm5719, %v5662, 0
    %v5748 = vsel %vm5719, %v5664, 0
    %v5750 = vsel %vm5719, %v5666, 0
    %v5752 = vsel %vm5719, %v5668, 0
    %v5754 = vsel %vm5719, %v5670, 0
    %v5756 = vsel %vm5719, %v5672, 0
    %v5758 = vsel %vm5719, %v5674, 0
    %v5760 = vsel %vm5719, %v5676, 0
    %v5762 = vsel %vm5719, %v5678, 0
    %v5764 = vsel %vm5719, %v5680, 0
    %v5766 = vsel %vm5719, %v5682, 0
    %v5768 = vsel %vm5719, %v5684, 0
    %v5770 = vsel %vm5719, %v5686, 0
    %v5772 = vsel %vm5719, %v5688, 0
    %v5774 = vsel %vm5719, %v5690, 0
    %v5776 = vsel %vm5719, %v5692, 0
    %v5778 = vsel %vm5719, %v5694, 0
    %v5780 = vsel %vm5719, %v5696, 0
    %v5782 = vsel %vm5719, %v5698, 0
    %vm5784 = vcmask 1041408
    %v5786 = vsel %vm5784, %v5716, 0
    %5788 = vmatprep.subr.bf16.mxu0 0
    %5789 = vmatpush1.bf16.msra.mxu0 %v5714
    %5790 = vmatprep.subr.bf16.mxu0 0
    %5791 = vmatpush1.bf16.msra.mxu0 %v5715
    %5792 = vmatprep.subr.bf16.mxu0 0
    %5793 = vmatpush1.bf16.msra.mxu0 %v5786
    %5794 = vmatprep.subr.bf16.mxu0 0
    %5795 = vmatpush1.bf16.msra.mxu0 0
    %5796 = vmatprep.subr.bf16.mxu0 0
    %5797 = vmatpush1.bf16.msra.mxu0 0
    %5798 = vmatprep.subr.bf16.mxu0 0
    %5799 = vmatpush1.bf16.msra.mxu0 0
    %5800 = vmatprep.subr.bf16.mxu0 0
    %5801 = vmatpush1.bf16.msra.mxu0 0
    %5802 = vmatprep.subr.bf16.mxu0 0
    %5803 = vmatpush1.bf16.msra.mxu0 0
    %5804 = vmatprep.subr.bf16.mxu0 0
    %5805 = vmatpush1.bf16.msra.mxu0 0
    %5806 = vmatprep.subr.bf16.mxu0 0
    %5807 = vmatpush1.bf16.msra.mxu0 0
    %5808 = vmatprep.subr.bf16.mxu0 0
    %5809 = vmatpush1.bf16.msra.mxu0 0
    %5810 = vmatprep.subr.bf16.mxu0 0
    %5811 = vmatpush1.bf16.msra.mxu0 0
    %5812 = vmatprep.subr.bf16.mxu0 0
    %5813 = vmatpush1.bf16.msra.mxu0 0
    %5814 = vmatprep.subr.bf16.mxu0 0
    %5815 = vmatpush1.bf16.msra.mxu0 0
    %5816 = vmatprep.subr.bf16.mxu0 0
    %5817 = vmatpush1.bf16.msra.mxu0 0
    %5818 = vmatprep.subr.bf16.mxu0 0
    %5819 = vmatpush1.bf16.msra.mxu0 0
    %5820 = vmatprep.mubr.bf16.mxu0 0
    %5821 = vmatmul.mubr.bf16.gmra.mrb[0].mxu0 %v5720
    %v5822 = vpop.f32.mrb[0].mxu0
    %v5823 = vadd.f32 0.0, %v5822
    %v5824 = vpop.f32.mrb[0].mxu0
    %v5825 = vpop.f32.mrb[0].mxu0
    %v5826 = vadd.f32 0.0, %v5825
    %v5827 = vpop.f32.mrb[0].mxu0
    %5828 = vmatprep.mubr.bf16.mxu0 0
    %5829 = vmatmul.mubr.bf16.gmra.mrb[0].mxu0 %v5722
    %v5830 = vpop.f32.mrb[0].mxu0
    %v5831 = vadd.f32 0.0, %v5830
    %v5832 = vpop.f32.mrb[0].mxu0
    %v5833 = vpop.f32.mrb[0].mxu0
    %v5834 = vadd.f32 0.0, %v5833
    %v5835 = vpop.f32.mrb[0].mxu0
    %5836 = vmatprep.mubr.bf16.mxu0 0
    %5837 = vmatmul.mubr.bf16.gmra.mrb[0].mxu0 %v5724
    %v5838 = vpop.f32.mrb[0].mxu0
    %v5839 = vadd.f32 0.0, %v5838
    %v5840 = vpop.f32.mrb[0].mxu0
    %v5841 = vpop.f32.mrb[0].mxu0
    %v5842 = vadd.f32 0.0, %v5841
    %v5843 = vpop.f32.mrb[0].mxu0
    %5844 = vmatprep.mubr.bf16.mxu0 0
    %5845 = vmatmul.mubr.bf16.gmra.mrb[0].mxu0 %v5726
    %v5846 = vpop.f32.mrb[0].mxu0
    %v5847 = vadd.f32 0.0, %v5846
    %v5848 = vpop.f32.mrb[0].mxu0
    %v5849 = vpop.f32.mrb[0].mxu0
    %v5850 = vadd.f32 0.0, %v5849
    %v5851 = vpop.f32.mrb[0].mxu0
    %5852 = vmatprep.mubr.bf16.mxu0 0
    %5853 = vmatmul.mubr.bf16.gmra.mrb[0].mxu0 %v5728
    %v5854 = vpop.f32.mrb[0].mxu0
    %v5855 = vadd.f32 0.0, %v5854
    %v5856 = vpop.f32.mrb[0].mxu0
    %v5857 = vpop.f32.mrb[0].mxu0
    %v5858 = vadd.f32 0.0, %v5857
    %v5859 = vpop.f32.mrb[0].mxu0
    %5860 = vmatprep.mubr.bf16.mxu0 0
    %5861 = vmatmul.mubr.bf16.gmra.mrb[0].mxu0 %v5730
    %v5862 = vpop.f32.mrb[0].mxu0
    %v5863 = vadd.f32 0.0, %v5862
    %v5864 = vpop.f32.mrb[0].mxu0
    %v5865 = vpop.f32.mrb[0].mxu0
    %v5866 = vadd.f32 0.0, %v5865
    %v5867 = vpop.f32.mrb[0].mxu0
    %5868 = vmatprep.mubr.bf16.mxu0 0
    %5869 = vmatmul.mubr.bf16.gmra.mrb[0].mxu0 %v5732
    %v5870 = vpop.f32.mrb[0].mxu0
    %v5871 = vadd.f32 0.0, %v5870
    %v5872 = vpop.f32.mrb[0].mxu0
    %v5873 = vpop.f32.mrb[0].mxu0
    %v5874 = vadd.f32 0.0, %v5873
    %v5875 = vpop.f32.mrb[0].mxu0
    %5876 = vmatprep.mubr.bf16.mxu0 0
    %5877 = vmatmul.mubr.bf16.gmra.mrb[0].mxu0 %v5734
    %v5878 = vpop.f32.mrb[0].mxu0
    %v5879 = vadd.f32 0.0, %v5878
    %v5880 = vpop.f32.mrb[0].mxu0
    %v5881 = vpop.f32.mrb[0].mxu0
    %v5882 = vadd.f32 0.0, %v5881
    %v5883 = vpop.f32.mrb[0].mxu0
    %5884 = vmatprep.mubr.bf16.mxu0 0
    %5885 = vmatmul.mubr.bf16.gmra.mrb[0].mxu0 %v5736
    %v5886 = vpop.f32.mrb[0].mxu0
    %v5887 = vadd.f32 0.0, %v5886
    %v5888 = vpop.f32.mrb[0].mxu0
    %v5889 = vpop.f32.mrb[0].mxu0
    %v5890 = vadd.f32 0.0, %v5889
    %v5891 = vpop.f32.mrb[0].mxu0
    %5892 = vmatprep.mubr.bf16.mxu0 0
    %5893 = vmatmul.mubr.bf16.gmra.mrb[0].mxu0 %v5738
    %v5894 = vpop.f32.mrb[0].mxu0
    %v5895 = vadd.f32 0.0, %v5894
    %v5896 = vpop.f32.mrb[0].mxu0
    %v5897 = vpop.f32.mrb[0].mxu0
    %v5898 = vadd.f32 0.0, %v5897
    %v5899 = vpop.f32.mrb[0].mxu0
    %5900 = vmatprep.mubr.bf16.mxu0 0
    %5901 = vmatmul.mubr.bf16.gmra.mrb[0].mxu0 %v5740
    %v5902 = vpop.f32.mrb[0].mxu0
    %v5903 = vadd.f32 0.0, %v5902
    %v5904 = vpop.f32.mrb[0].mxu0
    %v5905 = vpop.f32.mrb[0].mxu0
    %v5906 = vadd.f32 0.0, %v5905
    %v5907 = vpop.f32.mrb[0].mxu0
    %5908 = vmatprep.mubr.bf16.mxu0 0
    %5909 = vmatmul.mubr.bf16.gmra.mrb[0].mxu0 %v5742
    %v5910 = vpop.f32.mrb[0].mxu0
    %v5911 = vadd.f32 0.0, %v5910
    %v5912 = vpop.f32.mrb[0].mxu0
    %v5913 = vpop.f32.mrb[0].mxu0
    %v5914 = vadd.f32 0.0, %v5913
    %v5915 = vpop.f32.mrb[0].mxu0
    %5916 = vmatprep.mubr.bf16.mxu0 0
    %5917 = vmatmul.mubr.bf16.gmra.mrb[0].mxu0 %v5744
    %v5918 = vpop.f32.mrb[0].mxu0
    %v5919 = vadd.f32 0.0, %v5918
    %v5920 = vpop.f32.mrb[0].mxu0
    %v5921 = vpop.f32.mrb[0].mxu0
    %v5922 = vadd.f32 0.0, %v5921
    %v5923 = vpop.f32.mrb[0].mxu0
    %5924 = vmatprep.mubr.bf16.mxu0 0
    %5925 = vmatmul.mubr.bf16.gmra.mrb[0].mxu0 %v5746
    %v5926 = vpop.f32.mrb[0].mxu0
    %v5927 = vadd.f32 0.0, %v5926
    %v5928 = vpop.f32.mrb[0].mxu0
    %v5929 = vpop.f32.mrb[0].mxu0
    %v5930 = vadd.f32 0.0, %v5929
    %v5931 = vpop.f32.mrb[0].mxu0
    %5932 = vmatprep.mubr.bf16.mxu0 0
    %5933 = vmatmul.mubr.bf16.gmra.mrb[0].mxu0 %v5748
    %v5934 = vpop.f32.mrb[0].mxu0
    %v5935 = vadd.f32 0.0, %v5934
    %v5936 = vpop.f32.mrb[0].mxu0
    %v5937 = vpop.f32.mrb[0].mxu0
    %v5938 = vadd.f32 0.0, %v5937
    %v5939 = vpop.f32.mrb[0].mxu0
    %5940 = vmatprep.mubr.bf16.mxu0 0
    %5941 = vmatmul.mubr.bf16.gmra.mrb[0].mxu0 %v5750
    %v5942 = vpop.f32.mrb[0].mxu0
    %v5943 = vadd.f32 0.0, %v5942
    %v5944 = vpop.f32.mrb[0].mxu0
    %v5945 = vpop.f32.mrb[0].mxu0
    %v5946 = vadd.f32 0.0, %v5945
    %v5947 = vpop.f32.mrb[0].mxu0
    %5948 = vmatprep.mubr.bf16.mxu0 0
    %5949 = vmatmul.mubr.bf16.gmra.mrb[0].mxu0 %v5752
    %v5950 = vpop.f32.mrb[0].mxu0
    %v5951 = vadd.f32 0.0, %v5950
    %v5952 = vpop.f32.mrb[0].mxu0
    %v5953 = vpop.f32.mrb[0].mxu0
    %v5954 = vadd.f32 0.0, %v5953
    %v5955 = vpop.f32.mrb[0].mxu0
    %5956 = vmatprep.mubr.bf16.mxu0 0
    %5957 = vmatmul.mubr.bf16.gmra.mrb[0].mxu0 %v5754
    %v5958 = vpop.f32.mrb[0].mxu0
    %v5959 = vadd.f32 0.0, %v5958
    %v5960 = vpop.f32.mrb[0].mxu0
    %v5961 = vpop.f32.mrb[0].mxu0
    %v5962 = vadd.f32 0.0, %v5961
    %v5963 = vpop.f32.mrb[0].mxu0
    %5964 = vmatprep.mubr.bf16.mxu0 0
    %5965 = vmatmul.mubr.bf16.gmra.mrb[0].mxu0 %v5756
    %v5966 = vpop.f32.mrb[0].mxu0
    %v5967 = vadd.f32 0.0, %v5966
    %v5968 = vpop.f32.mrb[0].mxu0
    %v5969 = vpop.f32.mrb[0].mxu0
    %v5970 = vadd.f32 0.0, %v5969
    %v5971 = vpop.f32.mrb[0].mxu0
    %5972 = vmatprep.mubr.bf16.mxu0 0
    %5973 = vmatmul.mubr.bf16.gmra.mrb[0].mxu0 %v5758
    %v5974 = vpop.f32.mrb[0].mxu0
    %v5975 = vadd.f32 0.0, %v5974
    %v5976 = vpop.f32.mrb[0].mxu0
    %v5977 = vpop.f32.mrb[0].mxu0
    %v5978 = vadd.f32 0.0, %v5977
    %v5979 = vpop.f32.mrb[0].mxu0
    %5980 = vmatprep.mubr.bf16.mxu0 0
    %5981 = vmatmul.mubr.bf16.gmra.mrb[0].mxu0 %v5760
    %v5982 = vpop.f32.mrb[0].mxu0
    %v5983 = vadd.f32 0.0, %v5982
    %v5984 = vpop.f32.mrb[0].mxu0
    %v5985 = vpop.f32.mrb[0].mxu0
    %v5986 = vadd.f32 0.0, %v5985
    %v5987 = vpop.f32.mrb[0].mxu0
    %5988 = vmatprep.mubr.bf16.mxu0 0
    %5989 = vmatmul.mubr.bf16.gmra.mrb[0].mxu0 %v5762
    %v5990 = vpop.f32.mrb[0].mxu0
    %v5991 = vadd.f32 0.0, %v5990
    %v5992 = vpop.f32.mrb[0].mxu0
    %v5993 = vpop.f32.mrb[0].mxu0
    %v5994 = vadd.f32 0.0, %v5993
    %v5995 = vpop.f32.mrb[0].mxu0
    %5996 = vmatprep.mubr.bf16.mxu0 0
    %5997 = vmatmul.mubr.bf16.gmra.mrb[0].mxu0 %v5764
    %v5998 = vpop.f32.mrb[0].mxu0
    %v5999 = vadd.f32 0.0, %v5998
    %v6000 = vpop.f32.mrb[0].mxu0
    %v6001 = vpop.f32.mrb[0].mxu0
    %v6002 = vadd.f32 0.0, %v6001
    %v6003 = vpop.f32.mrb[0].mxu0
    %6004 = vmatprep.mubr.bf16.mxu0 0
    %6005 = vmatmul.mubr.bf16.gmra.mrb[0].mxu0 %v5766
    %v6006 = vpop.f32.mrb[0].mxu0
    %v6007 = vadd.f32 0.0, %v6006
    %v6008 = vpop.f32.mrb[0].mxu0
    %v6009 = vpop.f32.mrb[0].mxu0
    %v6010 = vadd.f32 0.0, %v6009
    %v6011 = vpop.f32.mrb[0].mxu0
    %6012 = vmatprep.mubr.bf16.mxu0 0
    %6013 = vmatmul.mubr.bf16.gmra.mrb[0].mxu0 %v5768
    %v6014 = vpop.f32.mrb[0].mxu0
    %v6015 = vadd.f32 0.0, %v6014
    %v6016 = vpop.f32.mrb[0].mxu0
    %v6017 = vpop.f32.mrb[0].mxu0
    %v6018 = vadd.f32 0.0, %v6017
    %v6019 = vpop.f32.mrb[0].mxu0
    %6020 = vmatprep.mubr.bf16.mxu0 0
    %6021 = vmatmul.mubr.bf16.gmra.mrb[0].mxu0 %v5770
    %v6022 = vpop.f32.mrb[0].mxu0
    %v6023 = vadd.f32 0.0, %v6022
    %v6024 = vpop.f32.mrb[0].mxu0
    %v6025 = vpop.f32.mrb[0].mxu0
    %v6026 = vadd.f32 0.0, %v6025
    %v6027 = vpop.f32.mrb[0].mxu0
    %6028 = vmatprep.mubr.bf16.mxu0 0
    %6029 = vmatmul.mubr.bf16.gmra.mrb[0].mxu0 %v5772
    %v6030 = vpop.f32.mrb[0].mxu0
    %v6031 = vadd.f32 0.0, %v6030
    %v6032 = vpop.f32.mrb[0].mxu0
    %v6033 = vpop.f32.mrb[0].mxu0
    %v6034 = vadd.f32 0.0, %v6033
    %v6035 = vpop.f32.mrb[0].mxu0
    %6036 = vmatprep.mubr.bf16.mxu0 0
    %6037 = vmatmul.mubr.bf16.gmra.mrb[0].mxu0 %v5774
    %v6038 = vpop.f32.mrb[0].mxu0
    %v6039 = vadd.f32 0.0, %v6038
    %v6040 = vpop.f32.mrb[0].mxu0
    %v6041 = vpop.f32.mrb[0].mxu0
    %v6042 = vadd.f32 0.0, %v6041
    %v6043 = vpop.f32.mrb[0].mxu0
    %6044 = vmatprep.mubr.bf16.mxu0 0
    %6045 = vmatmul.mubr.bf16.gmra.mrb[0].mxu0 %v5776
    %v6046 = vpop.f32.mrb[0].mxu0
    %v6047 = vadd.f32 0.0, %v6046
    %v6048 = vpop.f32.mrb[0].mxu0
    %v6049 = vpop.f32.mrb[0].mxu0
    %v6050 = vadd.f32 0.0, %v6049
    %v6051 = vpop.f32.mrb[0].mxu0
    %6052 = vmatprep.mubr.bf16.mxu0 0
    %6053 = vmatmul.mubr.bf16.gmra.mrb[0].mxu0 %v5778
    %v6054 = vpop.f32.mrb[0].mxu0
    %v6055 = vadd.f32 0.0, %v6054
    %v6056 = vpop.f32.mrb[0].mxu0
    %v6057 = vpop.f32.mrb[0].mxu0
    %v6058 = vadd.f32 0.0, %v6057
    %v6059 = vpop.f32.mrb[0].mxu0
    %6060 = vmatprep.mubr.bf16.mxu0 0
    %6061 = vmatmul.mubr.bf16.gmra.mrb[0].mxu0 %v5780
    %v6062 = vpop.f32.mrb[0].mxu0
    %v6063 = vadd.f32 0.0, %v6062
    %v6064 = vpop.f32.mrb[0].mxu0
    %v6065 = vpop.f32.mrb[0].mxu0
    %v6066 = vadd.f32 0.0, %v6065
    %v6067 = vpop.f32.mrb[0].mxu0
    %6068 = vmatprep.mubr.bf16.mxu0 0
    %6069 = vmatmul.mubr.bf16.gmra.mrb[0].mxu0 %v5782
    %v6070 = vpop.f32.mrb[0].mxu0
    %v6071 = vadd.f32 0.0, %v6070
    %v6072 = vpop.f32.mrb[0].mxu0
    %v6073 = vpop.f32.mrb[0].mxu0
    %v6074 = vadd.f32 0.0, %v6073
    %v6075 = vpop.f32.mrb[0].mxu0
    %6076 = vdwg.mxu0
    %6077 = vst [vmem:[#allocation2] sm:$0xff] %v5823
    %6078 = vst [vmem:[#allocation2 + $0x8] sm:$0xff] %v5826
    %6079 = vst [vmem:[#allocation2 + $0x10] sm:$0xff] %v5831
    %6080 = vst [vmem:[#allocation2 + $0x18] sm:$0xff] %v5834
    %6081 = vst [vmem:[#allocation2 + $0x20] sm:$0xff] %v5839
    %6082 = vst [vmem:[#allocation2 + $0x28] sm:$0xff] %v5842
    %6083 = vst [vmem:[#allocation2 + $0x30] sm:$0xff] %v5847
    %6084 = vst [vmem:[#allocation2 + $0x38] sm:$0xff] %v5850
    %6085 = vst [vmem:[#allocation2 + $0x40] sm:$0xff] %v5855
    %6086 = vst [vmem:[#allocation2 + $0x48] sm:$0xff] %v5858
    %6087 = vst [vmem:[#allocation2 + $0x50] sm:$0xff] %v5863
    %6088 = vst [vmem:[#allocation2 + $0x58] sm:$0xff] %v5866
    %6089 = vst [vmem:[#allocation2 + $0x60] sm:$0xff] %v5871
    %6090 = vst [vmem:[#allocation2 + $0x68] sm:$0xff] %v5874
    %6091 = vst [vmem:[#allocation2 + $0x70] sm:$0xff] %v5879
    %6092 = vst [vmem:[#allocation2 + $0x78] sm:$0xff] %v5882
    %6093 = vst [vmem:[#allocation2 + $0x80] sm:$0xff] %v5887
    %6094 = vst [vmem:[#allocation2 + $0x88] sm:$0xff] %v5890
    %6095 = vst [vmem:[#allocation2 + $0x90] sm:$0xff] %v5895
    %6096 = vst [vmem:[#allocation2 + $0x98] sm:$0xff] %v5898
    %6097 = vst [vmem:[#allocation2 + $0xa0] sm:$0xff] %v5903
    %6098 = vst [vmem:[#allocation2 + $0xa8] sm:$0xff] %v5906
    %6099 = vst [vmem:[#allocation2 + $0xb0] sm:$0xff] %v5911
    %6100 = vst [vmem:[#allocation2 + $0xb8] sm:$0xff] %v5914
    %6101 = vst [vmem:[#allocation2 + $0xc0] sm:$0xff] %v5919
    %6102 = vst [vmem:[#allocation2 + $0xc8] sm:$0xff] %v5922
    %6103 = vst [vmem:[#allocation2 + $0xd0] sm:$0xff] %v5927
    %6104 = vst [vmem:[#allocation2 + $0xd8] sm:$0xff] %v5930
    %6105 = vst [vmem:[#allocation2 + $0xe0] sm:$0xff] %v5935
    %6106 = vst [vmem:[#allocation2 + $0xe8] sm:$0xff] %v5938
    %6107 = vst [vmem:[#allocation2 + $0xf0] sm:$0xff] %v5943
    %6108 = vst [vmem:[#allocation2 + $0xf8] sm:$0xff] %v5946
    %6109 = vst [vmem:[#allocation2 + $0x100] sm:$0xff] %v5951
    %6110 = vst [vmem:[#allocation2 + $0x108] sm:$0xff] %v5954
    %6111 = vst [vmem:[#allocation2 + $0x110] sm:$0xff] %v5959
    %6112 = vst [vmem:[#allocation2 + $0x118] sm:$0xff] %v5962
    %6113 = vst [vmem:[#allocation2 + $0x120] sm:$0xff] %v5967
    %6114 = vst [vmem:[#allocation2 + $0x128] sm:$0xff] %v5970
    %6115 = vst [vmem:[#allocation2 + $0x130] sm:$0xff] %v5975
    %6116 = vst [vmem:[#allocation2 + $0x138] sm:$0xff] %v5978
    %6117 = vst [vmem:[#allocation2 + $0x140] sm:$0xff] %v5983
    %6118 = vst [vmem:[#allocation2 + $0x148] sm:$0xff] %v5986
    %6119 = vst [vmem:[#allocation2 + $0x150] sm:$0xff] %v5991
    %6120 = vst [vmem:[#allocation2 + $0x158] sm:$0xff] %v5994
    %6121 = vst [vmem:[#allocation2 + $0x160] sm:$0xff] %v5999
    %6122 = vst [vmem:[#allocation2 + $0x168] sm:$0xff] %v6002
    %6123 = vst [vmem:[#allocation2 + $0x170] sm:$0xff] %v6007
    %6124 = vst [vmem:[#allocation2 + $0x178] sm:$0xff] %v6010
    %6125 = vst [vmem:[#allocation2 + $0x180] sm:$0xff] %v6015
    %6126 = vst [vmem:[#allocation2 + $0x188] sm:$0xff] %v6018
    %6127 = vst [vmem:[#allocation2 + $0x190] sm:$0xff] %v6023
    %6128 = vst [vmem:[#allocation2 + $0x198] sm:$0xff] %v6026
    %6129 = vst [vmem:[#allocation2 + $0x1a0] sm:$0xff] %v6031
    %6130 = vst [vmem:[#allocation2 + $0x1a8] sm:$0xff] %v6034
    %6131 = vst [vmem:[#allocation2 + $0x1b0] sm:$0xff] %v6039
    %6132 = vst [vmem:[#allocation2 + $0x1b8] sm:$0xff] %v6042
    %6133 = vst [vmem:[#allocation2 + $0x1c0] sm:$0xff] %v6047
    %6134 = vst [vmem:[#allocation2 + $0x1c8] sm:$0xff] %v6050
    %6135 = vst [vmem:[#allocation2 + $0x1d0] sm:$0xff] %v6055
    %6136 = vst [vmem:[#allocation2 + $0x1d8] sm:$0xff] %v6058
    %6137 = vst [vmem:[#allocation2 + $0x1e0] sm:$0xff] %v6063
    %6138 = vst [vmem:[#allocation2 + $0x1e8] sm:$0xff] %v6066
    %6139 = vst [vmem:[#allocation2 + $0x1f0] sm:$0xff] %v6071
    %6140 = vst [vmem:[#allocation2 + $0x1f8] sm:$0xff] %v6074
    %v6141 = vld [vmem:[#allocation2] sm:$0xff]
    %v6142 = vld [vmem:[#allocation2 + $0x8] sm:$0xff]
    %v6143 = vld [vmem:[#allocation2 + $0x10] sm:$0xff]
    %v6144 = vld [vmem:[#allocation2 + $0x18] sm:$0xff]
    %v6145 = vadd.f32 %v6141, %v6142
    %v6146 = vadd.f32 %v6145, %v6143
    %v6147 = vadd.f32 %v6146, %v6144
    %v6148 = vrot.slane %v6147, 4
    %v6149 = vadd.f32 %v6147, %v6148
    %v6150 = vrot.slane %v6149, 2
    %v6151 = vadd.f32 %v6149, %v6150
    %v6152 = vrot.slane %v6151, 1
    %v6153 = vadd.f32 %v6151, %v6152
    %v6154 = vadd.f32 %v6153, 0.0
    %v6155 = vmul.f32 %v6141, %v6141
    %v6156 = vmul.f32 %v6142, %v6142
    %v6157 = vmul.f32 %v6143, %v6143
    %v6158 = vmul.f32 %v6144, %v6144
    %v6159 = vadd.f32 %v6155, %v6156
    %v6160 = vadd.f32 %v6159, %v6157
    %v6161 = vadd.f32 %v6160, %v6158
    %v6162 = vrot.slane %v6161, 4
    %v6163 = vadd.f32 %v6161, %v6162
    %v6164 = vrot.slane %v6163, 2
    %v6165 = vadd.f32 %v6163, %v6164
    %v6166 = vrot.slane %v6165, 1
    %v6167 = vadd.f32 %v6165, %v6166
    %v6168 = vadd.f32 %v6167, 0.0
    %v6169 = vld [vmem:[#allocation2 + $0x20] sm:$0xff]
    %v6170 = vld [vmem:[#allocation2 + $0x28] sm:$0xff]
    %v6171 = vld [vmem:[#allocation2 + $0x30] sm:$0xff]
    %v6172 = vld [vmem:[#allocation2 + $0x38] sm:$0xff]
    %v6173 = vadd.f32 %v6169, %v6170
    %v6174 = vadd.f32 %v6173, %v6171
    %v6175 = vadd.f32 %v6174, %v6172
    %v6176 = vrot.slane %v6175, 4
    %v6177 = vadd.f32 %v6175, %v6176
    %v6178 = vrot.slane %v6177, 2
    %v6179 = vadd.f32 %v6177, %v6178
    %v6180 = vrot.slane %v6179, 1
    %v6181 = vadd.f32 %v6179, %v6180
    %v6182 = vadd.f32 %v6154, %v6181
    %v6183 = vmul.f32 %v6169, %v6169
    %v6184 = vmul.f32 %v6170, %v6170
    %v6185 = vmul.f32 %v6171, %v6171
    %v6186 = vmul.f32 %v6172, %v6172
    %v6187 = vadd.f32 %v6183, %v6184
    %v6188 = vadd.f32 %v6187, %v6185
    %v6189 = vadd.f32 %v6188, %v6186
    %v6190 = vrot.slane %v6189, 4
    %v6191 = vadd.f32 %v6189, %v6190
    %v6192 = vrot.slane %v6191, 2
    %v6193 = vadd.f32 %v6191, %v6192
    %v6194 = vrot.slane %v6193, 1
    %v6195 = vadd.f32 %v6193, %v6194
    %v6196 = vadd.f32 %v6168, %v6195
    %v6197 = vld [vmem:[#allocation2 + $0x40] sm:$0xff]
    %v6198 = vld [vmem:[#allocation2 + $0x48] sm:$0xff]
    %v6199 = vld [vmem:[#allocation2 + $0x50] sm:$0xff]
    %v6200 = vld [vmem:[#allocation2 + $0x58] sm:$0xff]
    %v6201 = vadd.f32 %v6197, %v6198
    %v6202 = vadd.f32 %v6201, %v6199
    %v6203 = vadd.f32 %v6202, %v6200
    %v6204 = vrot.slane %v6203, 4
    %v6205 = vadd.f32 %v6203, %v6204
    %v6206 = vrot.slane %v6205, 2
    %v6207 = vadd.f32 %v6205, %v6206
    %v6208 = vrot.slane %v6207, 1
    %v6209 = vadd.f32 %v6207, %v6208
    %v6210 = vadd.f32 %v6182, %v6209
    %v6211 = vmul.f32 %v6197, %v6197
    %v6212 = vmul.f32 %v6198, %v6198
    %v6213 = vmul.f32 %v6199, %v6199
    %v6214 = vmul.f32 %v6200, %v6200
    %v6215 = vadd.f32 %v6211, %v6212
    %v6216 = vadd.f32 %v6215, %v6213
    %v6217 = vadd.f32 %v6216, %v6214
    %v6218 = vrot.slane %v6217, 4
    %v6219 = vadd.f32 %v6217, %v6218
    %v6220 = vrot.slane %v6219, 2
    %v6221 = vadd.f32 %v6219, %v6220
    %v6222 = vrot.slane %v6221, 1
    %v6223 = vadd.f32 %v6221, %v6222
    %v6224 = vadd.f32 %v6196, %v6223
    %v6225 = vld [vmem:[#allocation2 + $0x60] sm:$0xff]
    %v6226 = vld [vmem:[#allocation2 + $0x68] sm:$0xff]
    %v6227 = vld [vmem:[#allocation2 + $0x70] sm:$0xff]
    %v6228 = vld [vmem:[#allocation2 + $0x78] sm:$0xff]
    %v6229 = vadd.f32 %v6225, %v6226
    %v6230 = vadd.f32 %v6229, %v6227
    %v6231 = vadd.f32 %v6230, %v6228
    %v6232 = vrot.slane %v6231, 4
    %v6233 = vadd.f32 %v6231, %v6232
    %v6234 = vrot.slane %v6233, 2
    %v6235 = vadd.f32 %v6233, %v6234
    %v6236 = vrot.slane %v6235, 1
    %v6237 = vadd.f32 %v6235, %v6236
    %v6238 = vadd.f32 %v6210, %v6237
    %v6239 = vmul.f32 %v6225, %v6225
    %v6240 = vmul.f32 %v6226, %v6226
    %v6241 = vmul.f32 %v6227, %v6227
    %v6242 = vmul.f32 %v6228, %v6228
    %v6243 = vadd.f32 %v6239, %v6240
    %v6244 = vadd.f32 %v6243, %v6241
    %v6245 = vadd.f32 %v6244, %v6242
    %v6246 = vrot.slane %v6245, 4
    %v6247 = vadd.f32 %v6245, %v6246
    %v6248 = vrot.slane %v6247, 2
    %v6249 = vadd.f32 %v6247, %v6248
    %v6250 = vrot.slane %v6249, 1
    %v6251 = vadd.f32 %v6249, %v6250
    %v6252 = vadd.f32 %v6224, %v6251
    %v6253 = vld [vmem:[#allocation2 + $0x80] sm:$0xff]
    %v6254 = vld [vmem:[#allocation2 + $0x88] sm:$0xff]
    %v6255 = vld [vmem:[#allocation2 + $0x90] sm:$0xff]
    %v6256 = vld [vmem:[#allocation2 + $0x98] sm:$0xff]
    %v6257 = vadd.f32 %v6253, %v6254
    %v6258 = vadd.f32 %v6257, %v6255
    %v6259 = vadd.f32 %v6258, %v6256
    %v6260 = vrot.slane %v6259, 4
    %v6261 = vadd.f32 %v6259, %v6260
    %v6262 = vrot.slane %v6261, 2
    %v6263 = vadd.f32 %v6261, %v6262
    %v6264 = vrot.slane %v6263, 1
    %v6265 = vadd.f32 %v6263, %v6264
    %v6266 = vadd.f32 %v6238, %v6265
    %v6267 = vmul.f32 %v6253, %v6253
    %v6268 = vmul.f32 %v6254, %v6254
    %v6269 = vmul.f32 %v6255, %v6255
    %v6270 = vmul.f32 %v6256, %v6256
    %v6271 = vadd.f32 %v6267, %v6268
    %v6272 = vadd.f32 %v6271, %v6269
    %v6273 = vadd.f32 %v6272, %v6270
    %v6274 = vrot.slane %v6273, 4
    %v6275 = vadd.f32 %v6273, %v6274
    %v6276 = vrot.slane %v6275, 2
    %v6277 = vadd.f32 %v6275, %v6276
    %v6278 = vrot.slane %v6277, 1
    %v6279 = vadd.f32 %v6277, %v6278
    %v6280 = vadd.f32 %v6252, %v6279
    %v6281 = vld [vmem:[#allocation2 + $0xa0] sm:$0xff]
    %v6282 = vld [vmem:[#allocation2 + $0xa8] sm:$0xff]
    %v6283 = vld [vmem:[#allocation2 + $0xb0] sm:$0xff]
    %v6284 = vld [vmem:[#allocation2 + $0xb8] sm:$0xff]
    %v6285 = vadd.f32 %v6281, %v6282
    %v6286 = vadd.f32 %v6285, %v6283
    %v6287 = vadd.f32 %v6286, %v6284
    %v6288 = vrot.slane %v6287, 4
    %v6289 = vadd.f32 %v6287, %v6288
    %v6290 = vrot.slane %v6289, 2
    %v6291 = vadd.f32 %v6289, %v6290
    %v6292 = vrot.slane %v6291, 1
    %v6293 = vadd.f32 %v6291, %v6292
    %v6294 = vadd.f32 %v6266, %v6293
    %v6295 = vmul.f32 %v6281, %v6281
    %v6296 = vmul.f32 %v6282, %v6282
    %v6297 = vmul.f32 %v6283, %v6283
    %v6298 = vmul.f32 %v6284, %v6284
    %v6299 = vadd.f32 %v6295, %v6296
    %v6300 = vadd.f32 %v6299, %v6297
    %v6301 = vadd.f32 %v6300, %v6298
    %v6302 = vrot.slane %v6301, 4
    %v6303 = vadd.f32 %v6301, %v6302
    %v6304 = vrot.slane %v6303, 2
    %v6305 = vadd.f32 %v6303, %v6304
    %v6306 = vrot.slane %v6305, 1
    %v6307 = vadd.f32 %v6305, %v6306
    %v6308 = vadd.f32 %v6280, %v6307
    %v6309 = vld [vmem:[#allocation2 + $0xc0] sm:$0xff]
    %v6310 = vld [vmem:[#allocation2 + $0xc8] sm:$0xff]
    %v6311 = vld [vmem:[#allocation2 + $0xd0] sm:$0xff]
    %v6312 = vld [vmem:[#allocation2 + $0xd8] sm:$0xff]
    %v6313 = vadd.f32 %v6309, %v6310
    %v6314 = vadd.f32 %v6313, %v6311
    %v6315 = vadd.f32 %v6314, %v6312
    %v6316 = vrot.slane %v6315, 4
    %v6317 = vadd.f32 %v6315, %v6316
    %v6318 = vrot.slane %v6317, 2
    %v6319 = vadd.f32 %v6317, %v6318
    %v6320 = vrot.slane %v6319, 1
    %v6321 = vadd.f32 %v6319, %v6320
    %v6322 = vadd.f32 %v6294, %v6321
    %v6323 = vmul.f32 %v6309, %v6309
    %v6324 = vmul.f32 %v6310, %v6310
    %v6325 = vmul.f32 %v6311, %v6311
    %v6326 = vmul.f32 %v6312, %v6312
    %v6327 = vadd.f32 %v6323, %v6324
    %v6328 = vadd.f32 %v6327, %v6325
    %v6329 = vadd.f32 %v6328, %v6326
    %v6330 = vrot.slane %v6329, 4
    %v6331 = vadd.f32 %v6329, %v6330
    %v6332 = vrot.slane %v6331, 2
    %v6333 = vadd.f32 %v6331, %v6332
    %v6334 = vrot.slane %v6333, 1
    %v6335 = vadd.f32 %v6333, %v6334
    %v6336 = vadd.f32 %v6308, %v6335
    %v6337 = vld [vmem:[#allocation2 + $0xe0] sm:$0xff]
    %v6338 = vld [vmem:[#allocation2 + $0xe8] sm:$0xff]
    %v6339 = vld [vmem:[#allocation2 + $0xf0] sm:$0xff]
    %v6340 = vld [vmem:[#allocation2 + $0xf8] sm:$0xff]
    %v6341 = vadd.f32 %v6337, %v6338
    %v6342 = vadd.f32 %v6341, %v6339
    %v6343 = vadd.f32 %v6342, %v6340
    %v6344 = vrot.slane %v6343, 4
    %v6345 = vadd.f32 %v6343, %v6344
    %v6346 = vrot.slane %v6345, 2
    %v6347 = vadd.f32 %v6345, %v6346
    %v6348 = vrot.slane %v6347, 1
    %v6349 = vadd.f32 %v6347, %v6348
    %v6350 = vadd.f32 %v6322, %v6349
    %v6351 = vmul.f32 %v6337, %v6337
    %v6352 = vmul.f32 %v6338, %v6338
    %v6353 = vmul.f32 %v6339, %v6339
    %v6354 = vmul.f32 %v6340, %v6340
    %v6355 = vadd.f32 %v6351, %v6352
    %v6356 = vadd.f32 %v6355, %v6353
    %v6357 = vadd.f32 %v6356, %v6354
    %v6358 = vrot.slane %v6357, 4
    %v6359 = vadd.f32 %v6357, %v6358
    %v6360 = vrot.slane %v6359, 2
    %v6361 = vadd.f32 %v6359, %v6360
    %v6362 = vrot.slane %v6361, 1
    %v6363 = vadd.f32 %v6361, %v6362
    %v6364 = vadd.f32 %v6336, %v6363
    %v6365 = vld [vmem:[#allocation2 + $0x100] sm:$0xff]
    %v6366 = vld [vmem:[#allocation2 + $0x108] sm:$0xff]
    %v6367 = vld [vmem:[#allocation2 + $0x110] sm:$0xff]
    %v6368 = vld [vmem:[#allocation2 + $0x118] sm:$0xff]
    %v6369 = vadd.f32 %v6365, %v6366
    %v6370 = vadd.f32 %v6369, %v6367
    %v6371 = vadd.f32 %v6370, %v6368
    %v6372 = vrot.slane %v6371, 4
    %v6373 = vadd.f32 %v6371, %v6372
    %v6374 = vrot.slane %v6373, 2
    %v6375 = vadd.f32 %v6373, %v6374
    %v6376 = vrot.slane %v6375, 1
    %v6377 = vadd.f32 %v6375, %v6376
    %v6378 = vadd.f32 %v6350, %v6377
    %v6379 = vmul.f32 %v6365, %v6365
    %v6380 = vmul.f32 %v6366, %v6366
    %v6381 = vmul.f32 %v6367, %v6367
    %v6382 = vmul.f32 %v6368, %v6368
    %v6383 = vadd.f32 %v6379, %v6380
    %v6384 = vadd.f32 %v6383, %v6381
    %v6385 = vadd.f32 %v6384, %v6382
    %v6386 = vrot.slane %v6385, 4
    %v6387 = vadd.f32 %v6385, %v6386
    %v6388 = vrot.slane %v6387, 2
    %v6389 = vadd.f32 %v6387, %v6388
    %v6390 = vrot.slane %v6389, 1
    %v6391 = vadd.f32 %v6389, %v6390
    %v6392 = vadd.f32 %v6364, %v6391
    %v6393 = vld [vmem:[#allocation2 + $0x120] sm:$0xff]
    %v6394 = vld [vmem:[#allocation2 + $0x128] sm:$0xff]
    %v6395 = vld [vmem:[#allocation2 + $0x130] sm:$0xff]
    %v6396 = vld [vmem:[#allocation2 + $0x138] sm:$0xff]
    %v6397 = vadd.f32 %v6393, %v6394
    %v6398 = vadd.f32 %v6397, %v6395
    %v6399 = vadd.f32 %v6398, %v6396
    %v6400 = vrot.slane %v6399, 4
    %v6401 = vadd.f32 %v6399, %v6400
    %v6402 = vrot.slane %v6401, 2
    %v6403 = vadd.f32 %v6401, %v6402
    %v6404 = vrot.slane %v6403, 1
    %v6405 = vadd.f32 %v6403, %v6404
    %v6406 = vadd.f32 %v6378, %v6405
    %v6407 = vmul.f32 %v6393, %v6393
    %v6408 = vmul.f32 %v6394, %v6394
    %v6409 = vmul.f32 %v6395, %v6395
    %v6410 = vmul.f32 %v6396, %v6396
    %v6411 = vadd.f32 %v6407, %v6408
    %v6412 = vadd.f32 %v6411, %v6409
    %v6413 = vadd.f32 %v6412, %v6410
    %v6414 = vrot.slane %v6413, 4
    %v6415 = vadd.f32 %v6413, %v6414
    %v6416 = vrot.slane %v6415, 2
    %v6417 = vadd.f32 %v6415, %v6416
    %v6418 = vrot.slane %v6417, 1
    %v6419 = vadd.f32 %v6417, %v6418
    %v6420 = vadd.f32 %v6392, %v6419
    %v6421 = vld [vmem:[#allocation2 + $0x140] sm:$0xff]
    %v6422 = vld [vmem:[#allocation2 + $0x148] sm:$0xff]
    %v6423 = vld [vmem:[#allocation2 + $0x150] sm:$0xff]
    %v6424 = vld [vmem:[#allocation2 + $0x158] sm:$0xff]
    %v6425 = vadd.f32 %v6421, %v6422
    %v6426 = vadd.f32 %v6425, %v6423
    %v6427 = vadd.f32 %v6426, %v6424
    %v6428 = vrot.slane %v6427, 4
    %v6429 = vadd.f32 %v6427, %v6428
    %v6430 = vrot.slane %v6429, 2
    %v6431 = vadd.f32 %v6429, %v6430
    %v6432 = vrot.slane %v6431, 1
    %v6433 = vadd.f32 %v6431, %v6432
    %v6434 = vadd.f32 %v6406, %v6433
    %v6435 = vmul.f32 %v6421, %v6421
    %v6436 = vmul.f32 %v6422, %v6422
    %v6437 = vmul.f32 %v6423, %v6423
    %v6438 = vmul.f32 %v6424, %v6424
    %v6439 = vadd.f32 %v6435, %v6436
    %v6440 = vadd.f32 %v6439, %v6437
    %v6441 = vadd.f32 %v6440, %v6438
    %v6442 = vrot.slane %v6441, 4
    %v6443 = vadd.f32 %v6441, %v6442
    %v6444 = vrot.slane %v6443, 2
    %v6445 = vadd.f32 %v6443, %v6444
    %v6446 = vrot.slane %v6445, 1
    %v6447 = vadd.f32 %v6445, %v6446
    %v6448 = vadd.f32 %v6420, %v6447
    %v6449 = vld [vmem:[#allocation2 + $0x160] sm:$0xff]
    %v6450 = vld [vmem:[#allocation2 + $0x168] sm:$0xff]
    %v6451 = vld [vmem:[#allocation2 + $0x170] sm:$0xff]
    %v6452 = vld [vmem:[#allocation2 + $0x178] sm:$0xff]
    %v6453 = vadd.f32 %v6449, %v6450
    %v6454 = vadd.f32 %v6453, %v6451
    %v6455 = vadd.f32 %v6454, %v6452
    %v6456 = vrot.slane %v6455, 4
    %v6457 = vadd.f32 %v6455, %v6456
    %v6458 = vrot.slane %v6457, 2
    %v6459 = vadd.f32 %v6457, %v6458
    %v6460 = vrot.slane %v6459, 1
    %v6461 = vadd.f32 %v6459, %v6460
    %v6462 = vadd.f32 %v6434, %v6461
    %v6463 = vmul.f32 %v6449, %v6449
    %v6464 = vmul.f32 %v6450, %v6450
    %v6465 = vmul.f32 %v6451, %v6451
    %v6466 = vmul.f32 %v6452, %v6452
    %v6467 = vadd.f32 %v6463, %v6464
    %v6468 = vadd.f32 %v6467, %v6465
    %v6469 = vadd.f32 %v6468, %v6466
    %v6470 = vrot.slane %v6469, 4
    %v6471 = vadd.f32 %v6469, %v6470
    %v6472 = vrot.slane %v6471, 2
    %v6473 = vadd.f32 %v6471, %v6472
    %v6474 = vrot.slane %v6473, 1
    %v6475 = vadd.f32 %v6473, %v6474
    %v6476 = vadd.f32 %v6448, %v6475
    %v6477 = vld [vmem:[#allocation2 + $0x180] sm:$0xff]
    %v6478 = vld [vmem:[#allocation2 + $0x188] sm:$0xff]
    %v6479 = vld [vmem:[#allocation2 + $0x190] sm:$0xff]
    %v6480 = vld [vmem:[#allocation2 + $0x198] sm:$0xff]
    %v6481 = vadd.f32 %v6477, %v6478
    %v6482 = vadd.f32 %v6481, %v6479
    %v6483 = vadd.f32 %v6482, %v6480
    %v6484 = vrot.slane %v6483, 4
    %v6485 = vadd.f32 %v6483, %v6484
    %v6486 = vrot.slane %v6485, 2
    %v6487 = vadd.f32 %v6485, %v6486
    %v6488 = vrot.slane %v6487, 1
    %v6489 = vadd.f32 %v6487, %v6488
    %v6490 = vadd.f32 %v6462, %v6489
    %v6491 = vmul.f32 %v6477, %v6477
    %v6492 = vmul.f32 %v6478, %v6478
    %v6493 = vmul.f32 %v6479, %v6479
    %v6494 = vmul.f32 %v6480, %v6480
    %v6495 = vadd.f32 %v6491, %v6492
    %v6496 = vadd.f32 %v6495, %v6493
    %v6497 = vadd.f32 %v6496, %v6494
    %v6498 = vrot.slane %v6497, 4
    %v6499 = vadd.f32 %v6497, %v6498
    %v6500 = vrot.slane %v6499, 2
    %v6501 = vadd.f32 %v6499, %v6500
    %v6502 = vrot.slane %v6501, 1
    %v6503 = vadd.f32 %v6501, %v6502
    %v6504 = vadd.f32 %v6476, %v6503
    %v6505 = vld [vmem:[#allocation2 + $0x1a0] sm:$0xff]
    %v6506 = vld [vmem:[#allocation2 + $0x1a8] sm:$0xff]
    %v6507 = vld [vmem:[#allocation2 + $0x1b0] sm:$0xff]
    %v6508 = vld [vmem:[#allocation2 + $0x1b8] sm:$0xff]
    %v6509 = vadd.f32 %v6505, %v6506
    %v6510 = vadd.f32 %v6509, %v6507
    %v6511 = vadd.f32 %v6510, %v6508
    %v6512 = vrot.slane %v6511, 4
    %v6513 = vadd.f32 %v6511, %v6512
    %v6514 = vrot.slane %v6513, 2
    %v6515 = vadd.f32 %v6513, %v6514
    %v6516 = vrot.slane %v6515, 1
    %v6517 = vadd.f32 %v6515, %v6516
    %v6518 = vadd.f32 %v6490, %v6517
    %v6519 = vmul.f32 %v6505, %v6505
    %v6520 = vmul.f32 %v6506, %v6506
    %v6521 = vmul.f32 %v6507, %v6507
    %v6522 = vmul.f32 %v6508, %v6508
    %v6523 = vadd.f32 %v6519, %v6520
    %v6524 = vadd.f32 %v6523, %v6521
    %v6525 = vadd.f32 %v6524, %v6522
    %v6526 = vrot.slane %v6525, 4
    %v6527 = vadd.f32 %v6525, %v6526
    %v6528 = vrot.slane %v6527, 2
    %v6529 = vadd.f32 %v6527, %v6528
    %v6530 = vrot.slane %v6529, 1
    %v6531 = vadd.f32 %v6529, %v6530
    %v6532 = vadd.f32 %v6504, %v6531
    %v6533 = vld [vmem:[#allocation2 + $0x1c0] sm:$0xff]
    %v6534 = vld [vmem:[#allocation2 + $0x1c8] sm:$0xff]
    %v6535 = vld [vmem:[#allocation2 + $0x1d0] sm:$0xff]
    %v6536 = vld [vmem:[#allocation2 + $0x1d8] sm:$0xff]
    %v6537 = vadd.f32 %v6533, %v6534
    %v6538 = vadd.f32 %v6537, %v6535
    %v6539 = vadd.f32 %v6538, %v6536
    %v6540 = vrot.slane %v6539, 4
    %v6541 = vadd.f32 %v6539, %v6540
    %v6542 = vrot.slane %v6541, 2
    %v6543 = vadd.f32 %v6541, %v6542
    %v6544 = vrot.slane %v6543, 1
    %v6545 = vadd.f32 %v6543, %v6544
    %v6546 = vadd.f32 %v6518, %v6545
    %v6547 = vmul.f32 %v6533, %v6533
    %v6548 = vmul.f32 %v6534, %v6534
    %v6549 = vmul.f32 %v6535, %v6535
    %v6550 = vmul.f32 %v6536, %v6536
    %v6551 = vadd.f32 %v6547, %v6548
    %v6552 = vadd.f32 %v6551, %v6549
    %v6553 = vadd.f32 %v6552, %v6550
    %v6554 = vrot.slane %v6553, 4
    %v6555 = vadd.f32 %v6553, %v6554
    %v6556 = vrot.slane %v6555, 2
    %v6557 = vadd.f32 %v6555, %v6556
    %v6558 = vrot.slane %v6557, 1
    %v6559 = vadd.f32 %v6557, %v6558
    %v6560 = vadd.f32 %v6532, %v6559
    %v6561 = vld [vmem:[#allocation2 + $0x1e0] sm:$0xff]
    %v6562 = vld [vmem:[#allocation2 + $0x1e8] sm:$0xff]
    %v6563 = vld [vmem:[#allocation2 + $0x1f0] sm:$0xff]
    %v6564 = vld [vmem:[#allocation2 + $0x1f8] sm:$0xff]
    %v6565 = vadd.f32 %v6561, %v6562
    %v6566 = vadd.f32 %v6565, %v6563
    %v6567 = vadd.f32 %v6566, %v6564
    %v6568 = vrot.slane %v6567, 4
    %v6569 = vadd.f32 %v6567, %v6568
    %v6570 = vrot.slane %v6569, 2
    %v6571 = vadd.f32 %v6569, %v6570
    %v6572 = vrot.slane %v6571, 1
    %v6573 = vadd.f32 %v6571, %v6572
    %v6574 = vadd.f32 %v6546, %v6573
    %v6575 = vmul.f32 %v6561, %v6561
    %v6576 = vmul.f32 %v6562, %v6562
    %v6577 = vmul.f32 %v6563, %v6563
    %v6578 = vmul.f32 %v6564, %v6564
    %v6579 = vadd.f32 %v6575, %v6576
    %v6580 = vadd.f32 %v6579, %v6577
    %v6581 = vadd.f32 %v6580, %v6578
    %v6582 = vrot.slane %v6581, 4
    %v6583 = vadd.f32 %v6581, %v6582
    %v6584 = vrot.slane %v6583, 2
    %v6585 = vadd.f32 %v6583, %v6584
    %v6586 = vrot.slane %v6585, 1
    %v6587 = vadd.f32 %v6585, %v6586
    %v6588 = vadd.f32 %v6560, %v6587
    %v6589 = vmul.f32 %v6574, 0.001953125
    %v6590 = vmul.f32 %v6588, 0.001953125
    %v6591 = vmul.f32 %v6589, %v6589
    %v6592 = vsub.f32 %v6590, %v6591
    %v6593 = vmax.f32 %v6592, 0.0
    %v6594 = vld [vmem:[%s2] sm:$0x1]
    %v6595 = vadd.f32 %v6593, 1e-05
    %v6596 = vrsqrt.pop %v6595
    %v6597 = vmul.f32 %v6594, %v6596
    %v6598 = vld [vmem:[%s3] sm:$0x1]
    %v6599 = vmul.f32 %v6589, %v6597
    %v6600 = vsub.f32 %v6598, %v6599
    %v6601 = vld [vmem:[#allocation2] ss:$2 sm:$0xff]
    %v6603 = vlaneseq
    %v6604 = vshrl.u32 %v6603, 7
    %v6605 = vsub.s32 0, %v6604
    %v6606 = vrot.slane %v6597, %v6605
    %v6608 = vmul.f32 %v6601, %v6606
    %v6610 = vlaneseq
    %v6611 = vshrl.u32 %v6610, 7
    %v6612 = vsub.s32 0, %v6611
    %v6613 = vrot.slane %v6600, %v6612
    %v6615 = vadd.f32 %v6608, %v6613
    %v6616 = vmax.f32 %v6615, 0.0
    %s6617 = scalar_lea.vmem [#allocation2], 1
    %v6618 = vld [vmem:[%s6617] ss:$2 sm:$0xff]
    %v6619 = vmul.f32 %v6618, %v6606
    %v6620 = vadd.f32 %v6619, %v6613
    %v6621 = vmax.f32 %v6620, 0.0
    %s6622 = scalar_lea.vmem [#allocation2], 16
    %v6623 = vld [vmem:[%s6622] ss:$2 sm:$0xff]
    %v6624 = vmul.f32 %v6623, %v6606
    %v6625 = vadd.f32 %v6624, %v6613
    %v6626 = vmax.f32 %v6625, 0.0
    %s6627 = scalar_lea.vmem [#allocation2], 17
    %v6628 = vld [vmem:[%s6627] ss:$2 sm:$0xff]
    %v6629 = vmul.f32 %v6628, %v6606
    %v6630 = vadd.f32 %v6629, %v6613
    %v6631 = vmax.f32 %v6630, 0.0
    %v6632 = vmax.f32 %v6616, %v6621
    %v6633 = vmax.f32 %v6626, %v6631
    %v6634 = vmax.f32 %v6632, %v6633
    %6635 = vst [vmem:[#allocation3] sm:$0xff] %v6634
    %s6636 = scalar_lea.vmem [#allocation2], 32
    %v6637 = vld [vmem:[%s6636] ss:$2 sm:$0xff]
    %v6638 = vmul.f32 %v6637, %v6606
    %v6639 = vadd.f32 %v6638, %v6613
    %v6640 = vmax.f32 %v6639, 0.0
    %s6641 = scalar_lea.vmem [#allocation2], 33
    %v6642 = vld [vmem:[%s6641] ss:$2 sm:$0xff]
    %v6643 = vmul.f32 %v6642, %v6606
    %v6644 = vadd.f32 %v6643, %v6613
    %v6645 = vmax.f32 %v6644, 0.0
    %s6646 = scalar_lea.vmem [#allocation2], 48
    %v6647 = vld [vmem:[%s6646] ss:$2 sm:$0xff]
    %v6648 = vmul.f32 %v6647, %v6606
    %v6649 = vadd.f32 %v6648, %v6613
    %v6650 = vmax.f32 %v6649, 0.0
    %s6651 = scalar_lea.vmem [#allocation2], 49
    %v6652 = vld [vmem:[%s6651] ss:$2 sm:$0xff]
    %v6653 = vmul.f32 %v6652, %v6606
    %v6654 = vadd.f32 %v6653, %v6613
    %v6655 = vmax.f32 %v6654, 0.0
    %v6656 = vmax.f32 %v6640, %v6645
    %v6657 = vmax.f32 %v6650, %v6655
    %v6658 = vmax.f32 %v6656, %v6657
    %6659 = vst [vmem:[#allocation3 + $0x8] sm:$0xff] %v6658
    %s6660 = scalar_lea.vmem [#allocation2], 64
    %v6661 = vld [vmem:[%s6660] ss:$2 sm:$0xff]
    %v6662 = vmul.f32 %v6661, %v6606
    %v6663 = vadd.f32 %v6662, %v6613
    %v6664 = vmax.f32 %v6663, 0.0
    %s6665 = scalar_lea.vmem [#allocation2], 65
    %v6666 = vld [vmem:[%s6665] ss:$2 sm:$0xff]
    %v6667 = vmul.f32 %v6666, %v6606
    %v6668 = vadd.f32 %v6667, %v6613
    %v6669 = vmax.f32 %v6668, 0.0
    %s6670 = scalar_lea.vmem [#allocation2], 80
    %v6671 = vld [vmem:[%s6670] ss:$2 sm:$0xff]
    %v6672 = vmul.f32 %v6671, %v6606
    %v6673 = vadd.f32 %v6672, %v6613
    %v6674 = vmax.f32 %v6673, 0.0
    %s6675 = scalar_lea.vmem [#allocation2], 81
    %v6676 = vld [vmem:[%s6675] ss:$2 sm:$0xff]
    %v6677 = vmul.f32 %v6676, %v6606
    %v6678 = vadd.f32 %v6677, %v6613
    %v6679 = vmax.f32 %v6678, 0.0
    %v6680 = vmax.f32 %v6664, %v6669
    %v6681 = vmax.f32 %v6674, %v6679
    %v6682 = vmax.f32 %v6680, %v6681
    %6683 = vst [vmem:[#allocation3 + $0x10] sm:$0xff] %v6682
    %s6684 = scalar_lea.vmem [#allocation2], 96
    %v6685 = vld [vmem:[%s6684] ss:$2 sm:$0xff]
    %v6686 = vmul.f32 %v6685, %v6606
    %v6687 = vadd.f32 %v6686, %v6613
    %v6688 = vmax.f32 %v6687, 0.0
    %s6689 = scalar_lea.vmem [#allocation2], 97
    %v6690 = vld [vmem:[%s6689] ss:$2 sm:$0xff]
    %v6691 = vmul.f32 %v6690, %v6606
    %v6692 = vadd.f32 %v6691, %v6613
    %v6693 = vmax.f32 %v6692, 0.0
    %s6694 = scalar_lea.vmem [#allocation2], 112
    %v6695 = vld [vmem:[%s6694] ss:$2 sm:$0xff]
    %v6696 = vmul.f32 %v6695, %v6606
    %v6697 = vadd.f32 %v6696, %v6613
    %v6698 = vmax.f32 %v6697, 0.0
    %s6699 = scalar_lea.vmem [#allocation2], 113
    %v6700 = vld [vmem:[%s6699] ss:$2 sm:$0xff]
    %v6701 = vmul.f32 %v6700, %v6606
    %v6702 = vadd.f32 %v6701, %v6613
    %v6703 = vmax.f32 %v6702, 0.0
    %v6704 = vmax.f32 %v6688, %v6693
    %v6705 = vmax.f32 %v6698, %v6703
    %v6706 = vmax.f32 %v6704, %v6705
    %6707 = vst [vmem:[#allocation3 + $0x18] sm:$0xff] %v6706
    %s6708 = scalar_lea.vmem [#allocation2], 128
    %v6709 = vld [vmem:[%s6708] ss:$2 sm:$0xff]
    %v6710 = vmul.f32 %v6709, %v6606
    %v6711 = vadd.f32 %v6710, %v6613
    %v6712 = vmax.f32 %v6711, 0.0
    %s6713 = scalar_lea.vmem [#allocation2], 129
    %v6714 = vld [vmem:[%s6713] ss:$2 sm:$0xff]
    %v6715 = vmul.f32 %v6714, %v6606
    %v6716 = vadd.f32 %v6715, %v6613
    %v6717 = vmax.f32 %v6716, 0.0
    %s6718 = scalar_lea.vmem [#allocation2], 144
    %v6719 = vld [vmem:[%s6718] ss:$2 sm:$0xff]
    %v6720 = vmul.f32 %v6719, %v6606
    %v6721 = vadd.f32 %v6720, %v6613
    %v6722 = vmax.f32 %v6721, 0.0
    %s6723 = scalar_lea.vmem [#allocation2], 145
    %v6724 = vld [vmem:[%s6723] ss:$2 sm:$0xff]
    %v6725 = vmul.f32 %v6724, %v6606
    %v6726 = vadd.f32 %v6725, %v6613
    %v6727 = vmax.f32 %v6726, 0.0
    %v6728 = vmax.f32 %v6712, %v6717
    %v6729 = vmax.f32 %v6722, %v6727
    %v6730 = vmax.f32 %v6728, %v6729
    %6731 = vst [vmem:[#allocation3 + $0x20] sm:$0xff] %v6730
    %s6732 = scalar_lea.vmem [#allocation2], 160
    %v6733 = vld [vmem:[%s6732] ss:$2 sm:$0xff]
    %v6734 = vmul.f32 %v6733, %v6606
    %v6735 = vadd.f32 %v6734, %v6613
    %v6736 = vmax.f32 %v6735, 0.0
    %s6737 = scalar_lea.vmem [#allocation2], 161
    %v6738 = vld [vmem:[%s6737] ss:$2 sm:$0xff]
    %v6739 = vmul.f32 %v6738, %v6606
    %v6740 = vadd.f32 %v6739, %v6613
    %v6741 = vmax.f32 %v6740, 0.0
    %s6742 = scalar_lea.vmem [#allocation2], 176
    %v6743 = vld [vmem:[%s6742] ss:$2 sm:$0xff]
    %v6744 = vmul.f32 %v6743, %v6606
    %v6745 = vadd.f32 %v6744, %v6613
    %v6746 = vmax.f32 %v6745, 0.0
    %s6747 = scalar_lea.vmem [#allocation2], 177
    %v6748 = vld [vmem:[%s6747] ss:$2 sm:$0xff]
    %v6749 = vmul.f32 %v6748, %v6606
    %v6750 = vadd.f32 %v6749, %v6613
    %v6751 = vmax.f32 %v6750, 0.0
    %v6752 = vmax.f32 %v6736, %v6741
    %v6753 = vmax.f32 %v6746, %v6751
    %v6754 = vmax.f32 %v6752, %v6753
    %6755 = vst [vmem:[#allocation3 + $0x28] sm:$0xff] %v6754
    %s6756 = scalar_lea.vmem [#allocation2], 192
    %v6757 = vld [vmem:[%s6756] ss:$2 sm:$0xff]
    %v6758 = vmul.f32 %v6757, %v6606
    %v6759 = vadd.f32 %v6758, %v6613
    %v6760 = vmax.f32 %v6759, 0.0
    %s6761 = scalar_lea.vmem [#allocation2], 193
    %v6762 = vld [vmem:[%s6761] ss:$2 sm:$0xff]
    %v6763 = vmul.f32 %v6762, %v6606
    %v6764 = vadd.f32 %v6763, %v6613
    %v6765 = vmax.f32 %v6764, 0.0
    %s6766 = scalar_lea.vmem [#allocation2], 208
    %v6767 = vld [vmem:[%s6766] ss:$2 sm:$0xff]
    %v6768 = vmul.f32 %v6767, %v6606
    %v6769 = vadd.f32 %v6768, %v6613
    %v6770 = vmax.f32 %v6769, 0.0
    %s6771 = scalar_lea.vmem [#allocation2], 209
    %v6772 = vld [vmem:[%s6771] ss:$2 sm:$0xff]
    %v6773 = vmul.f32 %v6772, %v6606
    %v6774 = vadd.f32 %v6773, %v6613
    %v6775 = vmax.f32 %v6774, 0.0
    %v6776 = vmax.f32 %v6760, %v6765
    %v6777 = vmax.f32 %v6770, %v6775
    %v6778 = vmax.f32 %v6776, %v6777
    %6779 = vst [vmem:[#allocation3 + $0x30] sm:$0xff] %v6778
    %s6780 = scalar_lea.vmem [#allocation2], 224
    %v6781 = vld [vmem:[%s6780] ss:$2 sm:$0xff]
    %v6782 = vmul.f32 %v6781, %v6606
    %v6783 = vadd.f32 %v6782, %v6613
    %v6784 = vmax.f32 %v6783, 0.0
    %s6785 = scalar_lea.vmem [#allocation2], 225
    %v6786 = vld [vmem:[%s6785] ss:$2 sm:$0xff]
    %v6787 = vmul.f32 %v6786, %v6606
    %v6788 = vadd.f32 %v6787, %v6613
    %v6789 = vmax.f32 %v6788, 0.0
    %s6790 = scalar_lea.vmem [#allocation2], 240
    %v6791 = vld [vmem:[%s6790] ss:$2 sm:$0xff]
    %v6792 = vmul.f32 %v6791, %v6606
    %v6793 = vadd.f32 %v6792, %v6613
    %v6794 = vmax.f32 %v6793, 0.0
    %s6795 = scalar_lea.vmem [#allocation2], 241
    %v6796 = vld [vmem:[%s6795] ss:$2 sm:$0xff]
    %v6797 = vmul.f32 %v6796, %v6606
    %v6798 = vadd.f32 %v6797, %v6613
    %v6799 = vmax.f32 %v6798, 0.0
    %v6800 = vmax.f32 %v6784, %v6789
    %v6801 = vmax.f32 %v6794, %v6799
    %v6802 = vmax.f32 %v6800, %v6801
    %6803 = vst [vmem:[#allocation3 + $0x38] sm:$0xff] %v6802
    %s6804 = scalar_lea.vmem [#allocation2], 256
    %v6805 = vld [vmem:[%s6804] ss:$2 sm:$0xff]
    %v6806 = vmul.f32 %v6805, %v6606
    %v6807 = vadd.f32 %v6806, %v6613
    %v6808 = vmax.f32 %v6807, 0.0
    %s6809 = scalar_lea.vmem [#allocation2], 257
    %v6810 = vld [vmem:[%s6809] ss:$2 sm:$0xff]
    %v6811 = vmul.f32 %v6810, %v6606
    %v6812 = vadd.f32 %v6811, %v6613
    %v6813 = vmax.f32 %v6812, 0.0
    %s6814 = scalar_lea.vmem [#allocation2], 272
    %v6815 = vld [vmem:[%s6814] ss:$2 sm:$0xff]
    %v6816 = vmul.f32 %v6815, %v6606
    %v6817 = vadd.f32 %v6816, %v6613
    %v6818 = vmax.f32 %v6817, 0.0
    %s6819 = scalar_lea.vmem [#allocation2], 273
    %v6820 = vld [vmem:[%s6819] ss:$2 sm:$0xff]
    %v6821 = vmul.f32 %v6820, %v6606
    %v6822 = vadd.f32 %v6821, %v6613
    %v6823 = vmax.f32 %v6822, 0.0
    %v6824 = vmax.f32 %v6808, %v6813
    %v6825 = vmax.f32 %v6818, %v6823
    %v6826 = vmax.f32 %v6824, %v6825
    %6827 = vst [vmem:[#allocation3 + $0x40] sm:$0xff] %v6826
    %s6828 = scalar_lea.vmem [#allocation2], 288
    %v6829 = vld [vmem:[%s6828] ss:$2 sm:$0xff]
    %v6830 = vmul.f32 %v6829, %v6606
    %v6831 = vadd.f32 %v6830, %v6613
    %v6832 = vmax.f32 %v6831, 0.0
    %s6833 = scalar_lea.vmem [#allocation2], 289
    %v6834 = vld [vmem:[%s6833] ss:$2 sm:$0xff]
    %v6835 = vmul.f32 %v6834, %v6606
    %v6836 = vadd.f32 %v6835, %v6613
    %v6837 = vmax.f32 %v6836, 0.0
    %s6838 = scalar_lea.vmem [#allocation2], 304
    %v6839 = vld [vmem:[%s6838] ss:$2 sm:$0xff]
    %v6840 = vmul.f32 %v6839, %v6606
    %v6841 = vadd.f32 %v6840, %v6613
    %v6842 = vmax.f32 %v6841, 0.0
    %s6843 = scalar_lea.vmem [#allocation2], 305
    %v6844 = vld [vmem:[%s6843] ss:$2 sm:$0xff]
    %v6845 = vmul.f32 %v6844, %v6606
    %v6846 = vadd.f32 %v6845, %v6613
    %v6847 = vmax.f32 %v6846, 0.0
    %v6848 = vmax.f32 %v6832, %v6837
    %v6849 = vmax.f32 %v6842, %v6847
    %v6850 = vmax.f32 %v6848, %v6849
    %6851 = vst [vmem:[#allocation3 + $0x48] sm:$0xff] %v6850
    %s6852 = scalar_lea.vmem [#allocation2], 320
    %v6853 = vld [vmem:[%s6852] ss:$2 sm:$0xff]
    %v6854 = vmul.f32 %v6853, %v6606
    %v6855 = vadd.f32 %v6854, %v6613
    %v6856 = vmax.f32 %v6855, 0.0
    %s6857 = scalar_lea.vmem [#allocation2], 321
    %v6858 = vld [vmem:[%s6857] ss:$2 sm:$0xff]
    %v6859 = vmul.f32 %v6858, %v6606
    %v6860 = vadd.f32 %v6859, %v6613
    %v6861 = vmax.f32 %v6860, 0.0
    %s6862 = scalar_lea.vmem [#allocation2], 336
    %v6863 = vld [vmem:[%s6862] ss:$2 sm:$0xff]
    %v6864 = vmul.f32 %v6863, %v6606
    %v6865 = vadd.f32 %v6864, %v6613
    %v6866 = vmax.f32 %v6865, 0.0
    %s6867 = scalar_lea.vmem [#allocation2], 337
    %v6868 = vld [vmem:[%s6867] ss:$2 sm:$0xff]
    %v6869 = vmul.f32 %v6868, %v6606
    %v6870 = vadd.f32 %v6869, %v6613
    %v6871 = vmax.f32 %v6870, 0.0
    %v6872 = vmax.f32 %v6856, %v6861
    %v6873 = vmax.f32 %v6866, %v6871
    %v6874 = vmax.f32 %v6872, %v6873
    %6875 = vst [vmem:[#allocation3 + $0x50] sm:$0xff] %v6874
    %s6876 = scalar_lea.vmem [#allocation2], 352
    %v6877 = vld [vmem:[%s6876] ss:$2 sm:$0xff]
    %v6878 = vmul.f32 %v6877, %v6606
    %v6879 = vadd.f32 %v6878, %v6613
    %v6880 = vmax.f32 %v6879, 0.0
    %s6881 = scalar_lea.vmem [#allocation2], 353
    %v6882 = vld [vmem:[%s6881] ss:$2 sm:$0xff]
    %v6883 = vmul.f32 %v6882, %v6606
    %v6884 = vadd.f32 %v6883, %v6613
    %v6885 = vmax.f32 %v6884, 0.0
    %s6886 = scalar_lea.vmem [#allocation2], 368
    %v6887 = vld [vmem:[%s6886] ss:$2 sm:$0xff]
    %v6888 = vmul.f32 %v6887, %v6606
    %v6889 = vadd.f32 %v6888, %v6613
    %v6890 = vmax.f32 %v6889, 0.0
    %s6891 = scalar_lea.vmem [#allocation2], 369
    %v6892 = vld [vmem:[%s6891] ss:$2 sm:$0xff]
    %v6893 = vmul.f32 %v6892, %v6606
    %v6894 = vadd.f32 %v6893, %v6613
    %v6895 = vmax.f32 %v6894, 0.0
    %v6896 = vmax.f32 %v6880, %v6885
    %v6897 = vmax.f32 %v6890, %v6895
    %v6898 = vmax.f32 %v6896, %v6897
    %6899 = vst [vmem:[#allocation3 + $0x58] sm:$0xff] %v6898
    %s6900 = scalar_lea.vmem [#allocation2], 384
    %v6901 = vld [vmem:[%s6900] ss:$2 sm:$0xff]
    %v6902 = vmul.f32 %v6901, %v6606
    %v6903 = vadd.f32 %v6902, %v6613
    %v6904 = vmax.f32 %v6903, 0.0
    %s6905 = scalar_lea.vmem [#allocation2], 385
    %v6906 = vld [vmem:[%s6905] ss:$2 sm:$0xff]
    %v6907 = vmul.f32 %v6906, %v6606
    %v6908 = vadd.f32 %v6907, %v6613
    %v6909 = vmax.f32 %v6908, 0.0
    %s6910 = scalar_lea.vmem [#allocation2], 400
    %v6911 = vld [vmem:[%s6910] ss:$2 sm:$0xff]
    %v6912 = vmul.f32 %v6911, %v6606
    %v6913 = vadd.f32 %v6912, %v6613
    %v6914 = vmax.f32 %v6913, 0.0
    %s6915 = scalar_lea.vmem [#allocation2], 401
    %v6916 = vld [vmem:[%s6915] ss:$2 sm:$0xff]
    %v6917 = vmul.f32 %v6916, %v6606
    %v6918 = vadd.f32 %v6917, %v6613
    %v6919 = vmax.f32 %v6918, 0.0
    %v6920 = vmax.f32 %v6904, %v6909
    %v6921 = vmax.f32 %v6914, %v6919
    %v6922 = vmax.f32 %v6920, %v6921
    %6923 = vst [vmem:[#allocation3 + $0x60] sm:$0xff] %v6922
    %s6924 = scalar_lea.vmem [#allocation2], 416
    %v6925 = vld [vmem:[%s6924] ss:$2 sm:$0xff]
    %v6926 = vmul.f32 %v6925, %v6606
    %v6927 = vadd.f32 %v6926, %v6613
    %v6928 = vmax.f32 %v6927, 0.0
    %s6929 = scalar_lea.vmem [#allocation2], 417
    %v6930 = vld [vmem:[%s6929] ss:$2 sm:$0xff]
    %v6931 = vmul.f32 %v6930, %v6606
    %v6932 = vadd.f32 %v6931, %v6613
    %v6933 = vmax.f32 %v6932, 0.0
    %s6934 = scalar_lea.vmem [#allocation2], 432
    %v6935 = vld [vmem:[%s6934] ss:$2 sm:$0xff]
    %v6936 = vmul.f32 %v6935, %v6606
    %v6937 = vadd.f32 %v6936, %v6613
    %v6938 = vmax.f32 %v6937, 0.0
    %s6939 = scalar_lea.vmem [#allocation2], 433
    %v6940 = vld [vmem:[%s6939] ss:$2 sm:$0xff]
    %v6941 = vmul.f32 %v6940, %v6606
    %v6942 = vadd.f32 %v6941, %v6613
    %v6943 = vmax.f32 %v6942, 0.0
    %v6944 = vmax.f32 %v6928, %v6933
    %v6945 = vmax.f32 %v6938, %v6943
    %v6946 = vmax.f32 %v6944, %v6945
    %6947 = vst [vmem:[#allocation3 + $0x68] sm:$0xff] %v6946
    %s6948 = scalar_lea.vmem [#allocation2], 448
    %v6949 = vld [vmem:[%s6948] ss:$2 sm:$0xff]
    %v6950 = vmul.f32 %v6949, %v6606
    %v6951 = vadd.f32 %v6950, %v6613
    %v6952 = vmax.f32 %v6951, 0.0
    %s6953 = scalar_lea.vmem [#allocation2], 449
    %v6954 = vld [vmem:[%s6953] ss:$2 sm:$0xff]
    %v6955 = vmul.f32 %v6954, %v6606
    %v6956 = vadd.f32 %v6955, %v6613
    %v6957 = vmax.f32 %v6956, 0.0
    %s6958 = scalar_lea.vmem [#allocation2], 464
    %v6959 = vld [vmem:[%s6958] ss:$2 sm:$0xff]
    %v6960 = vmul.f32 %v6959, %v6606
    %v6961 = vadd.f32 %v6960, %v6613
    %v6962 = vmax.f32 %v6961, 0.0
    %s6963 = scalar_lea.vmem [#allocation2], 465
    %v6964 = vld [vmem:[%s6963] ss:$2 sm:$0xff]
    %v6965 = vmul.f32 %v6964, %v6606
    %v6966 = vadd.f32 %v6965, %v6613
    %v6967 = vmax.f32 %v6966, 0.0
    %v6968 = vmax.f32 %v6952, %v6957
    %v6969 = vmax.f32 %v6962, %v6967
    %v6970 = vmax.f32 %v6968, %v6969
    %6971 = vst [vmem:[#allocation3 + $0x70] sm:$0xff] %v6970
    %s6972 = scalar_lea.vmem [#allocation2], 480
    %v6973 = vld [vmem:[%s6972] ss:$2 sm:$0xff]
    %v6974 = vmul.f32 %v6973, %v6606
    %v6975 = vadd.f32 %v6974, %v6613
    %v6976 = vmax.f32 %v6975, 0.0
    %s6977 = scalar_lea.vmem [#allocation2], 481
    %v6978 = vld [vmem:[%s6977] ss:$2 sm:$0xff]
    %v6979 = vmul.f32 %v6978, %v6606
    %v6980 = vadd.f32 %v6979, %v6613
    %v6981 = vmax.f32 %v6980, 0.0
    %s6982 = scalar_lea.vmem [#allocation2], 496
    %v6983 = vld [vmem:[%s6982] ss:$2 sm:$0xff]
    %v6984 = vmul.f32 %v6983, %v6606
    %v6985 = vadd.f32 %v6984, %v6613
    %v6986 = vmax.f32 %v6985, 0.0
    %s6987 = scalar_lea.vmem [#allocation2], 497
    %v6988 = vld [vmem:[%s6987] ss:$2 sm:$0xff]
    %v6989 = vmul.f32 %v6988, %v6606
    %v6990 = vadd.f32 %v6989, %v6613
    %v6991 = vmax.f32 %v6990, 0.0
    %v6992 = vmax.f32 %v6976, %v6981
    %v6993 = vmax.f32 %v6986, %v6991
    %v6994 = vmax.f32 %v6992, %v6993
    %6995 = vst [vmem:[#allocation3 + $0x78] sm:$0xff] %v6994
    // Predicated region
    $region18: #{tpu_custom_call.1} parent=1 // pred_check
      _
    $region19: #{tpu_custom_call.1} parent=1 // pred_check_branch
      %6997 = sbr.rel (0) target = $region21
    $region20: #{tpu_custom_call.1} parent=1 // pred_region
      %s6999 = ssub.s32 2048, 2048
      %7000 = vsyncadd [#allocation4], %s6999
      %s7001 = sshll.u32 [#allocation3], 4
      %s7002 = int_to_ptr.vmem [resolvable:$true] %s7001
      %7007 = dma.vmem_to_hbm [thread:$0]  %s7002, 2048, %s4, [#allocation4], 128, 128, 8
    $region21: #{tpu_custom_call.1} parent=1 // pred_fallthru
      _
    // Predicated region
    $region22: #{tpu_custom_call.1} parent=1 // pred_check
      _
    $region23: #{tpu_custom_call.1} parent=1 // pred_check_branch
      %7009 = sbr.rel (0) target = $region25
    $region24: #{tpu_custom_call.1} parent=1 // pred_region
      %7010 = dma.done [#allocation4], 2048
    $region25: #{tpu_custom_call.1} parent=1 // pred_fallthru
      _
    %7011 = vsyncpa [#allocation4], 1

</llo_original>
